<compile_context>
chip_gen: v7x
topology: tpu7x:2x2x1
jax: 0.10.0
libtpu: 0.0.40
codegen_flags: <defaults>
</compile_context>

<pallas_src>
import functools
import math

import jax
import jax.numpy as jnp
from jax.experimental import pallas as pl
from jax.experimental.pallas import tpu as pltpu


# ----------------------------------------------------------------------------
# Fused PLM kernel, one grid step per transformer layer.  The activation
# (B*T, D) lives in a VMEM scratch across layer steps; per-layer weights are
# streamed by the auto-pipeline; the final vq_bins projection runs on the last
# step against a predict_w buffer filled by a background DMA.
# ----------------------------------------------------------------------------
def _plm_kernel(bias_ref,                       # (N, N) f32  block-diag causal+len bias
                x0_ref,                         # (N, D) f32  initial activation
                ln1_w_ref, ln1_b_ref,           # (1, 1, D) f32
                wqkv_ref, bqkv_ref,             # (1, D, 3D) bf16 / (1, 1, 3D) f32
                wo_ref, bo_ref,                 # (1, H, hd, D) bf16 / (1, 1, D) f32
                ln2_w_ref, ln2_b_ref,           # (1, 1, D) f32
                w1_ref, b1_ref,                 # (1, D, F) bf16 / (1, 1, F) f32
                w2_ref, b2_ref,                 # (1, F, D) bf16 / (1, 1, D) f32
                wp_hbm_ref,                     # (D, V) bf16, memory_space=ANY
                out_ref,                        # (N, V) f32
                x_scr,                          # VMEM (N, D) f32, layer-carried
                wp_vmem,                        # VMEM (D, V) bf16
                wp_sem,                         # DMA semaphore
                *, n_heads):
    l = pl.program_id(0)
    n_layers = pl.num_programs(0)
    N = x0_ref.shape[0]
    D = x0_ref.shape[1]
    hd = D // n_heads

    @pl.when(l == 0)
    def _init():
        x_scr[...] = x0_ref[...]
        # Background-fetch predict_w; hidden under all n_layers of compute.
        pltpu.make_async_copy(wp_hbm_ref, wp_vmem, wp_sem).start()

    x = x_scr[...]                              # (N, D) f32
    neg_bias = bias_ref[...]                    # (N, N) f32
    inv_sqrt_hd = jnp.float32(1.0 / math.sqrt(hd))
    dn_qkT = (((1,), (1,)), ((), ()))           # contract last dims: q @ k^T

    def _layer_norm(v, w, bias):
        mu = jnp.mean(v, axis=-1, keepdims=True)
        var = jnp.mean(jnp.square(v - mu), axis=-1, keepdims=True)
        return (v - mu) * jax.lax.rsqrt(var + 1e-5) * w + bias

    # ---- self-attention block (pre-norm) ------------------------------------
    xn = _layer_norm(x, ln1_w_ref[0, 0], ln1_b_ref[0, 0])
    qkv = jnp.dot(xn.astype(jnp.bfloat16), wqkv_ref[0],
                  preferred_element_type=jnp.float32) + bqkv_ref[0, 0]
    qkv_b = qkv.astype(jnp.bfloat16)            # single cast, sliced per head

    attn = jnp.zeros((N, D), jnp.float32)
    for h in range(n_heads):                    # unrolled (4 heads); hd=69 slices
        q = qkv_b[:, h * hd:(h + 1) * hd]
        k = qkv_b[:, D + h * hd:D + (h + 1) * hd]
        v = qkv_b[:, 2 * D + h * hd:2 * D + (h + 1) * hd]
        s = jax.lax.dot_general(q, k, dn_qkT, preferred_element_type=jnp.float32)
        s = s * inv_sqrt_hd + neg_bias
        s = s - jnp.max(s, axis=-1, keepdims=True)
        p = jnp.exp(s)
        p = p * pl.reciprocal(jnp.sum(p, axis=-1, keepdims=True), approx=True)
        o_h = jnp.dot(p.astype(jnp.bfloat16), v, preferred_element_type=jnp.float32)
        # per-head out-projection; replaces the lane-unaligned concat
        attn = attn + jnp.dot(o_h.astype(jnp.bfloat16), wo_ref[0, h],
                              preferred_element_type=jnp.float32)
    x = x + attn + bo_ref[0, 0]

    # ---- feed-forward block (pre-norm, ReLU) ---------------------------------
    xn2 = _layer_norm(x, ln2_w_ref[0, 0], ln2_b_ref[0, 0])
    h1 = jnp.dot(xn2.astype(jnp.bfloat16), w1_ref[0],
                 preferred_element_type=jnp.float32) + b1_ref[0, 0]
    h1 = jnp.maximum(h1, 0.0)
    ff = jnp.dot(h1.astype(jnp.bfloat16), w2_ref[0],
                 preferred_element_type=jnp.float32)
    x = x + ff + b2_ref[0, 0]

    x_scr[...] = x                              # carry to next layer step

    @pl.when(l == n_layers - 1)
    def _finalize():
        pltpu.make_async_copy(wp_hbm_ref, wp_vmem, wp_sem).wait()
        logits = jnp.dot(x.astype(jnp.bfloat16), wp_vmem[...],
                         preferred_element_type=jnp.float32)
        out_ref[...] = logits.astype(out_ref.dtype)


def plm_pallas(params, x, lens, *, n_heads):
    """x: [B, T, D] f32 (already position-embedded) -> logits [B, T, vq_bins]."""
    B, T, D = x.shape
    N = B * T
    L = params["wqkv"].shape[0]
    F = params["w1"].shape[-1]
    V = params["predict_w"].shape[-1]
    hd = D // n_heads

    x_flat = x.reshape(N, D).astype(jnp.float32)

    # block-diagonal causal + key-padding bias over the folded (B*T) rows
    idx = jnp.arange(N, dtype=jnp.int32)
    rb, cb = idx[:, None] // T, idx[None, :] // T
    rt, ct = idx[:, None] % T, idx[None, :] % T
    key_len = lens.astype(jnp.int32)[cb]                 # (1, N)
    allowed = (rb == cb) & (ct <= rt) & (ct < key_len)
    neg_bias = jnp.where(allowed, jnp.float32(0.0), jnp.float32(-1e30))

    # (L, D, D) -> (L, H, hd, D): per-head rows of the out-projection
    wo_r = params["wo"].reshape(L, n_heads, hd, D)

    kernel = functools.partial(_plm_kernel, n_heads=n_heads)

    def resident(shape):
        # constant index map: DMA'd once, resident across all layer steps
        return pl.BlockSpec(shape, lambda l, _s=len(shape): (0,) * _s)

    def per_layer(shape):
        # streamed per layer: auto-pipeline double-buffers layer l+1 under l
        return pl.BlockSpec((1,) + shape,
                            lambda l, _s=len(shape): (l,) + (0,) * _s)

    in_specs = [
        resident((N, N)),                                 # neg_bias
        resident((N, D)),                                 # x0
        per_layer((1, D)), per_layer((1, D)),             # ln1 w/b
        per_layer((D, 3 * D)), per_layer((1, 3 * D)),     # wqkv / bqkv
        per_layer((n_heads, hd, D)), per_layer((1, D)),   # wo (per-head) / bo
        per_layer((1, D)), per_layer((1, D)),             # ln2 w/b
        per_layer((D, F)), per_layer((1, F)),             # w1 / b1
        per_layer((F, D)), per_layer((1, D)),             # w2 / b2
        pl.BlockSpec(memory_space=pl.ANY),                # predict_w (manual DMA)
    ]
    out_spec = resident((N, V))                           # written on last step

    flops = L * (2 * N * D * 3 * D + 4 * N * N * D + 2 * N * D * D
                 + 4 * N * D * F) + 2 * N * D * V
    weight_bytes = sum(int(params[k].size) * params[k].dtype.itemsize
                       for k in ("wqkv", "wo", "w1", "w2", "predict_w"))
    cost = pl.CostEstimate(
        flops=int(flops),
        transcendentals=int(L * n_heads * N * N + 4 * L * N),
        bytes_accessed=int(weight_bytes + N * D * 4 + N * N * 4 + N * V * 4))

    out = pl.pallas_call(
        kernel,
        grid_spec=pltpu.PrefetchScalarGridSpec(
            num_scalar_prefetch=0,
            grid=(L,),
            in_specs=in_specs,
            out_specs=out_spec,
            scratch_shapes=[
                pltpu.VMEM((N, D), jnp.float32),          # layer-carried activation
                pltpu.VMEM((D, V), jnp.bfloat16),         # predict_w landing buffer
                pltpu.SemaphoreType.DMA(()),              # predict_w DMA semaphore
            ]),
        out_shape=jax.ShapeDtypeStruct((N, V), jnp.float32),
        compiler_params=pltpu.CompilerParams(
            dimension_semantics=("arbitrary",),           # serial layer axis
            vmem_limit_bytes=24 * 1024 * 1024),
        cost_estimate=cost,
    )(neg_bias, x_flat,
      params["ln1_w"], params["ln1_b"],
      params["wqkv"], params["bqkv"], wo_r, params["bo"],
      params["ln2_w"], params["ln2_b"],
      params["w1"], params["b1"], params["w2"], params["b2"],
      params["predict_w"])

    return out.reshape(B, T, V)


# ----------------------------------------------------------------------------
# Pure-JAX reference for the Pallas-covered part (same bf16 matmul casts).
# ----------------------------------------------------------------------------
def plm_reference(params, x, lens, *, n_heads):
    B, T, D = x.shape
    L = params["wqkv"].shape[0]
    hd = D // n_heads
    row = jnp.arange(T)[:, None]
    col = jnp.arange(T)[None, :]
    mask = (col <= row)[None] & (col[None] < lens[:, None, None])
    bias = jnp.where(mask, jnp.float32(0.0), jnp.float32(-1e30))[:, None]  # [B,1,T,T]

    def _ln(v, w, b):
        mu = jnp.mean(v, -1, keepdims=True)
        var = jnp.mean(jnp.square(v - mu), -1, keepdims=True)
        return (v - mu) * jax.lax.rsqrt(var + 1e-5) * w + b

    for l in range(L):
        xn = _ln(x, params["ln1_w"][l], params["ln1_b"][l])
        qkv = jnp.einsum("btd,de->bte", xn.astype(jnp.bfloat16), params["wqkv"][l],
                         preferred_element_type=jnp.float32) + params["bqkv"][l]
        q, k, v = jnp.split(qkv, 3, axis=-1)
        q = q.reshape(B, T, n_heads, hd).astype(jnp.bfloat16)
        k = k.reshape(B, T, n_heads, hd).astype(jnp.bfloat16)
        v = v.reshape(B, T, n_heads, hd).astype(jnp.bfloat16)
        s = jnp.einsum("bqhd,bkhd->bhqk", q, k,
                       preferred_element_type=jnp.float32) / math.sqrt(hd) + bias
        p = jax.nn.softmax(s, axis=-1)
        attn = jnp.einsum("bhqk,bkhd->bqhd", p.astype(jnp.bfloat16), v,
                          preferred_element_type=jnp.float32).reshape(B, T, D)
        attn = jnp.einsum("btd,de->bte", attn.astype(jnp.bfloat16), params["wo"][l],
                          preferred_element_type=jnp.float32)
        x = x + attn + params["bo"][l]

        xn2 = _ln(x, params["ln2_w"][l], params["ln2_b"][l])
        h1 = jnp.einsum("btd,df->btf", xn2.astype(jnp.bfloat16), params["w1"][l],
                        preferred_element_type=jnp.float32)
        h1 = jnp.maximum(h1 + params["b1"][l], 0.0)
        ff = jnp.einsum("btf,fd->btd", h1.astype(jnp.bfloat16), params["w2"][l],
                        preferred_element_type=jnp.float32)
        x = x + ff + params["b2"][l]

    return jnp.einsum("btd,dv->btv", x.astype(jnp.bfloat16), params["predict_w"],
                      preferred_element_type=jnp.float32)


# ----------------------------------------------------------------------------
# Megatts2PLM1 forward (embedding / pos-emb / loss / metric glue in plain JAX)
# ----------------------------------------------------------------------------
def _sine_pe(T, D):
    pos = jnp.arange(T, dtype=jnp.float32)[:, None]
    div = jnp.exp(jnp.arange(0, D, 2, dtype=jnp.float32) * (-math.log(10000.0) / D))
    ang = pos * div
    pe = jnp.zeros((T, D), jnp.float32)
    pe = pe.at[:, 0::2].set(jnp.sin(ang))
    pe = pe.at[:, 1::2].set(jnp.cos(ang))
    return pe


def megatts2_plm1_forward(params, tc_latent, p_codes, lens, *, n_heads=4,
                          use_pallas=True):
    """tc_latent: [B, tc_dim, T], p_codes: [B, T] int32, lens: [B] int32."""
    vq_bins = params["predict_w"].shape[-1]
    go_id = vq_bins
    ignore_id = vq_bins + 1

    B, _, T = tc_latent.shape
    x_tc = jnp.transpose(tc_latent, (0, 2, 1))                    # [B, T, tc_dim]

    # pad_y_go
    padded = jnp.concatenate(
        [jnp.full((B, 1), go_id, p_codes.dtype), p_codes], axis=1)
    p_in, targets = padded[:, :-1], padded[:, 1:]                 # [B, T] each

    pc_emb = jnp.take(params["pc_embedding"], p_in, axis=0)       # [B, T, vq_dim]
    x_emb = jnp.concatenate([x_tc, pc_emb], axis=-1)              # [B, T, D]
    D = x_emb.shape[-1]

    # SinePositionalEmbedding: x_scale=1, alpha=1 (non-trainable), dropout p=0
    x_pos = x_emb + params["pos_alpha"][0] * _sine_pe(T, D)[None]

    if use_pallas:
        logits_btv = plm_pallas(params, x_pos.astype(jnp.float32), lens,
                                n_heads=n_heads)
    else:
        logits_btv = plm_reference(params, x_pos.astype(jnp.float32), lens,
                                   n_heads=n_heads)

    # cross-entropy, reduction='sum', ignore_index = vq_bins + 1
    logp = jax.nn.log_softmax(logits_btv, axis=-1)
    valid = targets != ignore_id
    tgt = jnp.where(valid, targets, 0)
    nll = -jnp.take_along_axis(logp, tgt[..., None], axis=-1)[..., 0]
    loss = jnp.sum(jnp.where(valid, nll, 0.0))
    loss_log = loss / jnp.sum(lens).astype(jnp.float32)

    # MulticlassAccuracy(top_k=10, average='micro', ignore_index)
    _, top10 = jax.lax.top_k(logits_btv, 10)
    hit = jnp.any(top10 == targets[..., None], axis=-1)
    acc = (jnp.sum(jnp.where(valid, hit, False)).astype(jnp.float32)
           / jnp.maximum(jnp.sum(valid), 1).astype(jnp.float32))

    logits = jnp.transpose(logits_btv, (0, 2, 1))                 # [B, vq_bins, T]
    return logits, targets, loss, loss_log, acc


# ----------------------------------------------------------------------------
# Deterministic synthetic parameters (only arrays in the pytree!)
# ----------------------------------------------------------------------------
def init_params(key, *, n_layers=4, vq_dim=20, tc_latent_dim=256, vq_bins=1024):
    D = vq_dim + tc_latent_dim
    F = 4 * D
    L = n_layers
    ks = jax.random.split(key, 12)

    def w(k, fan_in, shape):  # bf16 matmul weights (halves weight DMA bytes)
        return (jax.random.normal(k, shape, jnp.float32)
                / math.sqrt(fan_in)).astype(jnp.bfloat16)

    def b(k, shape):
        return jax.random.normal(k, shape, jnp.float32) * 0.02

    return {
        "pc_embedding": jax.random.normal(ks[0], (vq_bins + 2, vq_dim), jnp.float32),
        "pos_alpha": jnp.ones((1,), jnp.float32),
        "ln1_w": jnp.ones((L, 1, D), jnp.float32),
        "ln1_b": jnp.zeros((L, 1, D), jnp.float32),
        "wqkv": w(ks[1], D, (L, D, 3 * D)),
        "bqkv": b(ks[2], (L, 1, 3 * D)),
        "wo": w(ks[3], D, (L, D, D)),
        "bo": b(ks[4], (L, 1, D)),
        "ln2_w": jnp.ones((L, 1, D), jnp.float32),
        "ln2_b": jnp.zeros((L, 1, D), jnp.float32),
        "w1": w(ks[5], D, (L, D, F)),
        "b1": b(ks[6], (L, 1, F)),
        "w2": w(ks[7], F, (L, F, D)),
        "b2": b(ks[8], (L, 1, D)),
        "predict_w": w(ks[9], D, (D, vq_bins)),
    }


if __name__ == "__main__":
    key = jax.random.PRNGKey(0)
    k_params, k_tc, k_codes = jax.random.split(key, 3)

    B, T = 2, 16
    N_LAYERS, N_HEADS = 4, 4
    VQ_DIM, TC_DIM, VQ_BINS = 20, 256, 1024

    params = init_params(k_params, n_layers=N_LAYERS, vq_dim=VQ_DIM,
                         tc_latent_dim=TC_DIM, vq_bins=VQ_BINS)
    tc_latent = jax.random.normal(k_tc, (B, TC_DIM, T), jnp.float32)
    p_codes = jax.random.randint(k_codes, (B, T), 0, VQ_BINS, jnp.int32)
    lens = jnp.array([T, T - 5], jnp.int32)
    # mark padded positions with ignore_index (vq_bins + 1), as the data pipeline would
    pad_mask = jnp.arange(T)[None, :] >= lens[:, None]
    p_codes = jnp.where(pad_mask, VQ_BINS + 1, p_codes)

    fwd = jax.jit(functools.partial(megatts2_plm1_forward,
                                    n_heads=N_HEADS, use_pallas=True))
    fwd_ref = jax.jit(functools.partial(megatts2_plm1_forward,
                                        n_heads=N_HEADS, use_pallas=False))

    logits, targets, loss, loss_log, acc = jax.block_until_ready(
        fwd(params, tc_latent, p_codes, lens))
    r_logits, r_targets, r_loss, r_loss_log, r_acc = jax.block_until_ready(
        fwd_ref(params, tc_latent, p_codes, lens))

    assert logits.shape == (B, VQ_BINS, T), logits.shape
    assert targets.shape == (B, T), targets.shape
    assert bool(jnp.isfinite(logits).all())
    assert bool(jnp.isfinite(loss)) and bool(jnp.isfinite(loss_log))
    assert bool(jnp.all(targets == r_targets))
    assert bool(jnp.allclose(logits, r_logits, atol=5e-2, rtol=5e-2)), (
        float(jnp.max(jnp.abs(logits - r_logits))))
    assert bool(jnp.allclose(loss, r_loss, rtol=5e-2, atol=5e-1)), (
        float(loss), float(r_loss))

    print("KERNEL_OK")
</pallas_src>

<mosaic_0001>
module attributes {stable_mosaic.version = 11 : i64} {
  func.func @_plm_kernel(%arg0: i32, %arg1: memref<32x32xf32, #tpu.memory_space<vmem>>, %arg2: memref<32x276xf32, #tpu.memory_space<vmem>>, %arg3: memref<1x1x276xf32, #tpu.memory_space<vmem>>, %arg4: memref<1x1x276xf32, #tpu.memory_space<vmem>>, %arg5: memref<1x276x828xbf16, #tpu.memory_space<vmem>>, %arg6: memref<1x1x828xf32, #tpu.memory_space<vmem>>, %arg7: memref<1x4x69x276xbf16, #tpu.memory_space<vmem>>, %arg8: memref<1x1x276xf32, #tpu.memory_space<vmem>>, %arg9: memref<1x1x276xf32, #tpu.memory_space<vmem>>, %arg10: memref<1x1x276xf32, #tpu.memory_space<vmem>>, %arg11: memref<1x276x1104xbf16, #tpu.memory_space<vmem>>, %arg12: memref<1x1x1104xf32, #tpu.memory_space<vmem>>, %arg13: memref<1x1104x276xbf16, #tpu.memory_space<vmem>>, %arg14: memref<1x1x276xf32, #tpu.memory_space<vmem>>, %arg15: memref<276x1024xbf16, #tpu.memory_space<any>>, %arg16: memref<32x1024xf32, #tpu.memory_space<vmem>>, %arg17: memref<32x276xf32, #tpu.memory_space<vmem>>, %arg18: memref<276x1024xbf16, #tpu.memory_space<vmem>>, %arg19: memref<!tpu.dma_semaphore, #tpu.memory_space<semaphore_mem>>) attributes {dimension_semantics = [#tpu.dimension_semantics<arbitrary>], iteration_bounds = array<i64: 4>, scalar_prefetch = 0 : i64, scratch_operands = 3 : i64, tpu.core_type = #tpu.core_type<tc>, window_params = [{pipeline_mode = #tpu.pipeline_mode<synchronous>, transform_indices = @transform_0, window_bounds = array<i64: 32, 32>}, {pipeline_mode = #tpu.pipeline_mode<synchronous>, transform_indices = @transform_1, window_bounds = array<i64: 32, 276>}, {transform_indices = @transform_2, window_bounds = array<i64: 1, 1, 276>}, {transform_indices = @transform_3, window_bounds = array<i64: 1, 1, 276>}, {transform_indices = @transform_4, window_bounds = array<i64: 1, 276, 828>}, {transform_indices = @transform_5, window_bounds = array<i64: 1, 1, 828>}, {transform_indices = @transform_6, window_bounds = array<i64: 1, 4, 69, 276>}, {transform_indices = @transform_7, window_bounds = array<i64: 1, 1, 276>}, {transform_indices = @transform_8, window_bounds = array<i64: 1, 1, 276>}, {transform_indices = @transform_9, window_bounds = array<i64: 1, 1, 276>}, {transform_indices = @transform_10, window_bounds = array<i64: 1, 276, 1104>}, {transform_indices = @transform_11, window_bounds = array<i64: 1, 1, 1104>}, {transform_indices = @transform_12, window_bounds = array<i64: 1, 1104, 276>}, {transform_indices = @transform_13, window_bounds = array<i64: 1, 1, 276>}, {}, {pipeline_mode = #tpu.pipeline_mode<synchronous>, transform_indices = @transform_15, window_bounds = array<i64: 32, 1024>}]} {
    %c0_i32 = arith.constant 0 : i32
    %0 = arith.cmpi eq, %arg0, %c0_i32 : i32
    %1 = arith.extui %0 : i1 to i32
    %c0_i32_0 = arith.constant 0 : i32
    %2 = arith.cmpi ne, %1, %c0_i32_0 : i32
    scf.if %2 {
      %c0_91 = arith.constant 0 : index
      %c0_92 = arith.constant 0 : index
      %199 = vector.load %arg2[%c0_91, %c0_92] : memref<32x276xf32, #tpu.memory_space<vmem>>, vector<32x276xf32>
      %c0_93 = arith.constant 0 : index
      %c0_94 = arith.constant 0 : index
      %200 = vector.load %arg17[%c0_93, %c0_94] : memref<32x276xf32, #tpu.memory_space<vmem>>, vector<32x276xf32>
      tpu.vector_store %arg17[%c0_93, %c0_94], %199 {strides = array<i32>} : memref<32x276xf32, #tpu.memory_space<vmem>>, vector<32x276xf32>,
      tpu.enqueue_dma source(%arg15 : memref<276x1024xbf16, #tpu.memory_space<any>>) target(%arg18 : memref<276x1024xbf16, #tpu.memory_space<vmem>>) target_semaphore(%arg19 : memref<!tpu.dma_semaphore, #tpu.memory_space<semaphore_mem>>)
    } else {
    }
    %c0 = arith.constant 0 : index
    %c0_1 = arith.constant 0 : index
    %3 = vector.load %arg17[%c0, %c0_1] : memref<32x276xf32, #tpu.memory_space<vmem>>, vector<32x276xf32>
    %c0_2 = arith.constant 0 : index
    %c0_3 = arith.constant 0 : index
    %4 = vector.load %arg1[%c0_2, %c0_3] : memref<32x32xf32, #tpu.memory_space<vmem>>, vector<32x32xf32>
    %c0_4 = arith.constant 0 : index
    %c0_5 = arith.constant 0 : index
    %c0_6 = arith.constant 0 : index
    %5 = vector.load %arg3[%c0_4, %c0_5, %c0_6] : memref<1x1x276xf32, #tpu.memory_space<vmem>>, vector<1x1x276xf32>
    %6 = vector.shape_cast %5 : vector<1x1x276xf32> to vector<276xf32>
    %c0_7 = arith.constant 0 : index
    %c0_8 = arith.constant 0 : index
    %c0_9 = arith.constant 0 : index
    %7 = vector.load %arg4[%c0_7, %c0_8, %c0_9] : memref<1x1x276xf32, #tpu.memory_space<vmem>>, vector<1x1x276xf32>
    %8 = vector.shape_cast %7 : vector<1x1x276xf32> to vector<276xf32>
    %cst = arith.constant dense<0.000000e+00> : vector<32xf32>
    %9 = vector.multi_reduction <add>, %3, %cst [1] : vector<32x276xf32> to vector<32xf32>
    %10 = vector.shape_cast %9 : vector<32xf32> to vector<32x1xf32>
    %cst_10 = arith.constant 2.760000e+02 : f32
    %11 = vector.broadcast %cst_10 : f32 to vector<32x1xf32>
    %12 = arith.divf %10, %11 : vector<32x1xf32>
    %13 = vector.broadcast %12 : vector<32x1xf32> to vector<32x276xf32>
    %14 = arith.subf %3, %13 : vector<32x276xf32>
    %15 = arith.mulf %14, %14 : vector<32x276xf32>
    %cst_11 = arith.constant dense<0.000000e+00> : vector<32xf32>
    %16 = vector.multi_reduction <add>, %15, %cst_11 [1] : vector<32x276xf32> to vector<32xf32>
    %17 = vector.shape_cast %16 : vector<32xf32> to vector<32x1xf32>
    %cst_12 = arith.constant 2.760000e+02 : f32
    %18 = vector.broadcast %cst_12 : f32 to vector<32x1xf32>
    %19 = arith.divf %17, %18 : vector<32x1xf32>
    %20 = vector.broadcast %12 : vector<32x1xf32> to vector<32x276xf32>
    %21 = arith.subf %3, %20 : vector<32x276xf32>
    %cst_13 = arith.constant 9.99999974E-6 : f32
    %22 = vector.broadcast %cst_13 : f32 to vector<32x1xf32>
    %23 = arith.addf %19, %22 : vector<32x1xf32>
    %24 = math.rsqrt %23 : vector<32x1xf32>
    %25 = vector.broadcast %24 : vector<32x1xf32> to vector<32x276xf32>
    %26 = arith.mulf %21, %25 : vector<32x276xf32>
    %27 = vector.shape_cast %6 : vector<276xf32> to vector<1x276xf32>
    %28 = vector.broadcast %27 : vector<1x276xf32> to vector<32x276xf32>
    %29 = arith.mulf %26, %28 : vector<32x276xf32>
    %30 = vector.shape_cast %8 : vector<276xf32> to vector<1x276xf32>
    %31 = vector.broadcast %30 : vector<1x276xf32> to vector<32x276xf32>
    %32 = arith.addf %29, %31 : vector<32x276xf32>
    %33 = arith.truncf %32 : vector<32x276xf32> to vector<32x276xbf16>
    %c0_14 = arith.constant 0 : index
    %c0_15 = arith.constant 0 : index
    %c0_16 = arith.constant 0 : index
    %34 = vector.load %arg5[%c0_14, %c0_15, %c0_16] : memref<1x276x828xbf16, #tpu.memory_space<vmem>>, vector<1x276x828xbf16>
    %35 = vector.shape_cast %34 : vector<1x276x828xbf16> to vector<276x828xbf16>
    %cst_17 = arith.constant dense<0.000000e+00> : vector<32x828xf32>
    %36 = tpu.matmul %33, %35, %cst_17 {dimension_numbers = #tpu.dot_dimension_numbers<[1], [0], [0], [1], [0, 0, 1, 1], [], []>} : vector<32x276xbf16>, vector<276x828xbf16>, vector<32x828xf32> -> vector<32x828xf32>
    %c0_18 = arith.constant 0 : index
    %c0_19 = arith.constant 0 : index
    %c0_20 = arith.constant 0 : index
    %37 = vector.load %arg6[%c0_18, %c0_19, %c0_20] : memref<1x1x828xf32, #tpu.memory_space<vmem>>, vector<1x1x828xf32>
    %38 = vector.shape_cast %37 : vector<1x1x828xf32> to vector<828xf32>
    %39 = vector.shape_cast %38 : vector<828xf32> to vector<1x828xf32>
    %40 = vector.broadcast %39 : vector<1x828xf32> to vector<32x828xf32>
    %41 = arith.addf %36, %40 : vector<32x828xf32>
    %42 = arith.truncf %41 : vector<32x828xf32> to vector<32x828xbf16>
    %cst_21 = arith.constant 0.000000e+00 : f32
    %43 = vector.broadcast %cst_21 : f32 to vector<32x276xf32>
    %44 = vector.extract_strided_slice %42 {offsets = [0, 0], sizes = [32, 69], strides = [1, 1]} : vector<32x828xbf16> to vector<32x69xbf16>
    %45 = vector.extract_strided_slice %42 {offsets = [0, 276], sizes = [32, 69], strides = [1, 1]} : vector<32x828xbf16> to vector<32x69xbf16>
    %46 = vector.extract_strided_slice %42 {offsets = [0, 552], sizes = [32, 69], strides = [1, 1]} : vector<32x828xbf16> to vector<32x69xbf16>
    %cst_22 = arith.constant dense<0.000000e+00> : vector<32x32xf32>
    %47 = tpu.matmul %44, %45, %cst_22 {dimension_numbers = #tpu.dot_dimension_numbers<[1], [1], [0], [0], [0, 0, 1, 0], [], []>} : vector<32x69xbf16>, vector<32x69xbf16>, vector<32x32xf32> -> vector<32x32xf32>
    %cst_23 = arith.constant 0.120385855 : f32
    %48 = vector.broadcast %cst_23 : f32 to vector<32x32xf32>
    %49 = arith.mulf %47, %48 : vector<32x32xf32>
    %50 = arith.addf %49, %4 : vector<32x32xf32>
    %cst_24 = arith.constant dense<0xFF800000> : vector<32xf32>
    %51 = vector.multi_reduction <maximumf>, %50, %cst_24 [1] : vector<32x32xf32> to vector<32xf32>
    %52 = vector.shape_cast %51 : vector<32xf32> to vector<32x1xf32>
    %53 = vector.broadcast %52 : vector<32x1xf32> to vector<32x32xf32>
    %54 = arith.subf %50, %53 : vector<32x32xf32>
    %55 = math.exp %54 : vector<32x32xf32>
    %cst_25 = arith.constant dense<0.000000e+00> : vector<32xf32>
    %56 = vector.multi_reduction <add>, %55, %cst_25 [1] : vector<32x32xf32> to vector<32xf32>
    %57 = vector.shape_cast %56 : vector<32xf32> to vector<32x1xf32>
    %58 = tpu.reciprocal %57 {approx = true} : vector<32x1xf32> -> vector<32x1xf32>
    %59 = vector.broadcast %58 : vector<32x1xf32> to vector<32x32xf32>
    %60 = arith.mulf %55, %59 : vector<32x32xf32>
    %61 = arith.truncf %60 : vector<32x32xf32> to vector<32x32xbf16>
    %cst_26 = arith.constant dense<0.000000e+00> : vector<32x69xf32>
    %62 = tpu.matmul %61, %46, %cst_26 {dimension_numbers = #tpu.dot_dimension_numbers<[1], [0], [0], [1], [0, 0, 1, 1], [], []>} : vector<32x32xbf16>, vector<32x69xbf16>, vector<32x69xf32> -> vector<32x69xf32>
    %63 = arith.truncf %62 : vector<32x69xf32> to vector<32x69xbf16>
    %c0_27 = arith.constant 0 : index
    %c0_28 = arith.constant 0 : index
    %c0_29 = arith.constant 0 : index
    %c0_30 = arith.constant 0 : index
    %64 = vector.load %arg7[%c0_27, %c0_28, %c0_29, %c0_30] : memref<1x4x69x276xbf16, #tpu.memory_space<vmem>>, vector<1x1x69x276xbf16>
    %65 = vector.shape_cast %64 : vector<1x1x69x276xbf16> to vector<69x276xbf16>
    %cst_31 = arith.constant dense<0.000000e+00> : vector<32x276xf32>
    %66 = tpu.matmul %63, %65, %cst_31 {dimension_numbers = #tpu.dot_dimension_numbers<[1], [0], [0], [1], [0, 0, 1, 1], [], []>} : vector<32x69xbf16>, vector<69x276xbf16>, vector<32x276xf32> -> vector<32x276xf32>
    %67 = arith.addf %43, %66 : vector<32x276xf32>
    %68 = vector.extract_strided_slice %42 {offsets = [0, 69], sizes = [32, 69], strides = [1, 1]} : vector<32x828xbf16> to vector<32x69xbf16>
    %69 = vector.extract_strided_slice %42 {offsets = [0, 345], sizes = [32, 69], strides = [1, 1]} : vector<32x828xbf16> to vector<32x69xbf16>
    %70 = vector.extract_strided_slice %42 {offsets = [0, 621], sizes = [32, 69], strides = [1, 1]} : vector<32x828xbf16> to vector<32x69xbf16>
    %cst_32 = arith.constant dense<0.000000e+00> : vector<32x32xf32>
    %71 = tpu.matmul %68, %69, %cst_32 {dimension_numbers = #tpu.dot_dimension_numbers<[1], [1], [0], [0], [0, 0, 1, 0], [], []>} : vector<32x69xbf16>, vector<32x69xbf16>, vector<32x32xf32> -> vector<32x32xf32>
    %cst_33 = arith.constant 0.120385855 : f32
    %72 = vector.broadcast %cst_33 : f32 to vector<32x32xf32>
    %73 = arith.mulf %71, %72 : vector<32x32xf32>
    %74 = arith.addf %73, %4 : vector<32x32xf32>
    %cst_34 = arith.constant dense<0xFF800000> : vector<32xf32>
    %75 = vector.multi_reduction <maximumf>, %74, %cst_34 [1] : vector<32x32xf32> to vector<32xf32>
    %76 = vector.shape_cast %75 : vector<32xf32> to vector<32x1xf32>
    %77 = vector.broadcast %76 : vector<32x1xf32> to vector<32x32xf32>
    %78 = arith.subf %74, %77 : vector<32x32xf32>
    %79 = math.exp %78 : vector<32x32xf32>
    %cst_35 = arith.constant dense<0.000000e+00> : vector<32xf32>
    %80 = vector.multi_reduction <add>, %79, %cst_35 [1] : vector<32x32xf32> to vector<32xf32>
    %81 = vector.shape_cast %80 : vector<32xf32> to vector<32x1xf32>
    %82 = tpu.reciprocal %81 {approx = true} : vector<32x1xf32> -> vector<32x1xf32>
    %83 = vector.broadcast %82 : vector<32x1xf32> to vector<32x32xf32>
    %84 = arith.mulf %79, %83 : vector<32x32xf32>
    %85 = arith.truncf %84 : vector<32x32xf32> to vector<32x32xbf16>
    %cst_36 = arith.constant dense<0.000000e+00> : vector<32x69xf32>
    %86 = tpu.matmul %85, %70, %cst_36 {dimension_numbers = #tpu.dot_dimension_numbers<[1], [0], [0], [1], [0, 0, 1, 1], [], []>} : vector<32x32xbf16>, vector<32x69xbf16>, vector<32x69xf32> -> vector<32x69xf32>
    %87 = arith.truncf %86 : vector<32x69xf32> to vector<32x69xbf16>
    %c0_37 = arith.constant 0 : index
    %c1 = arith.constant 1 : index
    %c0_38 = arith.constant 0 : index
    %c0_39 = arith.constant 0 : index
    %88 = vector.load %arg7[%c0_37, %c1, %c0_38, %c0_39] : memref<1x4x69x276xbf16, #tpu.memory_space<vmem>>, vector<1x1x69x276xbf16>
    %89 = vector.shape_cast %88 : vector<1x1x69x276xbf16> to vector<69x276xbf16>
    %cst_40 = arith.constant dense<0.000000e+00> : vector<32x276xf32>
    %90 = tpu.matmul %87, %89, %cst_40 {dimension_numbers = #tpu.dot_dimension_numbers<[1], [0], [0], [1], [0, 0, 1, 1], [], []>} : vector<32x69xbf16>, vector<69x276xbf16>, vector<32x276xf32> -> vector<32x276xf32>
    %91 = arith.addf %67, %90 : vector<32x276xf32>
    %92 = vector.extract_strided_slice %42 {offsets = [0, 138], sizes = [32, 69], strides = [1, 1]} : vector<32x828xbf16> to vector<32x69xbf16>
    %93 = vector.extract_strided_slice %42 {offsets = [0, 414], sizes = [32, 69], strides = [1, 1]} : vector<32x828xbf16> to vector<32x69xbf16>
    %94 = vector.extract_strided_slice %42 {offsets = [0, 690], sizes = [32, 69], strides = [1, 1]} : vector<32x828xbf16> to vector<32x69xbf16>
    %cst_41 = arith.constant dense<0.000000e+00> : vector<32x32xf32>
    %95 = tpu.matmul %92, %93, %cst_41 {dimension_numbers = #tpu.dot_dimension_numbers<[1], [1], [0], [0], [0, 0, 1, 0], [], []>} : vector<32x69xbf16>, vector<32x69xbf16>, vector<32x32xf32> -> vector<32x32xf32>
    %cst_42 = arith.constant 0.120385855 : f32
    %96 = vector.broadcast %cst_42 : f32 to vector<32x32xf32>
    %97 = arith.mulf %95, %96 : vector<32x32xf32>
    %98 = arith.addf %97, %4 : vector<32x32xf32>
    %cst_43 = arith.constant dense<0xFF800000> : vector<32xf32>
    %99 = vector.multi_reduction <maximumf>, %98, %cst_43 [1] : vector<32x32xf32> to vector<32xf32>
    %100 = vector.shape_cast %99 : vector<32xf32> to vector<32x1xf32>
    %101 = vector.broadcast %100 : vector<32x1xf32> to vector<32x32xf32>
    %102 = arith.subf %98, %101 : vector<32x32xf32>
    %103 = math.exp %102 : vector<32x32xf32>
    %cst_44 = arith.constant dense<0.000000e+00> : vector<32xf32>
    %104 = vector.multi_reduction <add>, %103, %cst_44 [1] : vector<32x32xf32> to vector<32xf32>
    %105 = vector.shape_cast %104 : vector<32xf32> to vector<32x1xf32>
    %106 = tpu.reciprocal %105 {approx = true} : vector<32x1xf32> -> vector<32x1xf32>
    %107 = vector.broadcast %106 : vector<32x1xf32> to vector<32x32xf32>
    %108 = arith.mulf %103, %107 : vector<32x32xf32>
    %109 = arith.truncf %108 : vector<32x32xf32> to vector<32x32xbf16>
    %cst_45 = arith.constant dense<0.000000e+00> : vector<32x69xf32>
    %110 = tpu.matmul %109, %94, %cst_45 {dimension_numbers = #tpu.dot_dimension_numbers<[1], [0], [0], [1], [0, 0, 1, 1], [], []>} : vector<32x32xbf16>, vector<32x69xbf16>, vector<32x69xf32> -> vector<32x69xf32>
    %111 = arith.truncf %110 : vector<32x69xf32> to vector<32x69xbf16>
    %c0_46 = arith.constant 0 : index
    %c2 = arith.constant 2 : index
    %c0_47 = arith.constant 0 : index
    %c0_48 = arith.constant 0 : index
    %112 = vector.load %arg7[%c0_46, %c2, %c0_47, %c0_48] : memref<1x4x69x276xbf16, #tpu.memory_space<vmem>>, vector<1x1x69x276xbf16>
    %113 = vector.shape_cast %112 : vector<1x1x69x276xbf16> to vector<69x276xbf16>
    %cst_49 = arith.constant dense<0.000000e+00> : vector<32x276xf32>
    %114 = tpu.matmul %111, %113, %cst_49 {dimension_numbers = #tpu.dot_dimension_numbers<[1], [0], [0], [1], [0, 0, 1, 1], [], []>} : vector<32x69xbf16>, vector<69x276xbf16>, vector<32x276xf32> -> vector<32x276xf32>
    %115 = arith.addf %91, %114 : vector<32x276xf32>
    %116 = vector.extract_strided_slice %42 {offsets = [0, 207], sizes = [32, 69], strides = [1, 1]} : vector<32x828xbf16> to vector<32x69xbf16>
    %117 = vector.extract_strided_slice %42 {offsets = [0, 483], sizes = [32, 69], strides = [1, 1]} : vector<32x828xbf16> to vector<32x69xbf16>
    %118 = vector.extract_strided_slice %42 {offsets = [0, 759], sizes = [32, 69], strides = [1, 1]} : vector<32x828xbf16> to vector<32x69xbf16>
    %cst_50 = arith.constant dense<0.000000e+00> : vector<32x32xf32>
    %119 = tpu.matmul %116, %117, %cst_50 {dimension_numbers = #tpu.dot_dimension_numbers<[1], [1], [0], [0], [0, 0, 1, 0], [], []>} : vector<32x69xbf16>, vector<32x69xbf16>, vector<32x32xf32> -> vector<32x32xf32>
    %cst_51 = arith.constant 0.120385855 : f32
    %120 = vector.broadcast %cst_51 : f32 to vector<32x32xf32>
    %121 = arith.mulf %119, %120 : vector<32x32xf32>
    %122 = arith.addf %121, %4 : vector<32x32xf32>
    %cst_52 = arith.constant dense<0xFF800000> : vector<32xf32>
    %123 = vector.multi_reduction <maximumf>, %122, %cst_52 [1] : vector<32x32xf32> to vector<32xf32>
    %124 = vector.shape_cast %123 : vector<32xf32> to vector<32x1xf32>
    %125 = vector.broadcast %124 : vector<32x1xf32> to vector<32x32xf32>
    %126 = arith.subf %122, %125 : vector<32x32xf32>
    %127 = math.exp %126 : vector<32x32xf32>
    %cst_53 = arith.constant dense<0.000000e+00> : vector<32xf32>
    %128 = vector.multi_reduction <add>, %127, %cst_53 [1] : vector<32x32xf32> to vector<32xf32>
    %129 = vector.shape_cast %128 : vector<32xf32> to vector<32x1xf32>
    %130 = tpu.reciprocal %129 {approx = true} : vector<32x1xf32> -> vector<32x1xf32>
    %131 = vector.broadcast %130 : vector<32x1xf32> to vector<32x32xf32>
    %132 = arith.mulf %127, %131 : vector<32x32xf32>
    %133 = arith.truncf %132 : vector<32x32xf32> to vector<32x32xbf16>
    %cst_54 = arith.constant dense<0.000000e+00> : vector<32x69xf32>
    %134 = tpu.matmul %133, %118, %cst_54 {dimension_numbers = #tpu.dot_dimension_numbers<[1], [0], [0], [1], [0, 0, 1, 1], [], []>} : vector<32x32xbf16>, vector<32x69xbf16>, vector<32x69xf32> -> vector<32x69xf32>
    %135 = arith.truncf %134 : vector<32x69xf32> to vector<32x69xbf16>
    %c0_55 = arith.constant 0 : index
    %c3 = arith.constant 3 : index
    %c0_56 = arith.constant 0 : index
    %c0_57 = arith.constant 0 : index
    %136 = vector.load %arg7[%c0_55, %c3, %c0_56, %c0_57] : memref<1x4x69x276xbf16, #tpu.memory_space<vmem>>, vector<1x1x69x276xbf16>
    %137 = vector.shape_cast %136 : vector<1x1x69x276xbf16> to vector<69x276xbf16>
    %cst_58 = arith.constant dense<0.000000e+00> : vector<32x276xf32>
    %138 = tpu.matmul %135, %137, %cst_58 {dimension_numbers = #tpu.dot_dimension_numbers<[1], [0], [0], [1], [0, 0, 1, 1], [], []>} : vector<32x69xbf16>, vector<69x276xbf16>, vector<32x276xf32> -> vector<32x276xf32>
    %139 = arith.addf %115, %138 : vector<32x276xf32>
    %140 = arith.addf %3, %139 : vector<32x276xf32>
    %c0_59 = arith.constant 0 : index
    %c0_60 = arith.constant 0 : index
    %c0_61 = arith.constant 0 : index
    %141 = vector.load %arg8[%c0_59, %c0_60, %c0_61] : memref<1x1x276xf32, #tpu.memory_space<vmem>>, vector<1x1x276xf32>
    %142 = vector.shape_cast %141 : vector<1x1x276xf32> to vector<276xf32>
    %143 = vector.shape_cast %142 : vector<276xf32> to vector<1x276xf32>
    %144 = vector.broadcast %143 : vector<1x276xf32> to vector<32x276xf32>
    %145 = arith.addf %140, %144 : vector<32x276xf32>
    %c0_62 = arith.constant 0 : index
    %c0_63 = arith.constant 0 : index
    %c0_64 = arith.constant 0 : index
    %146 = vector.load %arg9[%c0_62, %c0_63, %c0_64] : memref<1x1x276xf32, #tpu.memory_space<vmem>>, vector<1x1x276xf32>
    %147 = vector.shape_cast %146 : vector<1x1x276xf32> to vector<276xf32>
    %c0_65 = arith.constant 0 : index
    %c0_66 = arith.constant 0 : index
    %c0_67 = arith.constant 0 : index
    %148 = vector.load %arg10[%c0_65, %c0_66, %c0_67] : memref<1x1x276xf32, #tpu.memory_space<vmem>>, vector<1x1x276xf32>
    %149 = vector.shape_cast %148 : vector<1x1x276xf32> to vector<276xf32>
    %cst_68 = arith.constant dense<0.000000e+00> : vector<32xf32>
    %150 = vector.multi_reduction <add>, %145, %cst_68 [1] : vector<32x276xf32> to vector<32xf32>
    %151 = vector.shape_cast %150 : vector<32xf32> to vector<32x1xf32>
    %cst_69 = arith.constant 2.760000e+02 : f32
    %152 = vector.broadcast %cst_69 : f32 to vector<32x1xf32>
    %153 = arith.divf %151, %152 : vector<32x1xf32>
    %154 = vector.broadcast %153 : vector<32x1xf32> to vector<32x276xf32>
    %155 = arith.subf %145, %154 : vector<32x276xf32>
    %156 = arith.mulf %155, %155 : vector<32x276xf32>
    %cst_70 = arith.constant dense<0.000000e+00> : vector<32xf32>
    %157 = vector.multi_reduction <add>, %156, %cst_70 [1] : vector<32x276xf32> to vector<32xf32>
    %158 = vector.shape_cast %157 : vector<32xf32> to vector<32x1xf32>
    %cst_71 = arith.constant 2.760000e+02 : f32
    %159 = vector.broadcast %cst_71 : f32 to vector<32x1xf32>
    %160 = arith.divf %158, %159 : vector<32x1xf32>
    %161 = vector.broadcast %153 : vector<32x1xf32> to vector<32x276xf32>
    %162 = arith.subf %145, %161 : vector<32x276xf32>
    %cst_72 = arith.constant 9.99999974E-6 : f32
    %163 = vector.broadcast %cst_72 : f32 to vector<32x1xf32>
    %164 = arith.addf %160, %163 : vector<32x1xf32>
    %165 = math.rsqrt %164 : vector<32x1xf32>
    %166 = vector.broadcast %165 : vector<32x1xf32> to vector<32x276xf32>
    %167 = arith.mulf %162, %166 : vector<32x276xf32>
    %168 = vector.shape_cast %147 : vector<276xf32> to vector<1x276xf32>
    %169 = vector.broadcast %168 : vector<1x276xf32> to vector<32x276xf32>
    %170 = arith.mulf %167, %169 : vector<32x276xf32>
    %171 = vector.shape_cast %149 : vector<276xf32> to vector<1x276xf32>
    %172 = vector.broadcast %171 : vector<1x276xf32> to vector<32x276xf32>
    %173 = arith.addf %170, %172 : vector<32x276xf32>
    %174 = arith.truncf %173 : vector<32x276xf32> to vector<32x276xbf16>
    %c0_73 = arith.constant 0 : index
    %c0_74 = arith.constant 0 : index
    %c0_75 = arith.constant 0 : index
    %175 = vector.load %arg11[%c0_73, %c0_74, %c0_75] : memref<1x276x1104xbf16, #tpu.memory_space<vmem>>, vector<1x276x1104xbf16>
    %176 = vector.shape_cast %175 : vector<1x276x1104xbf16> to vector<276x1104xbf16>
    %cst_76 = arith.constant dense<0.000000e+00> : vector<32x1104xf32>
    %177 = tpu.matmul %174, %176, %cst_76 {dimension_numbers = #tpu.dot_dimension_numbers<[1], [0], [0], [1], [0, 0, 1, 1], [], []>} : vector<32x276xbf16>, vector<276x1104xbf16>, vector<32x1104xf32> -> vector<32x1104xf32>
    %c0_77 = arith.constant 0 : index
    %c0_78 = arith.constant 0 : index
    %c0_79 = arith.constant 0 : index
    %178 = vector.load %arg12[%c0_77, %c0_78, %c0_79] : memref<1x1x1104xf32, #tpu.memory_space<vmem>>, vector<1x1x1104xf32>
    %179 = vector.shape_cast %178 : vector<1x1x1104xf32> to vector<1104xf32>
    %180 = vector.shape_cast %179 : vector<1104xf32> to vector<1x1104xf32>
    %181 = vector.broadcast %180 : vector<1x1104xf32> to vector<32x1104xf32>
    %182 = arith.addf %177, %181 : vector<32x1104xf32>
    %cst_80 = arith.constant 0.000000e+00 : f32
    %183 = vector.broadcast %cst_80 : f32 to vector<32x1104xf32>
    %184 = arith.maximumf %182, %183 : vector<32x1104xf32>
    %185 = arith.truncf %184 : vector<32x1104xf32> to vector<32x1104xbf16>
    %c0_81 = arith.constant 0 : index
    %c0_82 = arith.constant 0 : index
    %c0_83 = arith.constant 0 : index
    %186 = vector.load %arg13[%c0_81, %c0_82, %c0_83] : memref<1x1104x276xbf16, #tpu.memory_space<vmem>>, vector<1x1104x276xbf16>
    %187 = vector.shape_cast %186 : vector<1x1104x276xbf16> to vector<1104x276xbf16>
    %cst_84 = arith.constant dense<0.000000e+00> : vector<32x276xf32>
    %188 = tpu.matmul %185, %187, %cst_84 {dimension_numbers = #tpu.dot_dimension_numbers<[1], [0], [0], [1], [0, 0, 1, 1], [], []>} : vector<32x1104xbf16>, vector<1104x276xbf16>, vector<32x276xf32> -> vector<32x276xf32>
    %189 = arith.addf %145, %188 : vector<32x276xf32>
    %c0_85 = arith.constant 0 : index
    %c0_86 = arith.constant 0 : index
    %c0_87 = arith.constant 0 : index
    %190 = vector.load %arg14[%c0_85, %c0_86, %c0_87] : memref<1x1x276xf32, #tpu.memory_space<vmem>>, vector<1x1x276xf32>
    %191 = vector.shape_cast %190 : vector<1x1x276xf32> to vector<276xf32>
    %192 = vector.shape_cast %191 : vector<276xf32> to vector<1x276xf32>
    %193 = vector.broadcast %192 : vector<1x276xf32> to vector<32x276xf32>
    %194 = arith.addf %189, %193 : vector<32x276xf32>
    %c0_88 = arith.constant 0 : index
    %c0_89 = arith.constant 0 : index
    %195 = vector.load %arg17[%c0_88, %c0_89] : memref<32x276xf32, #tpu.memory_space<vmem>>, vector<32x276xf32>
    tpu.vector_store %arg17[%c0_88, %c0_89], %194 {strides = array<i32>} : memref<32x276xf32, #tpu.memory_space<vmem>>, vector<32x276xf32>,
    %c3_i32 = arith.constant 3 : i32
    %196 = arith.cmpi eq, %arg0, %c3_i32 : i32
    %197 = arith.extui %196 : i1 to i32
    %c0_i32_90 = arith.constant 0 : i32
    %198 = arith.cmpi ne, %197, %c0_i32_90 : i32
    scf.if %198 {
      tpu.wait_dma2 semaphore(%arg19 : memref<!tpu.dma_semaphore, #tpu.memory_space<semaphore_mem>>) src(%arg15 : memref<276x1024xbf16, #tpu.memory_space<any>>) dst(%arg18 : memref<276x1024xbf16, #tpu.memory_space<vmem>>)
      %199 = arith.truncf %194 : vector<32x276xf32> to vector<32x276xbf16>
      %c0_91 = arith.constant 0 : index
      %c0_92 = arith.constant 0 : index
      %200 = vector.load %arg18[%c0_91, %c0_92] : memref<276x1024xbf16, #tpu.memory_space<vmem>>, vector<276x1024xbf16>
      %cst_93 = arith.constant dense<0.000000e+00> : vector<32x1024xf32>
      %201 = tpu.matmul %199, %200, %cst_93 {dimension_numbers = #tpu.dot_dimension_numbers<[1], [0], [0], [1], [0, 0, 1, 1], [], []>} : vector<32x276xbf16>, vector<276x1024xbf16>, vector<32x1024xf32> -> vector<32x1024xf32>
      %c0_94 = arith.constant 0 : index
      %c0_95 = arith.constant 0 : index
      %202 = vector.load %arg16[%c0_94, %c0_95] : memref<32x1024xf32, #tpu.memory_space<vmem>>, vector<32x1024xf32>
      tpu.vector_store %arg16[%c0_94, %c0_95], %201 {strides = array<i32>} : memref<32x1024xf32, #tpu.memory_space<vmem>>, vector<32x1024xf32>,
    } else {
    }
    return
  }
  func.func @transform_0(%arg0: i32) -> (i32, i32) {
    %c0_i32 = arith.constant 0 : i32
    %c0_i32_0 = arith.constant 0 : i32
    %c0_i32_1 = arith.constant 0 : i32
    return %c0_i32, %c0_i32_0 : i32, i32
  }
  func.func @transform_1(%arg0: i32) -> (i32, i32) {
    %c0_i32 = arith.constant 0 : i32
    %c0_i32_0 = arith.constant 0 : i32
    %c0_i32_1 = arith.constant 0 : i32
    return %c0_i32, %c0_i32_0 : i32, i32
  }
  func.func @transform_2(%arg0: i32) -> (i32, i32, i32) {
    %c0_i32 = arith.constant 0 : i32
    %c0_i32_0 = arith.constant 0 : i32
    %c0_i32_1 = arith.constant 0 : i32
    return %arg0, %c0_i32, %c0_i32_0 : i32, i32, i32
  }
  func.func @transform_3(%arg0: i32) -> (i32, i32, i32) {
    %c0_i32 = arith.constant 0 : i32
    %c0_i32_0 = arith.constant 0 : i32
    %c0_i32_1 = arith.constant 0 : i32
    return %arg0, %c0_i32, %c0_i32_0 : i32, i32, i32
  }
  func.func @transform_4(%arg0: i32) -> (i32, i32, i32) {
    %c0_i32 = arith.constant 0 : i32
    %c0_i32_0 = arith.constant 0 : i32
    %c0_i32_1 = arith.constant 0 : i32
    return %arg0, %c0_i32, %c0_i32_0 : i32, i32, i32
  }
  func.func @transform_5(%arg0: i32) -> (i32, i32, i32) {
    %c0_i32 = arith.constant 0 : i32
    %c0_i32_0 = arith.constant 0 : i32
    %c0_i32_1 = arith.constant 0 : i32
    return %arg0, %c0_i32, %c0_i32_0 : i32, i32, i32
  }
  func.func @transform_6(%arg0: i32) -> (i32, i32, i32, i32) {
    %c0_i32 = arith.constant 0 : i32
    %c0_i32_0 = arith.constant 0 : i32
    %c0_i32_1 = arith.constant 0 : i32
    %c0_i32_2 = arith.constant 0 : i32
    return %arg0, %c0_i32, %c0_i32_0, %c0_i32_1 : i32, i32, i32, i32
  }
  func.func @transform_7(%arg0: i32) -> (i32, i32, i32) {
    %c0_i32 = arith.constant 0 : i32
    %c0_i32_0 = arith.constant 0 : i32
    %c0_i32_1 = arith.constant 0 : i32
    return %arg0, %c0_i32, %c0_i32_0 : i32, i32, i32
  }
  func.func @transform_8(%arg0: i32) -> (i32, i32, i32) {
    %c0_i32 = arith.constant 0 : i32
    %c0_i32_0 = arith.constant 0 : i32
    %c0_i32_1 = arith.constant 0 : i32
    return %arg0, %c0_i32, %c0_i32_0 : i32, i32, i32
  }
  func.func @transform_9(%arg0: i32) -> (i32, i32, i32) {
    %c0_i32 = arith.constant 0 : i32
    %c0_i32_0 = arith.constant 0 : i32
    %c0_i32_1 = arith.constant 0 : i32
    return %arg0, %c0_i32, %c0_i32_0 : i32, i32, i32
  }
  func.func @transform_10(%arg0: i32) -> (i32, i32, i32) {
    %c0_i32 = arith.constant 0 : i32
    %c0_i32_0 = arith.constant 0 : i32
    %c0_i32_1 = arith.constant 0 : i32
    return %arg0, %c0_i32, %c0_i32_0 : i32, i32, i32
  }
  func.func @transform_11(%arg0: i32) -> (i32, i32, i32) {
    %c0_i32 = arith.constant 0 : i32
    %c0_i32_0 = arith.constant 0 : i32
    %c0_i32_1 = arith.constant 0 : i32
    return %arg0, %c0_i32, %c0_i32_0 : i32, i32, i32
  }
  func.func @transform_12(%arg0: i32) -> (i32, i32, i32) {
    %c0_i32 = arith.constant 0 : i32
    %c0_i32_0 = arith.constant 0 : i32
    %c0_i32_1 = arith.constant 0 : i32
    return %arg0, %c0_i32, %c0_i32_0 : i32, i32, i32
  }
  func.func @transform_13(%arg0: i32) -> (i32, i32, i32) {
    %c0_i32 = arith.constant 0 : i32
    %c0_i32_0 = arith.constant 0 : i32
    %c0_i32_1 = arith.constant 0 : i32
    return %arg0, %c0_i32, %c0_i32_0 : i32, i32, i32
  }
  func.func @transform_15(%arg0: i32) -> (i32, i32) {
    %c0_i32 = arith.constant 0 : i32
    %c0_i32_0 = arith.constant 0 : i32
    %c0_i32_1 = arith.constant 0 : i32
    return %c0_i32, %c0_i32_0 : i32, i32
  }
}

</mosaic_0001>

<llo_original>
// kernel: megatts2_plm1_forward.1
$region0: #{megatts2_plm1_forward.1}
  #allocation0 [shape = 'u32[]', space=smem, size = 0x4, offset = 0x4, fixed_abs, tag = 'smem constant byte address 0x4 - core index']
  #allocation1 [shape = 'u32[144,128]{1,0:T(1,128)}', space=vmem, size = 0x12000, scoped, tag = 'internal scratch']
  #allocation2 [shape = 'f32[32,276]{1,0:T(8,128)}', space=vmem, size = 0xc000, scoped, tag = 'scratch operand']
  #allocation3 [shape = 'bf16[276,1024]{1,0:T(8,128)(2,1)}', space=vmem, size = 0x8c000, scoped, tag = 'scratch operand']
  #allocation4 [shape = 's32[1]{0}', space=sflag, size = 0x4, scoped, tag = 'scratch operand']
  #allocation5 [shape = 's32[]', space=sflag, size = 0x4, offset = 0, fixed_abs, tag = 'sflag constant byte address 0x0 - dummy sync flag']
  %s0 = inlined_call_operand.vmem [shape: f32[32,32], index: 0, kind: input, shape index: {}]
  %s1 = inlined_call_operand.vmem [shape: f32[32,276], index: 1, kind: input, shape index: {}]
  %s2 = inlined_call_operand.vmem [shape: f32[4,1,276], index: 2, kind: input, shape index: {}]
  %s3 = inlined_call_operand.vmem [shape: f32[4,1,276], index: 3, kind: input, shape index: {}]
  %s4 = inlined_call_operand.vmem [shape: bf16[4,276,828], index: 4, kind: input, shape index: {}]
  %s5 = inlined_call_operand.vmem [shape: f32[4,1,828], index: 5, kind: input, shape index: {}]
  %s6 = inlined_call_operand.vmem [shape: bf16[4,4,69,276], index: 6, kind: input, shape index: {}]
  %s7 = inlined_call_operand.vmem [shape: f32[4,1,276], index: 7, kind: input, shape index: {}]
  %s8 = inlined_call_operand.vmem [shape: f32[4,1,276], index: 8, kind: input, shape index: {}]
  %s9 = inlined_call_operand.vmem [shape: f32[4,1,276], index: 9, kind: input, shape index: {}]
  %s10 = inlined_call_operand.vmem [shape: bf16[4,276,1104], index: 10, kind: input, shape index: {}]
  %s11 = inlined_call_operand.vmem [shape: f32[4,1,1104], index: 11, kind: input, shape index: {}]
  %s12 = inlined_call_operand.vmem [shape: bf16[4,1104,276], index: 12, kind: input, shape index: {}]
  %s13 = inlined_call_operand.vmem [shape: f32[4,1,276], index: 13, kind: input, shape index: {}]
  %s14 = inlined_call_operand.vmem [shape: bf16[276,1024], index: 14, kind: input, shape index: {}]
  %s15 = inlined_call_operand.vmem [shape: f32[32,1024], index: 15, kind: output, shape index: {}]
  %s16 = sld [smem:[#allocation0]]
  $region131: #{megatts2_plm1_forward.1} parent=0
    _
  %s18 = ssub.s32 1, %s16
  %s19 = scalar_select 0, %s18, %s16
  loop: start=0, step=1, limit=6
  $region2: #{megatts2_plm1_forward.1} parent=0 // loop_pre_header
    _
  $region3: #{megatts2_plm1_forward.1} parent=0 // loop_header
    %s21 = sphi 0, %s25
    %p22 = scmp.ge.s32.totalorder %s21, 6
    %s29 = sphi 0, %s29
    %s31 = sphi 0, %s29
    %s32 = sphi 0, %s31
    %s46 = sphi 0, %s32
    %s50 = sphi 0, %s50
    %s52 = sphi 0, %s50
    %s53 = sphi 0, %s52
    %s67 = sphi 0, %s53
    %s73 = sphi 0, %s75
    %s76 = sphi 0, %s73
    %s77 = sphi 0, %s76
    %s93 = sphi 0, %s77
    %s99 = sphi 0, %s101
    %s102 = sphi 0, %s99
    %s103 = sphi 0, %s102
    %s119 = sphi 0, %s103
    %s125 = sphi 0, %s127
    %s128 = sphi 0, %s125
    %s129 = sphi 0, %s128
    %s145 = sphi 0, %s129
    %s151 = sphi 0, %s153
    %s154 = sphi 0, %s151
    %s155 = sphi 0, %s154
    %s171 = sphi 0, %s155
    %s177 = sphi 0, %s179
    %s180 = sphi 0, %s177
    %s181 = sphi 0, %s180
    %s197 = sphi 0, %s181
    %s203 = sphi 0, %s205
    %s206 = sphi 0, %s203
    %s207 = sphi 0, %s206
    %s223 = sphi 0, %s207
    %s229 = sphi 0, %s231
    %s232 = sphi 0, %s229
    %s233 = sphi 0, %s232
    %s249 = sphi 0, %s233
    %s255 = sphi 0, %s257
    %s258 = sphi 0, %s255
    %s259 = sphi 0, %s258
    %s275 = sphi 0, %s259
    %s281 = sphi 0, %s283
    %s284 = sphi 0, %s281
    %s285 = sphi 0, %s284
    %s301 = sphi 0, %s285
    %s307 = sphi 0, %s309
    %s310 = sphi 0, %s307
    %s311 = sphi 0, %s310
    %s327 = sphi 0, %s311
    %s333 = sphi 0, %s335
    %s336 = sphi 0, %s333
    %s337 = sphi 0, %s336
    %s353 = sphi 0, %s337
    %s359 = sphi 0, %s361
    %s362 = sphi 0, %s359
    %s363 = sphi 0, %s362
    %s379 = sphi 0, %s363
    %s383 = sphi 0, %s383
    %s385 = sphi 0, %s383
    %s386 = sphi 0, %s385
    %s400 = sphi 0, %s386
  $region4: #{megatts2_plm1_forward.1} parent=0 // loop_header_branch
    %24 = sbr.rel (%p22) target = $region8
  $region5: #{megatts2_plm1_forward.1} parent=0 // loop_body
    %s26 = ssub.s32 %s21, 1
    %s27 = ssub.s32 %s21, 2
    %s28 = sadd.s32 %s21, 1
    %s30 = sadd.s32 %s29, 1
    %p33 = scmp.eq.s32.totalorder %s21, 3
    %p34 = scmp.ne.s32.totalorder %s29, %s31
    %p35 = scmp.eq.s32.totalorder %s21, 0
    %p36 = por %p34, %p35
    %p37 = scmp.ne.s32.totalorder %s29, %s31
    %p38 = scmp.eq.s32.totalorder %s26, 3
    %p39 = por %p37, %p38
    %p40 = scmp.ne.s32.totalorder %s31, %s32
    %p41 = scmp.eq.s32.totalorder %s26, 0
    %p42 = por %p40, %p41
    %p43 = scmp.ne.s32.totalorder %s31, %s32
    %p44 = scmp.eq.s32.totalorder %s27, 3
    %p45 = por %p43, %p44
    %p47 = scmp.ne.s32.totalorder %s32, %s46
    %p48 = scmp.eq.s32.totalorder %s27, 0
    %p49 = por %p47, %p48
    %s51 = sadd.s32 %s50, 1
    %p54 = scmp.eq.s32.totalorder %s21, 3
    %p55 = scmp.ne.s32.totalorder %s50, %s52
    %p56 = scmp.eq.s32.totalorder %s21, 0
    %p57 = por %p55, %p56
    %p58 = scmp.ne.s32.totalorder %s50, %s52
    %p59 = scmp.eq.s32.totalorder %s26, 3
    %p60 = por %p58, %p59
    %p61 = scmp.ne.s32.totalorder %s52, %s53
    %p62 = scmp.eq.s32.totalorder %s26, 0
    %p63 = por %p61, %p62
    %p64 = scmp.ne.s32.totalorder %s52, %s53
    %p65 = scmp.eq.s32.totalorder %s27, 3
    %p66 = por %p64, %p65
    %p68 = scmp.ne.s32.totalorder %s53, %s67
    %p69 = scmp.eq.s32.totalorder %s27, 0
    %p70 = por %p68, %p69
    %s71 = ssub.s32 %s21, %s28
    %p72 = scmp.eq.s32.totalorder %s71, 0
    %s74 = sadd.s32 %s73, 1
    %s75 = scalar_select %p72, %s73, %s74
    %p78 = pneg %p72
    %p79 = scmp.eq.s32.totalorder %s21, 3
    %p80 = por %p78, %p79
    %p81 = scmp.ne.s32.totalorder %s73, %s76
    %p82 = scmp.eq.s32.totalorder %s21, 0
    %p83 = por %p81, %p82
    %p84 = scmp.ne.s32.totalorder %s73, %s76
    %p85 = scmp.eq.s32.totalorder %s26, 3
    %p86 = por %p84, %p85
    %p87 = scmp.ne.s32.totalorder %s76, %s77
    %p88 = scmp.eq.s32.totalorder %s26, 0
    %p89 = por %p87, %p88
    %p90 = scmp.ne.s32.totalorder %s76, %s77
    %p91 = scmp.eq.s32.totalorder %s27, 3
    %p92 = por %p90, %p91
    %p94 = scmp.ne.s32.totalorder %s77, %s93
    %p95 = scmp.eq.s32.totalorder %s27, 0
    %p96 = por %p94, %p95
    %s97 = ssub.s32 %s21, %s28
    %p98 = scmp.eq.s32.totalorder %s97, 0
    %s100 = sadd.s32 %s99, 1
    %s101 = scalar_select %p98, %s99, %s100
    %p104 = pneg %p98
    %p105 = scmp.eq.s32.totalorder %s21, 3
    %p106 = por %p104, %p105
    %p107 = scmp.ne.s32.totalorder %s99, %s102
    %p108 = scmp.eq.s32.totalorder %s21, 0
    %p109 = por %p107, %p108
    %p110 = scmp.ne.s32.totalorder %s99, %s102
    %p111 = scmp.eq.s32.totalorder %s26, 3
    %p112 = por %p110, %p111
    %p113 = scmp.ne.s32.totalorder %s102, %s103
    %p114 = scmp.eq.s32.totalorder %s26, 0
    %p115 = por %p113, %p114
    %p116 = scmp.ne.s32.totalorder %s102, %s103
    %p117 = scmp.eq.s32.totalorder %s27, 3
    %p118 = por %p116, %p117
    %p120 = scmp.ne.s32.totalorder %s103, %s119
    %p121 = scmp.eq.s32.totalorder %s27, 0
    %p122 = por %p120, %p121
    %s123 = ssub.s32 %s21, %s28
    %p124 = scmp.eq.s32.totalorder %s123, 0
    %s126 = sadd.s32 %s125, 1
    %s127 = scalar_select %p124, %s125, %s126
    %p130 = pneg %p124
    %p131 = scmp.eq.s32.totalorder %s21, 3
    %p132 = por %p130, %p131
    %p133 = scmp.ne.s32.totalorder %s125, %s128
    %p134 = scmp.eq.s32.totalorder %s21, 0
    %p135 = por %p133, %p134
    %p136 = scmp.ne.s32.totalorder %s125, %s128
    %p137 = scmp.eq.s32.totalorder %s26, 3
    %p138 = por %p136, %p137
    %p139 = scmp.ne.s32.totalorder %s128, %s129
    %p140 = scmp.eq.s32.totalorder %s26, 0
    %p141 = por %p139, %p140
    %p142 = scmp.ne.s32.totalorder %s128, %s129
    %p143 = scmp.eq.s32.totalorder %s27, 3
    %p144 = por %p142, %p143
    %p146 = scmp.ne.s32.totalorder %s129, %s145
    %p147 = scmp.eq.s32.totalorder %s27, 0
    %p148 = por %p146, %p147
    %s149 = ssub.s32 %s21, %s28
    %p150 = scmp.eq.s32.totalorder %s149, 0
    %s152 = sadd.s32 %s151, 1
    %s153 = scalar_select %p150, %s151, %s152
    %p156 = pneg %p150
    %p157 = scmp.eq.s32.totalorder %s21, 3
    %p158 = por %p156, %p157
    %p159 = scmp.ne.s32.totalorder %s151, %s154
    %p160 = scmp.eq.s32.totalorder %s21, 0
    %p161 = por %p159, %p160
    %p162 = scmp.ne.s32.totalorder %s151, %s154
    %p163 = scmp.eq.s32.totalorder %s26, 3
    %p164 = por %p162, %p163
    %p165 = scmp.ne.s32.totalorder %s154, %s155
    %p166 = scmp.eq.s32.totalorder %s26, 0
    %p167 = por %p165, %p166
    %p168 = scmp.ne.s32.totalorder %s154, %s155
    %p169 = scmp.eq.s32.totalorder %s27, 3
    %p170 = por %p168, %p169
    %p172 = scmp.ne.s32.totalorder %s155, %s171
    %p173 = scmp.eq.s32.totalorder %s27, 0
    %p174 = por %p172, %p173
    %s175 = ssub.s32 %s21, %s28
    %p176 = scmp.eq.s32.totalorder %s175, 0
    %s178 = sadd.s32 %s177, 1
    %s179 = scalar_select %p176, %s177, %s178
    %p182 = pneg %p176
    %p183 = scmp.eq.s32.totalorder %s21, 3
    %p184 = por %p182, %p183
    %p185 = scmp.ne.s32.totalorder %s177, %s180
    %p186 = scmp.eq.s32.totalorder %s21, 0
    %p187 = por %p185, %p186
    %p188 = scmp.ne.s32.totalorder %s177, %s180
    %p189 = scmp.eq.s32.totalorder %s26, 3
    %p190 = por %p188, %p189
    %p191 = scmp.ne.s32.totalorder %s180, %s181
    %p192 = scmp.eq.s32.totalorder %s26, 0
    %p193 = por %p191, %p192
    %p194 = scmp.ne.s32.totalorder %s180, %s181
    %p195 = scmp.eq.s32.totalorder %s27, 3
    %p196 = por %p194, %p195
    %p198 = scmp.ne.s32.totalorder %s181, %s197
    %p199 = scmp.eq.s32.totalorder %s27, 0
    %p200 = por %p198, %p199
    %s201 = ssub.s32 %s21, %s28
    %p202 = scmp.eq.s32.totalorder %s201, 0
    %s204 = sadd.s32 %s203, 1
    %s205 = scalar_select %p202, %s203, %s204
    %p208 = pneg %p202
    %p209 = scmp.eq.s32.totalorder %s21, 3
    %p210 = por %p208, %p209
    %p211 = scmp.ne.s32.totalorder %s203, %s206
    %p212 = scmp.eq.s32.totalorder %s21, 0
    %p213 = por %p211, %p212
    %p214 = scmp.ne.s32.totalorder %s203, %s206
    %p215 = scmp.eq.s32.totalorder %s26, 3
    %p216 = por %p214, %p215
    %p217 = scmp.ne.s32.totalorder %s206, %s207
    %p218 = scmp.eq.s32.totalorder %s26, 0
    %p219 = por %p217, %p218
    %p220 = scmp.ne.s32.totalorder %s206, %s207
    %p221 = scmp.eq.s32.totalorder %s27, 3
    %p222 = por %p220, %p221
    %p224 = scmp.ne.s32.totalorder %s207, %s223
    %p225 = scmp.eq.s32.totalorder %s27, 0
    %p226 = por %p224, %p225
    %s227 = ssub.s32 %s21, %s28
    %p228 = scmp.eq.s32.totalorder %s227, 0
    %s230 = sadd.s32 %s229, 1
    %s231 = scalar_select %p228, %s229, %s230
    %p234 = pneg %p228
    %p235 = scmp.eq.s32.totalorder %s21, 3
    %p236 = por %p234, %p235
    %p237 = scmp.ne.s32.totalorder %s229, %s232
    %p238 = scmp.eq.s32.totalorder %s21, 0
    %p239 = por %p237, %p238
    %p240 = scmp.ne.s32.totalorder %s229, %s232
    %p241 = scmp.eq.s32.totalorder %s26, 3
    %p242 = por %p240, %p241
    %p243 = scmp.ne.s32.totalorder %s232, %s233
    %p244 = scmp.eq.s32.totalorder %s26, 0
    %p245 = por %p243, %p244
    %p246 = scmp.ne.s32.totalorder %s232, %s233
    %p247 = scmp.eq.s32.totalorder %s27, 3
    %p248 = por %p246, %p247
    %p250 = scmp.ne.s32.totalorder %s233, %s249
    %p251 = scmp.eq.s32.totalorder %s27, 0
    %p252 = por %p250, %p251
    %s253 = ssub.s32 %s21, %s28
    %p254 = scmp.eq.s32.totalorder %s253, 0
    %s256 = sadd.s32 %s255, 1
    %s257 = scalar_select %p254, %s255, %s256
    %p260 = pneg %p254
    %p261 = scmp.eq.s32.totalorder %s21, 3
    %p262 = por %p260, %p261
    %p263 = scmp.ne.s32.totalorder %s255, %s258
    %p264 = scmp.eq.s32.totalorder %s21, 0
    %p265 = por %p263, %p264
    %p266 = scmp.ne.s32.totalorder %s255, %s258
    %p267 = scmp.eq.s32.totalorder %s26, 3
    %p268 = por %p266, %p267
    %p269 = scmp.ne.s32.totalorder %s258, %s259
    %p270 = scmp.eq.s32.totalorder %s26, 0
    %p271 = por %p269, %p270
    %p272 = scmp.ne.s32.totalorder %s258, %s259
    %p273 = scmp.eq.s32.totalorder %s27, 3
    %p274 = por %p272, %p273
    %p276 = scmp.ne.s32.totalorder %s259, %s275
    %p277 = scmp.eq.s32.totalorder %s27, 0
    %p278 = por %p276, %p277
    %s279 = ssub.s32 %s21, %s28
    %p280 = scmp.eq.s32.totalorder %s279, 0
    %s282 = sadd.s32 %s281, 1
    %s283 = scalar_select %p280, %s281, %s282
    %p286 = pneg %p280
    %p287 = scmp.eq.s32.totalorder %s21, 3
    %p288 = por %p286, %p287
    %p289 = scmp.ne.s32.totalorder %s281, %s284
    %p290 = scmp.eq.s32.totalorder %s21, 0
    %p291 = por %p289, %p290
    %p292 = scmp.ne.s32.totalorder %s281, %s284
    %p293 = scmp.eq.s32.totalorder %s26, 3
    %p294 = por %p292, %p293
    %p295 = scmp.ne.s32.totalorder %s284, %s285
    %p296 = scmp.eq.s32.totalorder %s26, 0
    %p297 = por %p295, %p296
    %p298 = scmp.ne.s32.totalorder %s284, %s285
    %p299 = scmp.eq.s32.totalorder %s27, 3
    %p300 = por %p298, %p299
    %p302 = scmp.ne.s32.totalorder %s285, %s301
    %p303 = scmp.eq.s32.totalorder %s27, 0
    %p304 = por %p302, %p303
    %s305 = ssub.s32 %s21, %s28
    %p306 = scmp.eq.s32.totalorder %s305, 0
    %s308 = sadd.s32 %s307, 1
    %s309 = scalar_select %p306, %s307, %s308
    %p312 = pneg %p306
    %p313 = scmp.eq.s32.totalorder %s21, 3
    %p314 = por %p312, %p313
    %p315 = scmp.ne.s32.totalorder %s307, %s310
    %p316 = scmp.eq.s32.totalorder %s21, 0
    %p317 = por %p315, %p316
    %p318 = scmp.ne.s32.totalorder %s307, %s310
    %p319 = scmp.eq.s32.totalorder %s26, 3
    %p320 = por %p318, %p319
    %p321 = scmp.ne.s32.totalorder %s310, %s311
    %p322 = scmp.eq.s32.totalorder %s26, 0
    %p323 = por %p321, %p322
    %p324 = scmp.ne.s32.totalorder %s310, %s311
    %p325 = scmp.eq.s32.totalorder %s27, 3
    %p326 = por %p324, %p325
    %p328 = scmp.ne.s32.totalorder %s311, %s327
    %p329 = scmp.eq.s32.totalorder %s27, 0
    %p330 = por %p328, %p329
    %s331 = ssub.s32 %s21, %s28
    %p332 = scmp.eq.s32.totalorder %s331, 0
    %s334 = sadd.s32 %s333, 1
    %s335 = scalar_select %p332, %s333, %s334
    %p338 = pneg %p332
    %p339 = scmp.eq.s32.totalorder %s21, 3
    %p340 = por %p338, %p339
    %p341 = scmp.ne.s32.totalorder %s333, %s336
    %p342 = scmp.eq.s32.totalorder %s21, 0
    %p343 = por %p341, %p342
    %p344 = scmp.ne.s32.totalorder %s333, %s336
    %p345 = scmp.eq.s32.totalorder %s26, 3
    %p346 = por %p344, %p345
    %p347 = scmp.ne.s32.totalorder %s336, %s337
    %p348 = scmp.eq.s32.totalorder %s26, 0
    %p349 = por %p347, %p348
    %p350 = scmp.ne.s32.totalorder %s336, %s337
    %p351 = scmp.eq.s32.totalorder %s27, 3
    %p352 = por %p350, %p351
    %p354 = scmp.ne.s32.totalorder %s337, %s353
    %p355 = scmp.eq.s32.totalorder %s27, 0
    %p356 = por %p354, %p355
    %s357 = ssub.s32 %s21, %s28
    %p358 = scmp.eq.s32.totalorder %s357, 0
    %s360 = sadd.s32 %s359, 1
    %s361 = scalar_select %p358, %s359, %s360
    %p364 = pneg %p358
    %p365 = scmp.eq.s32.totalorder %s21, 3
    %p366 = por %p364, %p365
    %p367 = scmp.ne.s32.totalorder %s359, %s362
    %p368 = scmp.eq.s32.totalorder %s21, 0
    %p369 = por %p367, %p368
    %p370 = scmp.ne.s32.totalorder %s359, %s362
    %p371 = scmp.eq.s32.totalorder %s26, 3
    %p372 = por %p370, %p371
    %p373 = scmp.ne.s32.totalorder %s362, %s363
    %p374 = scmp.eq.s32.totalorder %s26, 0
    %p375 = por %p373, %p374
    %p376 = scmp.ne.s32.totalorder %s362, %s363
    %p377 = scmp.eq.s32.totalorder %s27, 3
    %p378 = por %p376, %p377
    %p380 = scmp.ne.s32.totalorder %s363, %s379
    %p381 = scmp.eq.s32.totalorder %s27, 0
    %p382 = por %p380, %p381
    %s384 = sadd.s32 %s383, 1
    %p387 = scmp.eq.s32.totalorder %s21, 3
    %p388 = scmp.ne.s32.totalorder %s383, %s385
    %p389 = scmp.eq.s32.totalorder %s21, 0
    %p390 = por %p388, %p389
    %p391 = scmp.ne.s32.totalorder %s383, %s385
    %p392 = scmp.eq.s32.totalorder %s26, 3
    %p393 = por %p391, %p392
    %p394 = scmp.ne.s32.totalorder %s385, %s386
    %p395 = scmp.eq.s32.totalorder %s26, 0
    %p396 = por %p394, %p395
    %p397 = scmp.ne.s32.totalorder %s385, %s386
    %p398 = scmp.eq.s32.totalorder %s27, 3
    %p399 = por %p397, %p398
    %p401 = scmp.ne.s32.totalorder %s386, %s400
    %p402 = scmp.eq.s32.totalorder %s27, 0
    %p403 = por %p401, %p402
    %p404 = scmp.le.s32.totalorder 1, %s21
    %p405 = scmp.lt.s32.totalorder %s21, 5
    %p406 = pnand %p404, %p405
    %p407 = pneg %p406
    // Predicated region
    $region9: #{megatts2_plm1_forward.1} parent=5 // pred_check
      _
    $region10: #{megatts2_plm1_forward.1} parent=5 // pred_check_branch
      %409 = sbr.rel (%p406) target = $region12
    $region11: #{megatts2_plm1_forward.1} parent=5 // pred_region
      %s410 = ssub.s32 %s21, 1
      // Predicated region
      $region13: #{megatts2_plm1_forward.1} parent=11 // pred_check
        %p411 = pneg %p42
      $region14: #{megatts2_plm1_forward.1} parent=11 // pred_check_branch
        %413 = sbr.rel (%p411) target = $region16
      $region15: #{megatts2_plm1_forward.1} parent=11 // pred_region
        _
      $region16: #{megatts2_plm1_forward.1} parent=11 // pred_fallthru
        _
      // Predicated region
      $region17: #{megatts2_plm1_forward.1} parent=11 // pred_check
        %p414 = pneg %p63
      $region18: #{megatts2_plm1_forward.1} parent=11 // pred_check_branch
        %416 = sbr.rel (%p414) target = $region20
      $region19: #{megatts2_plm1_forward.1} parent=11 // pred_region
        _
      $region20: #{megatts2_plm1_forward.1} parent=11 // pred_fallthru
        _
    $region12: #{megatts2_plm1_forward.1} parent=5 // pred_fallthru
      _
    %p417 = scmp.lt.s32.totalorder %s21, 4
    // Predicated region
    $region21: #{megatts2_plm1_forward.1} parent=5 // pred_check
      %p418 = pneg %p417
    $region22: #{megatts2_plm1_forward.1} parent=5 // pred_check_branch
      %420 = sbr.rel (%p418) target = $region24
    $region23: #{megatts2_plm1_forward.1} parent=5 // pred_region
      // Predicated region
      $region25: #{megatts2_plm1_forward.1} parent=23 // pred_check
        %p421 = pneg %p83
      $region26: #{megatts2_plm1_forward.1} parent=23 // pred_check_branch
        %423 = sbr.rel (%p421) target = $region28
      $region27: #{megatts2_plm1_forward.1} parent=23 // pred_region
        %p424 = scmp.lt.s32.totalorder %s21, 3
        %s425 = scalar_select %p424, %s21, 3
        %s426 = smul.addr %s425, 3
        %s427 = scalar_lea.vmem %s2, %s426
      $region28: #{megatts2_plm1_forward.1} parent=23 // pred_fallthru
        _
      // Predicated region
      $region29: #{megatts2_plm1_forward.1} parent=23 // pred_check
        %p428 = pneg %p109
      $region30: #{megatts2_plm1_forward.1} parent=23 // pred_check_branch
        %430 = sbr.rel (%p428) target = $region32
      $region31: #{megatts2_plm1_forward.1} parent=23 // pred_region
        %p431 = scmp.lt.s32.totalorder %s21, 3
        %s432 = scalar_select %p431, %s21, 3
        %s433 = smul.addr %s432, 3
        %s434 = scalar_lea.vmem %s3, %s433
      $region32: #{megatts2_plm1_forward.1} parent=23 // pred_fallthru
        _
      // Predicated region
      $region33: #{megatts2_plm1_forward.1} parent=23 // pred_check
        %p435 = pneg %p135
      $region34: #{megatts2_plm1_forward.1} parent=23 // pred_check_branch
        %437 = sbr.rel (%p435) target = $region36
      $region35: #{megatts2_plm1_forward.1} parent=23 // pred_region
        %p438 = scmp.lt.s32.totalorder %s21, 3
        %s439 = scalar_select %p438, %s21, 3
        %s440 = smul.addr %s439, 245
        %s441 = smul.addr %s440, 4
        %s442 = scalar_lea.vmem %s4, %s441
      $region36: #{megatts2_plm1_forward.1} parent=23 // pred_fallthru
        _
      // Predicated region
      $region37: #{megatts2_plm1_forward.1} parent=23 // pred_check
        %p443 = pneg %p161
      $region38: #{megatts2_plm1_forward.1} parent=23 // pred_check_branch
        %445 = sbr.rel (%p443) target = $region40
      $region39: #{megatts2_plm1_forward.1} parent=23 // pred_region
        %p446 = scmp.lt.s32.totalorder %s21, 3
        %s447 = scalar_select %p446, %s21, 3
        %s448 = smul.addr %s447, 7
        %s449 = scalar_lea.vmem %s5, %s448
      $region40: #{megatts2_plm1_forward.1} parent=23 // pred_fallthru
        _
      // Predicated region
      $region41: #{megatts2_plm1_forward.1} parent=23 // pred_check
        %p450 = pneg %p187
      $region42: #{megatts2_plm1_forward.1} parent=23 // pred_check_branch
        %452 = sbr.rel (%p450) target = $region44
      $region43: #{megatts2_plm1_forward.1} parent=23 // pred_region
        %p453 = scmp.lt.s32.totalorder %s21, 3
        %s454 = scalar_select %p453, %s21, 3
        %s455 = smul.addr %s454, 108
        %s456 = smul.addr %s455, 4
        %s457 = scalar_lea.vmem %s6, %s456
      $region44: #{megatts2_plm1_forward.1} parent=23 // pred_fallthru
        _
      // Predicated region
      $region45: #{megatts2_plm1_forward.1} parent=23 // pred_check
        %p458 = pneg %p213
      $region46: #{megatts2_plm1_forward.1} parent=23 // pred_check_branch
        %460 = sbr.rel (%p458) target = $region48
      $region47: #{megatts2_plm1_forward.1} parent=23 // pred_region
        %p461 = scmp.lt.s32.totalorder %s21, 3
        %s462 = scalar_select %p461, %s21, 3
        %s463 = smul.addr %s462, 3
        %s464 = scalar_lea.vmem %s7, %s463
      $region48: #{megatts2_plm1_forward.1} parent=23 // pred_fallthru
        _
      // Predicated region
      $region49: #{megatts2_plm1_forward.1} parent=23 // pred_check
        %p465 = pneg %p239
      $region50: #{megatts2_plm1_forward.1} parent=23 // pred_check_branch
        %467 = sbr.rel (%p465) target = $region52
      $region51: #{megatts2_plm1_forward.1} parent=23 // pred_region
        %p468 = scmp.lt.s32.totalorder %s21, 3
        %s469 = scalar_select %p468, %s21, 3
        %s470 = smul.addr %s469, 3
        %s471 = scalar_lea.vmem %s8, %s470
      $region52: #{megatts2_plm1_forward.1} parent=23 // pred_fallthru
        _
      // Predicated region
      $region53: #{megatts2_plm1_forward.1} parent=23 // pred_check
        %p472 = pneg %p265
      $region54: #{megatts2_plm1_forward.1} parent=23 // pred_check_branch
        %474 = sbr.rel (%p472) target = $region56
      $region55: #{megatts2_plm1_forward.1} parent=23 // pred_region
        %p475 = scmp.lt.s32.totalorder %s21, 3
        %s476 = scalar_select %p475, %s21, 3
        %s477 = smul.addr %s476, 3
        %s478 = scalar_lea.vmem %s9, %s477
      $region56: #{megatts2_plm1_forward.1} parent=23 // pred_fallthru
        _
      // Predicated region
      $region57: #{megatts2_plm1_forward.1} parent=23 // pred_check
        %p479 = pneg %p291
      $region58: #{megatts2_plm1_forward.1} parent=23 // pred_check_branch
        %481 = sbr.rel (%p479) target = $region60
      $region59: #{megatts2_plm1_forward.1} parent=23 // pred_region
        %p482 = scmp.lt.s32.totalorder %s21, 3
        %s483 = scalar_select %p482, %s21, 3
        %s484 = smul.addr %s483, 315
        %s485 = smul.addr %s484, 4
        %s486 = scalar_lea.vmem %s10, %s485
      $region60: #{megatts2_plm1_forward.1} parent=23 // pred_fallthru
        _
      // Predicated region
      $region61: #{megatts2_plm1_forward.1} parent=23 // pred_check
        %p487 = pneg %p317
      $region62: #{megatts2_plm1_forward.1} parent=23 // pred_check_branch
        %489 = sbr.rel (%p487) target = $region64
      $region63: #{megatts2_plm1_forward.1} parent=23 // pred_region
        %p490 = scmp.lt.s32.totalorder %s21, 3
        %s491 = scalar_select %p490, %s21, 3
        %s492 = smul.addr %s491, 9
        %s493 = scalar_lea.vmem %s11, %s492
      $region64: #{megatts2_plm1_forward.1} parent=23 // pred_fallthru
        _
      // Predicated region
      $region65: #{megatts2_plm1_forward.1} parent=23 // pred_check
        %p494 = pneg %p343
      $region66: #{megatts2_plm1_forward.1} parent=23 // pred_check_branch
        %496 = sbr.rel (%p494) target = $region68
      $region67: #{megatts2_plm1_forward.1} parent=23 // pred_region
        %p497 = scmp.lt.s32.totalorder %s21, 3
        %s498 = scalar_select %p497, %s21, 3
        %s499 = smul.addr %s498, 414
        %s500 = smul.addr %s499, 4
        %s501 = scalar_lea.vmem %s12, %s500
      $region68: #{megatts2_plm1_forward.1} parent=23 // pred_fallthru
        _
      // Predicated region
      $region69: #{megatts2_plm1_forward.1} parent=23 // pred_check
        %p502 = pneg %p369
      $region70: #{megatts2_plm1_forward.1} parent=23 // pred_check_branch
        %504 = sbr.rel (%p502) target = $region72
      $region71: #{megatts2_plm1_forward.1} parent=23 // pred_region
        %p505 = scmp.lt.s32.totalorder %s21, 3
        %s506 = scalar_select %p505, %s21, 3
        %s507 = smul.addr %s506, 3
        %s508 = scalar_lea.vmem %s13, %s507
      $region72: #{megatts2_plm1_forward.1} parent=23 // pred_fallthru
        _
    $region24: #{megatts2_plm1_forward.1} parent=5 // pred_fallthru
      _
    %p509 = scmp.le.s32.totalorder 1, %s21
    %p510 = scmp.lt.s32.totalorder %s21, 5
    %p511 = pnand %p509, %p510
    %p512 = pneg %p511
    // Predicated region
    $region73: #{megatts2_plm1_forward.1} parent=5 // pred_check
      _
    $region74: #{megatts2_plm1_forward.1} parent=5 // pred_check_branch
      %514 = sbr.rel (%p511) target = $region76
    $region75: #{megatts2_plm1_forward.1} parent=5 // pred_region
      %s515 = ssub.s32 %s21, 1
      %p516 = pneg %p42
      %p517 = pneg %p39
      %p518 = pneg %p63
      %p519 = pneg %p60
      %p520 = scmp.lt.s32.totalorder %s26, 3
      %s521 = scalar_select %p520, %s26, 3
      %s522 = smul.addr %s521, 3
      %s523 = scalar_lea.vmem %s2, %s522
      %p524 = pneg %p89
      %p525 = pneg %p86
      %p526 = scmp.lt.s32.totalorder %s26, 3
      %s527 = scalar_select %p526, %s26, 3
      %s528 = smul.addr %s527, 3
      %s529 = scalar_lea.vmem %s3, %s528
      %p530 = pneg %p115
      %p531 = pneg %p112
      %p532 = scmp.lt.s32.totalorder %s26, 3
      %s533 = scalar_select %p532, %s26, 3
      %s534 = smul.addr %s533, 245
      %s535 = smul.addr %s534, 4
      %s536 = scalar_lea.vmem %s4, %s535
      %p537 = pneg %p141
      %p538 = pneg %p138
      %p539 = scmp.lt.s32.totalorder %s26, 3
      %s540 = scalar_select %p539, %s26, 3
      %s541 = smul.addr %s540, 7
      %s542 = scalar_lea.vmem %s5, %s541
      %p543 = pneg %p167
      %p544 = pneg %p164
      %p545 = scmp.lt.s32.totalorder %s26, 3
      %s546 = scalar_select %p545, %s26, 3
      %s547 = smul.addr %s546, 108
      %s548 = smul.addr %s547, 4
      %s549 = scalar_lea.vmem %s6, %s548
      %p550 = pneg %p193
      %p551 = pneg %p190
      %p552 = scmp.lt.s32.totalorder %s26, 3
      %s553 = scalar_select %p552, %s26, 3
      %s554 = smul.addr %s553, 3
      %s555 = scalar_lea.vmem %s7, %s554
      %p556 = pneg %p219
      %p557 = pneg %p216
      %p558 = scmp.lt.s32.totalorder %s26, 3
      %s559 = scalar_select %p558, %s26, 3
      %s560 = smul.addr %s559, 3
      %s561 = scalar_lea.vmem %s8, %s560
      %p562 = pneg %p245
      %p563 = pneg %p242
      %p564 = scmp.lt.s32.totalorder %s26, 3
      %s565 = scalar_select %p564, %s26, 3
      %s566 = smul.addr %s565, 3
      %s567 = scalar_lea.vmem %s9, %s566
      %p568 = pneg %p271
      %p569 = pneg %p268
      %p570 = scmp.lt.s32.totalorder %s26, 3
      %s571 = scalar_select %p570, %s26, 3
      %s572 = smul.addr %s571, 315
      %s573 = smul.addr %s572, 4
      %s574 = scalar_lea.vmem %s10, %s573
      %p575 = pneg %p297
      %p576 = pneg %p294
      %p577 = scmp.lt.s32.totalorder %s26, 3
      %s578 = scalar_select %p577, %s26, 3
      %s579 = smul.addr %s578, 9
      %s580 = scalar_lea.vmem %s11, %s579
      %p581 = pneg %p323
      %p582 = pneg %p320
      %p583 = scmp.lt.s32.totalorder %s26, 3
      %s584 = scalar_select %p583, %s26, 3
      %s585 = smul.addr %s584, 414
      %s586 = smul.addr %s585, 4
      %s587 = scalar_lea.vmem %s12, %s586
      %p588 = pneg %p349
      %p589 = pneg %p346
      %p590 = scmp.lt.s32.totalorder %s26, 3
      %s591 = scalar_select %p590, %s26, 3
      %s592 = smul.addr %s591, 3
      %s593 = scalar_lea.vmem %s13, %s592
      %p594 = pneg %p375
      %p595 = pneg %p372
      %p596 = pneg %p396
      %p597 = pneg %p393
      %p598 = scmp.lt.s32.totalorder %s26, 3
      %s599 = scalar_select %p598, %s26, 3
      %s600 = smul.addr %s599, 3
      %s601 = scalar_lea.vmem %s2, %s600
      %p602 = scmp.lt.s32.totalorder %s26, 3
      %s603 = scalar_select %p602, %s26, 3
      %s604 = smul.addr %s603, 3
      %s605 = scalar_lea.vmem %s3, %s604
      %p606 = scmp.lt.s32.totalorder %s26, 3
      %s607 = scalar_select %p606, %s26, 3
      %s608 = smul.addr %s607, 245
      %s609 = smul.addr %s608, 4
      %s610 = scalar_lea.vmem %s4, %s609
      %p611 = scmp.lt.s32.totalorder %s26, 3
      %s612 = scalar_select %p611, %s26, 3
      %s613 = smul.addr %s612, 7
      %s614 = scalar_lea.vmem %s5, %s613
      %p615 = scmp.lt.s32.totalorder %s26, 3
      %s616 = scalar_select %p615, %s26, 3
      %s617 = smul.addr %s616, 108
      %s618 = smul.addr %s617, 4
      %s619 = scalar_lea.vmem %s6, %s618
      %p620 = scmp.lt.s32.totalorder %s26, 3
      %s621 = scalar_select %p620, %s26, 3
      %s622 = smul.addr %s621, 3
      %s623 = scalar_lea.vmem %s7, %s622
      %p624 = scmp.lt.s32.totalorder %s26, 3
      %s625 = scalar_select %p624, %s26, 3
      %s626 = smul.addr %s625, 3
      %s627 = scalar_lea.vmem %s8, %s626
      %p628 = scmp.lt.s32.totalorder %s26, 3
      %s629 = scalar_select %p628, %s26, 3
      %s630 = smul.addr %s629, 3
      %s631 = scalar_lea.vmem %s9, %s630
      %p632 = scmp.lt.s32.totalorder %s26, 3
      %s633 = scalar_select %p632, %s26, 3
      %s634 = smul.addr %s633, 315
      %s635 = smul.addr %s634, 4
      %s636 = scalar_lea.vmem %s10, %s635
      %p637 = scmp.lt.s32.totalorder %s26, 3
      %s638 = scalar_select %p637, %s26, 3
      %s639 = smul.addr %s638, 9
      %s640 = scalar_lea.vmem %s11, %s639
      %p641 = scmp.lt.s32.totalorder %s26, 3
      %s642 = scalar_select %p641, %s26, 3
      %s643 = smul.addr %s642, 414
      %s644 = smul.addr %s643, 4
      %s645 = scalar_lea.vmem %s12, %s644
      %p646 = scmp.lt.s32.totalorder %s26, 3
      %s647 = scalar_select %p646, %s26, 3
      %s648 = smul.addr %s647, 3
      %s649 = scalar_lea.vmem %s13, %s648
      %p651 = scmp.eq.s32.totalorder %s26, 0
      // Predicated region
      $region77: #{megatts2_plm1_forward.1} parent=75 // pred_check
        %p652 = pneg %p651
      $region78: #{megatts2_plm1_forward.1} parent=75 // pred_check_branch
        %654 = sbr.rel (%p652) target = $region80
      $region79: #{megatts2_plm1_forward.1} parent=75 // pred_region
        %v655 = vld [vmem:[%s1] sm:$0xff]
        %v656 = vld [vmem:[%s1 + $0x8] sm:$0xff]
        %v657 = vld [vmem:[%s1 + $0x10] sm:$0xff]
        %v658 = vld [vmem:[%s1 + $0x18] sm:$0xff]
        %v659 = vld [vmem:[%s1 + $0x20] sm:$0xff]
        %v660 = vld [vmem:[%s1 + $0x28] sm:$0xff]
        %v661 = vld [vmem:[%s1 + $0x30] sm:$0xff]
        %v662 = vld [vmem:[%s1 + $0x38] sm:$0xff]
        %v663 = vld [vmem:[%s1 + $0x40] sm:$0xff]
        %v664 = vld [vmem:[%s1 + $0x48] sm:$0xff]
        %v665 = vld [vmem:[%s1 + $0x50] sm:$0xff]
        %v666 = vld [vmem:[%s1 + $0x58] sm:$0xff]
        %667 = vst [vmem:[#allocation2] sm:$0xff] %v655
        %668 = vst [vmem:[#allocation2 + $0x8] sm:$0xff] %v656
        %vm669 = vcmask 162816
        %670 = vst.msk [vmem:[#allocation2 + $0x10] sm:$0xff] %vm669, %v657
        %671 = vst [vmem:[#allocation2 + $0x18] sm:$0xff] %v658
        %672 = vst [vmem:[#allocation2 + $0x20] sm:$0xff] %v659
        %673 = vst.msk [vmem:[#allocation2 + $0x28] sm:$0xff] %vm669, %v660
        %674 = vst [vmem:[#allocation2 + $0x30] sm:$0xff] %v661
        %675 = vst [vmem:[#allocation2 + $0x38] sm:$0xff] %v662
        %676 = vst.msk [vmem:[#allocation2 + $0x40] sm:$0xff] %vm669, %v663
        %677 = vst [vmem:[#allocation2 + $0x48] sm:$0xff] %v664
        %678 = vst [vmem:[#allocation2 + $0x50] sm:$0xff] %v665
        %679 = vst.msk [vmem:[#allocation2 + $0x58] sm:$0xff] %vm669, %v666
        %p681 = scmp.lt.u32.totalorder 1120, 8
        %p682 = pneg %p681
        // Predicated region
        $region81: #{megatts2_plm1_forward.1} parent=79 // pred_check
          _
        $region82: #{megatts2_plm1_forward.1} parent=79 // pred_check_branch
          %684 = sbr.rel (%p681) target = $region84
        $region83: #{megatts2_plm1_forward.1} parent=79 // pred_region
          %s699 = sand.u32 1120, 7
          %p700 = scmp.eq.s32.totalorder %s699, 0
          // Predicated region
          $region96: #{megatts2_plm1_forward.1} parent=83 // pred_check
            %p701 = pneg %p700
          $region97: #{megatts2_plm1_forward.1} parent=83 // pred_check_branch
            %703 = sbr.rel (%p701) target = $region99
          $region98: #{megatts2_plm1_forward.1} parent=83 // pred_region
            loop: start=0, step=1, limit=1
            $region100: #{megatts2_plm1_forward.1} parent=98 // loop_pre_header
              _
            $region101: #{megatts2_plm1_forward.1} parent=98 // loop_header
              %s705 = sphi 0, %s709
              %p706 = scmp.ge.s32.totalorder %s705, 1
              %s710 = sphi %s14, %s14
              %s711 = sphi [#allocation3], [#allocation3]
            $region102: #{megatts2_plm1_forward.1} parent=98 // loop_header_branch
              %708 = sbr.rel (%p706) target = $region106
            $region103: #{megatts2_plm1_forward.1} parent=98 // loop_body
              %v712 = vld [vmem:[%s710] sm:$0xff]
              %713 = vst [vmem:[%s711] sm:$0xff] %v712
              %v714 = vld [vmem:[%s710 + $0x8] sm:$0xff]
              %715 = vst [vmem:[%s711 + $0x8] sm:$0xff] %v714
              %v716 = vld [vmem:[%s710 + $0x10] sm:$0xff]
              %717 = vst [vmem:[%s711 + $0x10] sm:$0xff] %v716
              %v718 = vld [vmem:[%s710 + $0x18] sm:$0xff]
              %719 = vst [vmem:[%s711 + $0x18] sm:$0xff] %v718
              %v720 = vld [vmem:[%s710 + $0x20] sm:$0xff]
              %721 = vst [vmem:[%s711 + $0x20] sm:$0xff] %v720
              %v722 = vld [vmem:[%s710 + $0x28] sm:$0xff]
              %723 = vst [vmem:[%s711 + $0x28] sm:$0xff] %v722
              %v724 = vld [vmem:[%s710 + $0x30] sm:$0xff]
              %725 = vst [vmem:[%s711 + $0x30] sm:$0xff] %v724
              %v726 = vld [vmem:[%s710 + $0x38] sm:$0xff]
              %727 = vst [vmem:[%s711 + $0x38] sm:$0xff] %v726
              %v728 = vld [vmem:[%s710 + $0x40] sm:$0xff]
              %729 = vst [vmem:[%s711 + $0x40] sm:$0xff] %v728
              %v730 = vld [vmem:[%s710 + $0x48] sm:$0xff]
              %731 = vst [vmem:[%s711 + $0x48] sm:$0xff] %v730
              %v732 = vld [vmem:[%s710 + $0x50] sm:$0xff]
              %733 = vst [vmem:[%s711 + $0x50] sm:$0xff] %v732
              %v734 = vld [vmem:[%s710 + $0x58] sm:$0xff]
              %735 = vst [vmem:[%s711 + $0x58] sm:$0xff] %v734
              %v736 = vld [vmem:[%s710 + $0x60] sm:$0xff]
              %737 = vst [vmem:[%s711 + $0x60] sm:$0xff] %v736
              %v738 = vld [vmem:[%s710 + $0x68] sm:$0xff]
              %739 = vst [vmem:[%s711 + $0x68] sm:$0xff] %v738
              %v740 = vld [vmem:[%s710 + $0x70] sm:$0xff]
              %741 = vst [vmem:[%s711 + $0x70] sm:$0xff] %v740
              %v742 = vld [vmem:[%s710 + $0x78] sm:$0xff]
              %743 = vst [vmem:[%s711 + $0x78] sm:$0xff] %v742
              %v744 = vld [vmem:[%s710 + $0x80] sm:$0xff]
              %745 = vst [vmem:[%s711 + $0x80] sm:$0xff] %v744
              %v746 = vld [vmem:[%s710 + $0x88] sm:$0xff]
              %747 = vst [vmem:[%s711 + $0x88] sm:$0xff] %v746
              %v748 = vld [vmem:[%s710 + $0x90] sm:$0xff]
              %749 = vst [vmem:[%s711 + $0x90] sm:$0xff] %v748
              %v750 = vld [vmem:[%s710 + $0x98] sm:$0xff]
              %751 = vst [vmem:[%s711 + $0x98] sm:$0xff] %v750
              %v752 = vld [vmem:[%s710 + $0xa0] sm:$0xff]
              %753 = vst [vmem:[%s711 + $0xa0] sm:$0xff] %v752
              %v754 = vld [vmem:[%s710 + $0xa8] sm:$0xff]
              %755 = vst [vmem:[%s711 + $0xa8] sm:$0xff] %v754
              %v756 = vld [vmem:[%s710 + $0xb0] sm:$0xff]
              %757 = vst [vmem:[%s711 + $0xb0] sm:$0xff] %v756
              %v758 = vld [vmem:[%s710 + $0xb8] sm:$0xff]
              %759 = vst [vmem:[%s711 + $0xb8] sm:$0xff] %v758
              %v760 = vld [vmem:[%s710 + $0xc0] sm:$0xff]
              %761 = vst [vmem:[%s711 + $0xc0] sm:$0xff] %v760
              %v762 = vld [vmem:[%s710 + $0xc8] sm:$0xff]
              %763 = vst [vmem:[%s711 + $0xc8] sm:$0xff] %v762
              %v764 = vld [vmem:[%s710 + $0xd0] sm:$0xff]
              %765 = vst [vmem:[%s711 + $0xd0] sm:$0xff] %v764
              %v766 = vld [vmem:[%s710 + $0xd8] sm:$0xff]
              %767 = vst [vmem:[%s711 + $0xd8] sm:$0xff] %v766
              %v768 = vld [vmem:[%s710 + $0xe0] sm:$0xff]
              %769 = vst [vmem:[%s711 + $0xe0] sm:$0xff] %v768
              %v770 = vld [vmem:[%s710 + $0xe8] sm:$0xff]
              %771 = vst [vmem:[%s711 + $0xe8] sm:$0xff] %v770
              %v772 = vld [vmem:[%s710 + $0xf0] sm:$0xff]
              %773 = vst [vmem:[%s711 + $0xf0] sm:$0xff] %v772
              %v774 = vld [vmem:[%s710 + $0xf8] sm:$0xff]
              %775 = vst [vmem:[%s711 + $0xf8] sm:$0xff] %v774
              %v776 = vld [vmem:[%s710 + $0x100] sm:$0xff]
              %777 = vst [vmem:[%s711 + $0x100] sm:$0xff] %v776
              %v778 = vld [vmem:[%s710 + $0x108] sm:$0xff]
              %779 = vst [vmem:[%s711 + $0x108] sm:$0xff] %v778
              %v780 = vld [vmem:[%s710 + $0x110] sm:$0xff]
              %781 = vst [vmem:[%s711 + $0x110] sm:$0xff] %v780
              %v782 = vld [vmem:[%s710 + $0x118] sm:$0xff]
              %783 = vst [vmem:[%s711 + $0x118] sm:$0xff] %v782
              %v784 = vld [vmem:[%s710 + $0x120] sm:$0xff]
              %785 = vst [vmem:[%s711 + $0x120] sm:$0xff] %v784
              %v786 = vld [vmem:[%s710 + $0x128] sm:$0xff]
              %787 = vst [vmem:[%s711 + $0x128] sm:$0xff] %v786
              %v788 = vld [vmem:[%s710 + $0x130] sm:$0xff]
              %789 = vst [vmem:[%s711 + $0x130] sm:$0xff] %v788
              %v790 = vld [vmem:[%s710 + $0x138] sm:$0xff]
              %791 = vst [vmem:[%s711 + $0x138] sm:$0xff] %v790
              %v792 = vld [vmem:[%s710 + $0x140] sm:$0xff]
              %793 = vst [vmem:[%s711 + $0x140] sm:$0xff] %v792
              %v794 = vld [vmem:[%s710 + $0x148] sm:$0xff]
              %795 = vst [vmem:[%s711 + $0x148] sm:$0xff] %v794
              %v796 = vld [vmem:[%s710 + $0x150] sm:$0xff]
              %797 = vst [vmem:[%s711 + $0x150] sm:$0xff] %v796
              %v798 = vld [vmem:[%s710 + $0x158] sm:$0xff]
              %799 = vst [vmem:[%s711 + $0x158] sm:$0xff] %v798
              %v800 = vld [vmem:[%s710 + $0x160] sm:$0xff]
              %801 = vst [vmem:[%s711 + $0x160] sm:$0xff] %v800
              %v802 = vld [vmem:[%s710 + $0x168] sm:$0xff]
              %803 = vst [vmem:[%s711 + $0x168] sm:$0xff] %v802
              %v804 = vld [vmem:[%s710 + $0x170] sm:$0xff]
              %805 = vst [vmem:[%s711 + $0x170] sm:$0xff] %v804
              %v806 = vld [vmem:[%s710 + $0x178] sm:$0xff]
              %807 = vst [vmem:[%s711 + $0x178] sm:$0xff] %v806
              %v808 = vld [vmem:[%s710 + $0x180] sm:$0xff]
              %809 = vst [vmem:[%s711 + $0x180] sm:$0xff] %v808
              %v810 = vld [vmem:[%s710 + $0x188] sm:$0xff]
              %811 = vst [vmem:[%s711 + $0x188] sm:$0xff] %v810
              %v812 = vld [vmem:[%s710 + $0x190] sm:$0xff]
              %813 = vst [vmem:[%s711 + $0x190] sm:$0xff] %v812
              %v814 = vld [vmem:[%s710 + $0x198] sm:$0xff]
              %815 = vst [vmem:[%s711 + $0x198] sm:$0xff] %v814
              %v816 = vld [vmem:[%s710 + $0x1a0] sm:$0xff]
              %817 = vst [vmem:[%s711 + $0x1a0] sm:$0xff] %v816
              %v818 = vld [vmem:[%s710 + $0x1a8] sm:$0xff]
              %819 = vst [vmem:[%s711 + $0x1a8] sm:$0xff] %v818
              %v820 = vld [vmem:[%s710 + $0x1b0] sm:$0xff]
              %821 = vst [vmem:[%s711 + $0x1b0] sm:$0xff] %v820
              %v822 = vld [vmem:[%s710 + $0x1b8] sm:$0xff]
              %823 = vst [vmem:[%s711 + $0x1b8] sm:$0xff] %v822
              %v824 = vld [vmem:[%s710 + $0x1c0] sm:$0xff]
              %825 = vst [vmem:[%s711 + $0x1c0] sm:$0xff] %v824
              %v826 = vld [vmem:[%s710 + $0x1c8] sm:$0xff]
              %827 = vst [vmem:[%s711 + $0x1c8] sm:$0xff] %v826
              %v828 = vld [vmem:[%s710 + $0x1d0] sm:$0xff]
              %829 = vst [vmem:[%s711 + $0x1d0] sm:$0xff] %v828
              %v830 = vld [vmem:[%s710 + $0x1d8] sm:$0xff]
              %831 = vst [vmem:[%s711 + $0x1d8] sm:$0xff] %v830
              %v832 = vld [vmem:[%s710 + $0x1e0] sm:$0xff]
              %833 = vst [vmem:[%s711 + $0x1e0] sm:$0xff] %v832
              %v834 = vld [vmem:[%s710 + $0x1e8] sm:$0xff]
              %835 = vst [vmem:[%s711 + $0x1e8] sm:$0xff] %v834
              %v836 = vld [vmem:[%s710 + $0x1f0] sm:$0xff]
              %837 = vst [vmem:[%s711 + $0x1f0] sm:$0xff] %v836
              %v838 = vld [vmem:[%s710 + $0x1f8] sm:$0xff]
              %839 = vst [vmem:[%s711 + $0x1f8] sm:$0xff] %v838
              %v840 = vld [vmem:[%s710 + $0x200] sm:$0xff]
              %841 = vst [vmem:[%s711 + $0x200] sm:$0xff] %v840
              %v842 = vld [vmem:[%s710 + $0x208] sm:$0xff]
              %843 = vst [vmem:[%s711 + $0x208] sm:$0xff] %v842
              %v844 = vld [vmem:[%s710 + $0x210] sm:$0xff]
              %845 = vst [vmem:[%s711 + $0x210] sm:$0xff] %v844
              %v846 = vld [vmem:[%s710 + $0x218] sm:$0xff]
              %847 = vst [vmem:[%s711 + $0x218] sm:$0xff] %v846
              %v848 = vld [vmem:[%s710 + $0x220] sm:$0xff]
              %849 = vst [vmem:[%s711 + $0x220] sm:$0xff] %v848
              %v850 = vld [vmem:[%s710 + $0x228] sm:$0xff]
              %851 = vst [vmem:[%s711 + $0x228] sm:$0xff] %v850
              %v852 = vld [vmem:[%s710 + $0x230] sm:$0xff]
              %853 = vst [vmem:[%s711 + $0x230] sm:$0xff] %v852
              %v854 = vld [vmem:[%s710 + $0x238] sm:$0xff]
              %855 = vst [vmem:[%s711 + $0x238] sm:$0xff] %v854
              %v856 = vld [vmem:[%s710 + $0x240] sm:$0xff]
              %857 = vst [vmem:[%s711 + $0x240] sm:$0xff] %v856
              %v858 = vld [vmem:[%s710 + $0x248] sm:$0xff]
              %859 = vst [vmem:[%s711 + $0x248] sm:$0xff] %v858
              %v860 = vld [vmem:[%s710 + $0x250] sm:$0xff]
              %861 = vst [vmem:[%s711 + $0x250] sm:$0xff] %v860
              %v862 = vld [vmem:[%s710 + $0x258] sm:$0xff]
              %863 = vst [vmem:[%s711 + $0x258] sm:$0xff] %v862
              %v864 = vld [vmem:[%s710 + $0x260] sm:$0xff]
              %865 = vst [vmem:[%s711 + $0x260] sm:$0xff] %v864
              %v866 = vld [vmem:[%s710 + $0x268] sm:$0xff]
              %867 = vst [vmem:[%s711 + $0x268] sm:$0xff] %v866
              %v868 = vld [vmem:[%s710 + $0x270] sm:$0xff]
              %869 = vst [vmem:[%s711 + $0x270] sm:$0xff] %v868
              %v870 = vld [vmem:[%s710 + $0x278] sm:$0xff]
              %871 = vst [vmem:[%s711 + $0x278] sm:$0xff] %v870
              %v872 = vld [vmem:[%s710 + $0x280] sm:$0xff]
              %873 = vst [vmem:[%s711 + $0x280] sm:$0xff] %v872
              %v874 = vld [vmem:[%s710 + $0x288] sm:$0xff]
              %875 = vst [vmem:[%s711 + $0x288] sm:$0xff] %v874
              %v876 = vld [vmem:[%s710 + $0x290] sm:$0xff]
              %877 = vst [vmem:[%s711 + $0x290] sm:$0xff] %v876
              %v878 = vld [vmem:[%s710 + $0x298] sm:$0xff]
              %879 = vst [vmem:[%s711 + $0x298] sm:$0xff] %v878
              %v880 = vld [vmem:[%s710 + $0x2a0] sm:$0xff]
              %881 = vst [vmem:[%s711 + $0x2a0] sm:$0xff] %v880
              %v882 = vld [vmem:[%s710 + $0x2a8] sm:$0xff]
              %883 = vst [vmem:[%s711 + $0x2a8] sm:$0xff] %v882
              %v884 = vld [vmem:[%s710 + $0x2b0] sm:$0xff]
              %885 = vst [vmem:[%s711 + $0x2b0] sm:$0xff] %v884
              %v886 = vld [vmem:[%s710 + $0x2b8] sm:$0xff]
              %887 = vst [vmem:[%s711 + $0x2b8] sm:$0xff] %v886
              %v888 = vld [vmem:[%s710 + $0x2c0] sm:$0xff]
              %889 = vst [vmem:[%s711 + $0x2c0] sm:$0xff] %v888
              %v890 = vld [vmem:[%s710 + $0x2c8] sm:$0xff]
              %891 = vst [vmem:[%s711 + $0x2c8] sm:$0xff] %v890
              %v892 = vld [vmem:[%s710 + $0x2d0] sm:$0xff]
              %893 = vst [vmem:[%s711 + $0x2d0] sm:$0xff] %v892
              %v894 = vld [vmem:[%s710 + $0x2d8] sm:$0xff]
              %895 = vst [vmem:[%s711 + $0x2d8] sm:$0xff] %v894
              %v896 = vld [vmem:[%s710 + $0x2e0] sm:$0xff]
              %897 = vst [vmem:[%s711 + $0x2e0] sm:$0xff] %v896
              %v898 = vld [vmem:[%s710 + $0x2e8] sm:$0xff]
              %899 = vst [vmem:[%s711 + $0x2e8] sm:$0xff] %v898
              %v900 = vld [vmem:[%s710 + $0x2f0] sm:$0xff]
              %901 = vst [vmem:[%s711 + $0x2f0] sm:$0xff] %v900
              %v902 = vld [vmem:[%s710 + $0x2f8] sm:$0xff]
              %903 = vst [vmem:[%s711 + $0x2f8] sm:$0xff] %v902
              %v904 = vld [vmem:[%s710 + $0x300] sm:$0xff]
              %905 = vst [vmem:[%s711 + $0x300] sm:$0xff] %v904
              %v906 = vld [vmem:[%s710 + $0x308] sm:$0xff]
              %907 = vst [vmem:[%s711 + $0x308] sm:$0xff] %v906
              %v908 = vld [vmem:[%s710 + $0x310] sm:$0xff]
              %909 = vst [vmem:[%s711 + $0x310] sm:$0xff] %v908
              %v910 = vld [vmem:[%s710 + $0x318] sm:$0xff]
              %911 = vst [vmem:[%s711 + $0x318] sm:$0xff] %v910
              %v912 = vld [vmem:[%s710 + $0x320] sm:$0xff]
              %913 = vst [vmem:[%s711 + $0x320] sm:$0xff] %v912
              %v914 = vld [vmem:[%s710 + $0x328] sm:$0xff]
              %915 = vst [vmem:[%s711 + $0x328] sm:$0xff] %v914
              %v916 = vld [vmem:[%s710 + $0x330] sm:$0xff]
              %917 = vst [vmem:[%s711 + $0x330] sm:$0xff] %v916
              %v918 = vld [vmem:[%s710 + $0x338] sm:$0xff]
              %919 = vst [vmem:[%s711 + $0x338] sm:$0xff] %v918
              %v920 = vld [vmem:[%s710 + $0x340] sm:$0xff]
              %921 = vst [vmem:[%s711 + $0x340] sm:$0xff] %v920
              %v922 = vld [vmem:[%s710 + $0x348] sm:$0xff]
              %923 = vst [vmem:[%s711 + $0x348] sm:$0xff] %v922
              %v924 = vld [vmem:[%s710 + $0x350] sm:$0xff]
              %925 = vst [vmem:[%s711 + $0x350] sm:$0xff] %v924
              %v926 = vld [vmem:[%s710 + $0x358] sm:$0xff]
              %927 = vst [vmem:[%s711 + $0x358] sm:$0xff] %v926
              %v928 = vld [vmem:[%s710 + $0x360] sm:$0xff]
              %929 = vst [vmem:[%s711 + $0x360] sm:$0xff] %v928
              %v930 = vld [vmem:[%s710 + $0x368] sm:$0xff]
              %931 = vst [vmem:[%s711 + $0x368] sm:$0xff] %v930
              %v932 = vld [vmem:[%s710 + $0x370] sm:$0xff]
              %933 = vst [vmem:[%s711 + $0x370] sm:$0xff] %v932
              %v934 = vld [vmem:[%s710 + $0x378] sm:$0xff]
              %935 = vst [vmem:[%s711 + $0x378] sm:$0xff] %v934
              %v936 = vld [vmem:[%s710 + $0x380] sm:$0xff]
              %937 = vst [vmem:[%s711 + $0x380] sm:$0xff] %v936
              %v938 = vld [vmem:[%s710 + $0x388] sm:$0xff]
              %939 = vst [vmem:[%s711 + $0x388] sm:$0xff] %v938
              %v940 = vld [vmem:[%s710 + $0x390] sm:$0xff]
              %941 = vst [vmem:[%s711 + $0x390] sm:$0xff] %v940
              %v942 = vld [vmem:[%s710 + $0x398] sm:$0xff]
              %943 = vst [vmem:[%s711 + $0x398] sm:$0xff] %v942
              %v944 = vld [vmem:[%s710 + $0x3a0] sm:$0xff]
              %945 = vst [vmem:[%s711 + $0x3a0] sm:$0xff] %v944
              %v946 = vld [vmem:[%s710 + $0x3a8] sm:$0xff]
              %947 = vst [vmem:[%s711 + $0x3a8] sm:$0xff] %v946
              %v948 = vld [vmem:[%s710 + $0x3b0] sm:$0xff]
              %949 = vst [vmem:[%s711 + $0x3b0] sm:$0xff] %v948
              %v950 = vld [vmem:[%s710 + $0x3b8] sm:$0xff]
              %951 = vst [vmem:[%s711 + $0x3b8] sm:$0xff] %v950
              %v952 = vld [vmem:[%s710 + $0x3c0] sm:$0xff]
              %953 = vst [vmem:[%s711 + $0x3c0] sm:$0xff] %v952
              %v954 = vld [vmem:[%s710 + $0x3c8] sm:$0xff]
              %955 = vst [vmem:[%s711 + $0x3c8] sm:$0xff] %v954
              %v956 = vld [vmem:[%s710 + $0x3d0] sm:$0xff]
              %957 = vst [vmem:[%s711 + $0x3d0] sm:$0xff] %v956
              %v958 = vld [vmem:[%s710 + $0x3d8] sm:$0xff]
              %959 = vst [vmem:[%s711 + $0x3d8] sm:$0xff] %v958
              %v960 = vld [vmem:[%s710 + $0x3e0] sm:$0xff]
              %961 = vst [vmem:[%s711 + $0x3e0] sm:$0xff] %v960
              %v962 = vld [vmem:[%s710 + $0x3e8] sm:$0xff]
              %963 = vst [vmem:[%s711 + $0x3e8] sm:$0xff] %v962
              %v964 = vld [vmem:[%s710 + $0x3f0] sm:$0xff]
              %965 = vst [vmem:[%s711 + $0x3f0] sm:$0xff] %v964
              %v966 = vld [vmem:[%s710 + $0x3f8] sm:$0xff]
              %967 = vst [vmem:[%s711 + $0x3f8] sm:$0xff] %v966
              %v968 = vld [vmem:[%s710 + $0x400] sm:$0xff]
              %969 = vst [vmem:[%s711 + $0x400] sm:$0xff] %v968
              %v970 = vld [vmem:[%s710 + $0x408] sm:$0xff]
              %971 = vst [vmem:[%s711 + $0x408] sm:$0xff] %v970
              %v972 = vld [vmem:[%s710 + $0x410] sm:$0xff]
              %973 = vst [vmem:[%s711 + $0x410] sm:$0xff] %v972
              %v974 = vld [vmem:[%s710 + $0x418] sm:$0xff]
              %975 = vst [vmem:[%s711 + $0x418] sm:$0xff] %v974
              %v976 = vld [vmem:[%s710 + $0x420] sm:$0xff]
              %977 = vst [vmem:[%s711 + $0x420] sm:$0xff] %v976
              %v978 = vld [vmem:[%s710 + $0x428] sm:$0xff]
              %979 = vst [vmem:[%s711 + $0x428] sm:$0xff] %v978
              %v980 = vld [vmem:[%s710 + $0x430] sm:$0xff]
              %981 = vst [vmem:[%s711 + $0x430] sm:$0xff] %v980
              %v982 = vld [vmem:[%s710 + $0x438] sm:$0xff]
              %983 = vst [vmem:[%s711 + $0x438] sm:$0xff] %v982
              %v984 = vld [vmem:[%s710 + $0x440] sm:$0xff]
              %985 = vst [vmem:[%s711 + $0x440] sm:$0xff] %v984
              %v986 = vld [vmem:[%s710 + $0x448] sm:$0xff]
              %987 = vst [vmem:[%s711 + $0x448] sm:$0xff] %v986
              %v988 = vld [vmem:[%s710 + $0x450] sm:$0xff]
              %989 = vst [vmem:[%s711 + $0x450] sm:$0xff] %v988
              %v990 = vld [vmem:[%s710 + $0x458] sm:$0xff]
              %991 = vst [vmem:[%s711 + $0x458] sm:$0xff] %v990
            $region104: #{megatts2_plm1_forward.1} parent=98 // loop_footer
              %s709 = sadd.s32 1, %s705
            $region105: #{megatts2_plm1_forward.1} parent=98 // loop_footer_branch
              %704 = sbr.rel target = $region101
            $region106: #{megatts2_plm1_forward.1} parent=98 // loop_exit
              _
          $region99: #{megatts2_plm1_forward.1} parent=83 // pred_fallthru
            _
          %p992 = pneg %p700
          // Predicated region
          $region107: #{megatts2_plm1_forward.1} parent=83 // pred_check
            _
          $region108: #{megatts2_plm1_forward.1} parent=83 // pred_check_branch
            %994 = sbr.rel (%p700) target = $region110
          $region109: #{megatts2_plm1_forward.1} parent=83 // pred_region
            %s995 = sand.u32 1120, 7
          $region110: #{megatts2_plm1_forward.1} parent=83 // pred_fallthru
            _
        $region84: #{megatts2_plm1_forward.1} parent=79 // pred_fallthru
          _
        // Predicated region
        $region85: #{megatts2_plm1_forward.1} parent=79 // pred_check
          %p685 = pneg %p681
        $region86: #{megatts2_plm1_forward.1} parent=79 // pred_check_branch
          %687 = sbr.rel (%p685) target = $region88
        $region87: #{megatts2_plm1_forward.1} parent=79 // pred_region
          %s688 = sshllo.u32 0, 1120
          loop: start=0, step=1, limit=1
          $region89: #{megatts2_plm1_forward.1} parent=87 // loop_pre_header
            _
          $region90: #{megatts2_plm1_forward.1} parent=87 // loop_header
            %s690 = sphi 0, %s694
            %p691 = scmp.ge.s32.totalorder %s690, 1
            %s695 = sphi %s14, %s14
            %s696 = sphi [#allocation3], [#allocation3]
          $region91: #{megatts2_plm1_forward.1} parent=87 // loop_header_branch
            %693 = sbr.rel (%p691) target = $region95
          $region92: #{megatts2_plm1_forward.1} parent=87 // loop_body
            %v697 = vld [vmem:[%s695] sm:%s688]
            %698 = vst [vmem:[%s696] sm:%s688] %v697
          $region93: #{megatts2_plm1_forward.1} parent=87 // loop_footer
            %s694 = sadd.s32 1, %s690
          $region94: #{megatts2_plm1_forward.1} parent=87 // loop_footer_branch
            %689 = sbr.rel target = $region90
          $region95: #{megatts2_plm1_forward.1} parent=87 // loop_exit
            _
        $region88: #{megatts2_plm1_forward.1} parent=79 // pred_fallthru
          _
        // Predicated region
        $region111: #{megatts2_plm1_forward.1} parent=79 // pred_check
          _
        $region112: #{megatts2_plm1_forward.1} parent=79 // pred_check_branch
          %998 = sbr.rel (0) target = $region114
        $region113: #{megatts2_plm1_forward.1} parent=79 // pred_region
          %999 = vsyncadd [#allocation4], 17920
        $region114: #{megatts2_plm1_forward.1} parent=79 // pred_fallthru
          _
      $region80: #{megatts2_plm1_forward.1} parent=75 // pred_fallthru
        _
      %v1000 = vld [vmem:[#allocation2] sm:$0xff]
      %v1001 = vld [vmem:[#allocation2 + $0x8] sm:$0xff]
      %v1002 = vld [vmem:[#allocation2 + $0x10] sm:$0xff]
      %v1003 = vld [vmem:[#allocation2 + $0x18] sm:$0xff]
      %v1004 = vld [vmem:[#allocation2 + $0x20] sm:$0xff]
      %v1005 = vld [vmem:[#allocation2 + $0x28] sm:$0xff]
      %v1006 = vld [vmem:[#allocation2 + $0x30] sm:$0xff]
      %v1007 = vld [vmem:[#allocation2 + $0x38] sm:$0xff]
      %v1008 = vld [vmem:[#allocation2 + $0x40] sm:$0xff]
      %v1009 = vld [vmem:[#allocation2 + $0x48] sm:$0xff]
      %v1010 = vld [vmem:[#allocation2 + $0x50] sm:$0xff]
      %v1011 = vld [vmem:[#allocation2 + $0x58] sm:$0xff]
      %v1012 = vld [vmem:[%s0] sm:$0xff]
      %v1013 = vld [vmem:[%s0 + $0x8] sm:$0xff]
      %v1014 = vld [vmem:[%s0 + $0x10] sm:$0xff]
      %v1015 = vld [vmem:[%s0 + $0x18] sm:$0xff]
      %v1016 = vld [vmem:[%s601] sm:$0x7]
      %v1017 = vld [vmem:[%s605] sm:$0x7]
      %v1018 = vadd.f32 %v1000, %v1001
      %vm1019 = vcmask 162816
      %v1020 = vsel %vm1019, %v1002, 0.0
      %v1021 = vadd.f32 %v1018, %v1020
      %1022 = vadd.xlane.f32.xlu0 %v1021
      %v1023 = vpop.xlane.xlu0 %1022
      %v1024 = vadd.f32 %v1003, %v1004
      %v1025 = vsel %vm1019, %v1005, 0.0
      %v1026 = vadd.f32 %v1024, %v1025
      %1027 = vadd.xlane.f32.xlu0 %v1026
      %v1028 = vpop.xlane.xlu0 %1027
      %v1029 = vadd.f32 %v1006, %v1007
      %v1030 = vsel %vm1019, %v1008, 0.0
      %v1031 = vadd.f32 %v1029, %v1030
      %1032 = vadd.xlane.f32.xlu0 %v1031
      %v1033 = vpop.xlane.xlu0 %1032
      %v1034 = vadd.f32 %v1009, %v1010
      %v1035 = vsel %vm1019, %v1011, 0.0
      %v1036 = vadd.f32 %v1034, %v1035
      %1037 = vadd.xlane.f32.xlu0 %v1036
      %v1038 = vpop.xlane.xlu0 %1037
      %v1039 = vrcp.pop 276.0
      %v1040 = vmul.f32 %v1023, %v1039
      %v1041 = vmul.f32 %v1028, %v1039
      %v1042 = vmul.f32 %v1033, %v1039
      %v1043 = vmul.f32 %v1038, %v1039
      %v1044 = vsub.f32 %v1000, %v1040
      %v1045 = vsub.f32 %v1001, %v1040
      %v1046 = vsub.f32 %v1002, %v1040
      %v1047 = vsub.f32 %v1003, %v1041
      %v1048 = vsub.f32 %v1004, %v1041
      %v1049 = vsub.f32 %v1005, %v1041
      %v1050 = vsub.f32 %v1006, %v1042
      %v1051 = vsub.f32 %v1007, %v1042
      %v1052 = vsub.f32 %v1008, %v1042
      %v1053 = vsub.f32 %v1009, %v1043
      %v1054 = vsub.f32 %v1010, %v1043
      %v1055 = vsub.f32 %v1011, %v1043
      %v1056 = vmul.f32 %v1044, %v1044
      %v1057 = vmul.f32 %v1045, %v1045
      %v1058 = vmul.f32 %v1046, %v1046
      %v1059 = vmul.f32 %v1047, %v1047
      %v1060 = vmul.f32 %v1048, %v1048
      %v1061 = vmul.f32 %v1049, %v1049
      %v1062 = vmul.f32 %v1050, %v1050
      %v1063 = vmul.f32 %v1051, %v1051
      %v1064 = vmul.f32 %v1052, %v1052
      %v1065 = vmul.f32 %v1053, %v1053
      %v1066 = vmul.f32 %v1054, %v1054
      %v1067 = vmul.f32 %v1055, %v1055
      %v1068 = vadd.f32 %v1056, %v1057
      %v1069 = vsel %vm1019, %v1058, 0.0
      %v1070 = vadd.f32 %v1068, %v1069
      %1071 = vadd.xlane.f32.xlu0 %v1070
      %v1072 = vpop.xlane.xlu0 %1071
      %v1073 = vadd.f32 %v1059, %v1060
      %v1074 = vsel %vm1019, %v1061, 0.0
      %v1075 = vadd.f32 %v1073, %v1074
      %1076 = vadd.xlane.f32.xlu0 %v1075
      %v1077 = vpop.xlane.xlu0 %1076
      %v1078 = vadd.f32 %v1062, %v1063
      %v1079 = vsel %vm1019, %v1064, 0.0
      %v1080 = vadd.f32 %v1078, %v1079
      %1081 = vadd.xlane.f32.xlu0 %v1080
      %v1082 = vpop.xlane.xlu0 %1081
      %v1083 = vadd.f32 %v1065, %v1066
      %v1084 = vsel %vm1019, %v1067, 0.0
      %v1085 = vadd.f32 %v1083, %v1084
      %1086 = vadd.xlane.f32.xlu0 %v1085
      %v1087 = vpop.xlane.xlu0 %1086
      %v1088 = vmul.f32 %v1072, %v1039
      %v1089 = vmul.f32 %v1077, %v1039
      %v1090 = vmul.f32 %v1082, %v1039
      %v1091 = vmul.f32 %v1087, %v1039
      %v1092 = vadd.f32 %v1088, 1e-05
      %v1093 = vadd.f32 %v1089, 1e-05
      %v1094 = vadd.f32 %v1090, 1e-05
      %v1095 = vadd.f32 %v1091, 1e-05
      %v1096 = vrsqrt.pop %v1092
      %v1097 = vrsqrt.pop %v1093
      %v1098 = vrsqrt.pop %v1094
      %v1099 = vrsqrt.pop %v1095
      %v1100 = vmul.f32 %v1044, %v1096
      %v1101 = vmul.f32 %v1045, %v1096
      %v1102 = vmul.f32 %v1046, %v1096
      %v1103 = vmul.f32 %v1047, %v1097
      %v1104 = vmul.f32 %v1048, %v1097
      %v1105 = vmul.f32 %v1049, %v1097
      %v1106 = vmul.f32 %v1050, %v1098
      %v1107 = vmul.f32 %v1051, %v1098
      %v1108 = vmul.f32 %v1052, %v1098
      %v1109 = vmul.f32 %v1053, %v1099
      %v1110 = vmul.f32 %v1054, %v1099
      %v1111 = vmul.f32 %v1055, %v1099
      %v1113 = vlaneseq
      %v1114 = vshrl.u32 %v1113, 7
      %v1115 = vsub.s32 0, %v1114
      %v1116 = vrot.slane %v1016, %v1115
      %v1117 = vlaneseq
      %v1118 = vshrl.u32 %v1117, 7
      %v1119 = vsub.s32 1, %v1118
      %v1120 = vrot.slane %v1016, %v1119
      %v1121 = vlaneseq
      %v1122 = vshrl.u32 %v1121, 7
      %v1123 = vsub.s32 2, %v1122
      %v1124 = vrot.slane %v1016, %v1123
      %v1128 = vmul.f32 %v1100, %v1116
      %v1129 = vmul.f32 %v1101, %v1120
      %v1130 = vmul.f32 %v1102, %v1124
      %v1131 = vmul.f32 %v1103, %v1116
      %v1132 = vmul.f32 %v1104, %v1120
      %v1133 = vmul.f32 %v1105, %v1124
      %v1134 = vmul.f32 %v1106, %v1116
      %v1135 = vmul.f32 %v1107, %v1120
      %v1136 = vmul.f32 %v1108, %v1124
      %v1137 = vmul.f32 %v1109, %v1116
      %v1138 = vmul.f32 %v1110, %v1120
      %v1139 = vmul.f32 %v1111, %v1124
      %v1141 = vlaneseq
      %v1142 = vshrl.u32 %v1141, 7
      %v1143 = vsub.s32 0, %v1142
      %v1144 = vrot.slane %v1017, %v1143
      %v1145 = vlaneseq
      %v1146 = vshrl.u32 %v1145, 7
      %v1147 = vsub.s32 1, %v1146
      %v1148 = vrot.slane %v1017, %v1147
      %v1149 = vlaneseq
      %v1150 = vshrl.u32 %v1149, 7
      %v1151 = vsub.s32 2, %v1150
      %v1152 = vrot.slane %v1017, %v1151
      %v1156 = vadd.f32 %v1128, %v1144
      %v1157 = vadd.f32 %v1129, %v1148
      %v1158 = vadd.f32 %v1130, %v1152
      %v1159 = vadd.f32 %v1131, %v1144
      %v1160 = vadd.f32 %v1132, %v1148
      %v1161 = vadd.f32 %v1133, %v1152
      %v1162 = vadd.f32 %v1134, %v1144
      %v1163 = vadd.f32 %v1135, %v1148
      %v1164 = vadd.f32 %v1136, %v1152
      %v1165 = vadd.f32 %v1137, %v1144
      %v1166 = vadd.f32 %v1138, %v1148
      %v1167 = vadd.f32 %v1139, %v1152
      %v1168 = vpack.c.bf16 %v1159, %v1156
      %v1169 = vpack.c.bf16 %v1160, %v1157
      %v1170 = vpack.c.bf16 %v1161, %v1158
      %v1171 = vpack.c.bf16 %v1165, %v1162
      %v1172 = vpack.c.bf16 %v1166, %v1163
      %v1173 = vpack.c.bf16 %v1167, %v1164
      %v1174 = vld [vmem:[%s610] sm:$0xff]
      %v1175 = vld [vmem:[%s610 + $0x8] sm:$0xff]
      %v1176 = vld [vmem:[%s610 + $0x10] sm:$0xff]
      %v1177 = vld [vmem:[%s610 + $0x18] sm:$0xf]
      %v1178 = vld [vmem:[%s610 + $0x1c] sm:$0xff]
      %v1179 = vld [vmem:[%s610 + $0x24] sm:$0xff]
      %v1180 = vld [vmem:[%s610 + $0x2c] sm:$0xff]
      %v1181 = vld [vmem:[%s610 + $0x34] sm:$0xf]
      %v1182 = vld [vmem:[%s610 + $0x38] sm:$0xff]
      %v1183 = vld [vmem:[%s610 + $0x40] sm:$0xff]
      %v1184 = vld [vmem:[%s610 + $0x48] sm:$0xff]
      %v1185 = vld [vmem:[%s610 + $0x50] sm:$0xf]
      %v1186 = vld [vmem:[%s610 + $0x54] sm:$0xff]
      %v1187 = vld [vmem:[%s610 + $0x5c] sm:$0xff]
      %v1188 = vld [vmem:[%s610 + $0x64] sm:$0xff]
      %v1189 = vld [vmem:[%s610 + $0x6c] sm:$0xf]
      %v1190 = vld [vmem:[%s610 + $0x70] sm:$0xff]
      %v1191 = vld [vmem:[%s610 + $0x78] sm:$0xff]
      %v1192 = vld [vmem:[%s610 + $0x80] sm:$0xff]
      %v1193 = vld [vmem:[%s610 + $0x88] sm:$0xf]
      %v1194 = vld [vmem:[%s610 + $0x8c] sm:$0xff]
      %v1195 = vld [vmem:[%s610 + $0x94] sm:$0xff]
      %v1196 = vld [vmem:[%s610 + $0x9c] sm:$0xff]
      %v1197 = vld [vmem:[%s610 + $0xa4] sm:$0xf]
      %v1198 = vld [vmem:[%s610 + $0xa8] sm:$0xff]
      %v1199 = vld [vmem:[%s610 + $0xb0] sm:$0xff]
      %v1200 = vld [vmem:[%s610 + $0xb8] sm:$0xff]
      %v1201 = vld [vmem:[%s610 + $0xc0] sm:$0xf]
      %v1202 = vld [vmem:[%s610 + $0xc4] sm:$0xff]
      %v1203 = vld [vmem:[%s610 + $0xcc] sm:$0xff]
      %v1204 = vld [vmem:[%s610 + $0xd4] sm:$0xff]
      %v1205 = vld [vmem:[%s610 + $0xdc] sm:$0xf]
      %v1206 = vld [vmem:[%s610 + $0xe0] sm:$0xff]
      %v1207 = vld [vmem:[%s610 + $0xe8] sm:$0xff]
      %v1208 = vld [vmem:[%s610 + $0xf0] sm:$0xff]
      %v1209 = vld [vmem:[%s610 + $0xf8] sm:$0xf]
      %v1210 = vld [vmem:[%s610 + $0xfc] sm:$0xff]
      %v1211 = vld [vmem:[%s610 + $0x104] sm:$0xff]
      %v1212 = vld [vmem:[%s610 + $0x10c] sm:$0xff]
      %v1213 = vld [vmem:[%s610 + $0x114] sm:$0xf]
      %v1214 = vld [vmem:[%s610 + $0x118] sm:$0xff]
      %v1215 = vld [vmem:[%s610 + $0x120] sm:$0xff]
      %v1216 = vld [vmem:[%s610 + $0x128] sm:$0xff]
      %v1217 = vld [vmem:[%s610 + $0x130] sm:$0xf]
      %v1218 = vld [vmem:[%s610 + $0x134] sm:$0xff]
      %v1219 = vld [vmem:[%s610 + $0x13c] sm:$0xff]
      %v1220 = vld [vmem:[%s610 + $0x144] sm:$0xff]
      %v1221 = vld [vmem:[%s610 + $0x14c] sm:$0xf]
      %v1222 = vld [vmem:[%s610 + $0x150] sm:$0xff]
      %v1223 = vld [vmem:[%s610 + $0x158] sm:$0xff]
      %v1224 = vld [vmem:[%s610 + $0x160] sm:$0xff]
      %v1225 = vld [vmem:[%s610 + $0x168] sm:$0xf]
      %v1226 = vld [vmem:[%s610 + $0x16c] sm:$0xff]
      %v1227 = vld [vmem:[%s610 + $0x174] sm:$0xff]
      %v1228 = vld [vmem:[%s610 + $0x17c] sm:$0xff]
      %v1229 = vld [vmem:[%s610 + $0x184] sm:$0xf]
      %v1230 = vld [vmem:[%s610 + $0x188] sm:$0xff]
      %v1231 = vld [vmem:[%s610 + $0x190] sm:$0xff]
      %v1232 = vld [vmem:[%s610 + $0x198] sm:$0xff]
      %v1233 = vld [vmem:[%s610 + $0x1a0] sm:$0xf]
      %v1234 = vld [vmem:[%s610 + $0x1a4] sm:$0xff]
      %v1235 = vld [vmem:[%s610 + $0x1ac] sm:$0xff]
      %v1236 = vld [vmem:[%s610 + $0x1b4] sm:$0xff]
      %v1237 = vld [vmem:[%s610 + $0x1bc] sm:$0xf]
      %v1238 = vld [vmem:[%s610 + $0x1c0] sm:$0xff]
      %v1239 = vld [vmem:[%s610 + $0x1c8] sm:$0xff]
      %v1240 = vld [vmem:[%s610 + $0x1d0] sm:$0xff]
      %v1241 = vld [vmem:[%s610 + $0x1d8] sm:$0xf]
      %v1242 = vld [vmem:[%s610 + $0x1dc] sm:$0xff]
      %v1243 = vld [vmem:[%s610 + $0x1e4] sm:$0xff]
      %v1244 = vld [vmem:[%s610 + $0x1ec] sm:$0xff]
      %v1245 = vld [vmem:[%s610 + $0x1f4] sm:$0xf]
      %v1246 = vld [vmem:[%s610 + $0x1f8] sm:$0xff]
      %v1247 = vld [vmem:[%s610 + $0x200] sm:$0xff]
      %v1248 = vld [vmem:[%s610 + $0x208] sm:$0xff]
      %v1249 = vld [vmem:[%s610 + $0x210] sm:$0xf]
      %v1250 = vld [vmem:[%s610 + $0x214] sm:$0xff]
      %v1251 = vld [vmem:[%s610 + $0x21c] sm:$0xff]
      %v1252 = vld [vmem:[%s610 + $0x224] sm:$0xff]
      %v1253 = vld [vmem:[%s610 + $0x22c] sm:$0xf]
      %v1254 = vld [vmem:[%s610 + $0x230] sm:$0xff]
      %v1255 = vld [vmem:[%s610 + $0x238] sm:$0xff]
      %v1256 = vld [vmem:[%s610 + $0x240] sm:$0xff]
      %v1257 = vld [vmem:[%s610 + $0x248] sm:$0xf]
      %v1258 = vld [vmem:[%s610 + $0x24c] sm:$0xff]
      %v1259 = vld [vmem:[%s610 + $0x254] sm:$0xff]
      %v1260 = vld [vmem:[%s610 + $0x25c] sm:$0xff]
      %v1261 = vld [vmem:[%s610 + $0x264] sm:$0xf]
      %v1262 = vld [vmem:[%s610 + $0x268] sm:$0xff]
      %v1263 = vld [vmem:[%s610 + $0x270] sm:$0xff]
      %v1264 = vld [vmem:[%s610 + $0x278] sm:$0xff]
      %v1265 = vld [vmem:[%s610 + $0x280] sm:$0xf]
      %v1266 = vld [vmem:[%s610 + $0x284] sm:$0xff]
      %v1267 = vld [vmem:[%s610 + $0x28c] sm:$0xff]
      %v1268 = vld [vmem:[%s610 + $0x294] sm:$0xff]
      %v1269 = vld [vmem:[%s610 + $0x29c] sm:$0xf]
      %v1270 = vld [vmem:[%s610 + $0x2a0] sm:$0xff]
      %v1271 = vld [vmem:[%s610 + $0x2a8] sm:$0xff]
      %v1272 = vld [vmem:[%s610 + $0x2b0] sm:$0xff]
      %v1273 = vld [vmem:[%s610 + $0x2b8] sm:$0xf]
      %v1274 = vld [vmem:[%s610 + $0x2bc] sm:$0xff]
      %v1275 = vld [vmem:[%s610 + $0x2c4] sm:$0xff]
      %v1276 = vld [vmem:[%s610 + $0x2cc] sm:$0xff]
      %v1277 = vld [vmem:[%s610 + $0x2d4] sm:$0xf]
      %v1278 = vld [vmem:[%s610 + $0x2d8] sm:$0xff]
      %v1279 = vld [vmem:[%s610 + $0x2e0] sm:$0xff]
      %v1280 = vld [vmem:[%s610 + $0x2e8] sm:$0xff]
      %v1281 = vld [vmem:[%s610 + $0x2f0] sm:$0xf]
      %v1282 = vld [vmem:[%s610 + $0x2f4] sm:$0xff]
      %v1283 = vld [vmem:[%s610 + $0x2fc] sm:$0xff]
      %v1284 = vld [vmem:[%s610 + $0x304] sm:$0xff]
      %v1285 = vld [vmem:[%s610 + $0x30c] sm:$0xf]
      %v1286 = vld [vmem:[%s610 + $0x310] sm:$0xff]
      %v1287 = vld [vmem:[%s610 + $0x318] sm:$0xff]
      %v1288 = vld [vmem:[%s610 + $0x320] sm:$0xff]
      %v1289 = vld [vmem:[%s610 + $0x328] sm:$0xf]
      %v1290 = vld [vmem:[%s610 + $0x32c] sm:$0xff]
      %v1291 = vld [vmem:[%s610 + $0x334] sm:$0xff]
      %v1292 = vld [vmem:[%s610 + $0x33c] sm:$0xff]
      %v1293 = vld [vmem:[%s610 + $0x344] sm:$0xf]
      %v1294 = vld [vmem:[%s610 + $0x348] sm:$0xff]
      %v1295 = vld [vmem:[%s610 + $0x350] sm:$0xff]
      %v1296 = vld [vmem:[%s610 + $0x358] sm:$0xff]
      %v1297 = vld [vmem:[%s610 + $0x360] sm:$0xf]
      %v1298 = vld [vmem:[%s610 + $0x364] sm:$0xff]
      %v1299 = vld [vmem:[%s610 + $0x36c] sm:$0xff]
      %v1300 = vld [vmem:[%s610 + $0x374] sm:$0xff]
      %v1301 = vld [vmem:[%s610 + $0x37c] sm:$0xf]
      %v1302 = vld [vmem:[%s610 + $0x380] sm:$0xff]
      %v1303 = vld [vmem:[%s610 + $0x388] sm:$0xff]
      %v1304 = vld [vmem:[%s610 + $0x390] sm:$0xff]
      %v1305 = vld [vmem:[%s610 + $0x398] sm:$0xf]
      %v1306 = vld [vmem:[%s610 + $0x39c] sm:$0xff]
      %v1307 = vld [vmem:[%s610 + $0x3a4] sm:$0xff]
      %v1308 = vld [vmem:[%s610 + $0x3ac] sm:$0xff]
      %v1309 = vld [vmem:[%s610 + $0x3b4] sm:$0xf]
      %v1310 = vld [vmem:[%s610 + $0x3b8] sm:$0x33]
      %v1311 = vld [vmem:[%s610 + $0x3c0] sm:$0x33]
      %v1312 = vld [vmem:[%s610 + $0x3c8] sm:$0x33]
      %v1313 = vld [vmem:[%s610 + $0x3d0] sm:$0x3]
      %v1314 = vld [vmem:[%s614] sm:$0x7f]
      %v1316 = vlaneseq
      %v1317 = vshrl.u32 %v1316, 7
      %v1318 = vsub.s32 0, %v1317
      %v1319 = vrot.slane %v1314, %v1318
      %v1320 = vlaneseq
      %v1321 = vshrl.u32 %v1320, 7
      %v1322 = vsub.s32 1, %v1321
      %v1323 = vrot.slane %v1314, %v1322
      %v1324 = vlaneseq
      %v1325 = vshrl.u32 %v1324, 7
      %v1326 = vsub.s32 2, %v1325
      %v1327 = vrot.slane %v1314, %v1326
      %v1328 = vlaneseq
      %v1329 = vshrl.u32 %v1328, 7
      %v1330 = vsub.s32 3, %v1329
      %v1331 = vrot.slane %v1314, %v1330
      %v1332 = vlaneseq
      %v1333 = vshrl.u32 %v1332, 7
      %v1334 = vsub.s32 4, %v1333
      %v1335 = vrot.slane %v1314, %v1334
      %v1336 = vlaneseq
      %v1337 = vshrl.u32 %v1336, 7
      %v1338 = vsub.s32 5, %v1337
      %v1339 = vrot.slane %v1314, %v1338
      %v1340 = vlaneseq
      %v1341 = vshrl.u32 %v1340, 7
      %v1342 = vsub.s32 6, %v1341
      %v1343 = vrot.slane %v1314, %v1342
      %v1491 = vunpack.c.l.b16 %v1174
      %v1492 = vunpack.c.h.b16 %v1174
      %v1493 = vunpack.c.l.b16 %v1175
      %v1494 = vunpack.c.h.b16 %v1175
      %v1495 = vunpack.c.l.b16 %v1176
      %v1496 = vunpack.c.h.b16 %v1176
      %v1497 = vunpack.c.l.b16 %v1177
      %v1498 = vunpack.c.l.b16 %v1178
      %v1499 = vunpack.c.h.b16 %v1178
      %v1500 = vunpack.c.l.b16 %v1179
      %v1501 = vunpack.c.h.b16 %v1179
      %v1502 = vunpack.c.l.b16 %v1180
      %v1503 = vunpack.c.h.b16 %v1180
      %v1504 = vunpack.c.l.b16 %v1181
      %v1505 = vunpack.c.l.b16 %v1182
      %v1506 = vunpack.c.h.b16 %v1182
      %v1507 = vunpack.c.l.b16 %v1183
      %v1508 = vunpack.c.h.b16 %v1183
      %v1509 = vunpack.c.l.b16 %v1184
      %v1510 = vunpack.c.h.b16 %v1184
      %v1511 = vunpack.c.l.b16 %v1185
      %v1512 = vunpack.c.l.b16 %v1186
      %v1513 = vunpack.c.h.b16 %v1186
      %v1514 = vunpack.c.l.b16 %v1187
      %v1515 = vunpack.c.h.b16 %v1187
      %v1516 = vunpack.c.l.b16 %v1188
      %v1517 = vunpack.c.h.b16 %v1188
      %v1518 = vunpack.c.l.b16 %v1189
      %v1519 = vunpack.c.l.b16 %v1190
      %v1520 = vunpack.c.h.b16 %v1190
      %v1521 = vunpack.c.l.b16 %v1191
      %v1522 = vunpack.c.h.b16 %v1191
      %v1523 = vunpack.c.l.b16 %v1192
      %v1524 = vunpack.c.h.b16 %v1192
      %v1525 = vunpack.c.l.b16 %v1193
      %v1526 = vunpack.c.l.b16 %v1194
      %v1527 = vunpack.c.h.b16 %v1194
      %v1528 = vunpack.c.l.b16 %v1195
      %v1529 = vunpack.c.h.b16 %v1195
      %v1530 = vunpack.c.l.b16 %v1196
      %v1531 = vunpack.c.h.b16 %v1196
      %v1532 = vunpack.c.l.b16 %v1197
      %v1533 = vunpack.c.l.b16 %v1198
      %v1534 = vunpack.c.h.b16 %v1198
      %v1535 = vunpack.c.l.b16 %v1199
      %v1536 = vunpack.c.h.b16 %v1199
      %v1537 = vunpack.c.l.b16 %v1200
      %v1538 = vunpack.c.h.b16 %v1200
      %v1539 = vunpack.c.l.b16 %v1201
      %v1540 = vunpack.c.l.b16 %v1202
      %v1541 = vunpack.c.h.b16 %v1202
      %v1542 = vunpack.c.l.b16 %v1203
      %v1543 = vunpack.c.h.b16 %v1203
      %v1544 = vunpack.c.l.b16 %v1204
      %v1545 = vunpack.c.h.b16 %v1204
      %v1546 = vunpack.c.l.b16 %v1205
      %v1547 = vunpack.c.l.b16 %v1206
      %v1548 = vunpack.c.h.b16 %v1206
      %v1549 = vunpack.c.l.b16 %v1207
      %v1550 = vunpack.c.h.b16 %v1207
      %v1551 = vunpack.c.l.b16 %v1208
      %v1552 = vunpack.c.h.b16 %v1208
      %v1553 = vunpack.c.l.b16 %v1209
      %v1554 = vunpack.c.l.b16 %v1210
      %v1555 = vunpack.c.h.b16 %v1210
      %v1556 = vunpack.c.l.b16 %v1211
      %v1557 = vunpack.c.h.b16 %v1211
      %v1558 = vunpack.c.l.b16 %v1212
      %v1559 = vunpack.c.h.b16 %v1212
      %v1560 = vunpack.c.l.b16 %v1213
      %v1561 = vunpack.c.l.b16 %v1214
      %v1562 = vunpack.c.h.b16 %v1214
      %v1563 = vunpack.c.l.b16 %v1215
      %v1564 = vunpack.c.h.b16 %v1215
      %v1565 = vunpack.c.l.b16 %v1216
      %v1566 = vunpack.c.h.b16 %v1216
      %v1567 = vunpack.c.l.b16 %v1217
      %v1568 = vunpack.c.l.b16 %v1218
      %v1569 = vunpack.c.h.b16 %v1218
      %v1570 = vunpack.c.l.b16 %v1219
      %v1571 = vunpack.c.h.b16 %v1219
      %v1572 = vunpack.c.l.b16 %v1220
      %v1573 = vunpack.c.h.b16 %v1220
      %v1574 = vunpack.c.l.b16 %v1221
      %v1575 = vunpack.c.l.b16 %v1222
      %v1576 = vunpack.c.h.b16 %v1222
      %v1577 = vunpack.c.l.b16 %v1223
      %v1578 = vunpack.c.h.b16 %v1223
      %v1579 = vunpack.c.l.b16 %v1224
      %v1580 = vunpack.c.h.b16 %v1224
      %v1581 = vunpack.c.l.b16 %v1225
      %v1582 = vunpack.c.l.b16 %v1226
      %v1583 = vunpack.c.h.b16 %v1226
      %v1584 = vunpack.c.l.b16 %v1227
      %v1585 = vunpack.c.h.b16 %v1227
      %v1586 = vunpack.c.l.b16 %v1228
      %v1587 = vunpack.c.h.b16 %v1228
      %v1588 = vunpack.c.l.b16 %v1229
      %v1589 = vunpack.c.l.b16 %v1230
      %v1590 = vunpack.c.h.b16 %v1230
      %v1591 = vunpack.c.l.b16 %v1231
      %v1592 = vunpack.c.h.b16 %v1231
      %v1593 = vunpack.c.l.b16 %v1232
      %v1594 = vunpack.c.h.b16 %v1232
      %v1595 = vunpack.c.l.b16 %v1233
      %v1596 = vunpack.c.l.b16 %v1234
      %v1597 = vunpack.c.h.b16 %v1234
      %v1598 = vunpack.c.l.b16 %v1235
      %v1599 = vunpack.c.h.b16 %v1235
      %v1600 = vunpack.c.l.b16 %v1236
      %v1601 = vunpack.c.h.b16 %v1236
      %v1602 = vunpack.c.l.b16 %v1237
      %v1603 = vunpack.c.l.b16 %v1238
      %v1604 = vunpack.c.h.b16 %v1238
      %v1605 = vunpack.c.l.b16 %v1239
      %v1606 = vunpack.c.h.b16 %v1239
      %v1607 = vunpack.c.l.b16 %v1240
      %v1608 = vunpack.c.h.b16 %v1240
      %v1609 = vunpack.c.l.b16 %v1241
      %v1610 = vunpack.c.l.b16 %v1242
      %v1611 = vunpack.c.h.b16 %v1242
      %v1612 = vunpack.c.l.b16 %v1243
      %v1613 = vunpack.c.h.b16 %v1243
      %v1614 = vunpack.c.l.b16 %v1244
      %v1615 = vunpack.c.h.b16 %v1244
      %v1616 = vunpack.c.l.b16 %v1245
      %v1617 = vunpack.c.l.b16 %v1246
      %v1618 = vunpack.c.h.b16 %v1246
      %v1619 = vunpack.c.l.b16 %v1247
      %v1620 = vunpack.c.h.b16 %v1247
      %v1621 = vunpack.c.l.b16 %v1248
      %v1622 = vunpack.c.h.b16 %v1248
      %v1623 = vunpack.c.l.b16 %v1249
      %v1624 = vunpack.c.l.b16 %v1250
      %v1625 = vunpack.c.h.b16 %v1250
      %v1626 = vunpack.c.l.b16 %v1251
      %v1627 = vunpack.c.h.b16 %v1251
      %v1628 = vunpack.c.l.b16 %v1252
      %v1629 = vunpack.c.h.b16 %v1252
      %v1630 = vunpack.c.l.b16 %v1253
      %v1631 = vunpack.c.l.b16 %v1254
      %v1632 = vunpack.c.h.b16 %v1254
      %v1633 = vunpack.c.l.b16 %v1255
      %v1634 = vunpack.c.h.b16 %v1255
      %v1635 = vunpack.c.l.b16 %v1256
      %v1636 = vunpack.c.h.b16 %v1256
      %v1637 = vunpack.c.l.b16 %v1257
      %v1638 = vunpack.c.l.b16 %v1258
      %v1639 = vunpack.c.h.b16 %v1258
      %v1640 = vunpack.c.l.b16 %v1259
      %v1641 = vunpack.c.h.b16 %v1259
      %v1642 = vunpack.c.l.b16 %v1260
      %v1643 = vunpack.c.h.b16 %v1260
      %v1644 = vunpack.c.l.b16 %v1261
      %v1645 = vunpack.c.l.b16 %v1262
      %v1646 = vunpack.c.h.b16 %v1262
      %v1647 = vunpack.c.l.b16 %v1263
      %v1648 = vunpack.c.h.b16 %v1263
      %v1649 = vunpack.c.l.b16 %v1264
      %v1650 = vunpack.c.h.b16 %v1264
      %v1651 = vunpack.c.l.b16 %v1265
      %v1652 = vunpack.c.l.b16 %v1266
      %v1653 = vunpack.c.h.b16 %v1266
      %v1654 = vunpack.c.l.b16 %v1267
      %v1655 = vunpack.c.h.b16 %v1267
      %v1656 = vunpack.c.l.b16 %v1268
      %v1657 = vunpack.c.h.b16 %v1268
      %v1658 = vunpack.c.l.b16 %v1269
      %v1659 = vunpack.c.l.b16 %v1270
      %v1660 = vunpack.c.h.b16 %v1270
      %v1661 = vunpack.c.l.b16 %v1271
      %v1662 = vunpack.c.h.b16 %v1271
      %v1663 = vunpack.c.l.b16 %v1272
      %v1664 = vunpack.c.h.b16 %v1272
      %v1665 = vunpack.c.l.b16 %v1273
      %v1666 = vunpack.c.l.b16 %v1274
      %v1667 = vunpack.c.h.b16 %v1274
      %v1668 = vunpack.c.l.b16 %v1275
      %v1669 = vunpack.c.h.b16 %v1275
      %v1670 = vunpack.c.l.b16 %v1276
      %v1671 = vunpack.c.h.b16 %v1276
      %v1672 = vunpack.c.l.b16 %v1277
      %v1673 = vunpack.c.l.b16 %v1278
      %v1674 = vunpack.c.h.b16 %v1278
      %v1675 = vunpack.c.l.b16 %v1279
      %v1676 = vunpack.c.h.b16 %v1279
      %v1677 = vunpack.c.l.b16 %v1280
      %v1678 = vunpack.c.h.b16 %v1280
      %v1679 = vunpack.c.l.b16 %v1281
      %v1680 = vunpack.c.l.b16 %v1282
      %v1681 = vunpack.c.h.b16 %v1282
      %v1682 = vunpack.c.l.b16 %v1283
      %v1683 = vunpack.c.h.b16 %v1283
      %v1684 = vunpack.c.l.b16 %v1284
      %v1685 = vunpack.c.h.b16 %v1284
      %v1686 = vunpack.c.l.b16 %v1285
      %v1687 = vunpack.c.l.b16 %v1286
      %v1688 = vunpack.c.h.b16 %v1286
      %v1689 = vunpack.c.l.b16 %v1287
      %v1690 = vunpack.c.h.b16 %v1287
      %v1691 = vunpack.c.l.b16 %v1288
      %v1692 = vunpack.c.h.b16 %v1288
      %v1693 = vunpack.c.l.b16 %v1289
      %v1694 = vunpack.c.l.b16 %v1290
      %v1695 = vunpack.c.h.b16 %v1290
      %v1696 = vunpack.c.l.b16 %v1291
      %v1697 = vunpack.c.h.b16 %v1291
      %v1698 = vunpack.c.l.b16 %v1292
      %v1699 = vunpack.c.h.b16 %v1292
      %v1700 = vunpack.c.l.b16 %v1293
      %v1701 = vunpack.c.l.b16 %v1294
      %v1702 = vunpack.c.h.b16 %v1294
      %v1703 = vunpack.c.l.b16 %v1295
      %v1704 = vunpack.c.h.b16 %v1295
      %v1705 = vunpack.c.l.b16 %v1296
      %v1706 = vunpack.c.h.b16 %v1296
      %v1707 = vunpack.c.l.b16 %v1297
      %v1708 = vunpack.c.l.b16 %v1298
      %v1709 = vunpack.c.h.b16 %v1298
      %v1710 = vunpack.c.l.b16 %v1299
      %v1711 = vunpack.c.h.b16 %v1299
      %v1712 = vunpack.c.l.b16 %v1300
      %v1713 = vunpack.c.h.b16 %v1300
      %v1714 = vunpack.c.l.b16 %v1301
      %v1715 = vunpack.c.l.b16 %v1302
      %v1716 = vunpack.c.h.b16 %v1302
      %v1717 = vunpack.c.l.b16 %v1303
      %v1718 = vunpack.c.h.b16 %v1303
      %v1719 = vunpack.c.l.b16 %v1304
      %v1720 = vunpack.c.h.b16 %v1304
      %v1721 = vunpack.c.l.b16 %v1305
      %v1722 = vunpack.c.l.b16 %v1306
      %v1723 = vunpack.c.h.b16 %v1306
      %v1724 = vunpack.c.l.b16 %v1307
      %v1725 = vunpack.c.h.b16 %v1307
      %v1726 = vunpack.c.l.b16 %v1308
      %v1727 = vunpack.c.h.b16 %v1308
      %v1728 = vunpack.c.l.b16 %v1309
      %v1729 = vunpack.c.l.b16 %v1310
      %v1730 = vunpack.c.h.b16 %v1310
      %v1731 = vunpack.c.l.b16 %v1311
      %v1732 = vunpack.c.h.b16 %v1311
      %v1733 = vunpack.c.l.b16 %v1312
      %v1734 = vunpack.c.h.b16 %v1312
      %v1735 = vunpack.c.l.b16 %v1313
      %v1736 = vpack.c.b16 %v1498, %v1491
      %v1737 = vpack.c.b16 %v1499, %v1492
      %v1738 = vpack.c.b16 %v1500, %v1493
      %v1739 = vpack.c.b16 %v1501, %v1494
      %v1740 = vpack.c.b16 %v1502, %v1495
      %v1741 = vpack.c.b16 %v1503, %v1496
      %v1742 = vpack.c.b16 %v1504, %v1497
      %v1743 = vpack.c.b16 %v1512, %v1505
      %v1744 = vpack.c.b16 %v1513, %v1506
      %v1745 = vpack.c.b16 %v1514, %v1507
      %v1746 = vpack.c.b16 %v1515, %v1508
      %v1747 = vpack.c.b16 %v1516, %v1509
      %v1748 = vpack.c.b16 %v1517, %v1510
      %v1749 = vpack.c.b16 %v1518, %v1511
      %v1750 = vpack.c.b16 %v1526, %v1519
      %v1751 = vpack.c.b16 %v1527, %v1520
      %v1752 = vpack.c.b16 %v1528, %v1521
      %v1753 = vpack.c.b16 %v1529, %v1522
      %v1754 = vpack.c.b16 %v1530, %v1523
      %v1755 = vpack.c.b16 %v1531, %v1524
      %v1756 = vpack.c.b16 %v1532, %v1525
      %v1757 = vpack.c.b16 %v1540, %v1533
      %v1758 = vpack.c.b16 %v1541, %v1534
      %v1759 = vpack.c.b16 %v1542, %v1535
      %v1760 = vpack.c.b16 %v1543, %v1536
      %v1761 = vpack.c.b16 %v1544, %v1537
      %v1762 = vpack.c.b16 %v1545, %v1538
      %v1763 = vpack.c.b16 %v1546, %v1539
      %v1764 = vpack.c.b16 %v1554, %v1547
      %v1765 = vpack.c.b16 %v1555, %v1548
      %v1766 = vpack.c.b16 %v1556, %v1549
      %v1767 = vpack.c.b16 %v1557, %v1550
      %v1768 = vpack.c.b16 %v1558, %v1551
      %v1769 = vpack.c.b16 %v1559, %v1552
      %v1770 = vpack.c.b16 %v1560, %v1553
      %v1771 = vpack.c.b16 %v1568, %v1561
      %v1772 = vpack.c.b16 %v1569, %v1562
      %v1773 = vpack.c.b16 %v1570, %v1563
      %v1774 = vpack.c.b16 %v1571, %v1564
      %v1775 = vpack.c.b16 %v1572, %v1565
      %v1776 = vpack.c.b16 %v1573, %v1566
      %v1777 = vpack.c.b16 %v1574, %v1567
      %v1778 = vpack.c.b16 %v1582, %v1575
      %v1779 = vpack.c.b16 %v1583, %v1576
      %v1780 = vpack.c.b16 %v1584, %v1577
      %v1781 = vpack.c.b16 %v1585, %v1578
      %v1782 = vpack.c.b16 %v1586, %v1579
      %v1783 = vpack.c.b16 %v1587, %v1580
      %v1784 = vpack.c.b16 %v1588, %v1581
      %v1785 = vpack.c.b16 %v1596, %v1589
      %v1786 = vpack.c.b16 %v1597, %v1590
      %v1787 = vpack.c.b16 %v1598, %v1591
      %v1788 = vpack.c.b16 %v1599, %v1592
      %v1789 = vpack.c.b16 %v1600, %v1593
      %v1790 = vpack.c.b16 %v1601, %v1594
      %v1791 = vpack.c.b16 %v1602, %v1595
      %v1792 = vpack.c.b16 %v1610, %v1603
      %v1793 = vpack.c.b16 %v1611, %v1604
      %v1794 = vpack.c.b16 %v1612, %v1605
      %v1795 = vpack.c.b16 %v1613, %v1606
      %v1796 = vpack.c.b16 %v1614, %v1607
      %v1797 = vpack.c.b16 %v1615, %v1608
      %v1798 = vpack.c.b16 %v1616, %v1609
      %v1799 = vpack.c.b16 %v1624, %v1617
      %v1800 = vpack.c.b16 %v1625, %v1618
      %v1801 = vpack.c.b16 %v1626, %v1619
      %v1802 = vpack.c.b16 %v1627, %v1620
      %v1803 = vpack.c.b16 %v1628, %v1621
      %v1804 = vpack.c.b16 %v1629, %v1622
      %v1805 = vpack.c.b16 %v1630, %v1623
      %v1806 = vpack.c.b16 %v1638, %v1631
      %v1807 = vpack.c.b16 %v1639, %v1632
      %v1808 = vpack.c.b16 %v1640, %v1633
      %v1809 = vpack.c.b16 %v1641, %v1634
      %v1810 = vpack.c.b16 %v1642, %v1635
      %v1811 = vpack.c.b16 %v1643, %v1636
      %v1812 = vpack.c.b16 %v1644, %v1637
      %v1813 = vpack.c.b16 %v1652, %v1645
      %v1814 = vpack.c.b16 %v1653, %v1646
      %v1815 = vpack.c.b16 %v1654, %v1647
      %v1816 = vpack.c.b16 %v1655, %v1648
      %v1817 = vpack.c.b16 %v1656, %v1649
      %v1818 = vpack.c.b16 %v1657, %v1650
      %v1819 = vpack.c.b16 %v1658, %v1651
      %v1820 = vpack.c.b16 %v1666, %v1659
      %v1821 = vpack.c.b16 %v1667, %v1660
      %v1822 = vpack.c.b16 %v1668, %v1661
      %v1823 = vpack.c.b16 %v1669, %v1662
      %v1824 = vpack.c.b16 %v1670, %v1663
      %v1825 = vpack.c.b16 %v1671, %v1664
      %v1826 = vpack.c.b16 %v1672, %v1665
      %v1827 = vpack.c.b16 %v1680, %v1673
      %v1828 = vpack.c.b16 %v1681, %v1674
      %v1829 = vpack.c.b16 %v1682, %v1675
      %v1830 = vpack.c.b16 %v1683, %v1676
      %v1831 = vpack.c.b16 %v1684, %v1677
      %v1832 = vpack.c.b16 %v1685, %v1678
      %v1833 = vpack.c.b16 %v1686, %v1679
      %v1834 = vpack.c.b16 %v1694, %v1687
      %v1835 = vpack.c.b16 %v1695, %v1688
      %v1836 = vpack.c.b16 %v1696, %v1689
      %v1837 = vpack.c.b16 %v1697, %v1690
      %v1838 = vpack.c.b16 %v1698, %v1691
      %v1839 = vpack.c.b16 %v1699, %v1692
      %v1840 = vpack.c.b16 %v1700, %v1693
      %v1841 = vpack.c.b16 %v1708, %v1701
      %v1842 = vpack.c.b16 %v1709, %v1702
      %v1843 = vpack.c.b16 %v1710, %v1703
      %v1844 = vpack.c.b16 %v1711, %v1704
      %v1845 = vpack.c.b16 %v1712, %v1705
      %v1846 = vpack.c.b16 %v1713, %v1706
      %v1847 = vpack.c.b16 %v1714, %v1707
      %v1848 = vpack.c.b16 %v1722, %v1715
      %v1849 = vpack.c.b16 %v1723, %v1716
      %v1850 = vpack.c.b16 %v1724, %v1717
      %v1851 = vpack.c.b16 %v1725, %v1718
      %v1852 = vpack.c.b16 %v1726, %v1719
      %v1853 = vpack.c.b16 %v1727, %v1720
      %v1854 = vpack.c.b16 %v1728, %v1721
      %v1855 = vpack.c.b16 %v1729, %v1729
      %v1856 = vpack.c.b16 %v1730, %v1730
      %v1857 = vpack.c.b16 %v1731, %v1731
      %v1858 = vpack.c.b16 %v1732, %v1732
      %v1859 = vpack.c.b16 %v1733, %v1733
      %v1860 = vpack.c.b16 %v1734, %v1734
      %v1861 = vpack.c.b16 %v1735, %v1735
      %v1982 = vsel %vm1019, %v1170, 0
      %v1985 = vsel %vm1019, %v1173, 0
      %vm1987 = vcmask 1041408
      %v1989 = vsel %vm1987, %v1855, 0
      %v1992 = vsel %vm1987, %v1856, 0
      %v1995 = vsel %vm1987, %v1857, 0
      %v1998 = vsel %vm1987, %v1858, 0
      %v2001 = vsel %vm1987, %v1859, 0
      %v2004 = vsel %vm1987, %v1860, 0
      %v2007 = vsel %vm1987, %v1861, 0
      %2009 = vmatprep.subr.bf16.mxu0 %v1737
      %2010 = vmatpush1.bf16.msra.mxu0 %v1736
      %2011 = vmatprep.subr.bf16.mxu0 %v1744
      %2012 = vmatpush1.bf16.msra.mxu0 %v1743
      %2013 = vmatprep.subr.bf16.mxu0 %v1751
      %2014 = vmatpush1.bf16.msra.mxu0 %v1750
      %2015 = vmatprep.subr.bf16.mxu0 %v1758
      %2016 = vmatpush1.bf16.msra.mxu0 %v1757
      %2017 = vmatprep.subr.bf16.mxu0 %v1765
      %2018 = vmatpush1.bf16.msra.mxu0 %v1764
      %2019 = vmatprep.subr.bf16.mxu0 %v1772
      %2020 = vmatpush1.bf16.msra.mxu0 %v1771
      %2021 = vmatprep.subr.bf16.mxu0 %v1779
      %2022 = vmatpush1.bf16.msra.mxu0 %v1778
      %2023 = vmatprep.subr.bf16.mxu0 %v1786
      %2024 = vmatpush1.bf16.msra.mxu0 %v1785
      %2025 = vmatprep.subr.bf16.mxu0 %v1793
      %2026 = vmatpush1.bf16.msra.mxu0 %v1792
      %2027 = vmatprep.subr.bf16.mxu0 %v1800
      %2028 = vmatpush1.bf16.msra.mxu0 %v1799
      %2029 = vmatprep.subr.bf16.mxu0 %v1807
      %2030 = vmatpush1.bf16.msra.mxu0 %v1806
      %2031 = vmatprep.subr.bf16.mxu0 %v1814
      %2032 = vmatpush1.bf16.msra.mxu0 %v1813
      %2033 = vmatprep.subr.bf16.mxu0 %v1821
      %2034 = vmatpush1.bf16.msra.mxu0 %v1820
      %2035 = vmatprep.subr.bf16.mxu0 %v1828
      %2036 = vmatpush1.bf16.msra.mxu0 %v1827
      %2037 = vmatprep.subr.bf16.mxu0 %v1835
      %2038 = vmatpush1.bf16.msra.mxu0 %v1834
      %2039 = vmatprep.subr.bf16.mxu0 %v1842
      %2040 = vmatpush1.bf16.msra.mxu0 %v1841
      %2041 = vmatprep.mubr.bf16.mxu0 %v1169
      %2042 = vmatmul.mubr.bf16.gmra.mrb[0].mxu0 %v1168
      %v2043 = vpop.f32.mrb[0].mxu0
      %v2044 = vadd.f32 %v1319, %v2043
      %v2045 = vpop.f32.mrb[0].mxu0
      %v2046 = vadd.f32 %v1323, %v2045
      %v2047 = vpop.f32.mrb[0].mxu0
      %v2048 = vadd.f32 %v1319, %v2047
      %v2049 = vpop.f32.mrb[0].mxu0
      %v2050 = vadd.f32 %v1323, %v2049
      %2051 = vmatprep.mubr.bf16.mxu0 %v1172
      %2052 = vmatmul.mubr.bf16.gmra.mrb[0].mxu0 %v1171
      %v2053 = vpop.f32.mrb[0].mxu0
      %v2054 = vadd.f32 %v1319, %v2053
      %v2055 = vpop.f32.mrb[0].mxu0
      %v2056 = vadd.f32 %v1323, %v2055
      %v2057 = vpop.f32.mrb[0].mxu0
      %v2058 = vadd.f32 %v1319, %v2057
      %v2059 = vpop.f32.mrb[0].mxu0
      %v2060 = vadd.f32 %v1323, %v2059
      %2061 = vdwg.mxu0
      %2062 = vmatprep.subr.bf16.mxu0 %v1849
      %2063 = vmatpush1.bf16.msra.mxu0 %v1848
      %2064 = vmatprep.subr.bf16.mxu0 %v1992
      %2065 = vmatpush1.bf16.msra.mxu0 %v1989
      %2066 = vmatprep.subr.bf16.mxu0 0
      %2067 = vmatpush1.bf16.msra.mxu0 0
      %2068 = vmatprep.subr.bf16.mxu0 0
      %2069 = vmatpush1.bf16.msra.mxu0 0
      %2070 = vmatprep.subr.bf16.mxu0 0
      %2071 = vmatpush1.bf16.msra.mxu0 0
      %2072 = vmatprep.subr.bf16.mxu0 0
      %2073 = vmatpush1.bf16.msra.mxu0 0
      %2074 = vmatprep.subr.bf16.mxu0 0
      %2075 = vmatpush1.bf16.msra.mxu0 0
      %2076 = vmatprep.subr.bf16.mxu0 0
      %2077 = vmatpush1.bf16.msra.mxu0 0
      %2078 = vmatprep.subr.bf16.mxu0 0
      %2079 = vmatpush1.bf16.msra.mxu0 0
      %2080 = vmatprep.subr.bf16.mxu0 0
      %2081 = vmatpush1.bf16.msra.mxu0 0
      %2082 = vmatprep.subr.bf16.mxu0 0
      %2083 = vmatpush1.bf16.msra.mxu0 0
      %2084 = vmatprep.subr.bf16.mxu0 0
      %2085 = vmatpush1.bf16.msra.mxu0 0
      %2086 = vmatprep.subr.bf16.mxu0 0
      %2087 = vmatpush1.bf16.msra.mxu0 0
      %2088 = vmatprep.subr.bf16.mxu0 0
      %2089 = vmatpush1.bf16.msra.mxu0 0
      %2090 = vmatprep.subr.bf16.mxu0 0
      %2091 = vmatpush1.bf16.msra.mxu0 0
      %2092 = vmatprep.subr.bf16.mxu0 0
      %2093 = vmatpush1.bf16.msra.mxu0 0
      %2094 = vmatprep.mubr.bf16.mxu0 0
      %2095 = vmatmul.mubr.bf16.gmra.mrb[0].mxu0 %v1982
      %v2096 = vpop.f32.mrb[0].mxu0
      %v2097 = vadd.f32 %v2044, %v2096
      %v2098 = vpop.f32.mrb[0].mxu0
      %v2099 = vadd.f32 %v2046, %v2098
      %v2100 = vpop.f32.mrb[0].mxu0
      %v2101 = vadd.f32 %v2048, %v2100
      %v2102 = vpop.f32.mrb[0].mxu0
      %v2103 = vadd.f32 %v2050, %v2102
      %2104 = vmatprep.mubr.bf16.mxu0 0
      %2105 = vmatmul.mubr.bf16.gmra.mrb[0].mxu0 %v1985
      %v2106 = vpop.f32.mrb[0].mxu0
      %v2107 = vadd.f32 %v2054, %v2106
      %v2108 = vpop.f32.mrb[0].mxu0
      %v2109 = vadd.f32 %v2056, %v2108
      %v2110 = vpop.f32.mrb[0].mxu0
      %v2111 = vadd.f32 %v2058, %v2110
      %v2112 = vpop.f32.mrb[0].mxu0
      %v2113 = vadd.f32 %v2060, %v2112
      %2114 = vdwg.mxu0
      %2115 = vmatprep.subr.bf16.mxu0 %v1739
      %2116 = vmatpush1.bf16.msra.mxu0 %v1738
      %2117 = vmatprep.subr.bf16.mxu0 %v1746
      %2118 = vmatpush1.bf16.msra.mxu0 %v1745
      %2119 = vmatprep.subr.bf16.mxu0 %v1753
      %2120 = vmatpush1.bf16.msra.mxu0 %v1752
      %2121 = vmatprep.subr.bf16.mxu0 %v1760
      %2122 = vmatpush1.bf16.msra.mxu0 %v1759
      %2123 = vmatprep.subr.bf16.mxu0 %v1767
      %2124 = vmatpush1.bf16.msra.mxu0 %v1766
      %2125 = vmatprep.subr.bf16.mxu0 %v1774
      %2126 = vmatpush1.bf16.msra.mxu0 %v1773
      %2127 = vmatprep.subr.bf16.mxu0 %v1781
      %2128 = vmatpush1.bf16.msra.mxu0 %v1780
      %2129 = vmatprep.subr.bf16.mxu0 %v1788
      %2130 = vmatpush1.bf16.msra.mxu0 %v1787
      %2131 = vmatprep.subr.bf16.mxu0 %v1795
      %2132 = vmatpush1.bf16.msra.mxu0 %v1794
      %2133 = vmatprep.subr.bf16.mxu0 %v1802
      %2134 = vmatpush1.bf16.msra.mxu0 %v1801
      %2135 = vmatprep.subr.bf16.mxu0 %v1809
      %2136 = vmatpush1.bf16.msra.mxu0 %v1808
      %2137 = vmatprep.subr.bf16.mxu0 %v1816
      %2138 = vmatpush1.bf16.msra.mxu0 %v1815
      %2139 = vmatprep.subr.bf16.mxu0 %v1823
      %2140 = vmatpush1.bf16.msra.mxu0 %v1822
      %2141 = vmatprep.subr.bf16.mxu0 %v1830
      %2142 = vmatpush1.bf16.msra.mxu0 %v1829
      %2143 = vmatprep.subr.bf16.mxu0 %v1837
      %2144 = vmatpush1.bf16.msra.mxu0 %v1836
      %2145 = vmatprep.subr.bf16.mxu0 %v1844
      %2146 = vmatpush1.bf16.msra.mxu0 %v1843
      %2147 = vmatprep.mubr.bf16.mxu0 %v1169
      %2148 = vmatmul.mubr.bf16.gmra.mrb[0].mxu0 %v1168
      %v2149 = vpop.f32.mrb[0].mxu0
      %v2150 = vadd.f32 %v1327, %v2149
      %v2151 = vpop.f32.mrb[0].mxu0
      %v2152 = vadd.f32 %v1331, %v2151
      %v2153 = vpop.f32.mrb[0].mxu0
      %v2154 = vadd.f32 %v1327, %v2153
      %v2155 = vpop.f32.mrb[0].mxu0
      %v2156 = vadd.f32 %v1331, %v2155
      %2157 = vmatprep.mubr.bf16.mxu0 %v1172
      %2158 = vmatmul.mubr.bf16.gmra.mrb[0].mxu0 %v1171
      %v2159 = vpop.f32.mrb[0].mxu0
      %v2160 = vadd.f32 %v1327, %v2159
      %v2161 = vpop.f32.mrb[0].mxu0
      %v2162 = vadd.f32 %v1331, %v2161
      %v2163 = vpop.f32.mrb[0].mxu0
      %v2164 = vadd.f32 %v1327, %v2163
      %v2165 = vpop.f32.mrb[0].mxu0
      %v2166 = vadd.f32 %v1331, %v2165
      %2167 = vdwg.mxu0
      %2168 = vmatprep.subr.bf16.mxu0 %v1851
      %2169 = vmatpush1.bf16.msra.mxu0 %v1850
      %2170 = vmatprep.subr.bf16.mxu0 %v1998
      %2171 = vmatpush1.bf16.msra.mxu0 %v1995
      %2172 = vmatprep.subr.bf16.mxu0 0
      %2173 = vmatpush1.bf16.msra.mxu0 0
      %2174 = vmatprep.subr.bf16.mxu0 0
      %2175 = vmatpush1.bf16.msra.mxu0 0
      %2176 = vmatprep.subr.bf16.mxu0 0
      %2177 = vmatpush1.bf16.msra.mxu0 0
      %2178 = vmatprep.subr.bf16.mxu0 0
      %2179 = vmatpush1.bf16.msra.mxu0 0
      %2180 = vmatprep.subr.bf16.mxu0 0
      %2181 = vmatpush1.bf16.msra.mxu0 0
      %2182 = vmatprep.subr.bf16.mxu0 0
      %2183 = vmatpush1.bf16.msra.mxu0 0
      %2184 = vmatprep.subr.bf16.mxu0 0
      %2185 = vmatpush1.bf16.msra.mxu0 0
      %2186 = vmatprep.subr.bf16.mxu0 0
      %2187 = vmatpush1.bf16.msra.mxu0 0
      %2188 = vmatprep.subr.bf16.mxu0 0
      %2189 = vmatpush1.bf16.msra.mxu0 0
      %2190 = vmatprep.subr.bf16.mxu0 0
      %2191 = vmatpush1.bf16.msra.mxu0 0
      %2192 = vmatprep.subr.bf16.mxu0 0
      %2193 = vmatpush1.bf16.msra.mxu0 0
      %2194 = vmatprep.subr.bf16.mxu0 0
      %2195 = vmatpush1.bf16.msra.mxu0 0
      %2196 = vmatprep.subr.bf16.mxu0 0
      %2197 = vmatpush1.bf16.msra.mxu0 0
      %2198 = vmatprep.subr.bf16.mxu0 0
      %2199 = vmatpush1.bf16.msra.mxu0 0
      %2200 = vmatprep.mubr.bf16.mxu0 0
      %2201 = vmatmul.mubr.bf16.gmra.mrb[0].mxu0 %v1982
      %v2202 = vpop.f32.mrb[0].mxu0
      %v2203 = vadd.f32 %v2150, %v2202
      %v2204 = vpop.f32.mrb[0].mxu0
      %v2205 = vadd.f32 %v2152, %v2204
      %v2206 = vpop.f32.mrb[0].mxu0
      %v2207 = vadd.f32 %v2154, %v2206
      %v2208 = vpop.f32.mrb[0].mxu0
      %v2209 = vadd.f32 %v2156, %v2208
      %2210 = vmatprep.mubr.bf16.mxu0 0
      %2211 = vmatmul.mubr.bf16.gmra.mrb[0].mxu0 %v1985
      %v2212 = vpop.f32.mrb[0].mxu0
      %v2213 = vadd.f32 %v2160, %v2212
      %v2214 = vpop.f32.mrb[0].mxu0
      %v2215 = vadd.f32 %v2162, %v2214
      %v2216 = vpop.f32.mrb[0].mxu0
      %v2217 = vadd.f32 %v2164, %v2216
      %v2218 = vpop.f32.mrb[0].mxu0
      %v2219 = vadd.f32 %v2166, %v2218
      %2220 = vdwg.mxu0
      %2221 = vmatprep.subr.bf16.mxu0 %v1741
      %2222 = vmatpush1.bf16.msra.mxu0 %v1740
      %2223 = vmatprep.subr.bf16.mxu0 %v1748
      %2224 = vmatpush1.bf16.msra.mxu0 %v1747
      %2225 = vmatprep.subr.bf16.mxu0 %v1755
      %2226 = vmatpush1.bf16.msra.mxu0 %v1754
      %2227 = vmatprep.subr.bf16.mxu0 %v1762
      %2228 = vmatpush1.bf16.msra.mxu0 %v1761
      %2229 = vmatprep.subr.bf16.mxu0 %v1769
      %2230 = vmatpush1.bf16.msra.mxu0 %v1768
      %2231 = vmatprep.subr.bf16.mxu0 %v1776
      %2232 = vmatpush1.bf16.msra.mxu0 %v1775
      %2233 = vmatprep.subr.bf16.mxu0 %v1783
      %2234 = vmatpush1.bf16.msra.mxu0 %v1782
      %2235 = vmatprep.subr.bf16.mxu0 %v1790
      %2236 = vmatpush1.bf16.msra.mxu0 %v1789
      %2237 = vmatprep.subr.bf16.mxu0 %v1797
      %2238 = vmatpush1.bf16.msra.mxu0 %v1796
      %2239 = vmatprep.subr.bf16.mxu0 %v1804
      %2240 = vmatpush1.bf16.msra.mxu0 %v1803
      %2241 = vmatprep.subr.bf16.mxu0 %v1811
      %2242 = vmatpush1.bf16.msra.mxu0 %v1810
      %2243 = vmatprep.subr.bf16.mxu0 %v1818
      %2244 = vmatpush1.bf16.msra.mxu0 %v1817
      %2245 = vmatprep.subr.bf16.mxu0 %v1825
      %2246 = vmatpush1.bf16.msra.mxu0 %v1824
      %2247 = vmatprep.subr.bf16.mxu0 %v1832
      %2248 = vmatpush1.bf16.msra.mxu0 %v1831
      %2249 = vmatprep.subr.bf16.mxu0 %v1839
      %2250 = vmatpush1.bf16.msra.mxu0 %v1838
      %2251 = vmatprep.subr.bf16.mxu0 %v1846
      %2252 = vmatpush1.bf16.msra.mxu0 %v1845
      %2253 = vmatprep.mubr.bf16.mxu0 %v1169
      %2254 = vmatmul.mubr.bf16.gmra.mrb[0].mxu0 %v1168
      %v2255 = vpop.f32.mrb[0].mxu0
      %v2256 = vadd.f32 %v1335, %v2255
      %v2257 = vpop.f32.mrb[0].mxu0
      %v2258 = vadd.f32 %v1339, %v2257
      %v2259 = vpop.f32.mrb[0].mxu0
      %v2260 = vadd.f32 %v1335, %v2259
      %v2261 = vpop.f32.mrb[0].mxu0
      %v2262 = vadd.f32 %v1339, %v2261
      %2263 = vmatprep.mubr.bf16.mxu0 %v1172
      %2264 = vmatmul.mubr.bf16.gmra.mrb[0].mxu0 %v1171
      %v2265 = vpop.f32.mrb[0].mxu0
      %v2266 = vadd.f32 %v1335, %v2265
      %v2267 = vpop.f32.mrb[0].mxu0
      %v2268 = vadd.f32 %v1339, %v2267
      %v2269 = vpop.f32.mrb[0].mxu0
      %v2270 = vadd.f32 %v1335, %v2269
      %v2271 = vpop.f32.mrb[0].mxu0
      %v2272 = vadd.f32 %v1339, %v2271
      %2273 = vdwg.mxu0
      %2274 = vmatprep.subr.bf16.mxu0 %v1853
      %2275 = vmatpush1.bf16.msra.mxu0 %v1852
      %2276 = vmatprep.subr.bf16.mxu0 %v2004
      %2277 = vmatpush1.bf16.msra.mxu0 %v2001
      %2278 = vmatprep.subr.bf16.mxu0 0
      %2279 = vmatpush1.bf16.msra.mxu0 0
      %2280 = vmatprep.subr.bf16.mxu0 0
      %2281 = vmatpush1.bf16.msra.mxu0 0
      %2282 = vmatprep.subr.bf16.mxu0 0
      %2283 = vmatpush1.bf16.msra.mxu0 0
      %2284 = vmatprep.subr.bf16.mxu0 0
      %2285 = vmatpush1.bf16.msra.mxu0 0
      %2286 = vmatprep.subr.bf16.mxu0 0
      %2287 = vmatpush1.bf16.msra.mxu0 0
      %2288 = vmatprep.subr.bf16.mxu0 0
      %2289 = vmatpush1.bf16.msra.mxu0 0
      %2290 = vmatprep.subr.bf16.mxu0 0
      %2291 = vmatpush1.bf16.msra.mxu0 0
      %2292 = vmatprep.subr.bf16.mxu0 0
      %2293 = vmatpush1.bf16.msra.mxu0 0
      %2294 = vmatprep.subr.bf16.mxu0 0
      %2295 = vmatpush1.bf16.msra.mxu0 0
      %2296 = vmatprep.subr.bf16.mxu0 0
      %2297 = vmatpush1.bf16.msra.mxu0 0
      %2298 = vmatprep.subr.bf16.mxu0 0
      %2299 = vmatpush1.bf16.msra.mxu0 0
      %2300 = vmatprep.subr.bf16.mxu0 0
      %2301 = vmatpush1.bf16.msra.mxu0 0
      %2302 = vmatprep.subr.bf16.mxu0 0
      %2303 = vmatpush1.bf16.msra.mxu0 0
      %2304 = vmatprep.subr.bf16.mxu0 0
      %2305 = vmatpush1.bf16.msra.mxu0 0
      %2306 = vmatprep.mubr.bf16.mxu0 0
      %2307 = vmatmul.mubr.bf16.gmra.mrb[0].mxu0 %v1982
      %v2308 = vpop.f32.mrb[0].mxu0
      %v2309 = vadd.f32 %v2256, %v2308
      %v2310 = vpop.f32.mrb[0].mxu0
      %v2311 = vadd.f32 %v2258, %v2310
      %v2312 = vpop.f32.mrb[0].mxu0
      %v2313 = vadd.f32 %v2260, %v2312
      %v2314 = vpop.f32.mrb[0].mxu0
      %v2315 = vadd.f32 %v2262, %v2314
      %2316 = vmatprep.mubr.bf16.mxu0 0
      %2317 = vmatmul.mubr.bf16.gmra.mrb[0].mxu0 %v1985
      %v2318 = vpop.f32.mrb[0].mxu0
      %v2319 = vadd.f32 %v2266, %v2318
      %v2320 = vpop.f32.mrb[0].mxu0
      %v2321 = vadd.f32 %v2268, %v2320
      %v2322 = vpop.f32.mrb[0].mxu0
      %v2323 = vadd.f32 %v2270, %v2322
      %v2324 = vpop.f32.mrb[0].mxu0
      %v2325 = vadd.f32 %v2272, %v2324
      %2326 = vdwg.mxu0
      %2327 = vmatprep.subr.bf16.mxu0 0
      %2328 = vmatpush1.bf16.msra.mxu0 %v1742
      %2329 = vmatprep.subr.bf16.mxu0 0
      %2330 = vmatpush1.bf16.msra.mxu0 %v1749
      %2331 = vmatprep.subr.bf16.mxu0 0
      %2332 = vmatpush1.bf16.msra.mxu0 %v1756
      %2333 = vmatprep.subr.bf16.mxu0 0
      %2334 = vmatpush1.bf16.msra.mxu0 %v1763
      %2335 = vmatprep.subr.bf16.mxu0 0
      %2336 = vmatpush1.bf16.msra.mxu0 %v1770
      %2337 = vmatprep.subr.bf16.mxu0 0
      %2338 = vmatpush1.bf16.msra.mxu0 %v1777
      %2339 = vmatprep.subr.bf16.mxu0 0
      %2340 = vmatpush1.bf16.msra.mxu0 %v1784
      %2341 = vmatprep.subr.bf16.mxu0 0
      %2342 = vmatpush1.bf16.msra.mxu0 %v1791
      %2343 = vmatprep.subr.bf16.mxu0 0
      %2344 = vmatpush1.bf16.msra.mxu0 %v1798
      %2345 = vmatprep.subr.bf16.mxu0 0
      %2346 = vmatpush1.bf16.msra.mxu0 %v1805
      %2347 = vmatprep.subr.bf16.mxu0 0
      %2348 = vmatpush1.bf16.msra.mxu0 %v1812
      %2349 = vmatprep.subr.bf16.mxu0 0
      %2350 = vmatpush1.bf16.msra.mxu0 %v1819
      %2351 = vmatprep.subr.bf16.mxu0 0
      %2352 = vmatpush1.bf16.msra.mxu0 %v1826
      %2353 = vmatprep.subr.bf16.mxu0 0
      %2354 = vmatpush1.bf16.msra.mxu0 %v1833
      %2355 = vmatprep.subr.bf16.mxu0 0
      %2356 = vmatpush1.bf16.msra.mxu0 %v1840
      %2357 = vmatprep.subr.bf16.mxu0 0
      %2358 = vmatpush1.bf16.msra.mxu0 %v1847
      %2359 = vmatprep.mubr.bf16.mxu0 %v1169
      %2360 = vmatmul.mubr.bf16.gmra.mrb[0].mxu0 %v1168
      %v2361 = vpop.f32.mrb[0].mxu0
      %v2362 = vadd.f32 %v1343, %v2361
      %v2363 = vpop.f32.mrb[0].mxu0
      %v2364 = vpop.f32.mrb[0].mxu0
      %v2365 = vadd.f32 %v1343, %v2364
      %v2366 = vpop.f32.mrb[0].mxu0
      %2367 = vmatprep.mubr.bf16.mxu0 %v1172
      %2368 = vmatmul.mubr.bf16.gmra.mrb[0].mxu0 %v1171
      %v2369 = vpop.f32.mrb[0].mxu0
      %v2370 = vadd.f32 %v1343, %v2369
      %v2371 = vpop.f32.mrb[0].mxu0
      %v2372 = vpop.f32.mrb[0].mxu0
      %v2373 = vadd.f32 %v1343, %v2372
      %v2374 = vpop.f32.mrb[0].mxu0
      %2375 = vdwg.mxu0
      %2376 = vmatprep.subr.bf16.mxu0 0
      %2377 = vmatpush1.bf16.msra.mxu0 %v1854
      %2378 = vmatprep.subr.bf16.mxu0 0
      %2379 = vmatpush1.bf16.msra.mxu0 %v2007
      %2380 = vmatprep.subr.bf16.mxu0 0
      %2381 = vmatpush1.bf16.msra.mxu0 0
      %2382 = vmatprep.subr.bf16.mxu0 0
      %2383 = vmatpush1.bf16.msra.mxu0 0
      %2384 = vmatprep.subr.bf16.mxu0 0
      %2385 = vmatpush1.bf16.msra.mxu0 0
      %2386 = vmatprep.subr.bf16.mxu0 0
      %2387 = vmatpush1.bf16.msra.mxu0 0
      %2388 = vmatprep.subr.bf16.mxu0 0
      %2389 = vmatpush1.bf16.msra.mxu0 0
      %2390 = vmatprep.subr.bf16.mxu0 0
      %2391 = vmatpush1.bf16.msra.mxu0 0
      %2392 = vmatprep.subr.bf16.mxu0 0
      %2393 = vmatpush1.bf16.msra.mxu0 0
      %2394 = vmatprep.subr.bf16.mxu0 0
      %2395 = vmatpush1.bf16.msra.mxu0 0
      %2396 = vmatprep.subr.bf16.mxu0 0
      %2397 = vmatpush1.bf16.msra.mxu0 0
      %2398 = vmatprep.subr.bf16.mxu0 0
      %2399 = vmatpush1.bf16.msra.mxu0 0
      %2400 = vmatprep.subr.bf16.mxu0 0
      %2401 = vmatpush1.bf16.msra.mxu0 0
      %2402 = vmatprep.subr.bf16.mxu0 0
      %2403 = vmatpush1.bf16.msra.mxu0 0
      %2404 = vmatprep.subr.bf16.mxu0 0
      %2405 = vmatpush1.bf16.msra.mxu0 0
      %2406 = vmatprep.subr.bf16.mxu0 0
      %2407 = vmatpush1.bf16.msra.mxu0 0
      %2408 = vmatprep.mubr.bf16.mxu0 0
      %2409 = vmatmul.mubr.bf16.gmra.mrb[0].mxu0 %v1982
      %v2410 = vpop.f32.mrb[0].mxu0
      %v2411 = vadd.f32 %v2362, %v2410
      %v2412 = vpop.f32.mrb[0].mxu0
      %v2413 = vpop.f32.mrb[0].mxu0
      %v2414 = vadd.f32 %v2365, %v2413
      %v2415 = vpop.f32.mrb[0].mxu0
      %2416 = vmatprep.mubr.bf16.mxu0 0
      %2417 = vmatmul.mubr.bf16.gmra.mrb[0].mxu0 %v1985
      %v2418 = vpop.f32.mrb[0].mxu0
      %v2419 = vadd.f32 %v2370, %v2418
      %v2420 = vpop.f32.mrb[0].mxu0
      %v2421 = vpop.f32.mrb[0].mxu0
      %v2422 = vadd.f32 %v2373, %v2421
      %v2423 = vpop.f32.mrb[0].mxu0
      %2424 = vdwg.mxu0
      %v2425 = vpack.c.bf16 %v2101, %v2097
      %v2426 = vpack.c.bf16 %v2103, %v2099
      %v2427 = vpack.c.bf16 %v2207, %v2203
      %v2428 = vpack.c.bf16 %v2209, %v2205
      %v2429 = vpack.c.bf16 %v2313, %v2309
      %v2430 = vpack.c.bf16 %v2315, %v2311
      %v2431 = vpack.c.bf16 %v2414, %v2411
      %v2432 = vpack.c.bf16 %v2111, %v2107
      %v2433 = vpack.c.bf16 %v2113, %v2109
      %v2434 = vpack.c.bf16 %v2217, %v2213
      %v2435 = vpack.c.bf16 %v2219, %v2215
      %v2436 = vpack.c.bf16 %v2323, %v2319
      %v2437 = vpack.c.bf16 %v2325, %v2321
      %v2438 = vpack.c.bf16 %v2422, %v2419
      %2441 = vrot.lane.b32.xlu0 %v2427, 108
      %v2442 = vpop.permute.xlu0 %2441
      %2443 = vrot.lane.b32.xlu0 %v2434, 108
      %v2444 = vpop.permute.xlu0 %2443
      %vm2445 = vcmask 564224
      %v2447 = vsel %vm2445, %v2425, 0
      %v2450 = vsel %vm2445, %v2432, 0
      %v2453 = vsel %vm2445, %v2442, 0
      %v2456 = vsel %vm2445, %v2444, 0
      %2458 = vmatprep.subr.bf16.mxu0 0
      %2459 = vmatpush1.bf16.xpose.msra.mxu0 %v2453
      %2460 = vmatprep.subr.bf16.mxu0 0
      %2461 = vmatpush1.bf16.xpose.msra.mxu0 %v2456
      %2462 = vmatprep.subr.bf16.mxu0 0
      %2463 = vmatpush1.bf16.xpose.msra.mxu0 0
      %2464 = vmatprep.subr.bf16.mxu0 0
      %2465 = vmatpush1.bf16.xpose.msra.mxu0 0
      %2466 = vmatprep.subr.bf16.mxu0 0
      %2467 = vmatpush1.bf16.xpose.msra.mxu0 0
      %2468 = vmatprep.subr.bf16.mxu0 0
      %2469 = vmatpush1.bf16.xpose.msra.mxu0 0
      %2470 = vmatprep.subr.bf16.mxu0 0
      %2471 = vmatpush1.bf16.xpose.msra.mxu0 0
      %2472 = vmatprep.subr.bf16.mxu0 0
      %2473 = vmatpush1.bf16.xpose.msra.mxu0 0
      %2474 = vmatprep.subr.bf16.mxu0 0
      %2475 = vmatpush1.bf16.xpose.msra.mxu0 0
      %2476 = vmatprep.subr.bf16.mxu0 0
      %2477 = vmatpush1.bf16.xpose.msra.mxu0 0
      %2478 = vmatprep.subr.bf16.mxu0 0
      %2479 = vmatpush1.bf16.xpose.msra.mxu0 0
      %2480 = vmatprep.subr.bf16.mxu0 0
      %2481 = vmatpush1.bf16.xpose.msra.mxu0 0
      %2482 = vmatprep.subr.bf16.mxu0 0
      %2483 = vmatpush1.bf16.xpose.msra.mxu0 0
      %2484 = vmatprep.subr.bf16.mxu0 0
      %2485 = vmatpush1.bf16.xpose.msra.mxu0 0
      %2486 = vmatprep.subr.bf16.mxu0 0
      %2487 = vmatpush1.bf16.xpose.msra.mxu0 0
      %2488 = vmatprep.subr.bf16.mxu0 0
      %2489 = vmatpush1.bf16.xpose.msra.mxu0 0
      %2490 = vmatprep.mubr.bf16.mxu0 0
      %2491 = vmatmul.mubr.bf16.gmra.mrb[0].mxu0 %v2447
      %v2492 = vpop.f32.mrb[0].mxu0
      %v2493 = vadd.f32 0.0, %v2492
      %v2494 = vpop.f32.mrb[0].mxu0
      %v2495 = vpop.f32.mrb[0].mxu0
      %v2496 = vadd.f32 0.0, %v2495
      %v2497 = vpop.f32.mrb[0].mxu0
      %2498 = vmatprep.mubr.bf16.mxu0 0
      %2499 = vmatmul.mubr.bf16.gmra.mrb[0].mxu0 %v2450
      %v2500 = vpop.f32.mrb[0].mxu0
      %v2501 = vadd.f32 0.0, %v2500
      %v2502 = vpop.f32.mrb[0].mxu0
      %v2503 = vpop.f32.mrb[0].mxu0
      %v2504 = vadd.f32 0.0, %v2503
      %v2505 = vpop.f32.mrb[0].mxu0
      %2506 = vdwg.mxu0
      %v2507 = vmul.f32 %v2493, 0.120385855
      %v2508 = vmul.f32 %v2496, 0.120385855
      %v2509 = vmul.f32 %v2501, 0.120385855
      %v2510 = vmul.f32 %v2504, 0.120385855
      %v2511 = vadd.f32 %v2507, %v1012
      %v2512 = vadd.f32 %v2508, %v1013
      %v2513 = vadd.f32 %v2509, %v1014
      %v2514 = vadd.f32 %v2510, %v1015
      %vm2515 = vcmask 261120
      %v2516 = vsel %vm2515, %v2511, -inf
      %2517 = vmax.xlane.f32.xlu0 %v2516
      %v2518 = vpop.xlane.xlu0 %2517
      %v2519 = vsel %vm2515, %v2512, -inf
      %2520 = vmax.xlane.f32.xlu0 %v2519
      %v2521 = vpop.xlane.xlu0 %2520
      %v2522 = vsel %vm2515, %v2513, -inf
      %2523 = vmax.xlane.f32.xlu0 %v2522
      %v2524 = vpop.xlane.xlu0 %2523
      %v2525 = vsel %vm2515, %v2514, -inf
      %2526 = vmax.xlane.f32.xlu0 %v2525
      %v2527 = vpop.xlane.xlu0 %2526
      %v2528 = vsub.f32 %v2511, %v2518
      %v2529 = vsub.f32 %v2512, %v2521
      %v2530 = vsub.f32 %v2513, %v2524
      %v2531 = vsub.f32 %v2514, %v2527
      %v2532 = vmul.f32 %v2528, 1.442695
      %v2533 = vpow.pop %v2532
      %v2534 = vmul.f32 %v2529, 1.442695
      %v2535 = vpow.pop %v2534
      %v2536 = vmul.f32 %v2530, 1.442695
      %v2537 = vpow.pop %v2536
      %v2538 = vmul.f32 %v2531, 1.442695
      %v2539 = vpow.pop %v2538
      %v2540 = vsel %vm2515, %v2533, 0.0
      %2541 = vadd.xlane.f32.xlu0 %v2540
      %v2542 = vpop.xlane.xlu0 %2541
      %v2543 = vsel %vm2515, %v2535, 0.0
      %2544 = vadd.xlane.f32.xlu0 %v2543
      %v2545 = vpop.xlane.xlu0 %2544
      %v2546 = vsel %vm2515, %v2537, 0.0
      %2547 = vadd.xlane.f32.xlu0 %v2546
      %v2548 = vpop.xlane.xlu0 %2547
      %v2549 = vsel %vm2515, %v2539, 0.0
      %2550 = vadd.xlane.f32.xlu0 %v2549
      %v2551 = vpop.xlane.xlu0 %2550
      %v2552 = vrcp.pop %v2542
      %v2553 = vrcp.pop %v2545
      %v2554 = vrcp.pop %v2548
      %v2555 = vrcp.pop %v2551
      %v2556 = vmul.f32 %v2533, %v2552
      %v2557 = vmul.f32 %v2535, %v2553
      %v2558 = vmul.f32 %v2537, %v2554
      %v2559 = vmul.f32 %v2539, %v2555
      %v2560 = vpack.c.bf16 %v2557, %v2556
      %v2561 = vpack.c.bf16 %v2559, %v2558
      %2564 = vrot.lane.b32.xlu0 %v2429, 88
      %v2565 = vpop.permute.xlu0 %2564
      %2566 = vrot.lane.b32.xlu0 %v2436, 88
      %v2567 = vpop.permute.xlu0 %2566
      %v2571 = vsel %vm2515, %v2560, 0
      %v2574 = vsel %vm2515, %v2561, 0
      %2576 = vmatprep.subr.bf16.mxu0 0
      %2577 = vmatpush1.bf16.msra.mxu0 %v2565
      %2578 = vmatprep.subr.bf16.mxu0 0
      %2579 = vmatpush1.bf16.msra.mxu0 %v2567
      %2580 = vmatprep.subr.bf16.mxu0 0
      %2581 = vmatpush1.bf16.msra.mxu0 0
      %2582 = vmatprep.subr.bf16.mxu0 0
      %2583 = vmatpush1.bf16.msra.mxu0 0
      %2584 = vmatprep.subr.bf16.mxu0 0
      %2585 = vmatpush1.bf16.msra.mxu0 0
      %2586 = vmatprep.subr.bf16.mxu0 0
      %2587 = vmatpush1.bf16.msra.mxu0 0
      %2588 = vmatprep.subr.bf16.mxu0 0
      %2589 = vmatpush1.bf16.msra.mxu0 0
      %2590 = vmatprep.subr.bf16.mxu0 0
      %2591 = vmatpush1.bf16.msra.mxu0 0
      %2592 = vmatprep.subr.bf16.mxu0 0
      %2593 = vmatpush1.bf16.msra.mxu0 0
      %2594 = vmatprep.subr.bf16.mxu0 0
      %2595 = vmatpush1.bf16.msra.mxu0 0
      %2596 = vmatprep.subr.bf16.mxu0 0
      %2597 = vmatpush1.bf16.msra.mxu0 0
      %2598 = vmatprep.subr.bf16.mxu0 0
      %2599 = vmatpush1.bf16.msra.mxu0 0
      %2600 = vmatprep.subr.bf16.mxu0 0
      %2601 = vmatpush1.bf16.msra.mxu0 0
      %2602 = vmatprep.subr.bf16.mxu0 0
      %2603 = vmatpush1.bf16.msra.mxu0 0
      %2604 = vmatprep.subr.bf16.mxu0 0
      %2605 = vmatpush1.bf16.msra.mxu0 0
      %2606 = vmatprep.subr.bf16.mxu0 0
      %2607 = vmatpush1.bf16.msra.mxu0 0
      %2608 = vmatprep.mubr.bf16.mxu0 0
      %2609 = vmatmul.mubr.bf16.gmra.mrb[0].mxu0 %v2571
      %v2610 = vpop.f32.mrb[0].mxu0
      %v2611 = vadd.f32 0.0, %v2610
      %v2612 = vpop.f32.mrb[0].mxu0
      %v2613 = vpop.f32.mrb[0].mxu0
      %v2614 = vadd.f32 0.0, %v2613
      %v2615 = vpop.f32.mrb[0].mxu0
      %2616 = vmatprep.mubr.bf16.mxu0 0
      %2617 = vmatmul.mubr.bf16.gmra.mrb[0].mxu0 %v2574
      %v2618 = vpop.f32.mrb[0].mxu0
      %v2619 = vadd.f32 0.0, %v2618
      %v2620 = vpop.f32.mrb[0].mxu0
      %v2621 = vpop.f32.mrb[0].mxu0
      %v2622 = vadd.f32 0.0, %v2621
      %v2623 = vpop.f32.mrb[0].mxu0
      %2624 = vdwg.mxu0
      %v2625 = vpack.c.bf16 %v2614, %v2611
      %v2626 = vpack.c.bf16 %v2622, %v2619
      %v2627 = vld [vmem:[%s619] sm:$0xff]
      %v2628 = vld [vmem:[%s619 + $0x8] sm:$0xf]
      %v2629 = vld [vmem:[%s619 + $0xc] sm:$0xff]
      %v2630 = vld [vmem:[%s619 + $0x14] sm:$0xf]
      %v2631 = vld [vmem:[%s619 + $0x18] sm:$0xff]
      %v2632 = vld [vmem:[%s619 + $0x20] sm:$0xf]
      %v2633 = vld [vmem:[%s619 + $0x24] sm:$0xff]
      %v2634 = vld [vmem:[%s619 + $0x2c] sm:$0xf]
      %v2635 = vld [vmem:[%s619 + $0x30] sm:$0xff]
      %v2636 = vld [vmem:[%s619 + $0x38] sm:$0xf]
      %v2637 = vld [vmem:[%s619 + $0x3c] sm:$0xff]
      %v2638 = vld [vmem:[%s619 + $0x44] sm:$0xf]
      %v2639 = vld [vmem:[%s619 + $0x48] sm:$0xff]
      %v2640 = vld [vmem:[%s619 + $0x50] sm:$0xf]
      %v2641 = vld [vmem:[%s619 + $0x54] sm:$0xff]
      %v2642 = vld [vmem:[%s619 + $0x5c] sm:$0xf]
      %v2643 = vld [vmem:[%s619 + $0x60] sm:$0x77]
      %v2644 = vld [vmem:[%s619 + $0x68] sm:$0x7]
      %2649 = vrot.lane.b32.xlu0 %v2425, 59
      %v2650 = vpop.permute.xlu0 %2649
      %2651 = vrot.lane.b32.xlu0 %v2426, 59
      %v2652 = vpop.permute.xlu0 %2651
      %2653 = vrot.lane.b32.xlu0 %v2432, 59
      %v2654 = vpop.permute.xlu0 %2653
      %2655 = vrot.lane.b32.xlu0 %v2433, 59
      %v2656 = vpop.permute.xlu0 %2655
      %vm2657 = vcmask 482304
      %v2658 = vsel %vm2657, %v2650, %v2652
      %v2659 = vsel %vm2657, %v2654, %v2656
      %2662 = vrot.lane.b32.xlu0 %v2427, 39
      %v2663 = vpop.permute.xlu0 %2662
      %2664 = vrot.lane.b32.xlu0 %v2428, 39
      %v2665 = vpop.permute.xlu0 %2664
      %2666 = vrot.lane.b32.xlu0 %v2434, 39
      %v2667 = vpop.permute.xlu0 %2666
      %2668 = vrot.lane.b32.xlu0 %v2435, 39
      %v2669 = vpop.permute.xlu0 %2668
      %vm2670 = vcmask 318464
      %v2671 = vsel %vm2670, %v2663, %v2665
      %v2672 = vsel %vm2670, %v2667, %v2669
      %v2674 = vsel %vm2445, %v2658, 0
      %v2677 = vsel %vm2445, %v2659, 0
      %v2680 = vsel %vm2445, %v2671, 0
      %v2683 = vsel %vm2445, %v2672, 0
      %2685 = vmatprep.subr.bf16.mxu0 0
      %2686 = vmatpush1.bf16.xpose.msra.mxu0 %v2680
      %2687 = vmatprep.subr.bf16.mxu0 0
      %2688 = vmatpush1.bf16.xpose.msra.mxu0 %v2683
      %2689 = vmatprep.subr.bf16.mxu0 0
      %2690 = vmatpush1.bf16.xpose.msra.mxu0 0
      %2691 = vmatprep.subr.bf16.mxu0 0
      %2692 = vmatpush1.bf16.xpose.msra.mxu0 0
      %2693 = vmatprep.subr.bf16.mxu0 0
      %2694 = vmatpush1.bf16.xpose.msra.mxu0 0
      %2695 = vmatprep.subr.bf16.mxu0 0
      %2696 = vmatpush1.bf16.xpose.msra.mxu0 0
      %2697 = vmatprep.subr.bf16.mxu0 0
      %2698 = vmatpush1.bf16.xpose.msra.mxu0 0
      %2699 = vmatprep.subr.bf16.mxu0 0
      %2700 = vmatpush1.bf16.xpose.msra.mxu0 0
      %2701 = vmatprep.subr.bf16.mxu0 0
      %2702 = vmatpush1.bf16.xpose.msra.mxu0 0
      %2703 = vmatprep.subr.bf16.mxu0 0
      %2704 = vmatpush1.bf16.xpose.msra.mxu0 0
      %2705 = vmatprep.subr.bf16.mxu0 0
      %2706 = vmatpush1.bf16.xpose.msra.mxu0 0
      %2707 = vmatprep.subr.bf16.mxu0 0
      %2708 = vmatpush1.bf16.xpose.msra.mxu0 0
      %2709 = vmatprep.subr.bf16.mxu0 0
      %2710 = vmatpush1.bf16.xpose.msra.mxu0 0
      %2711 = vmatprep.subr.bf16.mxu0 0
      %2712 = vmatpush1.bf16.xpose.msra.mxu0 0
      %2713 = vmatprep.subr.bf16.mxu0 0
      %2714 = vmatpush1.bf16.xpose.msra.mxu0 0
      %2715 = vmatprep.subr.bf16.mxu0 0
      %2716 = vmatpush1.bf16.xpose.msra.mxu0 0
      %2717 = vmatprep.mubr.bf16.mxu0 0
      %2718 = vmatmul.mubr.bf16.gmra.mrb[0].mxu0 %v2674
      %v2719 = vpop.f32.mrb[0].mxu0
      %v2720 = vadd.f32 0.0, %v2719
      %v2721 = vpop.f32.mrb[0].mxu0
      %v2722 = vpop.f32.mrb[0].mxu0
      %v2723 = vadd.f32 0.0, %v2722
      %v2724 = vpop.f32.mrb[0].mxu0
      %2725 = vmatprep.mubr.bf16.mxu0 0
      %2726 = vmatmul.mubr.bf16.gmra.mrb[0].mxu0 %v2677
      %v2727 = vpop.f32.mrb[0].mxu0
      %v2728 = vadd.f32 0.0, %v2727
      %v2729 = vpop.f32.mrb[0].mxu0
      %v2730 = vpop.f32.mrb[0].mxu0
      %v2731 = vadd.f32 0.0, %v2730
      %v2732 = vpop.f32.mrb[0].mxu0
      %2733 = vdwg.mxu0
      %v2734 = vmul.f32 %v2720, 0.120385855
      %v2735 = vmul.f32 %v2723, 0.120385855
      %v2736 = vmul.f32 %v2728, 0.120385855
      %v2737 = vmul.f32 %v2731, 0.120385855
      %v2738 = vadd.f32 %v2734, %v1012
      %v2739 = vadd.f32 %v2735, %v1013
      %v2740 = vadd.f32 %v2736, %v1014
      %v2741 = vadd.f32 %v2737, %v1015
      %v2742 = vsel %vm2515, %v2738, -inf
      %2743 = vmax.xlane.f32.xlu0 %v2742
      %v2744 = vpop.xlane.xlu0 %2743
      %v2745 = vsel %vm2515, %v2739, -inf
      %2746 = vmax.xlane.f32.xlu0 %v2745
      %v2747 = vpop.xlane.xlu0 %2746
      %v2748 = vsel %vm2515, %v2740, -inf
      %2749 = vmax.xlane.f32.xlu0 %v2748
      %v2750 = vpop.xlane.xlu0 %2749
      %v2751 = vsel %vm2515, %v2741, -inf
      %2752 = vmax.xlane.f32.xlu0 %v2751
      %v2753 = vpop.xlane.xlu0 %2752
      %v2754 = vsub.f32 %v2738, %v2744
      %v2755 = vsub.f32 %v2739, %v2747
      %v2756 = vsub.f32 %v2740, %v2750
      %v2757 = vsub.f32 %v2741, %v2753
      %v2758 = vmul.f32 %v2754, 1.442695
      %v2759 = vpow.pop %v2758
      %v2760 = vmul.f32 %v2755, 1.442695
      %v2761 = vpow.pop %v2760
      %v2762 = vmul.f32 %v2756, 1.442695
      %v2763 = vpow.pop %v2762
      %v2764 = vmul.f32 %v2757, 1.442695
      %v2765 = vpow.pop %v2764
      %v2766 = vsel %vm2515, %v2759, 0.0
      %2767 = vadd.xlane.f32.xlu0 %v2766
      %v2768 = vpop.xlane.xlu0 %2767
      %v2769 = vsel %vm2515, %v2761, 0.0
      %2770 = vadd.xlane.f32.xlu0 %v2769
      %v2771 = vpop.xlane.xlu0 %2770
      %v2772 = vsel %vm2515, %v2763, 0.0
      %2773 = vadd.xlane.f32.xlu0 %v2772
      %v2774 = vpop.xlane.xlu0 %2773
      %v2775 = vsel %vm2515, %v2765, 0.0
      %2776 = vadd.xlane.f32.xlu0 %v2775
      %v2777 = vpop.xlane.xlu0 %2776
      %v2778 = vrcp.pop %v2768
      %v2779 = vrcp.pop %v2771
      %v2780 = vrcp.pop %v2774
      %v2781 = vrcp.pop %v2777
      %v2782 = vmul.f32 %v2759, %v2778
      %v2783 = vmul.f32 %v2761, %v2779
      %v2784 = vmul.f32 %v2763, %v2780
      %v2785 = vmul.f32 %v2765, %v2781
      %v2786 = vpack.c.bf16 %v2783, %v2782
      %v2787 = vpack.c.bf16 %v2785, %v2784
      %2790 = vrot.lane.b32.xlu0 %v2429, 19
      %v2791 = vpop.permute.xlu0 %2790
      %2792 = vrot.lane.b32.xlu0 %v2430, 19
      %v2793 = vpop.permute.xlu0 %2792
      %2794 = vrot.lane.b32.xlu0 %v2436, 19
      %v2795 = vpop.permute.xlu0 %2794
      %2796 = vrot.lane.b32.xlu0 %v2437, 19
      %v2797 = vpop.permute.xlu0 %2796
      %vm2798 = vcmask 154624
      %v2799 = vsel %vm2798, %v2791, %v2793
      %v2800 = vsel %vm2798, %v2795, %v2797
      %v2804 = vsel %vm2515, %v2786, 0
      %v2807 = vsel %vm2515, %v2787, 0
      %2809 = vmatprep.subr.bf16.mxu0 0
      %2810 = vmatpush1.bf16.msra.mxu0 %v2799
      %2811 = vmatprep.subr.bf16.mxu0 0
      %2812 = vmatpush1.bf16.msra.mxu0 %v2800
      %2813 = vmatprep.subr.bf16.mxu0 0
      %2814 = vmatpush1.bf16.msra.mxu0 0
      %2815 = vmatprep.subr.bf16.mxu0 0
      %2816 = vmatpush1.bf16.msra.mxu0 0
      %2817 = vmatprep.subr.bf16.mxu0 0
      %2818 = vmatpush1.bf16.msra.mxu0 0
      %2819 = vmatprep.subr.bf16.mxu0 0
      %2820 = vmatpush1.bf16.msra.mxu0 0
      %2821 = vmatprep.subr.bf16.mxu0 0
      %2822 = vmatpush1.bf16.msra.mxu0 0
      %2823 = vmatprep.subr.bf16.mxu0 0
      %2824 = vmatpush1.bf16.msra.mxu0 0
      %2825 = vmatprep.subr.bf16.mxu0 0
      %2826 = vmatpush1.bf16.msra.mxu0 0
      %2827 = vmatprep.subr.bf16.mxu0 0
      %2828 = vmatpush1.bf16.msra.mxu0 0
      %2829 = vmatprep.subr.bf16.mxu0 0
      %2830 = vmatpush1.bf16.msra.mxu0 0
      %2831 = vmatprep.subr.bf16.mxu0 0
      %2832 = vmatpush1.bf16.msra.mxu0 0
      %2833 = vmatprep.subr.bf16.mxu0 0
      %2834 = vmatpush1.bf16.msra.mxu0 0
      %2835 = vmatprep.subr.bf16.mxu0 0
      %2836 = vmatpush1.bf16.msra.mxu0 0
      %2837 = vmatprep.subr.bf16.mxu0 0
      %2838 = vmatpush1.bf16.msra.mxu0 0
      %2839 = vmatprep.subr.bf16.mxu0 0
      %2840 = vmatpush1.bf16.msra.mxu0 0
      %2841 = vmatprep.mubr.bf16.mxu0 0
      %2842 = vmatmul.mubr.bf16.gmra.mrb[0].mxu0 %v2804
      %v2843 = vpop.f32.mrb[0].mxu0
      %v2844 = vadd.f32 0.0, %v2843
      %v2845 = vpop.f32.mrb[0].mxu0
      %v2846 = vpop.f32.mrb[0].mxu0
      %v2847 = vadd.f32 0.0, %v2846
      %v2848 = vpop.f32.mrb[0].mxu0
      %2849 = vmatprep.mubr.bf16.mxu0 0
      %2850 = vmatmul.mubr.bf16.gmra.mrb[0].mxu0 %v2807
      %v2851 = vpop.f32.mrb[0].mxu0
      %v2852 = vadd.f32 0.0, %v2851
      %v2853 = vpop.f32.mrb[0].mxu0
      %v2854 = vpop.f32.mrb[0].mxu0
      %v2855 = vadd.f32 0.0, %v2854
      %v2856 = vpop.f32.mrb[0].mxu0
      %2857 = vdwg.mxu0
      %v2858 = vpack.c.bf16 %v2847, %v2844
      %v2859 = vpack.c.bf16 %v2855, %v2852
      %s2860 = scalar_lea.vmem %s619, 108
      %v2861 = vld [vmem:[%s2860] sm:$0xff]
      %v2862 = vld [vmem:[%s2860 + $0x8] sm:$0xf]
      %v2863 = vld [vmem:[%s2860 + $0xc] sm:$0xff]
      %v2864 = vld [vmem:[%s2860 + $0x14] sm:$0xf]
      %v2865 = vld [vmem:[%s2860 + $0x18] sm:$0xff]
      %v2866 = vld [vmem:[%s2860 + $0x20] sm:$0xf]
      %v2867 = vld [vmem:[%s2860 + $0x24] sm:$0xff]
      %v2868 = vld [vmem:[%s2860 + $0x2c] sm:$0xf]
      %v2869 = vld [vmem:[%s2860 + $0x30] sm:$0xff]
      %v2870 = vld [vmem:[%s2860 + $0x38] sm:$0xf]
      %v2871 = vld [vmem:[%s2860 + $0x3c] sm:$0xff]
      %v2872 = vld [vmem:[%s2860 + $0x44] sm:$0xf]
      %v2873 = vld [vmem:[%s2860 + $0x48] sm:$0xff]
      %v2874 = vld [vmem:[%s2860 + $0x50] sm:$0xf]
      %v2875 = vld [vmem:[%s2860 + $0x54] sm:$0xff]
      %v2876 = vld [vmem:[%s2860 + $0x5c] sm:$0xf]
      %v2877 = vld [vmem:[%s2860 + $0x60] sm:$0x77]
      %v2878 = vld [vmem:[%s2860 + $0x68] sm:$0x7]
      %v2897 = vunpack.c.l.b16 %v2861
      %v2898 = vunpack.c.h.b16 %v2861
      %v2899 = vunpack.c.l.b16 %v2862
      %v2900 = vunpack.c.l.b16 %v2863
      %v2901 = vunpack.c.h.b16 %v2863
      %v2902 = vunpack.c.l.b16 %v2864
      %v2903 = vunpack.c.l.b16 %v2865
      %v2904 = vunpack.c.h.b16 %v2865
      %v2905 = vunpack.c.l.b16 %v2866
      %v2906 = vunpack.c.l.b16 %v2867
      %v2907 = vunpack.c.h.b16 %v2867
      %v2908 = vunpack.c.l.b16 %v2868
      %v2909 = vunpack.c.l.b16 %v2869
      %v2910 = vunpack.c.h.b16 %v2869
      %v2911 = vunpack.c.l.b16 %v2870
      %v2912 = vunpack.c.l.b16 %v2871
      %v2913 = vunpack.c.h.b16 %v2871
      %v2914 = vunpack.c.l.b16 %v2872
      %v2915 = vunpack.c.l.b16 %v2873
      %v2916 = vunpack.c.h.b16 %v2873
      %v2917 = vunpack.c.l.b16 %v2874
      %v2918 = vunpack.c.l.b16 %v2875
      %v2919 = vunpack.c.h.b16 %v2875
      %v2920 = vunpack.c.l.b16 %v2876
      %v2921 = vunpack.c.l.b16 %v2877
      %v2922 = vunpack.c.h.b16 %v2877
      %v2923 = vunpack.c.l.b16 %v2878
      %v2924 = vpack.c.b16 %v2900, %v2897
      %v2925 = vpack.c.b16 %v2901, %v2898
      %v2926 = vpack.c.b16 %v2902, %v2899
      %v2927 = vpack.c.b16 %v2906, %v2903
      %v2928 = vpack.c.b16 %v2907, %v2904
      %v2929 = vpack.c.b16 %v2908, %v2905
      %v2930 = vpack.c.b16 %v2912, %v2909
      %v2931 = vpack.c.b16 %v2913, %v2910
      %v2932 = vpack.c.b16 %v2914, %v2911
      %v2933 = vpack.c.b16 %v2918, %v2915
      %v2934 = vpack.c.b16 %v2919, %v2916
      %v2935 = vpack.c.b16 %v2920, %v2917
      %v2936 = vpack.c.b16 %v2921, %v2921
      %v2937 = vpack.c.b16 %v2922, %v2922
      %v2938 = vpack.c.b16 %v2923, %v2923
      %v2952 = vsel %vm2445, %v2858, 0
      %v2955 = vsel %vm2445, %v2859, 0
      %vm2957 = vcmask 1042432
      %v2958 = vsel %vm1987, 4294967295, 65535
      %v2959 = vsel %vm2957, %v2958, 0
      %v2961 = vand.u32 %v2936, %v2959
      %v2964 = vand.u32 %v2937, %v2959
      %v2967 = vand.u32 %v2938, %v2959
      %2969 = vmatprep.subr.bf16.mxu0 %v2925
      %2970 = vmatpush1.bf16.msra.mxu0 %v2924
      %2971 = vmatprep.subr.bf16.mxu0 %v2928
      %2972 = vmatpush1.bf16.msra.mxu0 %v2927
      %2973 = vmatprep.subr.bf16.mxu0 %v2931
      %2974 = vmatpush1.bf16.msra.mxu0 %v2930
      %2975 = vmatprep.subr.bf16.mxu0 %v2934
      %2976 = vmatpush1.bf16.msra.mxu0 %v2933
      %2977 = vmatprep.subr.bf16.mxu0 %v2964
      %2978 = vmatpush1.bf16.msra.mxu0 %v2961
      %2979 = vmatprep.subr.bf16.mxu0 0
      %2980 = vmatpush1.bf16.msra.mxu0 0
      %2981 = vmatprep.subr.bf16.mxu0 0
      %2982 = vmatpush1.bf16.msra.mxu0 0
      %2983 = vmatprep.subr.bf16.mxu0 0
      %2984 = vmatpush1.bf16.msra.mxu0 0
      %2985 = vmatprep.subr.bf16.mxu0 0
      %2986 = vmatpush1.bf16.msra.mxu0 0
      %2987 = vmatprep.subr.bf16.mxu0 0
      %2988 = vmatpush1.bf16.msra.mxu0 0
      %2989 = vmatprep.subr.bf16.mxu0 0
      %2990 = vmatpush1.bf16.msra.mxu0 0
      %2991 = vmatprep.subr.bf16.mxu0 0
      %2992 = vmatpush1.bf16.msra.mxu0 0
      %2993 = vmatprep.subr.bf16.mxu0 0
      %2994 = vmatpush1.bf16.msra.mxu0 0
      %2995 = vmatprep.subr.bf16.mxu0 0
      %2996 = vmatpush1.bf16.msra.mxu0 0
      %2997 = vmatprep.subr.bf16.mxu0 0
      %2998 = vmatpush1.bf16.msra.mxu0 0
      %2999 = vmatprep.subr.bf16.mxu0 0
      %3000 = vmatpush1.bf16.msra.mxu0 0
      %3001 = vmatprep.mubr.bf16.mxu0 0
      %3002 = vmatmul.mubr.bf16.gmra.mrb[0].mxu0 %v2952
      %v3003 = vpop.f32.mrb[0].mxu0
      %v3004 = vadd.f32 0.0, %v3003
      %v3005 = vpop.f32.mrb[0].mxu0
      %v3006 = vadd.f32 0.0, %v3005
      %v3007 = vpop.f32.mrb[0].mxu0
      %v3008 = vadd.f32 0.0, %v3007
      %v3009 = vpop.f32.mrb[0].mxu0
      %v3010 = vadd.f32 0.0, %v3009
      %3011 = vmatprep.mubr.bf16.mxu0 0
      %3012 = vmatmul.mubr.bf16.gmra.mrb[0].mxu0 %v2955
      %v3013 = vpop.f32.mrb[0].mxu0
      %v3014 = vadd.f32 0.0, %v3013
      %v3015 = vpop.f32.mrb[0].mxu0
      %v3016 = vadd.f32 0.0, %v3015
      %v3017 = vpop.f32.mrb[0].mxu0
      %v3018 = vadd.f32 0.0, %v3017
      %v3019 = vpop.f32.mrb[0].mxu0
      %v3020 = vadd.f32 0.0, %v3019
      %3021 = vdwg.mxu0
      %3022 = vmatprep.subr.bf16.mxu0 0
      %3023 = vmatpush1.bf16.msra.mxu0 %v2926
      %3024 = vmatprep.subr.bf16.mxu0 0
      %3025 = vmatpush1.bf16.msra.mxu0 %v2929
      %3026 = vmatprep.subr.bf16.mxu0 0
      %3027 = vmatpush1.bf16.msra.mxu0 %v2932
      %3028 = vmatprep.subr.bf16.mxu0 0
      %3029 = vmatpush1.bf16.msra.mxu0 %v2935
      %3030 = vmatprep.subr.bf16.mxu0 0
      %3031 = vmatpush1.bf16.msra.mxu0 %v2967
      %3032 = vmatprep.subr.bf16.mxu0 0
      %3033 = vmatpush1.bf16.msra.mxu0 0
      %3034 = vmatprep.subr.bf16.mxu0 0
      %3035 = vmatpush1.bf16.msra.mxu0 0
      %3036 = vmatprep.subr.bf16.mxu0 0
      %3037 = vmatpush1.bf16.msra.mxu0 0
      %3038 = vmatprep.subr.bf16.mxu0 0
      %3039 = vmatpush1.bf16.msra.mxu0 0
      %3040 = vmatprep.subr.bf16.mxu0 0
      %3041 = vmatpush1.bf16.msra.mxu0 0
      %3042 = vmatprep.subr.bf16.mxu0 0
      %3043 = vmatpush1.bf16.msra.mxu0 0
      %3044 = vmatprep.subr.bf16.mxu0 0
      %3045 = vmatpush1.bf16.msra.mxu0 0
      %3046 = vmatprep.subr.bf16.mxu0 0
      %3047 = vmatpush1.bf16.msra.mxu0 0
      %3048 = vmatprep.subr.bf16.mxu0 0
      %3049 = vmatpush1.bf16.msra.mxu0 0
      %3050 = vmatprep.subr.bf16.mxu0 0
      %3051 = vmatpush1.bf16.msra.mxu0 0
      %3052 = vmatprep.subr.bf16.mxu0 0
      %3053 = vmatpush1.bf16.msra.mxu0 0
      %3054 = vmatprep.mubr.bf16.mxu0 0
      %3055 = vmatmul.mubr.bf16.gmra.mrb[0].mxu0 %v2952
      %v3056 = vpop.f32.mrb[0].mxu0
      %v3057 = vadd.f32 0.0, %v3056
      %v3058 = vpop.f32.mrb[0].mxu0
      %v3059 = vpop.f32.mrb[0].mxu0
      %v3060 = vadd.f32 0.0, %v3059
      %v3061 = vpop.f32.mrb[0].mxu0
      %3062 = vmatprep.mubr.bf16.mxu0 0
      %3063 = vmatmul.mubr.bf16.gmra.mrb[0].mxu0 %v2955
      %v3064 = vpop.f32.mrb[0].mxu0
      %v3065 = vadd.f32 0.0, %v3064
      %v3066 = vpop.f32.mrb[0].mxu0
      %v3067 = vpop.f32.mrb[0].mxu0
      %v3068 = vadd.f32 0.0, %v3067
      %v3069 = vpop.f32.mrb[0].mxu0
      %3070 = vdwg.mxu0
      %v3089 = vunpack.c.l.b16 %v2627
      %v3090 = vunpack.c.h.b16 %v2627
      %v3091 = vunpack.c.l.b16 %v2628
      %v3092 = vunpack.c.l.b16 %v2629
      %v3093 = vunpack.c.h.b16 %v2629
      %v3094 = vunpack.c.l.b16 %v2630
      %v3095 = vunpack.c.l.b16 %v2631
      %v3096 = vunpack.c.h.b16 %v2631
      %v3097 = vunpack.c.l.b16 %v2632
      %v3098 = vunpack.c.l.b16 %v2633
      %v3099 = vunpack.c.h.b16 %v2633
      %v3100 = vunpack.c.l.b16 %v2634
      %v3101 = vunpack.c.l.b16 %v2635
      %v3102 = vunpack.c.h.b16 %v2635
      %v3103 = vunpack.c.l.b16 %v2636
      %v3104 = vunpack.c.l.b16 %v2637
      %v3105 = vunpack.c.h.b16 %v2637
      %v3106 = vunpack.c.l.b16 %v2638
      %v3107 = vunpack.c.l.b16 %v2639
      %v3108 = vunpack.c.h.b16 %v2639
      %v3109 = vunpack.c.l.b16 %v2640
      %v3110 = vunpack.c.l.b16 %v2641
      %v3111 = vunpack.c.h.b16 %v2641
      %v3112 = vunpack.c.l.b16 %v2642
      %v3113 = vunpack.c.l.b16 %v2643
      %v3114 = vunpack.c.h.b16 %v2643
      %v3115 = vunpack.c.l.b16 %v2644
      %v3116 = vpack.c.b16 %v3092, %v3089
      %v3117 = vpack.c.b16 %v3093, %v3090
      %v3118 = vpack.c.b16 %v3094, %v3091
      %v3119 = vpack.c.b16 %v3098, %v3095
      %v3120 = vpack.c.b16 %v3099, %v3096
      %v3121 = vpack.c.b16 %v3100, %v3097
      %v3122 = vpack.c.b16 %v3104, %v3101
      %v3123 = vpack.c.b16 %v3105, %v3102
      %v3124 = vpack.c.b16 %v3106, %v3103
      %v3125 = vpack.c.b16 %v3110, %v3107
      %v3126 = vpack.c.b16 %v3111, %v3108
      %v3127 = vpack.c.b16 %v3112, %v3109
      %v3128 = vpack.c.b16 %v3113, %v3113
      %v3129 = vpack.c.b16 %v3114, %v3114
      %v3130 = vpack.c.b16 %v3115, %v3115
      %v3144 = vsel %vm2445, %v2625, 0
      %v3147 = vsel %vm2445, %v2626, 0
      %v3150 = vand.u32 %v3128, %v2959
      %v3153 = vand.u32 %v3129, %v2959
      %v3156 = vand.u32 %v3130, %v2959
      %3158 = vmatprep.subr.bf16.mxu0 %v3117
      %3159 = vmatpush1.bf16.msra.mxu0 %v3116
      %3160 = vmatprep.subr.bf16.mxu0 %v3120
      %3161 = vmatpush1.bf16.msra.mxu0 %v3119
      %3162 = vmatprep.subr.bf16.mxu0 %v3123
      %3163 = vmatpush1.bf16.msra.mxu0 %v3122
      %3164 = vmatprep.subr.bf16.mxu0 %v3126
      %3165 = vmatpush1.bf16.msra.mxu0 %v3125
      %3166 = vmatprep.subr.bf16.mxu0 %v3153
      %3167 = vmatpush1.bf16.msra.mxu0 %v3150
      %3168 = vmatprep.subr.bf16.mxu0 0
      %3169 = vmatpush1.bf16.msra.mxu0 0
      %3170 = vmatprep.subr.bf16.mxu0 0
      %3171 = vmatpush1.bf16.msra.mxu0 0
      %3172 = vmatprep.subr.bf16.mxu0 0
      %3173 = vmatpush1.bf16.msra.mxu0 0
      %3174 = vmatprep.subr.bf16.mxu0 0
      %3175 = vmatpush1.bf16.msra.mxu0 0
      %3176 = vmatprep.subr.bf16.mxu0 0
      %3177 = vmatpush1.bf16.msra.mxu0 0
      %3178 = vmatprep.subr.bf16.mxu0 0
      %3179 = vmatpush1.bf16.msra.mxu0 0
      %3180 = vmatprep.subr.bf16.mxu0 0
      %3181 = vmatpush1.bf16.msra.mxu0 0
      %3182 = vmatprep.subr.bf16.mxu0 0
      %3183 = vmatpush1.bf16.msra.mxu0 0
      %3184 = vmatprep.subr.bf16.mxu0 0
      %3185 = vmatpush1.bf16.msra.mxu0 0
      %3186 = vmatprep.subr.bf16.mxu0 0
      %3187 = vmatpush1.bf16.msra.mxu0 0
      %3188 = vmatprep.subr.bf16.mxu0 0
      %3189 = vmatpush1.bf16.msra.mxu0 0
      %3190 = vmatprep.mubr.bf16.mxu0 0
      %3191 = vmatmul.mubr.bf16.gmra.mrb[0].mxu0 %v3144
      %v3192 = vpop.f32.mrb[0].mxu0
      %v3193 = vadd.f32 %v3004, %v3192
      %v3194 = vpop.f32.mrb[0].mxu0
      %v3195 = vadd.f32 %v3006, %v3194
      %v3196 = vpop.f32.mrb[0].mxu0
      %v3197 = vadd.f32 %v3008, %v3196
      %v3198 = vpop.f32.mrb[0].mxu0
      %v3199 = vadd.f32 %v3010, %v3198
      %3200 = vmatprep.mubr.bf16.mxu0 0
      %3201 = vmatmul.mubr.bf16.gmra.mrb[0].mxu0 %v3147
      %v3202 = vpop.f32.mrb[0].mxu0
      %v3203 = vadd.f32 %v3014, %v3202
      %v3204 = vpop.f32.mrb[0].mxu0
      %v3205 = vadd.f32 %v3016, %v3204
      %v3206 = vpop.f32.mrb[0].mxu0
      %v3207 = vadd.f32 %v3018, %v3206
      %v3208 = vpop.f32.mrb[0].mxu0
      %v3209 = vadd.f32 %v3020, %v3208
      %3210 = vdwg.mxu0
      %3211 = vmatprep.subr.bf16.mxu0 0
      %3212 = vmatpush1.bf16.msra.mxu0 %v3118
      %3213 = vmatprep.subr.bf16.mxu0 0
      %3214 = vmatpush1.bf16.msra.mxu0 %v3121
      %3215 = vmatprep.subr.bf16.mxu0 0
      %3216 = vmatpush1.bf16.msra.mxu0 %v3124
      %3217 = vmatprep.subr.bf16.mxu0 0
      %3218 = vmatpush1.bf16.msra.mxu0 %v3127
      %3219 = vmatprep.subr.bf16.mxu0 0
      %3220 = vmatpush1.bf16.msra.mxu0 %v3156
      %3221 = vmatprep.subr.bf16.mxu0 0
      %3222 = vmatpush1.bf16.msra.mxu0 0
      %3223 = vmatprep.subr.bf16.mxu0 0
      %3224 = vmatpush1.bf16.msra.mxu0 0
      %3225 = vmatprep.subr.bf16.mxu0 0
      %3226 = vmatpush1.bf16.msra.mxu0 0
      %3227 = vmatprep.subr.bf16.mxu0 0
      %3228 = vmatpush1.bf16.msra.mxu0 0
      %3229 = vmatprep.subr.bf16.mxu0 0
      %3230 = vmatpush1.bf16.msra.mxu0 0
      %3231 = vmatprep.subr.bf16.mxu0 0
      %3232 = vmatpush1.bf16.msra.mxu0 0
      %3233 = vmatprep.subr.bf16.mxu0 0
      %3234 = vmatpush1.bf16.msra.mxu0 0
      %3235 = vmatprep.subr.bf16.mxu0 0
      %3236 = vmatpush1.bf16.msra.mxu0 0
      %3237 = vmatprep.subr.bf16.mxu0 0
      %3238 = vmatpush1.bf16.msra.mxu0 0
      %3239 = vmatprep.subr.bf16.mxu0 0
      %3240 = vmatpush1.bf16.msra.mxu0 0
      %3241 = vmatprep.subr.bf16.mxu0 0
      %3242 = vmatpush1.bf16.msra.mxu0 0
      %3243 = vmatprep.mubr.bf16.mxu0 0
      %3244 = vmatmul.mubr.bf16.gmra.mrb[0].mxu0 %v3144
      %v3245 = vpop.f32.mrb[0].mxu0
      %v3246 = vadd.f32 %v3057, %v3245
      %v3247 = vpop.f32.mrb[0].mxu0
      %v3248 = vpop.f32.mrb[0].mxu0
      %v3249 = vadd.f32 %v3060, %v3248
      %v3250 = vpop.f32.mrb[0].mxu0
      %3251 = vmatprep.mubr.bf16.mxu0 0
      %3252 = vmatmul.mubr.bf16.gmra.mrb[0].mxu0 %v3147
      %v3253 = vpop.f32.mrb[0].mxu0
      %v3254 = vadd.f32 %v3065, %v3253
      %v3255 = vpop.f32.mrb[0].mxu0
      %v3256 = vpop.f32.mrb[0].mxu0
      %v3257 = vadd.f32 %v3068, %v3256
      %v3258 = vpop.f32.mrb[0].mxu0
      %3259 = vdwg.mxu0
      %3260 = vrot.lane.b32.xlu0 %v2426, 118
      %v3261 = vpop.permute.xlu0 %3260
      %3262 = vrot.lane.b32.xlu0 %v2433, 118
      %v3263 = vpop.permute.xlu0 %3262
      %3264 = vrot.lane.b32.xlu0 %v2428, 98
      %v3265 = vpop.permute.xlu0 %3264
      %3266 = vrot.lane.b32.xlu0 %v2435, 98
      %v3267 = vpop.permute.xlu0 %3266
      %v3269 = vsel %vm2445, %v3261, 0
      %v3272 = vsel %vm2445, %v3263, 0
      %v3275 = vsel %vm2445, %v3265, 0
      %v3278 = vsel %vm2445, %v3267, 0
      %3280 = vmatprep.subr.bf16.mxu0 0
      %3281 = vmatpush1.bf16.xpose.msra.mxu0 %v3275
      %3282 = vmatprep.subr.bf16.mxu0 0
      %3283 = vmatpush1.bf16.xpose.msra.mxu0 %v3278
      %3284 = vmatprep.subr.bf16.mxu0 0
      %3285 = vmatpush1.bf16.xpose.msra.mxu0 0
      %3286 = vmatprep.subr.bf16.mxu0 0
      %3287 = vmatpush1.bf16.xpose.msra.mxu0 0
      %3288 = vmatprep.subr.bf16.mxu0 0
      %3289 = vmatpush1.bf16.xpose.msra.mxu0 0
      %3290 = vmatprep.subr.bf16.mxu0 0
      %3291 = vmatpush1.bf16.xpose.msra.mxu0 0
      %3292 = vmatprep.subr.bf16.mxu0 0
      %3293 = vmatpush1.bf16.xpose.msra.mxu0 0
      %3294 = vmatprep.subr.bf16.mxu0 0
      %3295 = vmatpush1.bf16.xpose.msra.mxu0 0
      %3296 = vmatprep.subr.bf16.mxu0 0
      %3297 = vmatpush1.bf16.xpose.msra.mxu0 0
      %3298 = vmatprep.subr.bf16.mxu0 0
      %3299 = vmatpush1.bf16.xpose.msra.mxu0 0
      %3300 = vmatprep.subr.bf16.mxu0 0
      %3301 = vmatpush1.bf16.xpose.msra.mxu0 0
      %3302 = vmatprep.subr.bf16.mxu0 0
      %3303 = vmatpush1.bf16.xpose.msra.mxu0 0
      %3304 = vmatprep.subr.bf16.mxu0 0
      %3305 = vmatpush1.bf16.xpose.msra.mxu0 0
      %3306 = vmatprep.subr.bf16.mxu0 0
      %3307 = vmatpush1.bf16.xpose.msra.mxu0 0
      %3308 = vmatprep.subr.bf16.mxu0 0
      %3309 = vmatpush1.bf16.xpose.msra.mxu0 0
      %3310 = vmatprep.subr.bf16.mxu0 0
      %3311 = vmatpush1.bf16.xpose.msra.mxu0 0
      %3312 = vmatprep.mubr.bf16.mxu0 0
      %3313 = vmatmul.mubr.bf16.gmra.mrb[0].mxu0 %v3269
      %v3314 = vpop.f32.mrb[0].mxu0
      %v3315 = vadd.f32 0.0, %v3314
      %v3316 = vpop.f32.mrb[0].mxu0
      %v3317 = vpop.f32.mrb[0].mxu0
      %v3318 = vadd.f32 0.0, %v3317
      %v3319 = vpop.f32.mrb[0].mxu0
      %3320 = vmatprep.mubr.bf16.mxu0 0
      %3321 = vmatmul.mubr.bf16.gmra.mrb[0].mxu0 %v3272
      %v3322 = vpop.f32.mrb[0].mxu0
      %v3323 = vadd.f32 0.0, %v3322
      %v3324 = vpop.f32.mrb[0].mxu0
      %v3325 = vpop.f32.mrb[0].mxu0
      %v3326 = vadd.f32 0.0, %v3325
      %v3327 = vpop.f32.mrb[0].mxu0
      %3328 = vdwg.mxu0
      %v3329 = vmul.f32 %v3315, 0.120385855
      %v3330 = vmul.f32 %v3318, 0.120385855
      %v3331 = vmul.f32 %v3323, 0.120385855
      %v3332 = vmul.f32 %v3326, 0.120385855
      %v3333 = vadd.f32 %v3329, %v1012
      %v3334 = vadd.f32 %v3330, %v1013
      %v3335 = vadd.f32 %v3331, %v1014
      %v3336 = vadd.f32 %v3332, %v1015
      %v3337 = vsel %vm2515, %v3333, -inf
      %3338 = vmax.xlane.f32.xlu0 %v3337
      %v3339 = vpop.xlane.xlu0 %3338
      %v3340 = vsel %vm2515, %v3334, -inf
      %3341 = vmax.xlane.f32.xlu0 %v3340
      %v3342 = vpop.xlane.xlu0 %3341
      %v3343 = vsel %vm2515, %v3335, -inf
      %3344 = vmax.xlane.f32.xlu0 %v3343
      %v3345 = vpop.xlane.xlu0 %3344
      %v3346 = vsel %vm2515, %v3336, -inf
      %3347 = vmax.xlane.f32.xlu0 %v3346
      %v3348 = vpop.xlane.xlu0 %3347
      %v3349 = vsub.f32 %v3333, %v3339
      %v3350 = vsub.f32 %v3334, %v3342
      %v3351 = vsub.f32 %v3335, %v3345
      %v3352 = vsub.f32 %v3336, %v3348
      %v3353 = vmul.f32 %v3349, 1.442695
      %v3354 = vpow.pop %v3353
      %v3355 = vmul.f32 %v3350, 1.442695
      %v3356 = vpow.pop %v3355
      %v3357 = vmul.f32 %v3351, 1.442695
      %v3358 = vpow.pop %v3357
      %v3359 = vmul.f32 %v3352, 1.442695
      %v3360 = vpow.pop %v3359
      %v3361 = vsel %vm2515, %v3354, 0.0
      %3362 = vadd.xlane.f32.xlu0 %v3361
      %v3363 = vpop.xlane.xlu0 %3362
      %v3364 = vsel %vm2515, %v3356, 0.0
      %3365 = vadd.xlane.f32.xlu0 %v3364
      %v3366 = vpop.xlane.xlu0 %3365
      %v3367 = vsel %vm2515, %v3358, 0.0
      %3368 = vadd.xlane.f32.xlu0 %v3367
      %v3369 = vpop.xlane.xlu0 %3368
      %v3370 = vsel %vm2515, %v3360, 0.0
      %3371 = vadd.xlane.f32.xlu0 %v3370
      %v3372 = vpop.xlane.xlu0 %3371
      %v3373 = vrcp.pop %v3363
      %v3374 = vrcp.pop %v3366
      %v3375 = vrcp.pop %v3369
      %v3376 = vrcp.pop %v3372
      %v3377 = vmul.f32 %v3354, %v3373
      %v3378 = vmul.f32 %v3356, %v3374
      %v3379 = vmul.f32 %v3358, %v3375
      %v3380 = vmul.f32 %v3360, %v3376
      %v3381 = vpack.c.bf16 %v3378, %v3377
      %v3382 = vpack.c.bf16 %v3380, %v3379
      %3383 = vrot.lane.b32.xlu0 %v2430, 78
      %v3384 = vpop.permute.xlu0 %3383
      %3385 = vrot.lane.b32.xlu0 %v2437, 78
      %v3386 = vpop.permute.xlu0 %3385
      %v3390 = vsel %vm2515, %v3381, 0
      %v3393 = vsel %vm2515, %v3382, 0
      %3395 = vmatprep.subr.bf16.mxu0 0
      %3396 = vmatpush1.bf16.msra.mxu0 %v3384
      %3397 = vmatprep.subr.bf16.mxu0 0
      %3398 = vmatpush1.bf16.msra.mxu0 %v3386
      %3399 = vmatprep.subr.bf16.mxu0 0
      %3400 = vmatpush1.bf16.msra.mxu0 0
      %3401 = vmatprep.subr.bf16.mxu0 0
      %3402 = vmatpush1.bf16.msra.mxu0 0
      %3403 = vmatprep.subr.bf16.mxu0 0
      %3404 = vmatpush1.bf16.msra.mxu0 0
      %3405 = vmatprep.subr.bf16.mxu0 0
      %3406 = vmatpush1.bf16.msra.mxu0 0
      %3407 = vmatprep.subr.bf16.mxu0 0
      %3408 = vmatpush1.bf16.msra.mxu0 0
      %3409 = vmatprep.subr.bf16.mxu0 0
      %3410 = vmatpush1.bf16.msra.mxu0 0
      %3411 = vmatprep.subr.bf16.mxu0 0
      %3412 = vmatpush1.bf16.msra.mxu0 0
      %3413 = vmatprep.subr.bf16.mxu0 0
      %3414 = vmatpush1.bf16.msra.mxu0 0
      %3415 = vmatprep.subr.bf16.mxu0 0
      %3416 = vmatpush1.bf16.msra.mxu0 0
      %3417 = vmatprep.subr.bf16.mxu0 0
      %3418 = vmatpush1.bf16.msra.mxu0 0
      %3419 = vmatprep.subr.bf16.mxu0 0
      %3420 = vmatpush1.bf16.msra.mxu0 0
      %3421 = vmatprep.subr.bf16.mxu0 0
      %3422 = vmatpush1.bf16.msra.mxu0 0
      %3423 = vmatprep.subr.bf16.mxu0 0
      %3424 = vmatpush1.bf16.msra.mxu0 0
      %3425 = vmatprep.subr.bf16.mxu0 0
      %3426 = vmatpush1.bf16.msra.mxu0 0
      %3427 = vmatprep.mubr.bf16.mxu0 0
      %3428 = vmatmul.mubr.bf16.gmra.mrb[0].mxu0 %v3390
      %v3429 = vpop.f32.mrb[0].mxu0
      %v3430 = vadd.f32 0.0, %v3429
      %v3431 = vpop.f32.mrb[0].mxu0
      %v3432 = vpop.f32.mrb[0].mxu0
      %v3433 = vadd.f32 0.0, %v3432
      %v3434 = vpop.f32.mrb[0].mxu0
      %3435 = vmatprep.mubr.bf16.mxu0 0
      %3436 = vmatmul.mubr.bf16.gmra.mrb[0].mxu0 %v3393
      %v3437 = vpop.f32.mrb[0].mxu0
      %v3438 = vadd.f32 0.0, %v3437
      %v3439 = vpop.f32.mrb[0].mxu0
      %v3440 = vpop.f32.mrb[0].mxu0
      %v3441 = vadd.f32 0.0, %v3440
      %v3442 = vpop.f32.mrb[0].mxu0
      %3443 = vdwg.mxu0
      %v3444 = vpack.c.bf16 %v3433, %v3430
      %v3445 = vpack.c.bf16 %v3441, %v3438
      %s3446 = scalar_lea.vmem %s619, 216
      %v3447 = vld [vmem:[%s3446] sm:$0xff]
      %v3448 = vld [vmem:[%s3446 + $0x8] sm:$0xf]
      %v3449 = vld [vmem:[%s3446 + $0xc] sm:$0xff]
      %v3450 = vld [vmem:[%s3446 + $0x14] sm:$0xf]
      %v3451 = vld [vmem:[%s3446 + $0x18] sm:$0xff]
      %v3452 = vld [vmem:[%s3446 + $0x20] sm:$0xf]
      %v3453 = vld [vmem:[%s3446 + $0x24] sm:$0xff]
      %v3454 = vld [vmem:[%s3446 + $0x2c] sm:$0xf]
      %v3455 = vld [vmem:[%s3446 + $0x30] sm:$0xff]
      %v3456 = vld [vmem:[%s3446 + $0x38] sm:$0xf]
      %v3457 = vld [vmem:[%s3446 + $0x3c] sm:$0xff]
      %v3458 = vld [vmem:[%s3446 + $0x44] sm:$0xf]
      %v3459 = vld [vmem:[%s3446 + $0x48] sm:$0xff]
      %v3460 = vld [vmem:[%s3446 + $0x50] sm:$0xf]
      %v3461 = vld [vmem:[%s3446 + $0x54] sm:$0xff]
      %v3462 = vld [vmem:[%s3446 + $0x5c] sm:$0xf]
      %v3463 = vld [vmem:[%s3446 + $0x60] sm:$0x77]
      %v3464 = vld [vmem:[%s3446 + $0x68] sm:$0x7]
      %v3483 = vunpack.c.l.b16 %v3447
      %v3484 = vunpack.c.h.b16 %v3447
      %v3485 = vunpack.c.l.b16 %v3448
      %v3486 = vunpack.c.l.b16 %v3449
      %v3487 = vunpack.c.h.b16 %v3449
      %v3488 = vunpack.c.l.b16 %v3450
      %v3489 = vunpack.c.l.b16 %v3451
      %v3490 = vunpack.c.h.b16 %v3451
      %v3491 = vunpack.c.l.b16 %v3452
      %v3492 = vunpack.c.l.b16 %v3453
      %v3493 = vunpack.c.h.b16 %v3453
      %v3494 = vunpack.c.l.b16 %v3454
      %v3495 = vunpack.c.l.b16 %v3455
      %v3496 = vunpack.c.h.b16 %v3455
      %v3497 = vunpack.c.l.b16 %v3456
      %v3498 = vunpack.c.l.b16 %v3457
      %v3499 = vunpack.c.h.b16 %v3457
      %v3500 = vunpack.c.l.b16 %v3458
      %v3501 = vunpack.c.l.b16 %v3459
      %v3502 = vunpack.c.h.b16 %v3459
      %v3503 = vunpack.c.l.b16 %v3460
      %v3504 = vunpack.c.l.b16 %v3461
      %v3505 = vunpack.c.h.b16 %v3461
      %v3506 = vunpack.c.l.b16 %v3462
      %v3507 = vunpack.c.l.b16 %v3463
      %v3508 = vunpack.c.h.b16 %v3463
      %v3509 = vunpack.c.l.b16 %v3464
      %v3510 = vpack.c.b16 %v3486, %v3483
      %v3511 = vpack.c.b16 %v3487, %v3484
      %v3512 = vpack.c.b16 %v3488, %v3485
      %v3513 = vpack.c.b16 %v3492, %v3489
      %v3514 = vpack.c.b16 %v3493, %v3490
      %v3515 = vpack.c.b16 %v3494, %v3491
      %v3516 = vpack.c.b16 %v3498, %v3495
      %v3517 = vpack.c.b16 %v3499, %v3496
      %v3518 = vpack.c.b16 %v3500, %v3497
      %v3519 = vpack.c.b16 %v3504, %v3501
      %v3520 = vpack.c.b16 %v3505, %v3502
      %v3521 = vpack.c.b16 %v3506, %v3503
      %v3522 = vpack.c.b16 %v3507, %v3507
      %v3523 = vpack.c.b16 %v3508, %v3508
      %v3524 = vpack.c.b16 %v3509, %v3509
      %v3538 = vsel %vm2445, %v3444, 0
      %v3541 = vsel %vm2445, %v3445, 0
      %v3544 = vand.u32 %v3522, %v2959
      %v3547 = vand.u32 %v3523, %v2959
      %v3550 = vand.u32 %v3524, %v2959
      %3552 = vmatprep.subr.bf16.mxu0 %v3511
      %3553 = vmatpush1.bf16.msra.mxu0 %v3510
      %3554 = vmatprep.subr.bf16.mxu0 %v3514
      %3555 = vmatpush1.bf16.msra.mxu0 %v3513
      %3556 = vmatprep.subr.bf16.mxu0 %v3517
      %3557 = vmatpush1.bf16.msra.mxu0 %v3516
      %3558 = vmatprep.subr.bf16.mxu0 %v3520
      %3559 = vmatpush1.bf16.msra.mxu0 %v3519
      %3560 = vmatprep.subr.bf16.mxu0 %v3547
      %3561 = vmatpush1.bf16.msra.mxu0 %v3544
      %3562 = vmatprep.subr.bf16.mxu0 0
      %3563 = vmatpush1.bf16.msra.mxu0 0
      %3564 = vmatprep.subr.bf16.mxu0 0
      %3565 = vmatpush1.bf16.msra.mxu0 0
      %3566 = vmatprep.subr.bf16.mxu0 0
      %3567 = vmatpush1.bf16.msra.mxu0 0
      %3568 = vmatprep.subr.bf16.mxu0 0
      %3569 = vmatpush1.bf16.msra.mxu0 0
      %3570 = vmatprep.subr.bf16.mxu0 0
      %3571 = vmatpush1.bf16.msra.mxu0 0
      %3572 = vmatprep.subr.bf16.mxu0 0
      %3573 = vmatpush1.bf16.msra.mxu0 0
      %3574 = vmatprep.subr.bf16.mxu0 0
      %3575 = vmatpush1.bf16.msra.mxu0 0
      %3576 = vmatprep.subr.bf16.mxu0 0
      %3577 = vmatpush1.bf16.msra.mxu0 0
      %3578 = vmatprep.subr.bf16.mxu0 0
      %3579 = vmatpush1.bf16.msra.mxu0 0
      %3580 = vmatprep.subr.bf16.mxu0 0
      %3581 = vmatpush1.bf16.msra.mxu0 0
      %3582 = vmatprep.subr.bf16.mxu0 0
      %3583 = vmatpush1.bf16.msra.mxu0 0
      %3584 = vmatprep.mubr.bf16.mxu0 0
      %3585 = vmatmul.mubr.bf16.gmra.mrb[0].mxu0 %v3538
      %v3586 = vpop.f32.mrb[0].mxu0
      %v3587 = vadd.f32 0.0, %v3586
      %v3588 = vpop.f32.mrb[0].mxu0
      %v3589 = vadd.f32 0.0, %v3588
      %v3590 = vpop.f32.mrb[0].mxu0
      %v3591 = vadd.f32 0.0, %v3590
      %v3592 = vpop.f32.mrb[0].mxu0
      %v3593 = vadd.f32 0.0, %v3592
      %3594 = vmatprep.mubr.bf16.mxu0 0
      %3595 = vmatmul.mubr.bf16.gmra.mrb[0].mxu0 %v3541
      %v3596 = vpop.f32.mrb[0].mxu0
      %v3597 = vadd.f32 0.0, %v3596
      %v3598 = vpop.f32.mrb[0].mxu0
      %v3599 = vadd.f32 0.0, %v3598
      %v3600 = vpop.f32.mrb[0].mxu0
      %v3601 = vadd.f32 0.0, %v3600
      %v3602 = vpop.f32.mrb[0].mxu0
      %v3603 = vadd.f32 0.0, %v3602
      %3604 = vdwg.mxu0
      %3605 = vmatprep.subr.bf16.mxu0 0
      %3606 = vmatpush1.bf16.msra.mxu0 %v3512
      %3607 = vmatprep.subr.bf16.mxu0 0
      %3608 = vmatpush1.bf16.msra.mxu0 %v3515
      %3609 = vmatprep.subr.bf16.mxu0 0
      %3610 = vmatpush1.bf16.msra.mxu0 %v3518
      %3611 = vmatprep.subr.bf16.mxu0 0
      %3612 = vmatpush1.bf16.msra.mxu0 %v3521
      %3613 = vmatprep.subr.bf16.mxu0 0
      %3614 = vmatpush1.bf16.msra.mxu0 %v3550
      %3615 = vmatprep.subr.bf16.mxu0 0
      %3616 = vmatpush1.bf16.msra.mxu0 0
      %3617 = vmatprep.subr.bf16.mxu0 0
      %3618 = vmatpush1.bf16.msra.mxu0 0
      %3619 = vmatprep.subr.bf16.mxu0 0
      %3620 = vmatpush1.bf16.msra.mxu0 0
      %3621 = vmatprep.subr.bf16.mxu0 0
      %3622 = vmatpush1.bf16.msra.mxu0 0
      %3623 = vmatprep.subr.bf16.mxu0 0
      %3624 = vmatpush1.bf16.msra.mxu0 0
      %3625 = vmatprep.subr.bf16.mxu0 0
      %3626 = vmatpush1.bf16.msra.mxu0 0
      %3627 = vmatprep.subr.bf16.mxu0 0
      %3628 = vmatpush1.bf16.msra.mxu0 0
      %3629 = vmatprep.subr.bf16.mxu0 0
      %3630 = vmatpush1.bf16.msra.mxu0 0
      %3631 = vmatprep.subr.bf16.mxu0 0
      %3632 = vmatpush1.bf16.msra.mxu0 0
      %3633 = vmatprep.subr.bf16.mxu0 0
      %3634 = vmatpush1.bf16.msra.mxu0 0
      %3635 = vmatprep.subr.bf16.mxu0 0
      %3636 = vmatpush1.bf16.msra.mxu0 0
      %3637 = vmatprep.mubr.bf16.mxu0 0
      %3638 = vmatmul.mubr.bf16.gmra.mrb[0].mxu0 %v3538
      %v3639 = vpop.f32.mrb[0].mxu0
      %v3640 = vadd.f32 0.0, %v3639
      %v3641 = vpop.f32.mrb[0].mxu0
      %v3642 = vpop.f32.mrb[0].mxu0
      %v3643 = vadd.f32 0.0, %v3642
      %v3644 = vpop.f32.mrb[0].mxu0
      %3645 = vmatprep.mubr.bf16.mxu0 0
      %3646 = vmatmul.mubr.bf16.gmra.mrb[0].mxu0 %v3541
      %v3647 = vpop.f32.mrb[0].mxu0
      %v3648 = vadd.f32 0.0, %v3647
      %v3649 = vpop.f32.mrb[0].mxu0
      %v3650 = vpop.f32.mrb[0].mxu0
      %v3651 = vadd.f32 0.0, %v3650
      %v3652 = vpop.f32.mrb[0].mxu0
      %3653 = vdwg.mxu0
      %v3654 = vadd.f32 %v3193, %v3587
      %v3655 = vadd.f32 %v3195, %v3589
      %v3656 = vadd.f32 %v3246, %v3640
      %v3657 = vadd.f32 %v3197, %v3591
      %v3658 = vadd.f32 %v3199, %v3593
      %v3659 = vadd.f32 %v3249, %v3643
      %v3660 = vadd.f32 %v3203, %v3597
      %v3661 = vadd.f32 %v3205, %v3599
      %v3662 = vadd.f32 %v3254, %v3648
      %v3663 = vadd.f32 %v3207, %v3601
      %v3664 = vadd.f32 %v3209, %v3603
      %v3665 = vadd.f32 %v3257, %v3651
      %3666 = vrot.lane.b32.xlu0 %v2426, 49
      %v3667 = vpop.permute.xlu0 %3666
      %3668 = vrot.lane.b32.xlu0 %v2427, 49
      %v3669 = vpop.permute.xlu0 %3668
      %3670 = vrot.lane.b32.xlu0 %v2433, 49
      %v3671 = vpop.permute.xlu0 %3670
      %3672 = vrot.lane.b32.xlu0 %v2434, 49
      %v3673 = vpop.permute.xlu0 %3672
      %vm3674 = vcmask 400384
      %v3675 = vsel %vm3674, %v3667, %v3669
      %v3676 = vsel %vm3674, %v3671, %v3673
      %3677 = vrot.lane.b32.xlu0 %v2428, 29
      %v3678 = vpop.permute.xlu0 %3677
      %3679 = vrot.lane.b32.xlu0 %v2429, 29
      %v3680 = vpop.permute.xlu0 %3679
      %3681 = vrot.lane.b32.xlu0 %v2435, 29
      %v3682 = vpop.permute.xlu0 %3681
      %3683 = vrot.lane.b32.xlu0 %v2436, 29
      %v3684 = vpop.permute.xlu0 %3683
      %vm3685 = vcmask 236544
      %v3686 = vsel %vm3685, %v3678, %v3680
      %v3687 = vsel %vm3685, %v3682, %v3684
      %v3689 = vsel %vm2445, %v3675, 0
      %v3692 = vsel %vm2445, %v3676, 0
      %v3695 = vsel %vm2445, %v3686, 0
      %v3698 = vsel %vm2445, %v3687, 0
      %3700 = vmatprep.subr.bf16.mxu0 0
      %3701 = vmatpush1.bf16.xpose.msra.mxu0 %v3695
      %3702 = vmatprep.subr.bf16.mxu0 0
      %3703 = vmatpush1.bf16.xpose.msra.mxu0 %v3698
      %3704 = vmatprep.subr.bf16.mxu0 0
      %3705 = vmatpush1.bf16.xpose.msra.mxu0 0
      %3706 = vmatprep.subr.bf16.mxu0 0
      %3707 = vmatpush1.bf16.xpose.msra.mxu0 0
      %3708 = vmatprep.subr.bf16.mxu0 0
      %3709 = vmatpush1.bf16.xpose.msra.mxu0 0
      %3710 = vmatprep.subr.bf16.mxu0 0
      %3711 = vmatpush1.bf16.xpose.msra.mxu0 0
      %3712 = vmatprep.subr.bf16.mxu0 0
      %3713 = vmatpush1.bf16.xpose.msra.mxu0 0
      %3714 = vmatprep.subr.bf16.mxu0 0
      %3715 = vmatpush1.bf16.xpose.msra.mxu0 0
      %3716 = vmatprep.subr.bf16.mxu0 0
      %3717 = vmatpush1.bf16.xpose.msra.mxu0 0
      %3718 = vmatprep.subr.bf16.mxu0 0
      %3719 = vmatpush1.bf16.xpose.msra.mxu0 0
      %3720 = vmatprep.subr.bf16.mxu0 0
      %3721 = vmatpush1.bf16.xpose.msra.mxu0 0
      %3722 = vmatprep.subr.bf16.mxu0 0
      %3723 = vmatpush1.bf16.xpose.msra.mxu0 0
      %3724 = vmatprep.subr.bf16.mxu0 0
      %3725 = vmatpush1.bf16.xpose.msra.mxu0 0
      %3726 = vmatprep.subr.bf16.mxu0 0
      %3727 = vmatpush1.bf16.xpose.msra.mxu0 0
      %3728 = vmatprep.subr.bf16.mxu0 0
      %3729 = vmatpush1.bf16.xpose.msra.mxu0 0
      %3730 = vmatprep.subr.bf16.mxu0 0
      %3731 = vmatpush1.bf16.xpose.msra.mxu0 0
      %3732 = vmatprep.mubr.bf16.mxu0 0
      %3733 = vmatmul.mubr.bf16.gmra.mrb[0].mxu0 %v3689
      %v3734 = vpop.f32.mrb[0].mxu0
      %v3735 = vadd.f32 0.0, %v3734
      %v3736 = vpop.f32.mrb[0].mxu0
      %v3737 = vpop.f32.mrb[0].mxu0
      %v3738 = vadd.f32 0.0, %v3737
      %v3739 = vpop.f32.mrb[0].mxu0
      %3740 = vmatprep.mubr.bf16.mxu0 0
      %3741 = vmatmul.mubr.bf16.gmra.mrb[0].mxu0 %v3692
      %v3742 = vpop.f32.mrb[0].mxu0
      %v3743 = vadd.f32 0.0, %v3742
      %v3744 = vpop.f32.mrb[0].mxu0
      %v3745 = vpop.f32.mrb[0].mxu0
      %v3746 = vadd.f32 0.0, %v3745
      %v3747 = vpop.f32.mrb[0].mxu0
      %3748 = vdwg.mxu0
      %v3749 = vmul.f32 %v3735, 0.120385855
      %v3750 = vmul.f32 %v3738, 0.120385855
      %v3751 = vmul.f32 %v3743, 0.120385855
      %v3752 = vmul.f32 %v3746, 0.120385855
      %v3753 = vadd.f32 %v3749, %v1012
      %v3754 = vadd.f32 %v3750, %v1013
      %v3755 = vadd.f32 %v3751, %v1014
      %v3756 = vadd.f32 %v3752, %v1015
      %v3757 = vsel %vm2515, %v3753, -inf
      %3758 = vmax.xlane.f32.xlu0 %v3757
      %v3759 = vpop.xlane.xlu0 %3758
      %v3760 = vsel %vm2515, %v3754, -inf
      %3761 = vmax.xlane.f32.xlu0 %v3760
      %v3762 = vpop.xlane.xlu0 %3761
      %v3763 = vsel %vm2515, %v3755, -inf
      %3764 = vmax.xlane.f32.xlu0 %v3763
      %v3765 = vpop.xlane.xlu0 %3764
      %v3766 = vsel %vm2515, %v3756, -inf
      %3767 = vmax.xlane.f32.xlu0 %v3766
      %v3768 = vpop.xlane.xlu0 %3767
      %v3769 = vsub.f32 %v3753, %v3759
      %v3770 = vsub.f32 %v3754, %v3762
      %v3771 = vsub.f32 %v3755, %v3765
      %v3772 = vsub.f32 %v3756, %v3768
      %v3773 = vmul.f32 %v3769, 1.442695
      %v3774 = vpow.pop %v3773
      %v3775 = vmul.f32 %v3770, 1.442695
      %v3776 = vpow.pop %v3775
      %v3777 = vmul.f32 %v3771, 1.442695
      %v3778 = vpow.pop %v3777
      %v3779 = vmul.f32 %v3772, 1.442695
      %v3780 = vpow.pop %v3779
      %v3781 = vsel %vm2515, %v3774, 0.0
      %3782 = vadd.xlane.f32.xlu0 %v3781
      %v3783 = vpop.xlane.xlu0 %3782
      %v3784 = vsel %vm2515, %v3776, 0.0
      %3785 = vadd.xlane.f32.xlu0 %v3784
      %v3786 = vpop.xlane.xlu0 %3785
      %v3787 = vsel %vm2515, %v3778, 0.0
      %3788 = vadd.xlane.f32.xlu0 %v3787
      %v3789 = vpop.xlane.xlu0 %3788
      %v3790 = vsel %vm2515, %v3780, 0.0
      %3791 = vadd.xlane.f32.xlu0 %v3790
      %v3792 = vpop.xlane.xlu0 %3791
      %v3793 = vrcp.pop %v3783
      %v3794 = vrcp.pop %v3786
      %v3795 = vrcp.pop %v3789
      %v3796 = vrcp.pop %v3792
      %v3797 = vmul.f32 %v3774, %v3793
      %v3798 = vmul.f32 %v3776, %v3794
      %v3799 = vmul.f32 %v3778, %v3795
      %v3800 = vmul.f32 %v3780, %v3796
      %v3801 = vpack.c.bf16 %v3798, %v3797
      %v3802 = vpack.c.bf16 %v3800, %v3799
      %3805 = vrot.lane.b32.xlu0 %v2430, 9
      %v3806 = vpop.permute.xlu0 %3805
      %3807 = vrot.lane.b32.xlu0 %v2431, 9
      %v3808 = vpop.permute.xlu0 %3807
      %3809 = vrot.lane.b32.xlu0 %v2437, 9
      %v3810 = vpop.permute.xlu0 %3809
      %3811 = vrot.lane.b32.xlu0 %v2438, 9
      %v3812 = vpop.permute.xlu0 %3811
      %vm3813 = vcmask 72704
      %v3814 = vsel %vm3813, %v3806, %v3808
      %v3815 = vsel %vm3813, %v3810, %v3812
      %v3819 = vsel %vm2515, %v3801, 0
      %v3822 = vsel %vm2515, %v3802, 0
      %3824 = vmatprep.subr.bf16.mxu0 0
      %3825 = vmatpush1.bf16.msra.mxu0 %v3814
      %3826 = vmatprep.subr.bf16.mxu0 0
      %3827 = vmatpush1.bf16.msra.mxu0 %v3815
      %3828 = vmatprep.subr.bf16.mxu0 0
      %3829 = vmatpush1.bf16.msra.mxu0 0
      %3830 = vmatprep.subr.bf16.mxu0 0
      %3831 = vmatpush1.bf16.msra.mxu0 0
      %3832 = vmatprep.subr.bf16.mxu0 0
      %3833 = vmatpush1.bf16.msra.mxu0 0
      %3834 = vmatprep.subr.bf16.mxu0 0
      %3835 = vmatpush1.bf16.msra.mxu0 0
      %3836 = vmatprep.subr.bf16.mxu0 0
      %3837 = vmatpush1.bf16.msra.mxu0 0
      %3838 = vmatprep.subr.bf16.mxu0 0
      %3839 = vmatpush1.bf16.msra.mxu0 0
      %3840 = vmatprep.subr.bf16.mxu0 0
      %3841 = vmatpush1.bf16.msra.mxu0 0
      %3842 = vmatprep.subr.bf16.mxu0 0
      %3843 = vmatpush1.bf16.msra.mxu0 0
      %3844 = vmatprep.subr.bf16.mxu0 0
      %3845 = vmatpush1.bf16.msra.mxu0 0
      %3846 = vmatprep.subr.bf16.mxu0 0
      %3847 = vmatpush1.bf16.msra.mxu0 0
      %3848 = vmatprep.subr.bf16.mxu0 0
      %3849 = vmatpush1.bf16.msra.mxu0 0
      %3850 = vmatprep.subr.bf16.mxu0 0
      %3851 = vmatpush1.bf16.msra.mxu0 0
      %3852 = vmatprep.subr.bf16.mxu0 0
      %3853 = vmatpush1.bf16.msra.mxu0 0
      %3854 = vmatprep.subr.bf16.mxu0 0
      %3855 = vmatpush1.bf16.msra.mxu0 0
      %3856 = vmatprep.mubr.bf16.mxu0 0
      %3857 = vmatmul.mubr.bf16.gmra.mrb[0].mxu0 %v3819
      %v3858 = vpop.f32.mrb[0].mxu0
      %v3859 = vadd.f32 0.0, %v3858
      %v3860 = vpop.f32.mrb[0].mxu0
      %v3861 = vpop.f32.mrb[0].mxu0
      %v3862 = vadd.f32 0.0, %v3861
      %v3863 = vpop.f32.mrb[0].mxu0
      %3864 = vmatprep.mubr.bf16.mxu0 0
      %3865 = vmatmul.mubr.bf16.gmra.mrb[0].mxu0 %v3822
      %v3866 = vpop.f32.mrb[0].mxu0
      %v3867 = vadd.f32 0.0, %v3866
      %v3868 = vpop.f32.mrb[0].mxu0
      %v3869 = vpop.f32.mrb[0].mxu0
      %v3870 = vadd.f32 0.0, %v3869
      %v3871 = vpop.f32.mrb[0].mxu0
      %3872 = vdwg.mxu0
      %v3873 = vpack.c.bf16 %v3862, %v3859
      %v3874 = vpack.c.bf16 %v3870, %v3867
      %s3875 = scalar_lea.vmem %s619, 324
      %v3876 = vld [vmem:[%s3875] sm:$0xff]
      %v3877 = vld [vmem:[%s3875 + $0x8] sm:$0xf]
      %v3878 = vld [vmem:[%s3875 + $0xc] sm:$0xff]
      %v3879 = vld [vmem:[%s3875 + $0x14] sm:$0xf]
      %v3880 = vld [vmem:[%s3875 + $0x18] sm:$0xff]
      %v3881 = vld [vmem:[%s3875 + $0x20] sm:$0xf]
      %v3882 = vld [vmem:[%s3875 + $0x24] sm:$0xff]
      %v3883 = vld [vmem:[%s3875 + $0x2c] sm:$0xf]
      %v3884 = vld [vmem:[%s3875 + $0x30] sm:$0xff]
      %v3885 = vld [vmem:[%s3875 + $0x38] sm:$0xf]
      %v3886 = vld [vmem:[%s3875 + $0x3c] sm:$0xff]
      %v3887 = vld [vmem:[%s3875 + $0x44] sm:$0xf]
      %v3888 = vld [vmem:[%s3875 + $0x48] sm:$0xff]
      %v3889 = vld [vmem:[%s3875 + $0x50] sm:$0xf]
      %v3890 = vld [vmem:[%s3875 + $0x54] sm:$0xff]
      %v3891 = vld [vmem:[%s3875 + $0x5c] sm:$0xf]
      %v3892 = vld [vmem:[%s3875 + $0x60] sm:$0x77]
      %v3893 = vld [vmem:[%s3875 + $0x68] sm:$0x7]
      %v3912 = vunpack.c.l.b16 %v3876
      %v3913 = vunpack.c.h.b16 %v3876
      %v3914 = vunpack.c.l.b16 %v3877
      %v3915 = vunpack.c.l.b16 %v3878
      %v3916 = vunpack.c.h.b16 %v3878
      %v3917 = vunpack.c.l.b16 %v3879
      %v3918 = vunpack.c.l.b16 %v3880
      %v3919 = vunpack.c.h.b16 %v3880
      %v3920 = vunpack.c.l.b16 %v3881
      %v3921 = vunpack.c.l.b16 %v3882
      %v3922 = vunpack.c.h.b16 %v3882
      %v3923 = vunpack.c.l.b16 %v3883
      %v3924 = vunpack.c.l.b16 %v3884
      %v3925 = vunpack.c.h.b16 %v3884
      %v3926 = vunpack.c.l.b16 %v3885
      %v3927 = vunpack.c.l.b16 %v3886
      %v3928 = vunpack.c.h.b16 %v3886
      %v3929 = vunpack.c.l.b16 %v3887
      %v3930 = vunpack.c.l.b16 %v3888
      %v3931 = vunpack.c.h.b16 %v3888
      %v3932 = vunpack.c.l.b16 %v3889
      %v3933 = vunpack.c.l.b16 %v3890
      %v3934 = vunpack.c.h.b16 %v3890
      %v3935 = vunpack.c.l.b16 %v3891
      %v3936 = vunpack.c.l.b16 %v3892
      %v3937 = vunpack.c.h.b16 %v3892
      %v3938 = vunpack.c.l.b16 %v3893
      %v3939 = vpack.c.b16 %v3915, %v3912
      %v3940 = vpack.c.b16 %v3916, %v3913
      %v3941 = vpack.c.b16 %v3917, %v3914
      %v3942 = vpack.c.b16 %v3921, %v3918
      %v3943 = vpack.c.b16 %v3922, %v3919
      %v3944 = vpack.c.b16 %v3923, %v3920
      %v3945 = vpack.c.b16 %v3927, %v3924
      %v3946 = vpack.c.b16 %v3928, %v3925
      %v3947 = vpack.c.b16 %v3929, %v3926
      %v3948 = vpack.c.b16 %v3933, %v3930
      %v3949 = vpack.c.b16 %v3934, %v3931
      %v3950 = vpack.c.b16 %v3935, %v3932
      %v3951 = vpack.c.b16 %v3936, %v3936
      %v3952 = vpack.c.b16 %v3937, %v3937
      %v3953 = vpack.c.b16 %v3938, %v3938
      %v3967 = vsel %vm2445, %v3873, 0
      %v3970 = vsel %vm2445, %v3874, 0
      %v3973 = vand.u32 %v3951, %v2959
      %v3976 = vand.u32 %v3952, %v2959
      %v3979 = vand.u32 %v3953, %v2959
      %3981 = vmatprep.subr.bf16.mxu0 %v3940
      %3982 = vmatpush1.bf16.msra.mxu0 %v3939
      %3983 = vmatprep.subr.bf16.mxu0 %v3943
      %3984 = vmatpush1.bf16.msra.mxu0 %v3942
      %3985 = vmatprep.subr.bf16.mxu0 %v3946
      %3986 = vmatpush1.bf16.msra.mxu0 %v3945
      %3987 = vmatprep.subr.bf16.mxu0 %v3949
      %3988 = vmatpush1.bf16.msra.mxu0 %v3948
      %3989 = vmatprep.subr.bf16.mxu0 %v3976
      %3990 = vmatpush1.bf16.msra.mxu0 %v3973
      %3991 = vmatprep.subr.bf16.mxu0 0
      %3992 = vmatpush1.bf16.msra.mxu0 0
      %3993 = vmatprep.subr.bf16.mxu0 0
      %3994 = vmatpush1.bf16.msra.mxu0 0
      %3995 = vmatprep.subr.bf16.mxu0 0
      %3996 = vmatpush1.bf16.msra.mxu0 0
      %3997 = vmatprep.subr.bf16.mxu0 0
      %3998 = vmatpush1.bf16.msra.mxu0 0
      %3999 = vmatprep.subr.bf16.mxu0 0
      %4000 = vmatpush1.bf16.msra.mxu0 0
      %4001 = vmatprep.subr.bf16.mxu0 0
      %4002 = vmatpush1.bf16.msra.mxu0 0
      %4003 = vmatprep.subr.bf16.mxu0 0
      %4004 = vmatpush1.bf16.msra.mxu0 0
      %4005 = vmatprep.subr.bf16.mxu0 0
      %4006 = vmatpush1.bf16.msra.mxu0 0
      %4007 = vmatprep.subr.bf16.mxu0 0
      %4008 = vmatpush1.bf16.msra.mxu0 0
      %4009 = vmatprep.subr.bf16.mxu0 0
      %4010 = vmatpush1.bf16.msra.mxu0 0
      %4011 = vmatprep.subr.bf16.mxu0 0
      %4012 = vmatpush1.bf16.msra.mxu0 0
      %4013 = vmatprep.mubr.bf16.mxu0 0
      %4014 = vmatmul.mubr.bf16.gmra.mrb[0].mxu0 %v3967
      %v4015 = vpop.f32.mrb[0].mxu0
      %v4016 = vadd.f32 0.0, %v4015
      %v4017 = vpop.f32.mrb[0].mxu0
      %v4018 = vadd.f32 0.0, %v4017
      %v4019 = vpop.f32.mrb[0].mxu0
      %v4020 = vadd.f32 0.0, %v4019
      %v4021 = vpop.f32.mrb[0].mxu0
      %v4022 = vadd.f32 0.0, %v4021
      %4023 = vmatprep.mubr.bf16.mxu0 0
      %4024 = vmatmul.mubr.bf16.gmra.mrb[0].mxu0 %v3970
      %v4025 = vpop.f32.mrb[0].mxu0
      %v4026 = vadd.f32 0.0, %v4025
      %v4027 = vpop.f32.mrb[0].mxu0
      %v4028 = vadd.f32 0.0, %v4027
      %v4029 = vpop.f32.mrb[0].mxu0
      %v4030 = vadd.f32 0.0, %v4029
      %v4031 = vpop.f32.mrb[0].mxu0
      %v4032 = vadd.f32 0.0, %v4031
      %4033 = vdwg.mxu0
      %4034 = vmatprep.subr.bf16.mxu0 0
      %4035 = vmatpush1.bf16.msra.mxu0 %v3941
      %4036 = vmatprep.subr.bf16.mxu0 0
      %4037 = vmatpush1.bf16.msra.mxu0 %v3944
      %4038 = vmatprep.subr.bf16.mxu0 0
      %4039 = vmatpush1.bf16.msra.mxu0 %v3947
      %4040 = vmatprep.subr.bf16.mxu0 0
      %4041 = vmatpush1.bf16.msra.mxu0 %v3950
      %4042 = vmatprep.subr.bf16.mxu0 0
      %4043 = vmatpush1.bf16.msra.mxu0 %v3979
      %4044 = vmatprep.subr.bf16.mxu0 0
      %4045 = vmatpush1.bf16.msra.mxu0 0
      %4046 = vmatprep.subr.bf16.mxu0 0
      %4047 = vmatpush1.bf16.msra.mxu0 0
      %4048 = vmatprep.subr.bf16.mxu0 0
      %4049 = vmatpush1.bf16.msra.mxu0 0
      %4050 = vmatprep.subr.bf16.mxu0 0
      %4051 = vmatpush1.bf16.msra.mxu0 0
      %4052 = vmatprep.subr.bf16.mxu0 0
      %4053 = vmatpush1.bf16.msra.mxu0 0
      %4054 = vmatprep.subr.bf16.mxu0 0
      %4055 = vmatpush1.bf16.msra.mxu0 0
      %4056 = vmatprep.subr.bf16.mxu0 0
      %4057 = vmatpush1.bf16.msra.mxu0 0
      %4058 = vmatprep.subr.bf16.mxu0 0
      %4059 = vmatpush1.bf16.msra.mxu0 0
      %4060 = vmatprep.subr.bf16.mxu0 0
      %4061 = vmatpush1.bf16.msra.mxu0 0
      %4062 = vmatprep.subr.bf16.mxu0 0
      %4063 = vmatpush1.bf16.msra.mxu0 0
      %4064 = vmatprep.subr.bf16.mxu0 0
      %4065 = vmatpush1.bf16.msra.mxu0 0
      %4066 = vmatprep.mubr.bf16.mxu0 0
      %4067 = vmatmul.mubr.bf16.gmra.mrb[0].mxu0 %v3967
      %v4068 = vpop.f32.mrb[0].mxu0
      %v4069 = vadd.f32 0.0, %v4068
      %v4070 = vpop.f32.mrb[0].mxu0
      %v4071 = vpop.f32.mrb[0].mxu0
      %v4072 = vadd.f32 0.0, %v4071
      %v4073 = vpop.f32.mrb[0].mxu0
      %4074 = vmatprep.mubr.bf16.mxu0 0
      %4075 = vmatmul.mubr.bf16.gmra.mrb[0].mxu0 %v3970
      %v4076 = vpop.f32.mrb[0].mxu0
      %v4077 = vadd.f32 0.0, %v4076
      %v4078 = vpop.f32.mrb[0].mxu0
      %v4079 = vpop.f32.mrb[0].mxu0
      %v4080 = vadd.f32 0.0, %v4079
      %v4081 = vpop.f32.mrb[0].mxu0
      %4082 = vdwg.mxu0
      %v4083 = vadd.f32 %v3654, %v4016
      %v4084 = vadd.f32 %v3655, %v4018
      %v4085 = vadd.f32 %v3656, %v4069
      %v4086 = vadd.f32 %v3657, %v4020
      %v4087 = vadd.f32 %v3658, %v4022
      %v4088 = vadd.f32 %v3659, %v4072
      %v4089 = vadd.f32 %v3660, %v4026
      %v4090 = vadd.f32 %v3661, %v4028
      %v4091 = vadd.f32 %v3662, %v4077
      %v4092 = vadd.f32 %v3663, %v4030
      %v4093 = vadd.f32 %v3664, %v4032
      %v4094 = vadd.f32 %v3665, %v4080
      %v4095 = vadd.f32 %v1000, %v4083
      %v4096 = vadd.f32 %v1001, %v4084
      %v4097 = vadd.f32 %v1002, %v4085
      %v4098 = vadd.f32 %v1003, %v4086
      %v4099 = vadd.f32 %v1004, %v4087
      %v4100 = vadd.f32 %v1005, %v4088
      %v4101 = vadd.f32 %v1006, %v4089
      %v4102 = vadd.f32 %v1007, %v4090
      %v4103 = vadd.f32 %v1008, %v4091
      %v4104 = vadd.f32 %v1009, %v4092
      %v4105 = vadd.f32 %v1010, %v4093
      %v4106 = vadd.f32 %v1011, %v4094
      %v4107 = vld [vmem:[%s623] sm:$0x7]
      %v4109 = vlaneseq
      %v4110 = vshrl.u32 %v4109, 7
      %v4111 = vsub.s32 0, %v4110
      %v4112 = vrot.slane %v4107, %v4111
      %v4113 = vlaneseq
      %v4114 = vshrl.u32 %v4113, 7
      %v4115 = vsub.s32 1, %v4114
      %v4116 = vrot.slane %v4107, %v4115
      %v4117 = vlaneseq
      %v4118 = vshrl.u32 %v4117, 7
      %v4119 = vsub.s32 2, %v4118
      %v4120 = vrot.slane %v4107, %v4119
      %v4124 = vadd.f32 %v4095, %v4112
      %v4125 = vadd.f32 %v4096, %v4116
      %v4126 = vadd.f32 %v4097, %v4120
      %v4127 = vadd.f32 %v4098, %v4112
      %v4128 = vadd.f32 %v4099, %v4116
      %v4129 = vadd.f32 %v4100, %v4120
      %v4130 = vadd.f32 %v4101, %v4112
      %v4131 = vadd.f32 %v4102, %v4116
      %v4132 = vadd.f32 %v4103, %v4120
      %v4133 = vadd.f32 %v4104, %v4112
      %v4134 = vadd.f32 %v4105, %v4116
      %v4135 = vadd.f32 %v4106, %v4120
      %v4136 = vld [vmem:[%s627] sm:$0x7]
      %v4137 = vld [vmem:[%s631] sm:$0x7]
      %v4138 = vadd.f32 %v4124, %v4125
      %v4139 = vsel %vm1019, %v4126, 0.0
      %v4140 = vadd.f32 %v4138, %v4139
      %4141 = vadd.xlane.f32.xlu0 %v4140
      %v4142 = vpop.xlane.xlu0 %4141
      %v4143 = vadd.f32 %v4127, %v4128
      %v4144 = vsel %vm1019, %v4129, 0.0
      %v4145 = vadd.f32 %v4143, %v4144
      %4146 = vadd.xlane.f32.xlu0 %v4145
      %v4147 = vpop.xlane.xlu0 %4146
      %v4148 = vadd.f32 %v4130, %v4131
      %v4149 = vsel %vm1019, %v4132, 0.0
      %v4150 = vadd.f32 %v4148, %v4149
      %4151 = vadd.xlane.f32.xlu0 %v4150
      %v4152 = vpop.xlane.xlu0 %4151
      %v4153 = vadd.f32 %v4133, %v4134
      %v4154 = vsel %vm1019, %v4135, 0.0
      %v4155 = vadd.f32 %v4153, %v4154
      %4156 = vadd.xlane.f32.xlu0 %v4155
      %v4157 = vpop.xlane.xlu0 %4156
      %v4158 = vmul.f32 %v4142, %v1039
      %v4159 = vmul.f32 %v4147, %v1039
      %v4160 = vmul.f32 %v4152, %v1039
      %v4161 = vmul.f32 %v4157, %v1039
      %v4162 = vsub.f32 %v4124, %v4158
      %v4163 = vsub.f32 %v4125, %v4158
      %v4164 = vsub.f32 %v4126, %v4158
      %v4165 = vsub.f32 %v4127, %v4159
      %v4166 = vsub.f32 %v4128, %v4159
      %v4167 = vsub.f32 %v4129, %v4159
      %v4168 = vsub.f32 %v4130, %v4160
      %v4169 = vsub.f32 %v4131, %v4160
      %v4170 = vsub.f32 %v4132, %v4160
      %v4171 = vsub.f32 %v4133, %v4161
      %v4172 = vsub.f32 %v4134, %v4161
      %v4173 = vsub.f32 %v4135, %v4161
      %v4174 = vmul.f32 %v4162, %v4162
      %v4175 = vmul.f32 %v4163, %v4163
      %v4176 = vmul.f32 %v4164, %v4164
      %v4177 = vmul.f32 %v4165, %v4165
      %v4178 = vmul.f32 %v4166, %v4166
      %v4179 = vmul.f32 %v4167, %v4167
      %v4180 = vmul.f32 %v4168, %v4168
      %v4181 = vmul.f32 %v4169, %v4169
      %v4182 = vmul.f32 %v4170, %v4170
      %v4183 = vmul.f32 %v4171, %v4171
      %v4184 = vmul.f32 %v4172, %v4172
      %v4185 = vmul.f32 %v4173, %v4173
      %v4186 = vadd.f32 %v4174, %v4175
      %v4187 = vsel %vm1019, %v4176, 0.0
      %v4188 = vadd.f32 %v4186, %v4187
      %4189 = vadd.xlane.f32.xlu0 %v4188
      %v4190 = vpop.xlane.xlu0 %4189
      %v4191 = vadd.f32 %v4177, %v4178
      %v4192 = vsel %vm1019, %v4179, 0.0
      %v4193 = vadd.f32 %v4191, %v4192
      %4194 = vadd.xlane.f32.xlu0 %v4193
      %v4195 = vpop.xlane.xlu0 %4194
      %v4196 = vadd.f32 %v4180, %v4181
      %v4197 = vsel %vm1019, %v4182, 0.0
      %v4198 = vadd.f32 %v4196, %v4197
      %4199 = vadd.xlane.f32.xlu0 %v4198
      %v4200 = vpop.xlane.xlu0 %4199
      %v4201 = vadd.f32 %v4183, %v4184
      %v4202 = vsel %vm1019, %v4185, 0.0
      %v4203 = vadd.f32 %v4201, %v4202
      %4204 = vadd.xlane.f32.xlu0 %v4203
      %v4205 = vpop.xlane.xlu0 %4204
      %v4206 = vmul.f32 %v4190, %v1039
      %v4207 = vmul.f32 %v4195, %v1039
      %v4208 = vmul.f32 %v4200, %v1039
      %v4209 = vmul.f32 %v4205, %v1039
      %v4210 = vadd.f32 %v4206, 1e-05
      %v4211 = vadd.f32 %v4207, 1e-05
      %v4212 = vadd.f32 %v4208, 1e-05
      %v4213 = vadd.f32 %v4209, 1e-05
      %v4214 = vrsqrt.pop %v4210
      %v4215 = vrsqrt.pop %v4211
      %v4216 = vrsqrt.pop %v4212
      %v4217 = vrsqrt.pop %v4213
      %v4218 = vmul.f32 %v4162, %v4214
      %v4219 = vmul.f32 %v4163, %v4214
      %v4220 = vmul.f32 %v4164, %v4214
      %v4221 = vmul.f32 %v4165, %v4215
      %v4222 = vmul.f32 %v4166, %v4215
      %v4223 = vmul.f32 %v4167, %v4215
      %v4224 = vmul.f32 %v4168, %v4216
      %v4225 = vmul.f32 %v4169, %v4216
      %v4226 = vmul.f32 %v4170, %v4216
      %v4227 = vmul.f32 %v4171, %v4217
      %v4228 = vmul.f32 %v4172, %v4217
      %v4229 = vmul.f32 %v4173, %v4217
      %v4231 = vlaneseq
      %v4232 = vshrl.u32 %v4231, 7
      %v4233 = vsub.s32 0, %v4232
      %v4234 = vrot.slane %v4136, %v4233
      %v4235 = vlaneseq
      %v4236 = vshrl.u32 %v4235, 7
      %v4237 = vsub.s32 1, %v4236
      %v4238 = vrot.slane %v4136, %v4237
      %v4239 = vlaneseq
      %v4240 = vshrl.u32 %v4239, 7
      %v4241 = vsub.s32 2, %v4240
      %v4242 = vrot.slane %v4136, %v4241
      %v4246 = vmul.f32 %v4218, %v4234
      %v4247 = vmul.f32 %v4219, %v4238
      %v4248 = vmul.f32 %v4220, %v4242
      %v4249 = vmul.f32 %v4221, %v4234
      %v4250 = vmul.f32 %v4222, %v4238
      %v4251 = vmul.f32 %v4223, %v4242
      %v4252 = vmul.f32 %v4224, %v4234
      %v4253 = vmul.f32 %v4225, %v4238
      %v4254 = vmul.f32 %v4226, %v4242
      %v4255 = vmul.f32 %v4227, %v4234
      %v4256 = vmul.f32 %v4228, %v4238
      %v4257 = vmul.f32 %v4229, %v4242
      %v4259 = vlaneseq
      %v4260 = vshrl.u32 %v4259, 7
      %v4261 = vsub.s32 0, %v4260
      %v4262 = vrot.slane %v4137, %v4261
      %v4263 = vlaneseq
      %v4264 = vshrl.u32 %v4263, 7
      %v4265 = vsub.s32 1, %v4264
      %v4266 = vrot.slane %v4137, %v4265
      %v4267 = vlaneseq
      %v4268 = vshrl.u32 %v4267, 7
      %v4269 = vsub.s32 2, %v4268
      %v4270 = vrot.slane %v4137, %v4269
      %v4274 = vadd.f32 %v4246, %v4262
      %v4275 = vadd.f32 %v4247, %v4266
      %v4276 = vadd.f32 %v4248, %v4270
      %v4277 = vadd.f32 %v4249, %v4262
      %v4278 = vadd.f32 %v4250, %v4266
      %v4279 = vadd.f32 %v4251, %v4270
      %v4280 = vadd.f32 %v4252, %v4262
      %v4281 = vadd.f32 %v4253, %v4266
      %v4282 = vadd.f32 %v4254, %v4270
      %v4283 = vadd.f32 %v4255, %v4262
      %v4284 = vadd.f32 %v4256, %v4266
      %v4285 = vadd.f32 %v4257, %v4270
      %v4286 = vpack.c.bf16 %v4277, %v4274
      %v4287 = vpack.c.bf16 %v4278, %v4275
      %v4288 = vpack.c.bf16 %v4279, %v4276
      %v4289 = vpack.c.bf16 %v4283, %v4280
      %v4290 = vpack.c.bf16 %v4284, %v4281
      %v4291 = vpack.c.bf16 %v4285, %v4282
      %v4292 = vld [vmem:[%s636] sm:$0xff]
      %v4293 = vld [vmem:[%s636 + $0x8] sm:$0xff]
      %v4294 = vld [vmem:[%s636 + $0x10] sm:$0xff]
      %v4295 = vld [vmem:[%s636 + $0x18] sm:$0xff]
      %v4296 = vld [vmem:[%s636 + $0x20] sm:$0xf]
      %v4297 = vld [vmem:[%s636 + $0x24] sm:$0xff]
      %v4298 = vld [vmem:[%s636 + $0x2c] sm:$0xff]
      %v4299 = vld [vmem:[%s636 + $0x34] sm:$0xff]
      %v4300 = vld [vmem:[%s636 + $0x3c] sm:$0xff]
      %v4301 = vld [vmem:[%s636 + $0x44] sm:$0xf]
      %v4302 = vld [vmem:[%s636 + $0x48] sm:$0xff]
      %v4303 = vld [vmem:[%s636 + $0x50] sm:$0xff]
      %v4304 = vld [vmem:[%s636 + $0x58] sm:$0xff]
      %v4305 = vld [vmem:[%s636 + $0x60] sm:$0xff]
      %v4306 = vld [vmem:[%s636 + $0x68] sm:$0xf]
      %v4307 = vld [vmem:[%s636 + $0x6c] sm:$0xff]
      %v4308 = vld [vmem:[%s636 + $0x74] sm:$0xff]
      %v4309 = vld [vmem:[%s636 + $0x7c] sm:$0xff]
      %v4310 = vld [vmem:[%s636 + $0x84] sm:$0xff]
      %v4311 = vld [vmem:[%s636 + $0x8c] sm:$0xf]
      %v4312 = vld [vmem:[%s636 + $0x90] sm:$0xff]
      %v4313 = vld [vmem:[%s636 + $0x98] sm:$0xff]
      %v4314 = vld [vmem:[%s636 + $0xa0] sm:$0xff]
      %v4315 = vld [vmem:[%s636 + $0xa8] sm:$0xff]
      %v4316 = vld [vmem:[%s636 + $0xb0] sm:$0xf]
      %v4317 = vld [vmem:[%s636 + $0xb4] sm:$0xff]
      %v4318 = vld [vmem:[%s636 + $0xbc] sm:$0xff]
      %v4319 = vld [vmem:[%s636 + $0xc4] sm:$0xff]
      %v4320 = vld [vmem:[%s636 + $0xcc] sm:$0xff]
      %v4321 = vld [vmem:[%s636 + $0xd4] sm:$0xf]
      %v4322 = vld [vmem:[%s636 + $0xd8] sm:$0xff]
      %v4323 = vld [vmem:[%s636 + $0xe0] sm:$0xff]
      %v4324 = vld [vmem:[%s636 + $0xe8] sm:$0xff]
      %v4325 = vld [vmem:[%s636 + $0xf0] sm:$0xff]
      %v4326 = vld [vmem:[%s636 + $0xf8] sm:$0xf]
      %v4327 = vld [vmem:[%s636 + $0xfc] sm:$0xff]
      %v4328 = vld [vmem:[%s636 + $0x104] sm:$0xff]
      %v4329 = vld [vmem:[%s636 + $0x10c] sm:$0xff]
      %v4330 = vld [vmem:[%s636 + $0x114] sm:$0xff]
      %v4331 = vld [vmem:[%s636 + $0x11c] sm:$0xf]
      %v4332 = vld [vmem:[%s636 + $0x120] sm:$0xff]
      %v4333 = vld [vmem:[%s636 + $0x128] sm:$0xff]
      %v4334 = vld [vmem:[%s636 + $0x130] sm:$0xff]
      %v4335 = vld [vmem:[%s636 + $0x138] sm:$0xff]
      %v4336 = vld [vmem:[%s636 + $0x140] sm:$0xf]
      %v4337 = vld [vmem:[%s636 + $0x144] sm:$0xff]
      %v4338 = vld [vmem:[%s636 + $0x14c] sm:$0xff]
      %v4339 = vld [vmem:[%s636 + $0x154] sm:$0xff]
      %v4340 = vld [vmem:[%s636 + $0x15c] sm:$0xff]
      %v4341 = vld [vmem:[%s636 + $0x164] sm:$0xf]
      %v4342 = vld [vmem:[%s636 + $0x168] sm:$0xff]
      %v4343 = vld [vmem:[%s636 + $0x170] sm:$0xff]
      %v4344 = vld [vmem:[%s636 + $0x178] sm:$0xff]
      %v4345 = vld [vmem:[%s636 + $0x180] sm:$0xff]
      %v4346 = vld [vmem:[%s636 + $0x188] sm:$0xf]
      %v4347 = vld [vmem:[%s636 + $0x18c] sm:$0xff]
      %v4348 = vld [vmem:[%s636 + $0x194] sm:$0xff]
      %v4349 = vld [vmem:[%s636 + $0x19c] sm:$0xff]
      %v4350 = vld [vmem:[%s636 + $0x1a4] sm:$0xff]
      %v4351 = vld [vmem:[%s636 + $0x1ac] sm:$0xf]
      %v4352 = vld [vmem:[%s636 + $0x1b0] sm:$0xff]
      %v4353 = vld [vmem:[%s636 + $0x1b8] sm:$0xff]
      %v4354 = vld [vmem:[%s636 + $0x1c0] sm:$0xff]
      %v4355 = vld [vmem:[%s636 + $0x1c8] sm:$0xff]
      %v4356 = vld [vmem:[%s636 + $0x1d0] sm:$0xf]
      %v4357 = vld [vmem:[%s636 + $0x1d4] sm:$0xff]
      %v4358 = vld [vmem:[%s636 + $0x1dc] sm:$0xff]
      %v4359 = vld [vmem:[%s636 + $0x1e4] sm:$0xff]
      %v4360 = vld [vmem:[%s636 + $0x1ec] sm:$0xff]
      %v4361 = vld [vmem:[%s636 + $0x1f4] sm:$0xf]
      %v4362 = vld [vmem:[%s636 + $0x1f8] sm:$0xff]
      %v4363 = vld [vmem:[%s636 + $0x200] sm:$0xff]
      %v4364 = vld [vmem:[%s636 + $0x208] sm:$0xff]
      %v4365 = vld [vmem:[%s636 + $0x210] sm:$0xff]
      %v4366 = vld [vmem:[%s636 + $0x218] sm:$0xf]
      %v4367 = vld [vmem:[%s636 + $0x21c] sm:$0xff]
      %v4368 = vld [vmem:[%s636 + $0x224] sm:$0xff]
      %v4369 = vld [vmem:[%s636 + $0x22c] sm:$0xff]
      %v4370 = vld [vmem:[%s636 + $0x234] sm:$0xff]
      %v4371 = vld [vmem:[%s636 + $0x23c] sm:$0xf]
      %v4372 = vld [vmem:[%s636 + $0x240] sm:$0xff]
      %v4373 = vld [vmem:[%s636 + $0x248] sm:$0xff]
      %v4374 = vld [vmem:[%s636 + $0x250] sm:$0xff]
      %v4375 = vld [vmem:[%s636 + $0x258] sm:$0xff]
      %v4376 = vld [vmem:[%s636 + $0x260] sm:$0xf]
      %v4377 = vld [vmem:[%s636 + $0x264] sm:$0xff]
      %v4378 = vld [vmem:[%s636 + $0x26c] sm:$0xff]
      %v4379 = vld [vmem:[%s636 + $0x274] sm:$0xff]
      %v4380 = vld [vmem:[%s636 + $0x27c] sm:$0xff]
      %v4381 = vld [vmem:[%s636 + $0x284] sm:$0xf]
      %v4382 = vld [vmem:[%s636 + $0x288] sm:$0xff]
      %v4383 = vld [vmem:[%s636 + $0x290] sm:$0xff]
      %v4384 = vld [vmem:[%s636 + $0x298] sm:$0xff]
      %v4385 = vld [vmem:[%s636 + $0x2a0] sm:$0xff]
      %v4386 = vld [vmem:[%s636 + $0x2a8] sm:$0xf]
      %v4387 = vld [vmem:[%s636 + $0x2ac] sm:$0xff]
      %v4388 = vld [vmem:[%s636 + $0x2b4] sm:$0xff]
      %v4389 = vld [vmem:[%s636 + $0x2bc] sm:$0xff]
      %v4390 = vld [vmem:[%s636 + $0x2c4] sm:$0xff]
      %v4391 = vld [vmem:[%s636 + $0x2cc] sm:$0xf]
      %v4392 = vld [vmem:[%s636 + $0x2d0] sm:$0xff]
      %v4393 = vld [vmem:[%s636 + $0x2d8] sm:$0xff]
      %v4394 = vld [vmem:[%s636 + $0x2e0] sm:$0xff]
      %v4395 = vld [vmem:[%s636 + $0x2e8] sm:$0xff]
      %v4396 = vld [vmem:[%s636 + $0x2f0] sm:$0xf]
      %v4397 = vld [vmem:[%s636 + $0x2f4] sm:$0xff]
      %v4398 = vld [vmem:[%s636 + $0x2fc] sm:$0xff]
      %v4399 = vld [vmem:[%s636 + $0x304] sm:$0xff]
      %v4400 = vld [vmem:[%s636 + $0x30c] sm:$0xff]
      %v4401 = vld [vmem:[%s636 + $0x314] sm:$0xf]
      %v4402 = vld [vmem:[%s636 + $0x318] sm:$0xff]
      %v4403 = vld [vmem:[%s636 + $0x320] sm:$0xff]
      %v4404 = vld [vmem:[%s636 + $0x328] sm:$0xff]
      %v4405 = vld [vmem:[%s636 + $0x330] sm:$0xff]
      %v4406 = vld [vmem:[%s636 + $0x338] sm:$0xf]
      %v4407 = vld [vmem:[%s636 + $0x33c] sm:$0xff]
      %v4408 = vld [vmem:[%s636 + $0x344] sm:$0xff]
      %v4409 = vld [vmem:[%s636 + $0x34c] sm:$0xff]
      %v4410 = vld [vmem:[%s636 + $0x354] sm:$0xff]
      %v4411 = vld [vmem:[%s636 + $0x35c] sm:$0xf]
      %v4412 = vld [vmem:[%s636 + $0x360] sm:$0xff]
      %v4413 = vld [vmem:[%s636 + $0x368] sm:$0xff]
      %v4414 = vld [vmem:[%s636 + $0x370] sm:$0xff]
      %v4415 = vld [vmem:[%s636 + $0x378] sm:$0xff]
      %v4416 = vld [vmem:[%s636 + $0x380] sm:$0xf]
      %v4417 = vld [vmem:[%s636 + $0x384] sm:$0xff]
      %v4418 = vld [vmem:[%s636 + $0x38c] sm:$0xff]
      %v4419 = vld [vmem:[%s636 + $0x394] sm:$0xff]
      %v4420 = vld [vmem:[%s636 + $0x39c] sm:$0xff]
      %v4421 = vld [vmem:[%s636 + $0x3a4] sm:$0xf]
      %v4422 = vld [vmem:[%s636 + $0x3a8] sm:$0xff]
      %v4423 = vld [vmem:[%s636 + $0x3b0] sm:$0xff]
      %v4424 = vld [vmem:[%s636 + $0x3b8] sm:$0xff]
      %v4425 = vld [vmem:[%s636 + $0x3c0] sm:$0xff]
      %v4426 = vld [vmem:[%s636 + $0x3c8] sm:$0xf]
      %v4427 = vld [vmem:[%s636 + $0x3cc] sm:$0xff]
      %v4428 = vld [vmem:[%s636 + $0x3d4] sm:$0xff]
      %v4429 = vld [vmem:[%s636 + $0x3dc] sm:$0xff]
      %v4430 = vld [vmem:[%s636 + $0x3e4] sm:$0xff]
      %v4431 = vld [vmem:[%s636 + $0x3ec] sm:$0xf]
      %v4432 = vld [vmem:[%s636 + $0x3f0] sm:$0xff]
      %v4433 = vld [vmem:[%s636 + $0x3f8] sm:$0xff]
      %v4434 = vld [vmem:[%s636 + $0x400] sm:$0xff]
      %v4435 = vld [vmem:[%s636 + $0x408] sm:$0xff]
      %v4436 = vld [vmem:[%s636 + $0x410] sm:$0xf]
      %v4437 = vld [vmem:[%s636 + $0x414] sm:$0xff]
      %v4438 = vld [vmem:[%s636 + $0x41c] sm:$0xff]
      %v4439 = vld [vmem:[%s636 + $0x424] sm:$0xff]
      %v4440 = vld [vmem:[%s636 + $0x42c] sm:$0xff]
      %v4441 = vld [vmem:[%s636 + $0x434] sm:$0xf]
      %v4442 = vld [vmem:[%s636 + $0x438] sm:$0xff]
      %v4443 = vld [vmem:[%s636 + $0x440] sm:$0xff]
      %v4444 = vld [vmem:[%s636 + $0x448] sm:$0xff]
      %v4445 = vld [vmem:[%s636 + $0x450] sm:$0xff]
      %v4446 = vld [vmem:[%s636 + $0x458] sm:$0xf]
      %v4447 = vld [vmem:[%s636 + $0x45c] sm:$0xff]
      %v4448 = vld [vmem:[%s636 + $0x464] sm:$0xff]
      %v4449 = vld [vmem:[%s636 + $0x46c] sm:$0xff]
      %v4450 = vld [vmem:[%s636 + $0x474] sm:$0xff]
      %v4451 = vld [vmem:[%s636 + $0x47c] sm:$0xf]
      %v4452 = vld [vmem:[%s636 + $0x480] sm:$0xff]
      %v4453 = vld [vmem:[%s636 + $0x488] sm:$0xff]
      %v4454 = vld [vmem:[%s636 + $0x490] sm:$0xff]
      %v4455 = vld [vmem:[%s636 + $0x498] sm:$0xff]
      %v4456 = vld [vmem:[%s636 + $0x4a0] sm:$0xf]
      %v4457 = vld [vmem:[%s636 + $0x4a4] sm:$0xff]
      %v4458 = vld [vmem:[%s636 + $0x4ac] sm:$0xff]
      %v4459 = vld [vmem:[%s636 + $0x4b4] sm:$0xff]
      %v4460 = vld [vmem:[%s636 + $0x4bc] sm:$0xff]
      %v4461 = vld [vmem:[%s636 + $0x4c4] sm:$0xf]
      %v4462 = vld [vmem:[%s636 + $0x4c8] sm:$0x33]
      %v4463 = vld [vmem:[%s636 + $0x4d0] sm:$0x33]
      %v4464 = vld [vmem:[%s636 + $0x4d8] sm:$0x33]
      %v4465 = vld [vmem:[%s636 + $0x4e0] sm:$0x33]
      %v4466 = vld [vmem:[%s636 + $0x4e8] sm:$0x3]
      %v4467 = vld [vmem:[%s640] sm:$0xff]
      %v4468 = vld [vmem:[%s640 + $0x8] sm:$0x1]
      %v4471 = vlaneseq
      %v4472 = vshrl.u32 %v4471, 7
      %v4473 = vsub.s32 0, %v4472
      %v4474 = vrot.slane %v4467, %v4473
      %v4475 = vlaneseq
      %v4476 = vshrl.u32 %v4475, 7
      %v4477 = vsub.s32 1, %v4476
      %v4478 = vrot.slane %v4467, %v4477
      %v4479 = vlaneseq
      %v4480 = vshrl.u32 %v4479, 7
      %v4481 = vsub.s32 2, %v4480
      %v4482 = vrot.slane %v4467, %v4481
      %v4483 = vlaneseq
      %v4484 = vshrl.u32 %v4483, 7
      %v4485 = vsub.s32 3, %v4484
      %v4486 = vrot.slane %v4467, %v4485
      %v4487 = vlaneseq
      %v4488 = vshrl.u32 %v4487, 7
      %v4489 = vsub.s32 4, %v4488
      %v4490 = vrot.slane %v4467, %v4489
      %v4491 = vlaneseq
      %v4492 = vshrl.u32 %v4491, 7
      %v4493 = vsub.s32 5, %v4492
      %v4494 = vrot.slane %v4467, %v4493
      %v4495 = vlaneseq
      %v4496 = vshrl.u32 %v4495, 7
      %v4497 = vsub.s32 6, %v4496
      %v4498 = vrot.slane %v4467, %v4497
      %v4499 = vlaneseq
      %v4500 = vshrl.u32 %v4499, 7
      %v4501 = vsub.s32 7, %v4500
      %v4502 = vrot.slane %v4467, %v4501
      %v4503 = vlaneseq
      %v4504 = vshrl.u32 %v4503, 7
      %v4505 = vsub.s32 0, %v4504
      %v4506 = vrot.slane %v4468, %v4505
      %v4691 = vunpack.c.l.b16 %v4292
      %v4692 = vunpack.c.h.b16 %v4292
      %v4693 = vunpack.c.l.b16 %v4293
      %v4694 = vunpack.c.h.b16 %v4293
      %v4695 = vunpack.c.l.b16 %v4294
      %v4696 = vunpack.c.h.b16 %v4294
      %v4697 = vunpack.c.l.b16 %v4295
      %v4698 = vunpack.c.h.b16 %v4295
      %v4699 = vunpack.c.l.b16 %v4296
      %v4700 = vunpack.c.l.b16 %v4297
      %v4701 = vunpack.c.h.b16 %v4297
      %v4702 = vunpack.c.l.b16 %v4298
      %v4703 = vunpack.c.h.b16 %v4298
      %v4704 = vunpack.c.l.b16 %v4299
      %v4705 = vunpack.c.h.b16 %v4299
      %v4706 = vunpack.c.l.b16 %v4300
      %v4707 = vunpack.c.h.b16 %v4300
      %v4708 = vunpack.c.l.b16 %v4301
      %v4709 = vunpack.c.l.b16 %v4302
      %v4710 = vunpack.c.h.b16 %v4302
      %v4711 = vunpack.c.l.b16 %v4303
      %v4712 = vunpack.c.h.b16 %v4303
      %v4713 = vunpack.c.l.b16 %v4304
      %v4714 = vunpack.c.h.b16 %v4304
      %v4715 = vunpack.c.l.b16 %v4305
      %v4716 = vunpack.c.h.b16 %v4305
      %v4717 = vunpack.c.l.b16 %v4306
      %v4718 = vunpack.c.l.b16 %v4307
      %v4719 = vunpack.c.h.b16 %v4307
      %v4720 = vunpack.c.l.b16 %v4308
      %v4721 = vunpack.c.h.b16 %v4308
      %v4722 = vunpack.c.l.b16 %v4309
      %v4723 = vunpack.c.h.b16 %v4309
      %v4724 = vunpack.c.l.b16 %v4310
      %v4725 = vunpack.c.h.b16 %v4310
      %v4726 = vunpack.c.l.b16 %v4311
      %v4727 = vunpack.c.l.b16 %v4312
      %v4728 = vunpack.c.h.b16 %v4312
      %v4729 = vunpack.c.l.b16 %v4313
      %v4730 = vunpack.c.h.b16 %v4313
      %v4731 = vunpack.c.l.b16 %v4314
      %v4732 = vunpack.c.h.b16 %v4314
      %v4733 = vunpack.c.l.b16 %v4315
      %v4734 = vunpack.c.h.b16 %v4315
      %v4735 = vunpack.c.l.b16 %v4316
      %v4736 = vunpack.c.l.b16 %v4317
      %v4737 = vunpack.c.h.b16 %v4317
      %v4738 = vunpack.c.l.b16 %v4318
      %v4739 = vunpack.c.h.b16 %v4318
      %v4740 = vunpack.c.l.b16 %v4319
      %v4741 = vunpack.c.h.b16 %v4319
      %v4742 = vunpack.c.l.b16 %v4320
      %v4743 = vunpack.c.h.b16 %v4320
      %v4744 = vunpack.c.l.b16 %v4321
      %v4745 = vunpack.c.l.b16 %v4322
      %v4746 = vunpack.c.h.b16 %v4322
      %v4747 = vunpack.c.l.b16 %v4323
      %v4748 = vunpack.c.h.b16 %v4323
      %v4749 = vunpack.c.l.b16 %v4324
      %v4750 = vunpack.c.h.b16 %v4324
      %v4751 = vunpack.c.l.b16 %v4325
      %v4752 = vunpack.c.h.b16 %v4325
      %v4753 = vunpack.c.l.b16 %v4326
      %v4754 = vunpack.c.l.b16 %v4327
      %v4755 = vunpack.c.h.b16 %v4327
      %v4756 = vunpack.c.l.b16 %v4328
      %v4757 = vunpack.c.h.b16 %v4328
      %v4758 = vunpack.c.l.b16 %v4329
      %v4759 = vunpack.c.h.b16 %v4329
      %v4760 = vunpack.c.l.b16 %v4330
      %v4761 = vunpack.c.h.b16 %v4330
      %v4762 = vunpack.c.l.b16 %v4331
      %v4763 = vunpack.c.l.b16 %v4332
      %v4764 = vunpack.c.h.b16 %v4332
      %v4765 = vunpack.c.l.b16 %v4333
      %v4766 = vunpack.c.h.b16 %v4333
      %v4767 = vunpack.c.l.b16 %v4334
      %v4768 = vunpack.c.h.b16 %v4334
      %v4769 = vunpack.c.l.b16 %v4335
      %v4770 = vunpack.c.h.b16 %v4335
      %v4771 = vunpack.c.l.b16 %v4336
      %v4772 = vunpack.c.l.b16 %v4337
      %v4773 = vunpack.c.h.b16 %v4337
      %v4774 = vunpack.c.l.b16 %v4338
      %v4775 = vunpack.c.h.b16 %v4338
      %v4776 = vunpack.c.l.b16 %v4339
      %v4777 = vunpack.c.h.b16 %v4339
      %v4778 = vunpack.c.l.b16 %v4340
      %v4779 = vunpack.c.h.b16 %v4340
      %v4780 = vunpack.c.l.b16 %v4341
      %v4781 = vunpack.c.l.b16 %v4342
      %v4782 = vunpack.c.h.b16 %v4342
      %v4783 = vunpack.c.l.b16 %v4343
      %v4784 = vunpack.c.h.b16 %v4343
      %v4785 = vunpack.c.l.b16 %v4344
      %v4786 = vunpack.c.h.b16 %v4344
      %v4787 = vunpack.c.l.b16 %v4345
      %v4788 = vunpack.c.h.b16 %v4345
      %v4789 = vunpack.c.l.b16 %v4346
      %v4790 = vunpack.c.l.b16 %v4347
      %v4791 = vunpack.c.h.b16 %v4347
      %v4792 = vunpack.c.l.b16 %v4348
      %v4793 = vunpack.c.h.b16 %v4348
      %v4794 = vunpack.c.l.b16 %v4349
      %v4795 = vunpack.c.h.b16 %v4349
      %v4796 = vunpack.c.l.b16 %v4350
      %v4797 = vunpack.c.h.b16 %v4350
      %v4798 = vunpack.c.l.b16 %v4351
      %v4799 = vunpack.c.l.b16 %v4352
      %v4800 = vunpack.c.h.b16 %v4352
      %v4801 = vunpack.c.l.b16 %v4353
      %v4802 = vunpack.c.h.b16 %v4353
      %v4803 = vunpack.c.l.b16 %v4354
      %v4804 = vunpack.c.h.b16 %v4354
      %v4805 = vunpack.c.l.b16 %v4355
      %v4806 = vunpack.c.h.b16 %v4355
      %v4807 = vunpack.c.l.b16 %v4356
      %v4808 = vunpack.c.l.b16 %v4357
      %v4809 = vunpack.c.h.b16 %v4357
      %v4810 = vunpack.c.l.b16 %v4358
      %v4811 = vunpack.c.h.b16 %v4358
      %v4812 = vunpack.c.l.b16 %v4359
      %v4813 = vunpack.c.h.b16 %v4359
      %v4814 = vunpack.c.l.b16 %v4360
      %v4815 = vunpack.c.h.b16 %v4360
      %v4816 = vunpack.c.l.b16 %v4361
      %v4817 = vunpack.c.l.b16 %v4362
      %v4818 = vunpack.c.h.b16 %v4362
      %v4819 = vunpack.c.l.b16 %v4363
      %v4820 = vunpack.c.h.b16 %v4363
      %v4821 = vunpack.c.l.b16 %v4364
      %v4822 = vunpack.c.h.b16 %v4364
      %v4823 = vunpack.c.l.b16 %v4365
      %v4824 = vunpack.c.h.b16 %v4365
      %v4825 = vunpack.c.l.b16 %v4366
      %v4826 = vunpack.c.l.b16 %v4367
      %v4827 = vunpack.c.h.b16 %v4367
      %v4828 = vunpack.c.l.b16 %v4368
      %v4829 = vunpack.c.h.b16 %v4368
      %v4830 = vunpack.c.l.b16 %v4369
      %v4831 = vunpack.c.h.b16 %v4369
      %v4832 = vunpack.c.l.b16 %v4370
      %v4833 = vunpack.c.h.b16 %v4370
      %v4834 = vunpack.c.l.b16 %v4371
      %v4835 = vunpack.c.l.b16 %v4372
      %v4836 = vunpack.c.h.b16 %v4372
      %v4837 = vunpack.c.l.b16 %v4373
      %v4838 = vunpack.c.h.b16 %v4373
      %v4839 = vunpack.c.l.b16 %v4374
      %v4840 = vunpack.c.h.b16 %v4374
      %v4841 = vunpack.c.l.b16 %v4375
      %v4842 = vunpack.c.h.b16 %v4375
      %v4843 = vunpack.c.l.b16 %v4376
      %v4844 = vunpack.c.l.b16 %v4377
      %v4845 = vunpack.c.h.b16 %v4377
      %v4846 = vunpack.c.l.b16 %v4378
      %v4847 = vunpack.c.h.b16 %v4378
      %v4848 = vunpack.c.l.b16 %v4379
      %v4849 = vunpack.c.h.b16 %v4379
      %v4850 = vunpack.c.l.b16 %v4380
      %v4851 = vunpack.c.h.b16 %v4380
      %v4852 = vunpack.c.l.b16 %v4381
      %v4853 = vunpack.c.l.b16 %v4382
      %v4854 = vunpack.c.h.b16 %v4382
      %v4855 = vunpack.c.l.b16 %v4383
      %v4856 = vunpack.c.h.b16 %v4383
      %v4857 = vunpack.c.l.b16 %v4384
      %v4858 = vunpack.c.h.b16 %v4384
      %v4859 = vunpack.c.l.b16 %v4385
      %v4860 = vunpack.c.h.b16 %v4385
      %v4861 = vunpack.c.l.b16 %v4386
      %v4862 = vunpack.c.l.b16 %v4387
      %v4863 = vunpack.c.h.b16 %v4387
      %v4864 = vunpack.c.l.b16 %v4388
      %v4865 = vunpack.c.h.b16 %v4388
      %v4866 = vunpack.c.l.b16 %v4389
      %v4867 = vunpack.c.h.b16 %v4389
      %v4868 = vunpack.c.l.b16 %v4390
      %v4869 = vunpack.c.h.b16 %v4390
      %v4870 = vunpack.c.l.b16 %v4391
      %v4871 = vunpack.c.l.b16 %v4392
      %v4872 = vunpack.c.h.b16 %v4392
      %v4873 = vunpack.c.l.b16 %v4393
      %v4874 = vunpack.c.h.b16 %v4393
      %v4875 = vunpack.c.l.b16 %v4394
      %v4876 = vunpack.c.h.b16 %v4394
      %v4877 = vunpack.c.l.b16 %v4395
      %v4878 = vunpack.c.h.b16 %v4395
      %v4879 = vunpack.c.l.b16 %v4396
      %v4880 = vunpack.c.l.b16 %v4397
      %v4881 = vunpack.c.h.b16 %v4397
      %v4882 = vunpack.c.l.b16 %v4398
      %v4883 = vunpack.c.h.b16 %v4398
      %v4884 = vunpack.c.l.b16 %v4399
      %v4885 = vunpack.c.h.b16 %v4399
      %v4886 = vunpack.c.l.b16 %v4400
      %v4887 = vunpack.c.h.b16 %v4400
      %v4888 = vunpack.c.l.b16 %v4401
      %v4889 = vunpack.c.l.b16 %v4402
      %v4890 = vunpack.c.h.b16 %v4402
      %v4891 = vunpack.c.l.b16 %v4403
      %v4892 = vunpack.c.h.b16 %v4403
      %v4893 = vunpack.c.l.b16 %v4404
      %v4894 = vunpack.c.h.b16 %v4404
      %v4895 = vunpack.c.l.b16 %v4405
      %v4896 = vunpack.c.h.b16 %v4405
      %v4897 = vunpack.c.l.b16 %v4406
      %v4898 = vunpack.c.l.b16 %v4407
      %v4899 = vunpack.c.h.b16 %v4407
      %v4900 = vunpack.c.l.b16 %v4408
      %v4901 = vunpack.c.h.b16 %v4408
      %v4902 = vunpack.c.l.b16 %v4409
      %v4903 = vunpack.c.h.b16 %v4409
      %v4904 = vunpack.c.l.b16 %v4410
      %v4905 = vunpack.c.h.b16 %v4410
      %v4906 = vunpack.c.l.b16 %v4411
      %v4907 = vunpack.c.l.b16 %v4412
      %v4908 = vunpack.c.h.b16 %v4412
      %v4909 = vunpack.c.l.b16 %v4413
      %v4910 = vunpack.c.h.b16 %v4413
      %v4911 = vunpack.c.l.b16 %v4414
      %v4912 = vunpack.c.h.b16 %v4414
      %v4913 = vunpack.c.l.b16 %v4415
      %v4914 = vunpack.c.h.b16 %v4415
      %v4915 = vunpack.c.l.b16 %v4416
      %v4916 = vunpack.c.l.b16 %v4417
      %v4917 = vunpack.c.h.b16 %v4417
      %v4918 = vunpack.c.l.b16 %v4418
      %v4919 = vunpack.c.h.b16 %v4418
      %v4920 = vunpack.c.l.b16 %v4419
      %v4921 = vunpack.c.h.b16 %v4419
      %v4922 = vunpack.c.l.b16 %v4420
      %v4923 = vunpack.c.h.b16 %v4420
      %v4924 = vunpack.c.l.b16 %v4421
      %v4925 = vunpack.c.l.b16 %v4422
      %v4926 = vunpack.c.h.b16 %v4422
      %v4927 = vunpack.c.l.b16 %v4423
      %v4928 = vunpack.c.h.b16 %v4423
      %v4929 = vunpack.c.l.b16 %v4424
      %v4930 = vunpack.c.h.b16 %v4424
      %v4931 = vunpack.c.l.b16 %v4425
      %v4932 = vunpack.c.h.b16 %v4425
      %v4933 = vunpack.c.l.b16 %v4426
      %v4934 = vunpack.c.l.b16 %v4427
      %v4935 = vunpack.c.h.b16 %v4427
      %v4936 = vunpack.c.l.b16 %v4428
      %v4937 = vunpack.c.h.b16 %v4428
      %v4938 = vunpack.c.l.b16 %v4429
      %v4939 = vunpack.c.h.b16 %v4429
      %v4940 = vunpack.c.l.b16 %v4430
      %v4941 = vunpack.c.h.b16 %v4430
      %v4942 = vunpack.c.l.b16 %v4431
      %v4943 = vunpack.c.l.b16 %v4432
      %v4944 = vunpack.c.h.b16 %v4432
      %v4945 = vunpack.c.l.b16 %v4433
      %v4946 = vunpack.c.h.b16 %v4433
      %v4947 = vunpack.c.l.b16 %v4434
      %v4948 = vunpack.c.h.b16 %v4434
      %v4949 = vunpack.c.l.b16 %v4435
      %v4950 = vunpack.c.h.b16 %v4435
      %v4951 = vunpack.c.l.b16 %v4436
      %v4952 = vunpack.c.l.b16 %v4437
      %v4953 = vunpack.c.h.b16 %v4437
      %v4954 = vunpack.c.l.b16 %v4438
      %v4955 = vunpack.c.h.b16 %v4438
      %v4956 = vunpack.c.l.b16 %v4439
      %v4957 = vunpack.c.h.b16 %v4439
      %v4958 = vunpack.c.l.b16 %v4440
      %v4959 = vunpack.c.h.b16 %v4440
      %v4960 = vunpack.c.l.b16 %v4441
      %v4961 = vunpack.c.l.b16 %v4442
      %v4962 = vunpack.c.h.b16 %v4442
      %v4963 = vunpack.c.l.b16 %v4443
      %v4964 = vunpack.c.h.b16 %v4443
      %v4965 = vunpack.c.l.b16 %v4444
      %v4966 = vunpack.c.h.b16 %v4444
      %v4967 = vunpack.c.l.b16 %v4445
      %v4968 = vunpack.c.h.b16 %v4445
      %v4969 = vunpack.c.l.b16 %v4446
      %v4970 = vunpack.c.l.b16 %v4447
      %v4971 = vunpack.c.h.b16 %v4447
      %v4972 = vunpack.c.l.b16 %v4448
      %v4973 = vunpack.c.h.b16 %v4448
      %v4974 = vunpack.c.l.b16 %v4449
      %v4975 = vunpack.c.h.b16 %v4449
      %v4976 = vunpack.c.l.b16 %v4450
      %v4977 = vunpack.c.h.b16 %v4450
      %v4978 = vunpack.c.l.b16 %v4451
      %v4979 = vunpack.c.l.b16 %v4452
      %v4980 = vunpack.c.h.b16 %v4452
      %v4981 = vunpack.c.l.b16 %v4453
      %v4982 = vunpack.c.h.b16 %v4453
      %v4983 = vunpack.c.l.b16 %v4454
      %v4984 = vunpack.c.h.b16 %v4454
      %v4985 = vunpack.c.l.b16 %v4455
      %v4986 = vunpack.c.h.b16 %v4455
      %v4987 = vunpack.c.l.b16 %v4456
      %v4988 = vunpack.c.l.b16 %v4457
      %v4989 = vunpack.c.h.b16 %v4457
      %v4990 = vunpack.c.l.b16 %v4458
      %v4991 = vunpack.c.h.b16 %v4458
      %v4992 = vunpack.c.l.b16 %v4459
      %v4993 = vunpack.c.h.b16 %v4459
      %v4994 = vunpack.c.l.b16 %v4460
      %v4995 = vunpack.c.h.b16 %v4460
      %v4996 = vunpack.c.l.b16 %v4461
      %v4997 = vunpack.c.l.b16 %v4462
      %v4998 = vunpack.c.h.b16 %v4462
      %v4999 = vunpack.c.l.b16 %v4463
      %v5000 = vunpack.c.h.b16 %v4463
      %v5001 = vunpack.c.l.b16 %v4464
      %v5002 = vunpack.c.h.b16 %v4464
      %v5003 = vunpack.c.l.b16 %v4465
      %v5004 = vunpack.c.h.b16 %v4465
      %v5005 = vunpack.c.l.b16 %v4466
      %v5006 = vpack.c.b16 %v4700, %v4691
      %v5007 = vpack.c.b16 %v4701, %v4692
      %v5008 = vpack.c.b16 %v4702, %v4693
      %v5009 = vpack.c.b16 %v4703, %v4694
      %v5010 = vpack.c.b16 %v4704, %v4695
      %v5011 = vpack.c.b16 %v4705, %v4696
      %v5012 = vpack.c.b16 %v4706, %v4697
      %v5013 = vpack.c.b16 %v4707, %v4698
      %v5014 = vpack.c.b16 %v4708, %v4699
      %v5015 = vpack.c.b16 %v4718, %v4709
      %v5016 = vpack.c.b16 %v4719, %v4710
      %v5017 = vpack.c.b16 %v4720, %v4711
      %v5018 = vpack.c.b16 %v4721, %v4712
      %v5019 = vpack.c.b16 %v4722, %v4713
      %v5020 = vpack.c.b16 %v4723, %v4714
      %v5021 = vpack.c.b16 %v4724, %v4715
      %v5022 = vpack.c.b16 %v4725, %v4716
      %v5023 = vpack.c.b16 %v4726, %v4717
      %v5024 = vpack.c.b16 %v4736, %v4727
      %v5025 = vpack.c.b16 %v4737, %v4728
      %v5026 = vpack.c.b16 %v4738, %v4729
      %v5027 = vpack.c.b16 %v4739, %v4730
      %v5028 = vpack.c.b16 %v4740, %v4731
      %v5029 = vpack.c.b16 %v4741, %v4732
      %v5030 = vpack.c.b16 %v4742, %v4733
      %v5031 = vpack.c.b16 %v4743, %v4734
      %v5032 = vpack.c.b16 %v4744, %v4735
      %v5033 = vpack.c.b16 %v4754, %v4745
      %v5034 = vpack.c.b16 %v4755, %v4746
      %v5035 = vpack.c.b16 %v4756, %v4747
      %v5036 = vpack.c.b16 %v4757, %v4748
      %v5037 = vpack.c.b16 %v4758, %v4749
      %v5038 = vpack.c.b16 %v4759, %v4750
      %v5039 = vpack.c.b16 %v4760, %v4751
      %v5040 = vpack.c.b16 %v4761, %v4752
      %v5041 = vpack.c.b16 %v4762, %v4753
      %v5042 = vpack.c.b16 %v4772, %v4763
      %v5043 = vpack.c.b16 %v4773, %v4764
      %v5044 = vpack.c.b16 %v4774, %v4765
      %v5045 = vpack.c.b16 %v4775, %v4766
      %v5046 = vpack.c.b16 %v4776, %v4767
      %v5047 = vpack.c.b16 %v4777, %v4768
      %v5048 = vpack.c.b16 %v4778, %v4769
      %v5049 = vpack.c.b16 %v4779, %v4770
      %v5050 = vpack.c.b16 %v4780, %v4771
      %v5051 = vpack.c.b16 %v4790, %v4781
      %v5052 = vpack.c.b16 %v4791, %v4782
      %v5053 = vpack.c.b16 %v4792, %v4783
      %v5054 = vpack.c.b16 %v4793, %v4784
      %v5055 = vpack.c.b16 %v4794, %v4785
      %v5056 = vpack.c.b16 %v4795, %v4786
      %v5057 = vpack.c.b16 %v4796, %v4787
      %v5058 = vpack.c.b16 %v4797, %v4788
      %v5059 = vpack.c.b16 %v4798, %v4789
      %v5060 = vpack.c.b16 %v4808, %v4799
      %v5061 = vpack.c.b16 %v4809, %v4800
      %v5062 = vpack.c.b16 %v4810, %v4801
      %v5063 = vpack.c.b16 %v4811, %v4802
      %v5064 = vpack.c.b16 %v4812, %v4803
      %v5065 = vpack.c.b16 %v4813, %v4804
      %v5066 = vpack.c.b16 %v4814, %v4805
      %v5067 = vpack.c.b16 %v4815, %v4806
      %v5068 = vpack.c.b16 %v4816, %v4807
      %v5069 = vpack.c.b16 %v4826, %v4817
      %v5070 = vpack.c.b16 %v4827, %v4818
      %v5071 = vpack.c.b16 %v4828, %v4819
      %v5072 = vpack.c.b16 %v4829, %v4820
      %v5073 = vpack.c.b16 %v4830, %v4821
      %v5074 = vpack.c.b16 %v4831, %v4822
      %v5075 = vpack.c.b16 %v4832, %v4823
      %v5076 = vpack.c.b16 %v4833, %v4824
      %v5077 = vpack.c.b16 %v4834, %v4825
      %v5078 = vpack.c.b16 %v4844, %v4835
      %v5079 = vpack.c.b16 %v4845, %v4836
      %v5080 = vpack.c.b16 %v4846, %v4837
      %v5081 = vpack.c.b16 %v4847, %v4838
      %v5082 = vpack.c.b16 %v4848, %v4839
      %v5083 = vpack.c.b16 %v4849, %v4840
      %v5084 = vpack.c.b16 %v4850, %v4841
      %v5085 = vpack.c.b16 %v4851, %v4842
      %v5086 = vpack.c.b16 %v4852, %v4843
      %v5087 = vpack.c.b16 %v4862, %v4853
      %v5088 = vpack.c.b16 %v4863, %v4854
      %v5089 = vpack.c.b16 %v4864, %v4855
      %v5090 = vpack.c.b16 %v4865, %v4856
      %v5091 = vpack.c.b16 %v4866, %v4857
      %v5092 = vpack.c.b16 %v4867, %v4858
      %v5093 = vpack.c.b16 %v4868, %v4859
      %v5094 = vpack.c.b16 %v4869, %v4860
      %v5095 = vpack.c.b16 %v4870, %v4861
      %v5096 = vpack.c.b16 %v4880, %v4871
      %v5097 = vpack.c.b16 %v4881, %v4872
      %v5098 = vpack.c.b16 %v4882, %v4873
      %v5099 = vpack.c.b16 %v4883, %v4874
      %v5100 = vpack.c.b16 %v4884, %v4875
      %v5101 = vpack.c.b16 %v4885, %v4876
      %v5102 = vpack.c.b16 %v4886, %v4877
      %v5103 = vpack.c.b16 %v4887, %v4878
      %v5104 = vpack.c.b16 %v4888, %v4879
      %v5105 = vpack.c.b16 %v4898, %v4889
      %v5106 = vpack.c.b16 %v4899, %v4890
      %v5107 = vpack.c.b16 %v4900, %v4891
      %v5108 = vpack.c.b16 %v4901, %v4892
      %v5109 = vpack.c.b16 %v4902, %v4893
      %v5110 = vpack.c.b16 %v4903, %v4894
      %v5111 = vpack.c.b16 %v4904, %v4895
      %v5112 = vpack.c.b16 %v4905, %v4896
      %v5113 = vpack.c.b16 %v4906, %v4897
      %v5114 = vpack.c.b16 %v4916, %v4907
      %v5115 = vpack.c.b16 %v4917, %v4908
      %v5116 = vpack.c.b16 %v4918, %v4909
      %v5117 = vpack.c.b16 %v4919, %v4910
      %v5118 = vpack.c.b16 %v4920, %v4911
      %v5119 = vpack.c.b16 %v4921, %v4912
      %v5120 = vpack.c.b16 %v4922, %v4913
      %v5121 = vpack.c.b16 %v4923, %v4914
      %v5122 = vpack.c.b16 %v4924, %v4915
      %v5123 = vpack.c.b16 %v4934, %v4925
      %v5124 = vpack.c.b16 %v4935, %v4926
      %v5125 = vpack.c.b16 %v4936, %v4927
      %v5126 = vpack.c.b16 %v4937, %v4928
      %v5127 = vpack.c.b16 %v4938, %v4929
      %v5128 = vpack.c.b16 %v4939, %v4930
      %v5129 = vpack.c.b16 %v4940, %v4931
      %v5130 = vpack.c.b16 %v4941, %v4932
      %v5131 = vpack.c.b16 %v4942, %v4933
      %v5132 = vpack.c.b16 %v4952, %v4943
      %v5133 = vpack.c.b16 %v4953, %v4944
      %v5134 = vpack.c.b16 %v4954, %v4945
      %v5135 = vpack.c.b16 %v4955, %v4946
      %v5136 = vpack.c.b16 %v4956, %v4947
      %v5137 = vpack.c.b16 %v4957, %v4948
      %v5138 = vpack.c.b16 %v4958, %v4949
      %v5139 = vpack.c.b16 %v4959, %v4950
      %v5140 = vpack.c.b16 %v4960, %v4951
      %v5141 = vpack.c.b16 %v4970, %v4961
      %v5142 = vpack.c.b16 %v4971, %v4962
      %v5143 = vpack.c.b16 %v4972, %v4963
      %v5144 = vpack.c.b16 %v4973, %v4964
      %v5145 = vpack.c.b16 %v4974, %v4965
      %v5146 = vpack.c.b16 %v4975, %v4966
      %v5147 = vpack.c.b16 %v4976, %v4967
      %v5148 = vpack.c.b16 %v4977, %v4968
      %v5149 = vpack.c.b16 %v4978, %v4969
      %v5150 = vpack.c.b16 %v4988, %v4979
      %v5151 = vpack.c.b16 %v4989, %v4980
      %v5152 = vpack.c.b16 %v4990, %v4981
      %v5153 = vpack.c.b16 %v4991, %v4982
      %v5154 = vpack.c.b16 %v4992, %v4983
      %v5155 = vpack.c.b16 %v4993, %v4984
      %v5156 = vpack.c.b16 %v4994, %v4985
      %v5157 = vpack.c.b16 %v4995, %v4986
      %v5158 = vpack.c.b16 %v4996, %v4987
      %v5159 = vpack.c.b16 %v4997, %v4997
      %v5160 = vpack.c.b16 %v4998, %v4998
      %v5161 = vpack.c.b16 %v4999, %v4999
      %v5162 = vpack.c.b16 %v5000, %v5000
      %v5163 = vpack.c.b16 %v5001, %v5001
      %v5164 = vpack.c.b16 %v5002, %v5002
      %v5165 = vpack.c.b16 %v5003, %v5003
      %v5166 = vpack.c.b16 %v5004, %v5004
      %v5167 = vpack.c.b16 %v5005, %v5005
      %v5322 = vsel %vm1019, %v4288, 0
      %v5325 = vsel %vm1019, %v4291, 0
      %v5328 = vsel %vm1987, %v5159, 0
      %v5331 = vsel %vm1987, %v5160, 0
      %v5334 = vsel %vm1987, %v5161, 0
      %v5337 = vsel %vm1987, %v5162, 0
      %v5340 = vsel %vm1987, %v5163, 0
      %v5343 = vsel %vm1987, %v5164, 0
      %v5346 = vsel %vm1987, %v5165, 0
      %v5349 = vsel %vm1987, %v5166, 0
      %v5352 = vsel %vm1987, %v5167, 0
      %5354 = vmatprep.subr.bf16.mxu0 %v5007
      %5355 = vmatpush1.bf16.msra.mxu0 %v5006
      %5356 = vmatprep.subr.bf16.mxu0 %v5016
      %5357 = vmatpush1.bf16.msra.mxu0 %v5015
      %5358 = vmatprep.subr.bf16.mxu0 %v5025
      %5359 = vmatpush1.bf16.msra.mxu0 %v5024
      %5360 = vmatprep.subr.bf16.mxu0 %v5034
      %5361 = vmatpush1.bf16.msra.mxu0 %v5033
      %5362 = vmatprep.subr.bf16.mxu0 %v5043
      %5363 = vmatpush1.bf16.msra.mxu0 %v5042
      %5364 = vmatprep.subr.bf16.mxu0 %v5052
      %5365 = vmatpush1.bf16.msra.mxu0 %v5051
      %5366 = vmatprep.subr.bf16.mxu0 %v5061
      %5367 = vmatpush1.bf16.msra.mxu0 %v5060
      %5368 = vmatprep.subr.bf16.mxu0 %v5070
      %5369 = vmatpush1.bf16.msra.mxu0 %v5069
      %5370 = vmatprep.subr.bf16.mxu0 %v5079
      %5371 = vmatpush1.bf16.msra.mxu0 %v5078
      %5372 = vmatprep.subr.bf16.mxu0 %v5088
      %5373 = vmatpush1.bf16.msra.mxu0 %v5087
      %5374 = vmatprep.subr.bf16.mxu0 %v5097
      %5375 = vmatpush1.bf16.msra.mxu0 %v5096
      %5376 = vmatprep.subr.bf16.mxu0 %v5106
      %5377 = vmatpush1.bf16.msra.mxu0 %v5105
      %5378 = vmatprep.subr.bf16.mxu0 %v5115
      %5379 = vmatpush1.bf16.msra.mxu0 %v5114
      %5380 = vmatprep.subr.bf16.mxu0 %v5124
      %5381 = vmatpush1.bf16.msra.mxu0 %v5123
      %5382 = vmatprep.subr.bf16.mxu0 %v5133
      %5383 = vmatpush1.bf16.msra.mxu0 %v5132
      %5384 = vmatprep.subr.bf16.mxu0 %v5142
      %5385 = vmatpush1.bf16.msra.mxu0 %v5141
      %5386 = vmatprep.mubr.bf16.mxu0 %v4287
      %5387 = vmatmul.mubr.bf16.gmra.mrb[0].mxu0 %v4286
      %v5388 = vpop.f32.mrb[0].mxu0
      %v5389 = vadd.f32 %v4474, %v5388
      %v5390 = vpop.f32.mrb[0].mxu0
      %v5391 = vadd.f32 %v4478, %v5390
      %v5392 = vpop.f32.mrb[0].mxu0
      %v5393 = vadd.f32 %v4474, %v5392
      %v5394 = vpop.f32.mrb[0].mxu0
      %v5395 = vadd.f32 %v4478, %v5394
      %5396 = vmatprep.mubr.bf16.mxu0 %v4290
      %5397 = vmatmul.mubr.bf16.gmra.mrb[0].mxu0 %v4289
      %v5398 = vpop.f32.mrb[0].mxu0
      %v5399 = vadd.f32 %v4474, %v5398
      %v5400 = vpop.f32.mrb[0].mxu0
      %v5401 = vadd.f32 %v4478, %v5400
      %v5402 = vpop.f32.mrb[0].mxu0
      %v5403 = vadd.f32 %v4474, %v5402
      %v5404 = vpop.f32.mrb[0].mxu0
      %v5405 = vadd.f32 %v4478, %v5404
      %5406 = vdwg.mxu0
      %5407 = vmatprep.subr.bf16.mxu0 %v5151
      %5408 = vmatpush1.bf16.msra.mxu0 %v5150
      %5409 = vmatprep.subr.bf16.mxu0 %v5331
      %5410 = vmatpush1.bf16.msra.mxu0 %v5328
      %5411 = vmatprep.subr.bf16.mxu0 0
      %5412 = vmatpush1.bf16.msra.mxu0 0
      %5413 = vmatprep.subr.bf16.mxu0 0
      %5414 = vmatpush1.bf16.msra.mxu0 0
      %5415 = vmatprep.subr.bf16.mxu0 0
      %5416 = vmatpush1.bf16.msra.mxu0 0
      %5417 = vmatprep.subr.bf16.mxu0 0
      %5418 = vmatpush1.bf16.msra.mxu0 0
      %5419 = vmatprep.subr.bf16.mxu0 0
      %5420 = vmatpush1.bf16.msra.mxu0 0
      %5421 = vmatprep.subr.bf16.mxu0 0
      %5422 = vmatpush1.bf16.msra.mxu0 0
      %5423 = vmatprep.subr.bf16.mxu0 0
      %5424 = vmatpush1.bf16.msra.mxu0 0
      %5425 = vmatprep.subr.bf16.mxu0 0
      %5426 = vmatpush1.bf16.msra.mxu0 0
      %5427 = vmatprep.subr.bf16.mxu0 0
      %5428 = vmatpush1.bf16.msra.mxu0 0
      %5429 = vmatprep.subr.bf16.mxu0 0
      %5430 = vmatpush1.bf16.msra.mxu0 0
      %5431 = vmatprep.subr.bf16.mxu0 0
      %5432 = vmatpush1.bf16.msra.mxu0 0
      %5433 = vmatprep.subr.bf16.mxu0 0
      %5434 = vmatpush1.bf16.msra.mxu0 0
      %5435 = vmatprep.subr.bf16.mxu0 0
      %5436 = vmatpush1.bf16.msra.mxu0 0
      %5437 = vmatprep.subr.bf16.mxu0 0
      %5438 = vmatpush1.bf16.msra.mxu0 0
      %5439 = vmatprep.mubr.bf16.mxu0 0
      %5440 = vmatmul.mubr.bf16.gmra.mrb[0].mxu0 %v5322
      %v5441 = vpop.f32.mrb[0].mxu0
      %v5442 = vadd.f32 %v5389, %v5441
      %v5443 = vpop.f32.mrb[0].mxu0
      %v5444 = vadd.f32 %v5391, %v5443
      %v5445 = vpop.f32.mrb[0].mxu0
      %v5446 = vadd.f32 %v5393, %v5445
      %v5447 = vpop.f32.mrb[0].mxu0
      %v5448 = vadd.f32 %v5395, %v5447
      %5449 = vmatprep.mubr.bf16.mxu0 0
      %5450 = vmatmul.mubr.bf16.gmra.mrb[0].mxu0 %v5325
      %v5451 = vpop.f32.mrb[0].mxu0
      %v5452 = vadd.f32 %v5399, %v5451
      %v5453 = vpop.f32.mrb[0].mxu0
      %v5454 = vadd.f32 %v5401, %v5453
      %v5455 = vpop.f32.mrb[0].mxu0
      %v5456 = vadd.f32 %v5403, %v5455
      %v5457 = vpop.f32.mrb[0].mxu0
      %v5458 = vadd.f32 %v5405, %v5457
      %5459 = vdwg.mxu0
      %5460 = vmatprep.subr.bf16.mxu0 %v5009
      %5461 = vmatpush1.bf16.msra.mxu0 %v5008
      %5462 = vmatprep.subr.bf16.mxu0 %v5018
      %5463 = vmatpush1.bf16.msra.mxu0 %v5017
      %5464 = vmatprep.subr.bf16.mxu0 %v5027
      %5465 = vmatpush1.bf16.msra.mxu0 %v5026
      %5466 = vmatprep.subr.bf16.mxu0 %v5036
      %5467 = vmatpush1.bf16.msra.mxu0 %v5035
      %5468 = vmatprep.subr.bf16.mxu0 %v5045
      %5469 = vmatpush1.bf16.msra.mxu0 %v5044
      %5470 = vmatprep.subr.bf16.mxu0 %v5054
      %5471 = vmatpush1.bf16.msra.mxu0 %v5053
      %5472 = vmatprep.subr.bf16.mxu0 %v5063
      %5473 = vmatpush1.bf16.msra.mxu0 %v5062
      %5474 = vmatprep.subr.bf16.mxu0 %v5072
      %5475 = vmatpush1.bf16.msra.mxu0 %v5071
      %5476 = vmatprep.subr.bf16.mxu0 %v5081
      %5477 = vmatpush1.bf16.msra.mxu0 %v5080
      %5478 = vmatprep.subr.bf16.mxu0 %v5090
      %5479 = vmatpush1.bf16.msra.mxu0 %v5089
      %5480 = vmatprep.subr.bf16.mxu0 %v5099
      %5481 = vmatpush1.bf16.msra.mxu0 %v5098
      %5482 = vmatprep.subr.bf16.mxu0 %v5108
      %5483 = vmatpush1.bf16.msra.mxu0 %v5107
      %5484 = vmatprep.subr.bf16.mxu0 %v5117
      %5485 = vmatpush1.bf16.msra.mxu0 %v5116
      %5486 = vmatprep.subr.bf16.mxu0 %v5126
      %5487 = vmatpush1.bf16.msra.mxu0 %v5125
      %5488 = vmatprep.subr.bf16.mxu0 %v5135
      %5489 = vmatpush1.bf16.msra.mxu0 %v5134
      %5490 = vmatprep.subr.bf16.mxu0 %v5144
      %5491 = vmatpush1.bf16.msra.mxu0 %v5143
      %5492 = vmatprep.mubr.bf16.mxu0 %v4287
      %5493 = vmatmul.mubr.bf16.gmra.mrb[0].mxu0 %v4286
      %v5494 = vpop.f32.mrb[0].mxu0
      %v5495 = vadd.f32 %v4482, %v5494
      %v5496 = vpop.f32.mrb[0].mxu0
      %v5497 = vadd.f32 %v4486, %v5496
      %v5498 = vpop.f32.mrb[0].mxu0
      %v5499 = vadd.f32 %v4482, %v5498
      %v5500 = vpop.f32.mrb[0].mxu0
      %v5501 = vadd.f32 %v4486, %v5500
      %5502 = vmatprep.mubr.bf16.mxu0 %v4290
      %5503 = vmatmul.mubr.bf16.gmra.mrb[0].mxu0 %v4289
      %v5504 = vpop.f32.mrb[0].mxu0
      %v5505 = vadd.f32 %v4482, %v5504
      %v5506 = vpop.f32.mrb[0].mxu0
      %v5507 = vadd.f32 %v4486, %v5506
      %v5508 = vpop.f32.mrb[0].mxu0
      %v5509 = vadd.f32 %v4482, %v5508
      %v5510 = vpop.f32.mrb[0].mxu0
      %v5511 = vadd.f32 %v4486, %v5510
      %5512 = vdwg.mxu0
      %5513 = vmatprep.subr.bf16.mxu0 %v5153
      %5514 = vmatpush1.bf16.msra.mxu0 %v5152
      %5515 = vmatprep.subr.bf16.mxu0 %v5337
      %5516 = vmatpush1.bf16.msra.mxu0 %v5334
      %5517 = vmatprep.subr.bf16.mxu0 0
      %5518 = vmatpush1.bf16.msra.mxu0 0
      %5519 = vmatprep.subr.bf16.mxu0 0
      %5520 = vmatpush1.bf16.msra.mxu0 0
      %5521 = vmatprep.subr.bf16.mxu0 0
      %5522 = vmatpush1.bf16.msra.mxu0 0
      %5523 = vmatprep.subr.bf16.mxu0 0
      %5524 = vmatpush1.bf16.msra.mxu0 0
      %5525 = vmatprep.subr.bf16.mxu0 0
      %5526 = vmatpush1.bf16.msra.mxu0 0
      %5527 = vmatprep.subr.bf16.mxu0 0
      %5528 = vmatpush1.bf16.msra.mxu0 0
      %5529 = vmatprep.subr.bf16.mxu0 0
      %5530 = vmatpush1.bf16.msra.mxu0 0
      %5531 = vmatprep.subr.bf16.mxu0 0
      %5532 = vmatpush1.bf16.msra.mxu0 0
      %5533 = vmatprep.subr.bf16.mxu0 0
      %5534 = vmatpush1.bf16.msra.mxu0 0
      %5535 = vmatprep.subr.bf16.mxu0 0
      %5536 = vmatpush1.bf16.msra.mxu0 0
      %5537 = vmatprep.subr.bf16.mxu0 0
      %5538 = vmatpush1.bf16.msra.mxu0 0
      %5539 = vmatprep.subr.bf16.mxu0 0
      %5540 = vmatpush1.bf16.msra.mxu0 0
      %5541 = vmatprep.subr.bf16.mxu0 0
      %5542 = vmatpush1.bf16.msra.mxu0 0
      %5543 = vmatprep.subr.bf16.mxu0 0
      %5544 = vmatpush1.bf16.msra.mxu0 0
      %5545 = vmatprep.mubr.bf16.mxu0 0
      %5546 = vmatmul.mubr.bf16.gmra.mrb[0].mxu0 %v5322
      %v5547 = vpop.f32.mrb[0].mxu0
      %v5548 = vadd.f32 %v5495, %v5547
      %v5549 = vpop.f32.mrb[0].mxu0
      %v5550 = vadd.f32 %v5497, %v5549
      %v5551 = vpop.f32.mrb[0].mxu0
      %v5552 = vadd.f32 %v5499, %v5551
      %v5553 = vpop.f32.mrb[0].mxu0
      %v5554 = vadd.f32 %v5501, %v5553
      %5555 = vmatprep.mubr.bf16.mxu0 0
      %5556 = vmatmul.mubr.bf16.gmra.mrb[0].mxu0 %v5325
      %v5557 = vpop.f32.mrb[0].mxu0
      %v5558 = vadd.f32 %v5505, %v5557
      %v5559 = vpop.f32.mrb[0].mxu0
      %v5560 = vadd.f32 %v5507, %v5559
      %v5561 = vpop.f32.mrb[0].mxu0
      %v5562 = vadd.f32 %v5509, %v5561
      %v5563 = vpop.f32.mrb[0].mxu0
      %v5564 = vadd.f32 %v5511, %v5563
      %5565 = vdwg.mxu0
      %5566 = vmatprep.subr.bf16.mxu0 %v5011
      %5567 = vmatpush1.bf16.msra.mxu0 %v5010
      %5568 = vmatprep.subr.bf16.mxu0 %v5020
      %5569 = vmatpush1.bf16.msra.mxu0 %v5019
      %5570 = vmatprep.subr.bf16.mxu0 %v5029
      %5571 = vmatpush1.bf16.msra.mxu0 %v5028
      %5572 = vmatprep.subr.bf16.mxu0 %v5038
      %5573 = vmatpush1.bf16.msra.mxu0 %v5037
      %5574 = vmatprep.subr.bf16.mxu0 %v5047
      %5575 = vmatpush1.bf16.msra.mxu0 %v5046
      %5576 = vmatprep.subr.bf16.mxu0 %v5056
      %5577 = vmatpush1.bf16.msra.mxu0 %v5055
      %5578 = vmatprep.subr.bf16.mxu0 %v5065
      %5579 = vmatpush1.bf16.msra.mxu0 %v5064
      %5580 = vmatprep.subr.bf16.mxu0 %v5074
      %5581 = vmatpush1.bf16.msra.mxu0 %v5073
      %5582 = vmatprep.subr.bf16.mxu0 %v5083
      %5583 = vmatpush1.bf16.msra.mxu0 %v5082
      %5584 = vmatprep.subr.bf16.mxu0 %v5092
      %5585 = vmatpush1.bf16.msra.mxu0 %v5091
      %5586 = vmatprep.subr.bf16.mxu0 %v5101
      %5587 = vmatpush1.bf16.msra.mxu0 %v5100
      %5588 = vmatprep.subr.bf16.mxu0 %v5110
      %5589 = vmatpush1.bf16.msra.mxu0 %v5109
      %5590 = vmatprep.subr.bf16.mxu0 %v5119
      %5591 = vmatpush1.bf16.msra.mxu0 %v5118
      %5592 = vmatprep.subr.bf16.mxu0 %v5128
      %5593 = vmatpush1.bf16.msra.mxu0 %v5127
      %5594 = vmatprep.subr.bf16.mxu0 %v5137
      %5595 = vmatpush1.bf16.msra.mxu0 %v5136
      %5596 = vmatprep.subr.bf16.mxu0 %v5146
      %5597 = vmatpush1.bf16.msra.mxu0 %v5145
      %5598 = vmatprep.mubr.bf16.mxu0 %v4287
      %5599 = vmatmul.mubr.bf16.gmra.mrb[0].mxu0 %v4286
      %v5600 = vpop.f32.mrb[0].mxu0
      %v5601 = vadd.f32 %v4490, %v5600
      %v5602 = vpop.f32.mrb[0].mxu0
      %v5603 = vadd.f32 %v4494, %v5602
      %v5604 = vpop.f32.mrb[0].mxu0
      %v5605 = vadd.f32 %v4490, %v5604
      %v5606 = vpop.f32.mrb[0].mxu0
      %v5607 = vadd.f32 %v4494, %v5606
      %5608 = vmatprep.mubr.bf16.mxu0 %v4290
      %5609 = vmatmul.mubr.bf16.gmra.mrb[0].mxu0 %v4289
      %v5610 = vpop.f32.mrb[0].mxu0
      %v5611 = vadd.f32 %v4490, %v5610
      %v5612 = vpop.f32.mrb[0].mxu0
      %v5613 = vadd.f32 %v4494, %v5612
      %v5614 = vpop.f32.mrb[0].mxu0
      %v5615 = vadd.f32 %v4490, %v5614
      %v5616 = vpop.f32.mrb[0].mxu0
      %v5617 = vadd.f32 %v4494, %v5616
      %5618 = vdwg.mxu0
      %5619 = vmatprep.subr.bf16.mxu0 %v5155
      %5620 = vmatpush1.bf16.msra.mxu0 %v5154
      %5621 = vmatprep.subr.bf16.mxu0 %v5343
      %5622 = vmatpush1.bf16.msra.mxu0 %v5340
      %5623 = vmatprep.subr.bf16.mxu0 0
      %5624 = vmatpush1.bf16.msra.mxu0 0
      %5625 = vmatprep.subr.bf16.mxu0 0
      %5626 = vmatpush1.bf16.msra.mxu0 0
      %5627 = vmatprep.subr.bf16.mxu0 0
      %5628 = vmatpush1.bf16.msra.mxu0 0
      %5629 = vmatprep.subr.bf16.mxu0 0
      %5630 = vmatpush1.bf16.msra.mxu0 0
      %5631 = vmatprep.subr.bf16.mxu0 0
      %5632 = vmatpush1.bf16.msra.mxu0 0
      %5633 = vmatprep.subr.bf16.mxu0 0
      %5634 = vmatpush1.bf16.msra.mxu0 0
      %5635 = vmatprep.subr.bf16.mxu0 0
      %5636 = vmatpush1.bf16.msra.mxu0 0
      %5637 = vmatprep.subr.bf16.mxu0 0
      %5638 = vmatpush1.bf16.msra.mxu0 0
      %5639 = vmatprep.subr.bf16.mxu0 0
      %5640 = vmatpush1.bf16.msra.mxu0 0
      %5641 = vmatprep.subr.bf16.mxu0 0
      %5642 = vmatpush1.bf16.msra.mxu0 0
      %5643 = vmatprep.subr.bf16.mxu0 0
      %5644 = vmatpush1.bf16.msra.mxu0 0
      %5645 = vmatprep.subr.bf16.mxu0 0
      %5646 = vmatpush1.bf16.msra.mxu0 0
      %5647 = vmatprep.subr.bf16.mxu0 0
      %5648 = vmatpush1.bf16.msra.mxu0 0
      %5649 = vmatprep.subr.bf16.mxu0 0
      %5650 = vmatpush1.bf16.msra.mxu0 0
      %5651 = vmatprep.mubr.bf16.mxu0 0
      %5652 = vmatmul.mubr.bf16.gmra.mrb[0].mxu0 %v5322
      %v5653 = vpop.f32.mrb[0].mxu0
      %v5654 = vadd.f32 %v5601, %v5653
      %v5655 = vpop.f32.mrb[0].mxu0
      %v5656 = vadd.f32 %v5603, %v5655
      %v5657 = vpop.f32.mrb[0].mxu0
      %v5658 = vadd.f32 %v5605, %v5657
      %v5659 = vpop.f32.mrb[0].mxu0
      %v5660 = vadd.f32 %v5607, %v5659
      %5661 = vmatprep.mubr.bf16.mxu0 0
      %5662 = vmatmul.mubr.bf16.gmra.mrb[0].mxu0 %v5325
      %v5663 = vpop.f32.mrb[0].mxu0
      %v5664 = vadd.f32 %v5611, %v5663
      %v5665 = vpop.f32.mrb[0].mxu0
      %v5666 = vadd.f32 %v5613, %v5665
      %v5667 = vpop.f32.mrb[0].mxu0
      %v5668 = vadd.f32 %v5615, %v5667
      %v5669 = vpop.f32.mrb[0].mxu0
      %v5670 = vadd.f32 %v5617, %v5669
      %5671 = vdwg.mxu0
      %5672 = vmatprep.subr.bf16.mxu0 %v5013
      %5673 = vmatpush1.bf16.msra.mxu0 %v5012
      %5674 = vmatprep.subr.bf16.mxu0 %v5022
      %5675 = vmatpush1.bf16.msra.mxu0 %v5021
      %5676 = vmatprep.subr.bf16.mxu0 %v5031
      %5677 = vmatpush1.bf16.msra.mxu0 %v5030
      %5678 = vmatprep.subr.bf16.mxu0 %v5040
      %5679 = vmatpush1.bf16.msra.mxu0 %v5039
      %5680 = vmatprep.subr.bf16.mxu0 %v5049
      %5681 = vmatpush1.bf16.msra.mxu0 %v5048
      %5682 = vmatprep.subr.bf16.mxu0 %v5058
      %5683 = vmatpush1.bf16.msra.mxu0 %v5057
      %5684 = vmatprep.subr.bf16.mxu0 %v5067
      %5685 = vmatpush1.bf16.msra.mxu0 %v5066
      %5686 = vmatprep.subr.bf16.mxu0 %v5076
      %5687 = vmatpush1.bf16.msra.mxu0 %v5075
      %5688 = vmatprep.subr.bf16.mxu0 %v5085
      %5689 = vmatpush1.bf16.msra.mxu0 %v5084
      %5690 = vmatprep.subr.bf16.mxu0 %v5094
      %5691 = vmatpush1.bf16.msra.mxu0 %v5093
      %5692 = vmatprep.subr.bf16.mxu0 %v5103
      %5693 = vmatpush1.bf16.msra.mxu0 %v5102
      %5694 = vmatprep.subr.bf16.mxu0 %v5112
      %5695 = vmatpush1.bf16.msra.mxu0 %v5111
      %5696 = vmatprep.subr.bf16.mxu0 %v5121
      %5697 = vmatpush1.bf16.msra.mxu0 %v5120
      %5698 = vmatprep.subr.bf16.mxu0 %v5130
      %5699 = vmatpush1.bf16.msra.mxu0 %v5129
      %5700 = vmatprep.subr.bf16.mxu0 %v5139
      %5701 = vmatpush1.bf16.msra.mxu0 %v5138
      %5702 = vmatprep.subr.bf16.mxu0 %v5148
      %5703 = vmatpush1.bf16.msra.mxu0 %v5147
      %5704 = vmatprep.mubr.bf16.mxu0 %v4287
      %5705 = vmatmul.mubr.bf16.gmra.mrb[0].mxu0 %v4286
      %v5706 = vpop.f32.mrb[0].mxu0
      %v5707 = vadd.f32 %v4498, %v5706
      %v5708 = vpop.f32.mrb[0].mxu0
      %v5709 = vadd.f32 %v4502, %v5708
      %v5710 = vpop.f32.mrb[0].mxu0
      %v5711 = vadd.f32 %v4498, %v5710
      %v5712 = vpop.f32.mrb[0].mxu0
      %v5713 = vadd.f32 %v4502, %v5712
      %5714 = vmatprep.mubr.bf16.mxu0 %v4290
      %5715 = vmatmul.mubr.bf16.gmra.mrb[0].mxu0 %v4289
      %v5716 = vpop.f32.mrb[0].mxu0
      %v5717 = vadd.f32 %v4498, %v5716
      %v5718 = vpop.f32.mrb[0].mxu0
      %v5719 = vadd.f32 %v4502, %v5718
      %v5720 = vpop.f32.mrb[0].mxu0
      %v5721 = vadd.f32 %v4498, %v5720
      %v5722 = vpop.f32.mrb[0].mxu0
      %v5723 = vadd.f32 %v4502, %v5722
      %5724 = vdwg.mxu0
      %5725 = vmatprep.subr.bf16.mxu0 %v5157
      %5726 = vmatpush1.bf16.msra.mxu0 %v5156
      %5727 = vmatprep.subr.bf16.mxu0 %v5349
      %5728 = vmatpush1.bf16.msra.mxu0 %v5346
      %5729 = vmatprep.subr.bf16.mxu0 0
      %5730 = vmatpush1.bf16.msra.mxu0 0
      %5731 = vmatprep.subr.bf16.mxu0 0
      %5732 = vmatpush1.bf16.msra.mxu0 0
      %5733 = vmatprep.subr.bf16.mxu0 0
      %5734 = vmatpush1.bf16.msra.mxu0 0
      %5735 = vmatprep.subr.bf16.mxu0 0
      %5736 = vmatpush1.bf16.msra.mxu0 0
      %5737 = vmatprep.subr.bf16.mxu0 0
      %5738 = vmatpush1.bf16.msra.mxu0 0
      %5739 = vmatprep.subr.bf16.mxu0 0
      %5740 = vmatpush1.bf16.msra.mxu0 0
      %5741 = vmatprep.subr.bf16.mxu0 0
      %5742 = vmatpush1.bf16.msra.mxu0 0
      %5743 = vmatprep.subr.bf16.mxu0 0
      %5744 = vmatpush1.bf16.msra.mxu0 0
      %5745 = vmatprep.subr.bf16.mxu0 0
      %5746 = vmatpush1.bf16.msra.mxu0 0
      %5747 = vmatprep.subr.bf16.mxu0 0
      %5748 = vmatpush1.bf16.msra.mxu0 0
      %5749 = vmatprep.subr.bf16.mxu0 0
      %5750 = vmatpush1.bf16.msra.mxu0 0
      %5751 = vmatprep.subr.bf16.mxu0 0
      %5752 = vmatpush1.bf16.msra.mxu0 0
      %5753 = vmatprep.subr.bf16.mxu0 0
      %5754 = vmatpush1.bf16.msra.mxu0 0
      %5755 = vmatprep.subr.bf16.mxu0 0
      %5756 = vmatpush1.bf16.msra.mxu0 0
      %5757 = vmatprep.mubr.bf16.mxu0 0
      %5758 = vmatmul.mubr.bf16.gmra.mrb[0].mxu0 %v5322
      %v5759 = vpop.f32.mrb[0].mxu0
      %v5760 = vadd.f32 %v5707, %v5759
      %v5761 = vpop.f32.mrb[0].mxu0
      %v5762 = vadd.f32 %v5709, %v5761
      %v5763 = vpop.f32.mrb[0].mxu0
      %v5764 = vadd.f32 %v5711, %v5763
      %v5765 = vpop.f32.mrb[0].mxu0
      %v5766 = vadd.f32 %v5713, %v5765
      %5767 = vmatprep.mubr.bf16.mxu0 0
      %5768 = vmatmul.mubr.bf16.gmra.mrb[0].mxu0 %v5325
      %v5769 = vpop.f32.mrb[0].mxu0
      %v5770 = vadd.f32 %v5717, %v5769
      %v5771 = vpop.f32.mrb[0].mxu0
      %v5772 = vadd.f32 %v5719, %v5771
      %v5773 = vpop.f32.mrb[0].mxu0
      %v5774 = vadd.f32 %v5721, %v5773
      %v5775 = vpop.f32.mrb[0].mxu0
      %v5776 = vadd.f32 %v5723, %v5775
      %5777 = vdwg.mxu0
      %5778 = vmatprep.subr.bf16.mxu0 0
      %5779 = vmatpush1.bf16.msra.mxu0 %v5014
      %5780 = vmatprep.subr.bf16.mxu0 0
      %5781 = vmatpush1.bf16.msra.mxu0 %v5023
      %5782 = vmatprep.subr.bf16.mxu0 0
      %5783 = vmatpush1.bf16.msra.mxu0 %v5032
      %5784 = vmatprep.subr.bf16.mxu0 0
      %5785 = vmatpush1.bf16.msra.mxu0 %v5041
      %5786 = vmatprep.subr.bf16.mxu0 0
      %5787 = vmatpush1.bf16.msra.mxu0 %v5050
      %5788 = vmatprep.subr.bf16.mxu0 0
      %5789 = vmatpush1.bf16.msra.mxu0 %v5059
      %5790 = vmatprep.subr.bf16.mxu0 0
      %5791 = vmatpush1.bf16.msra.mxu0 %v5068
      %5792 = vmatprep.subr.bf16.mxu0 0
      %5793 = vmatpush1.bf16.msra.mxu0 %v5077
      %5794 = vmatprep.subr.bf16.mxu0 0
      %5795 = vmatpush1.bf16.msra.mxu0 %v5086
      %5796 = vmatprep.subr.bf16.mxu0 0
      %5797 = vmatpush1.bf16.msra.mxu0 %v5095
      %5798 = vmatprep.subr.bf16.mxu0 0
      %5799 = vmatpush1.bf16.msra.mxu0 %v5104
      %5800 = vmatprep.subr.bf16.mxu0 0
      %5801 = vmatpush1.bf16.msra.mxu0 %v5113
      %5802 = vmatprep.subr.bf16.mxu0 0
      %5803 = vmatpush1.bf16.msra.mxu0 %v5122
      %5804 = vmatprep.subr.bf16.mxu0 0
      %5805 = vmatpush1.bf16.msra.mxu0 %v5131
      %5806 = vmatprep.subr.bf16.mxu0 0
      %5807 = vmatpush1.bf16.msra.mxu0 %v5140
      %5808 = vmatprep.subr.bf16.mxu0 0
      %5809 = vmatpush1.bf16.msra.mxu0 %v5149
      %5810 = vmatprep.mubr.bf16.mxu0 %v4287
      %5811 = vmatmul.mubr.bf16.gmra.mrb[0].mxu0 %v4286
      %v5812 = vpop.f32.mrb[0].mxu0
      %v5813 = vadd.f32 %v4506, %v5812
      %v5814 = vpop.f32.mrb[0].mxu0
      %v5815 = vpop.f32.mrb[0].mxu0
      %v5816 = vadd.f32 %v4506, %v5815
      %v5817 = vpop.f32.mrb[0].mxu0
      %5818 = vmatprep.mubr.bf16.mxu0 %v4290
      %5819 = vmatmul.mubr.bf16.gmra.mrb[0].mxu0 %v4289
      %v5820 = vpop.f32.mrb[0].mxu0
      %v5821 = vadd.f32 %v4506, %v5820
      %v5822 = vpop.f32.mrb[0].mxu0
      %v5823 = vpop.f32.mrb[0].mxu0
      %v5824 = vadd.f32 %v4506, %v5823
      %v5825 = vpop.f32.mrb[0].mxu0
      %5826 = vdwg.mxu0
      %5827 = vmatprep.subr.bf16.mxu0 0
      %5828 = vmatpush1.bf16.msra.mxu0 %v5158
      %5829 = vmatprep.subr.bf16.mxu0 0
      %5830 = vmatpush1.bf16.msra.mxu0 %v5352
      %5831 = vmatprep.subr.bf16.mxu0 0
      %5832 = vmatpush1.bf16.msra.mxu0 0
      %5833 = vmatprep.subr.bf16.mxu0 0
      %5834 = vmatpush1.bf16.msra.mxu0 0
      %5835 = vmatprep.subr.bf16.mxu0 0
      %5836 = vmatpush1.bf16.msra.mxu0 0
      %5837 = vmatprep.subr.bf16.mxu0 0
      %5838 = vmatpush1.bf16.msra.mxu0 0
      %5839 = vmatprep.subr.bf16.mxu0 0
      %5840 = vmatpush1.bf16.msra.mxu0 0
      %5841 = vmatprep.subr.bf16.mxu0 0
      %5842 = vmatpush1.bf16.msra.mxu0 0
      %5843 = vmatprep.subr.bf16.mxu0 0
      %5844 = vmatpush1.bf16.msra.mxu0 0
      %5845 = vmatprep.subr.bf16.mxu0 0
      %5846 = vmatpush1.bf16.msra.mxu0 0
      %5847 = vmatprep.subr.bf16.mxu0 0
      %5848 = vmatpush1.bf16.msra.mxu0 0
      %5849 = vmatprep.subr.bf16.mxu0 0
      %5850 = vmatpush1.bf16.msra.mxu0 0
      %5851 = vmatprep.subr.bf16.mxu0 0
      %5852 = vmatpush1.bf16.msra.mxu0 0
      %5853 = vmatprep.subr.bf16.mxu0 0
      %5854 = vmatpush1.bf16.msra.mxu0 0
      %5855 = vmatprep.subr.bf16.mxu0 0
      %5856 = vmatpush1.bf16.msra.mxu0 0
      %5857 = vmatprep.subr.bf16.mxu0 0
      %5858 = vmatpush1.bf16.msra.mxu0 0
      %5859 = vmatprep.mubr.bf16.mxu0 0
      %5860 = vmatmul.mubr.bf16.gmra.mrb[0].mxu0 %v5322
      %v5861 = vpop.f32.mrb[0].mxu0
      %v5862 = vadd.f32 %v5813, %v5861
      %v5863 = vpop.f32.mrb[0].mxu0
      %v5864 = vpop.f32.mrb[0].mxu0
      %v5865 = vadd.f32 %v5816, %v5864
      %v5866 = vpop.f32.mrb[0].mxu0
      %5867 = vmatprep.mubr.bf16.mxu0 0
      %5868 = vmatmul.mubr.bf16.gmra.mrb[0].mxu0 %v5325
      %v5869 = vpop.f32.mrb[0].mxu0
      %v5870 = vadd.f32 %v5821, %v5869
      %v5871 = vpop.f32.mrb[0].mxu0
      %v5872 = vpop.f32.mrb[0].mxu0
      %v5873 = vadd.f32 %v5824, %v5872
      %v5874 = vpop.f32.mrb[0].mxu0
      %5875 = vdwg.mxu0
      %v5876 = vmax.f32 %v5442, 0.0
      %v5877 = vmax.f32 %v5444, 0.0
      %v5878 = vmax.f32 %v5548, 0.0
      %v5879 = vmax.f32 %v5550, 0.0
      %v5880 = vmax.f32 %v5654, 0.0
      %v5881 = vmax.f32 %v5656, 0.0
      %v5882 = vmax.f32 %v5760, 0.0
      %v5883 = vmax.f32 %v5762, 0.0
      %v5884 = vmax.f32 %v5862, 0.0
      %v5885 = vmax.f32 %v5446, 0.0
      %v5886 = vmax.f32 %v5448, 0.0
      %v5887 = vmax.f32 %v5552, 0.0
      %v5888 = vmax.f32 %v5554, 0.0
      %v5889 = vmax.f32 %v5658, 0.0
      %v5890 = vmax.f32 %v5660, 0.0
      %v5891 = vmax.f32 %v5764, 0.0
      %v5892 = vmax.f32 %v5766, 0.0
      %v5893 = vmax.f32 %v5865, 0.0
      %v5894 = vmax.f32 %v5452, 0.0
      %v5895 = vmax.f32 %v5454, 0.0
      %v5896 = vmax.f32 %v5558, 0.0
      %v5897 = vmax.f32 %v5560, 0.0
      %v5898 = vmax.f32 %v5664, 0.0
      %v5899 = vmax.f32 %v5666, 0.0
      %v5900 = vmax.f32 %v5770, 0.0
      %v5901 = vmax.f32 %v5772, 0.0
      %v5902 = vmax.f32 %v5870, 0.0
      %v5903 = vmax.f32 %v5456, 0.0
      %v5904 = vmax.f32 %v5458, 0.0
      %v5905 = vmax.f32 %v5562, 0.0
      %v5906 = vmax.f32 %v5564, 0.0
      %v5907 = vmax.f32 %v5668, 0.0
      %v5908 = vmax.f32 %v5670, 0.0
      %v5909 = vmax.f32 %v5774, 0.0
      %v5910 = vmax.f32 %v5776, 0.0
      %v5911 = vmax.f32 %v5873, 0.0
      %v5912 = vpack.c.bf16 %v5885, %v5876
      %v5913 = vpack.c.bf16 %v5886, %v5877
      %v5914 = vpack.c.bf16 %v5887, %v5878
      %v5915 = vpack.c.bf16 %v5888, %v5879
      %v5916 = vpack.c.bf16 %v5889, %v5880
      %v5917 = vpack.c.bf16 %v5890, %v5881
      %v5918 = vpack.c.bf16 %v5891, %v5882
      %v5919 = vpack.c.bf16 %v5892, %v5883
      %v5920 = vpack.c.bf16 %v5893, %v5884
      %v5921 = vpack.c.bf16 %v5903, %v5894
      %v5922 = vpack.c.bf16 %v5904, %v5895
      %v5923 = vpack.c.bf16 %v5905, %v5896
      %v5924 = vpack.c.bf16 %v5906, %v5897
      %v5925 = vpack.c.bf16 %v5907, %v5898
      %v5926 = vpack.c.bf16 %v5908, %v5899
      %v5927 = vpack.c.bf16 %v5909, %v5900
      %v5928 = vpack.c.bf16 %v5910, %v5901
      %v5929 = vpack.c.bf16 %v5911, %v5902
      %v5930 = vld [vmem:[%s645] sm:$0xff]
      %v5931 = vld [vmem:[%s645 + $0x8] sm:$0xf]
      %v5932 = vld [vmem:[%s645 + $0xc] sm:$0xff]
      %v5933 = vld [vmem:[%s645 + $0x14] sm:$0xf]
      %v5934 = vld [vmem:[%s645 + $0x18] sm:$0xff]
      %v5935 = vld [vmem:[%s645 + $0x20] sm:$0xf]
      %v5936 = vld [vmem:[%s645 + $0x24] sm:$0xff]
      %v5937 = vld [vmem:[%s645 + $0x2c] sm:$0xf]
      %v5938 = vld [vmem:[%s645 + $0x30] sm:$0xff]
      %v5939 = vld [vmem:[%s645 + $0x38] sm:$0xf]
      %v5940 = vld [vmem:[%s645 + $0x3c] sm:$0xff]
      %v5941 = vld [vmem:[%s645 + $0x44] sm:$0xf]
      %v5942 = vld [vmem:[%s645 + $0x48] sm:$0xff]
      %v5943 = vld [vmem:[%s645 + $0x50] sm:$0xf]
      %v5944 = vld [vmem:[%s645 + $0x54] sm:$0xff]
      %v5945 = vld [vmem:[%s645 + $0x5c] sm:$0xf]
      %v5946 = vld [vmem:[%s645 + $0x60] sm:$0xff]
      %v5947 = vld [vmem:[%s645 + $0x68] sm:$0xf]
      %v5948 = vld [vmem:[%s645 + $0x6c] sm:$0xff]
      %v5949 = vld [vmem:[%s645 + $0x74] sm:$0xf]
      %v5950 = vld [vmem:[%s645 + $0x78] sm:$0xff]
      %v5951 = vld [vmem:[%s645 + $0x80] sm:$0xf]
      %v5952 = vld [vmem:[%s645 + $0x84] sm:$0xff]
      %v5953 = vld [vmem:[%s645 + $0x8c] sm:$0xf]
      %v5954 = vld [vmem:[%s645 + $0x90] sm:$0xff]
      %v5955 = vld [vmem:[%s645 + $0x98] sm:$0xf]
      %v5956 = vld [vmem:[%s645 + $0x9c] sm:$0xff]
      %v5957 = vld [vmem:[%s645 + $0xa4] sm:$0xf]
      %v5958 = vld [vmem:[%s645 + $0xa8] sm:$0xff]
      %v5959 = vld [vmem:[%s645 + $0xb0] sm:$0xf]
      %v5960 = vld [vmem:[%s645 + $0xb4] sm:$0xff]
      %v5961 = vld [vmem:[%s645 + $0xbc] sm:$0xf]
      %v5962 = vld [vmem:[%s645 + $0xc0] sm:$0xff]
      %v5963 = vld [vmem:[%s645 + $0xc8] sm:$0xf]
      %v5964 = vld [vmem:[%s645 + $0xcc] sm:$0xff]
      %v5965 = vld [vmem:[%s645 + $0xd4] sm:$0xf]
      %v5966 = vld [vmem:[%s645 + $0xd8] sm:$0xff]
      %v5967 = vld [vmem:[%s645 + $0xe0] sm:$0xf]
      %v5968 = vld [vmem:[%s645 + $0xe4] sm:$0xff]
      %v5969 = vld [vmem:[%s645 + $0xec] sm:$0xf]
      %v5970 = vld [vmem:[%s645 + $0xf0] sm:$0xff]
      %v5971 = vld [vmem:[%s645 + $0xf8] sm:$0xf]
      %v5972 = vld [vmem:[%s645 + $0xfc] sm:$0xff]
      %v5973 = vld [vmem:[%s645 + $0x104] sm:$0xf]
      %v5974 = vld [vmem:[%s645 + $0x108] sm:$0xff]
      %v5975 = vld [vmem:[%s645 + $0x110] sm:$0xf]
      %v5976 = vld [vmem:[%s645 + $0x114] sm:$0xff]
      %v5977 = vld [vmem:[%s645 + $0x11c] sm:$0xf]
      %v5978 = vld [vmem:[%s645 + $0x120] sm:$0xff]
      %v5979 = vld [vmem:[%s645 + $0x128] sm:$0xf]
      %v5980 = vld [vmem:[%s645 + $0x12c] sm:$0xff]
      %v5981 = vld [vmem:[%s645 + $0x134] sm:$0xf]
      %v5982 = vld [vmem:[%s645 + $0x138] sm:$0xff]
      %v5983 = vld [vmem:[%s645 + $0x140] sm:$0xf]
      %v5984 = vld [vmem:[%s645 + $0x144] sm:$0xff]
      %v5985 = vld [vmem:[%s645 + $0x14c] sm:$0xf]
      %v5986 = vld [vmem:[%s645 + $0x150] sm:$0xff]
      %v5987 = vld [vmem:[%s645 + $0x158] sm:$0xf]
      %v5988 = vld [vmem:[%s645 + $0x15c] sm:$0xff]
      %v5989 = vld [vmem:[%s645 + $0x164] sm:$0xf]
      %v5990 = vld [vmem:[%s645 + $0x168] sm:$0xff]
      %v5991 = vld [vmem:[%s645 + $0x170] sm:$0xf]
      %v5992 = vld [vmem:[%s645 + $0x174] sm:$0xff]
      %v5993 = vld [vmem:[%s645 + $0x17c] sm:$0xf]
      %v5994 = vld [vmem:[%s645 + $0x180] sm:$0xff]
      %v5995 = vld [vmem:[%s645 + $0x188] sm:$0xf]
      %v5996 = vld [vmem:[%s645 + $0x18c] sm:$0xff]
      %v5997 = vld [vmem:[%s645 + $0x194] sm:$0xf]
      %v5998 = vld [vmem:[%s645 + $0x198] sm:$0xff]
      %v5999 = vld [vmem:[%s645 + $0x1a0] sm:$0xf]
      %v6000 = vld [vmem:[%s645 + $0x1a4] sm:$0xff]
      %v6001 = vld [vmem:[%s645 + $0x1ac] sm:$0xf]
      %v6002 = vld [vmem:[%s645 + $0x1b0] sm:$0xff]
      %v6003 = vld [vmem:[%s645 + $0x1b8] sm:$0xf]
      %v6004 = vld [vmem:[%s645 + $0x1bc] sm:$0xff]
      %v6005 = vld [vmem:[%s645 + $0x1c4] sm:$0xf]
      %v6006 = vld [vmem:[%s645 + $0x1c8] sm:$0xff]
      %v6007 = vld [vmem:[%s645 + $0x1d0] sm:$0xf]
      %v6008 = vld [vmem:[%s645 + $0x1d4] sm:$0xff]
      %v6009 = vld [vmem:[%s645 + $0x1dc] sm:$0xf]
      %v6010 = vld [vmem:[%s645 + $0x1e0] sm:$0xff]
      %v6011 = vld [vmem:[%s645 + $0x1e8] sm:$0xf]
      %v6012 = vld [vmem:[%s645 + $0x1ec] sm:$0xff]
      %v6013 = vld [vmem:[%s645 + $0x1f4] sm:$0xf]
      %v6014 = vld [vmem:[%s645 + $0x1f8] sm:$0xff]
      %v6015 = vld [vmem:[%s645 + $0x200] sm:$0xf]
      %v6016 = vld [vmem:[%s645 + $0x204] sm:$0xff]
      %v6017 = vld [vmem:[%s645 + $0x20c] sm:$0xf]
      %v6018 = vld [vmem:[%s645 + $0x210] sm:$0xff]
      %v6019 = vld [vmem:[%s645 + $0x218] sm:$0xf]
      %v6020 = vld [vmem:[%s645 + $0x21c] sm:$0xff]
      %v6021 = vld [vmem:[%s645 + $0x224] sm:$0xf]
      %v6022 = vld [vmem:[%s645 + $0x228] sm:$0xff]
      %v6023 = vld [vmem:[%s645 + $0x230] sm:$0xf]
      %v6024 = vld [vmem:[%s645 + $0x234] sm:$0xff]
      %v6025 = vld [vmem:[%s645 + $0x23c] sm:$0xf]
      %v6026 = vld [vmem:[%s645 + $0x240] sm:$0xff]
      %v6027 = vld [vmem:[%s645 + $0x248] sm:$0xf]
      %v6028 = vld [vmem:[%s645 + $0x24c] sm:$0xff]
      %v6029 = vld [vmem:[%s645 + $0x254] sm:$0xf]
      %v6030 = vld [vmem:[%s645 + $0x258] sm:$0xff]
      %v6031 = vld [vmem:[%s645 + $0x260] sm:$0xf]
      %v6032 = vld [vmem:[%s645 + $0x264] sm:$0xff]
      %v6033 = vld [vmem:[%s645 + $0x26c] sm:$0xf]
      %v6034 = vld [vmem:[%s645 + $0x270] sm:$0xff]
      %v6035 = vld [vmem:[%s645 + $0x278] sm:$0xf]
      %v6036 = vld [vmem:[%s645 + $0x27c] sm:$0xff]
      %v6037 = vld [vmem:[%s645 + $0x284] sm:$0xf]
      %v6038 = vld [vmem:[%s645 + $0x288] sm:$0xff]
      %v6039 = vld [vmem:[%s645 + $0x290] sm:$0xf]
      %v6040 = vld [vmem:[%s645 + $0x294] sm:$0xff]
      %v6041 = vld [vmem:[%s645 + $0x29c] sm:$0xf]
      %v6042 = vld [vmem:[%s645 + $0x2a0] sm:$0xff]
      %v6043 = vld [vmem:[%s645 + $0x2a8] sm:$0xf]
      %v6044 = vld [vmem:[%s645 + $0x2ac] sm:$0xff]
      %v6045 = vld [vmem:[%s645 + $0x2b4] sm:$0xf]
      %v6046 = vld [vmem:[%s645 + $0x2b8] sm:$0xff]
      %v6047 = vld [vmem:[%s645 + $0x2c0] sm:$0xf]
      %v6048 = vld [vmem:[%s645 + $0x2c4] sm:$0xff]
      %v6049 = vld [vmem:[%s645 + $0x2cc] sm:$0xf]
      %v6050 = vld [vmem:[%s645 + $0x2d0] sm:$0xff]
      %v6051 = vld [vmem:[%s645 + $0x2d8] sm:$0xf]
      %v6052 = vld [vmem:[%s645 + $0x2dc] sm:$0xff]
      %v6053 = vld [vmem:[%s645 + $0x2e4] sm:$0xf]
      %v6054 = vld [vmem:[%s645 + $0x2e8] sm:$0xff]
      %v6055 = vld [vmem:[%s645 + $0x2f0] sm:$0xf]
      %v6056 = vld [vmem:[%s645 + $0x2f4] sm:$0xff]
      %v6057 = vld [vmem:[%s645 + $0x2fc] sm:$0xf]
      %v6058 = vld [vmem:[%s645 + $0x300] sm:$0xff]
      %v6059 = vld [vmem:[%s645 + $0x308] sm:$0xf]
      %v6060 = vld [vmem:[%s645 + $0x30c] sm:$0xff]
      %v6061 = vld [vmem:[%s645 + $0x314] sm:$0xf]
      %v6062 = vld [vmem:[%s645 + $0x318] sm:$0xff]
      %v6063 = vld [vmem:[%s645 + $0x320] sm:$0xf]
      %v6064 = vld [vmem:[%s645 + $0x324] sm:$0xff]
      %v6065 = vld [vmem:[%s645 + $0x32c] sm:$0xf]
      %v6066 = vld [vmem:[%s645 + $0x330] sm:$0xff]
      %v6067 = vld [vmem:[%s645 + $0x338] sm:$0xf]
      %v6068 = vld [vmem:[%s645 + $0x33c] sm:$0xff]
      %v6069 = vld [vmem:[%s645 + $0x344] sm:$0xf]
      %v6070 = vld [vmem:[%s645 + $0x348] sm:$0xff]
      %v6071 = vld [vmem:[%s645 + $0x350] sm:$0xf]
      %v6072 = vld [vmem:[%s645 + $0x354] sm:$0xff]
      %v6073 = vld [vmem:[%s645 + $0x35c] sm:$0xf]
      %v6074 = vld [vmem:[%s645 + $0x360] sm:$0xff]
      %v6075 = vld [vmem:[%s645 + $0x368] sm:$0xf]
      %v6076 = vld [vmem:[%s645 + $0x36c] sm:$0xff]
      %v6077 = vld [vmem:[%s645 + $0x374] sm:$0xf]
      %v6078 = vld [vmem:[%s645 + $0x378] sm:$0xff]
      %v6079 = vld [vmem:[%s645 + $0x380] sm:$0xf]
      %v6080 = vld [vmem:[%s645 + $0x384] sm:$0xff]
      %v6081 = vld [vmem:[%s645 + $0x38c] sm:$0xf]
      %v6082 = vld [vmem:[%s645 + $0x390] sm:$0xff]
      %v6083 = vld [vmem:[%s645 + $0x398] sm:$0xf]
      %v6084 = vld [vmem:[%s645 + $0x39c] sm:$0xff]
      %v6085 = vld [vmem:[%s645 + $0x3a4] sm:$0xf]
      %v6086 = vld [vmem:[%s645 + $0x3a8] sm:$0xff]
      %v6087 = vld [vmem:[%s645 + $0x3b0] sm:$0xf]
      %v6088 = vld [vmem:[%s645 + $0x3b4] sm:$0xff]
      %v6089 = vld [vmem:[%s645 + $0x3bc] sm:$0xf]
      %v6090 = vld [vmem:[%s645 + $0x3c0] sm:$0xff]
      %v6091 = vld [vmem:[%s645 + $0x3c8] sm:$0xf]
      %v6092 = vld [vmem:[%s645 + $0x3cc] sm:$0xff]
      %v6093 = vld [vmem:[%s645 + $0x3d4] sm:$0xf]
      %v6094 = vld [vmem:[%s645 + $0x3d8] sm:$0xff]
      %v6095 = vld [vmem:[%s645 + $0x3e0] sm:$0xf]
      %v6096 = vld [vmem:[%s645 + $0x3e4] sm:$0xff]
      %v6097 = vld [vmem:[%s645 + $0x3ec] sm:$0xf]
      %v6098 = vld [vmem:[%s645 + $0x3f0] sm:$0xff]
      %v6099 = vld [vmem:[%s645 + $0x3f8] sm:$0xf]
      %v6100 = vld [vmem:[%s645 + $0x3fc] sm:$0xff]
      %v6101 = vld [vmem:[%s645 + $0x404] sm:$0xf]
      %v6102 = vld [vmem:[%s645 + $0x408] sm:$0xff]
      %v6103 = vld [vmem:[%s645 + $0x410] sm:$0xf]
      %v6104 = vld [vmem:[%s645 + $0x414] sm:$0xff]
      %v6105 = vld [vmem:[%s645 + $0x41c] sm:$0xf]
      %v6106 = vld [vmem:[%s645 + $0x420] sm:$0xff]
      %v6107 = vld [vmem:[%s645 + $0x428] sm:$0xf]
      %v6108 = vld [vmem:[%s645 + $0x42c] sm:$0xff]
      %v6109 = vld [vmem:[%s645 + $0x434] sm:$0xf]
      %v6110 = vld [vmem:[%s645 + $0x438] sm:$0xff]
      %v6111 = vld [vmem:[%s645 + $0x440] sm:$0xf]
      %v6112 = vld [vmem:[%s645 + $0x444] sm:$0xff]
      %v6113 = vld [vmem:[%s645 + $0x44c] sm:$0xf]
      %v6114 = vld [vmem:[%s645 + $0x450] sm:$0xff]
      %v6115 = vld [vmem:[%s645 + $0x458] sm:$0xf]
      %v6116 = vld [vmem:[%s645 + $0x45c] sm:$0xff]
      %v6117 = vld [vmem:[%s645 + $0x464] sm:$0xf]
      %v6118 = vld [vmem:[%s645 + $0x468] sm:$0xff]
      %v6119 = vld [vmem:[%s645 + $0x470] sm:$0xf]
      %v6120 = vld [vmem:[%s645 + $0x474] sm:$0xff]
      %v6121 = vld [vmem:[%s645 + $0x47c] sm:$0xf]
      %v6122 = vld [vmem:[%s645 + $0x480] sm:$0xff]
      %v6123 = vld [vmem:[%s645 + $0x488] sm:$0xf]
      %v6124 = vld [vmem:[%s645 + $0x48c] sm:$0xff]
      %v6125 = vld [vmem:[%s645 + $0x494] sm:$0xf]
      %v6126 = vld [vmem:[%s645 + $0x498] sm:$0xff]
      %v6127 = vld [vmem:[%s645 + $0x4a0] sm:$0xf]
      %v6128 = vld [vmem:[%s645 + $0x4a4] sm:$0xff]
      %v6129 = vld [vmem:[%s645 + $0x4ac] sm:$0xf]
      %v6130 = vld [vmem:[%s645 + $0x4b0] sm:$0xff]
      %v6131 = vld [vmem:[%s645 + $0x4b8] sm:$0xf]
      %v6132 = vld [vmem:[%s645 + $0x4bc] sm:$0xff]
      %v6133 = vld [vmem:[%s645 + $0x4c4] sm:$0xf]
      %v6134 = vld [vmem:[%s645 + $0x4c8] sm:$0xff]
      %v6135 = vld [vmem:[%s645 + $0x4d0] sm:$0xf]
      %v6136 = vld [vmem:[%s645 + $0x4d4] sm:$0xff]
      %v6137 = vld [vmem:[%s645 + $0x4dc] sm:$0xf]
      %v6138 = vld [vmem:[%s645 + $0x4e0] sm:$0xff]
      %v6139 = vld [vmem:[%s645 + $0x4e8] sm:$0xf]
      %v6140 = vld [vmem:[%s645 + $0x4ec] sm:$0xff]
      %v6141 = vld [vmem:[%s645 + $0x4f4] sm:$0xf]
      %v6142 = vld [vmem:[%s645 + $0x4f8] sm:$0xff]
      %v6143 = vld [vmem:[%s645 + $0x500] sm:$0xf]
      %v6144 = vld [vmem:[%s645 + $0x504] sm:$0xff]
      %v6145 = vld [vmem:[%s645 + $0x50c] sm:$0xf]
      %v6146 = vld [vmem:[%s645 + $0x510] sm:$0xff]
      %v6147 = vld [vmem:[%s645 + $0x518] sm:$0xf]
      %v6148 = vld [vmem:[%s645 + $0x51c] sm:$0xff]
      %v6149 = vld [vmem:[%s645 + $0x524] sm:$0xf]
      %v6150 = vld [vmem:[%s645 + $0x528] sm:$0xff]
      %v6151 = vld [vmem:[%s645 + $0x530] sm:$0xf]
      %v6152 = vld [vmem:[%s645 + $0x534] sm:$0xff]
      %v6153 = vld [vmem:[%s645 + $0x53c] sm:$0xf]
      %v6154 = vld [vmem:[%s645 + $0x540] sm:$0xff]
      %v6155 = vld [vmem:[%s645 + $0x548] sm:$0xf]
      %v6156 = vld [vmem:[%s645 + $0x54c] sm:$0xff]
      %v6157 = vld [vmem:[%s645 + $0x554] sm:$0xf]
      %v6158 = vld [vmem:[%s645 + $0x558] sm:$0xff]
      %v6159 = vld [vmem:[%s645 + $0x560] sm:$0xf]
      %v6160 = vld [vmem:[%s645 + $0x564] sm:$0xff]
      %v6161 = vld [vmem:[%s645 + $0x56c] sm:$0xf]
      %v6162 = vld [vmem:[%s645 + $0x570] sm:$0xff]
      %v6163 = vld [vmem:[%s645 + $0x578] sm:$0xf]
      %v6164 = vld [vmem:[%s645 + $0x57c] sm:$0xff]
      %v6165 = vld [vmem:[%s645 + $0x584] sm:$0xf]
      %v6166 = vld [vmem:[%s645 + $0x588] sm:$0xff]
      %v6167 = vld [vmem:[%s645 + $0x590] sm:$0xf]
      %v6168 = vld [vmem:[%s645 + $0x594] sm:$0xff]
      %v6169 = vld [vmem:[%s645 + $0x59c] sm:$0xf]
      %v6170 = vld [vmem:[%s645 + $0x5a0] sm:$0xff]
      %v6171 = vld [vmem:[%s645 + $0x5a8] sm:$0xf]
      %v6172 = vld [vmem:[%s645 + $0x5ac] sm:$0xff]
      %v6173 = vld [vmem:[%s645 + $0x5b4] sm:$0xf]
      %v6174 = vld [vmem:[%s645 + $0x5b8] sm:$0xff]
      %v6175 = vld [vmem:[%s645 + $0x5c0] sm:$0xf]
      %v6176 = vld [vmem:[%s645 + $0x5c4] sm:$0xff]
      %v6177 = vld [vmem:[%s645 + $0x5cc] sm:$0xf]
      %v6178 = vld [vmem:[%s645 + $0x5d0] sm:$0xff]
      %v6179 = vld [vmem:[%s645 + $0x5d8] sm:$0xf]
      %v6180 = vld [vmem:[%s645 + $0x5dc] sm:$0xff]
      %v6181 = vld [vmem:[%s645 + $0x5e4] sm:$0xf]
      %v6182 = vld [vmem:[%s645 + $0x5e8] sm:$0xff]
      %v6183 = vld [vmem:[%s645 + $0x5f0] sm:$0xf]
      %v6184 = vld [vmem:[%s645 + $0x5f4] sm:$0xff]
      %v6185 = vld [vmem:[%s645 + $0x5fc] sm:$0xf]
      %v6186 = vld [vmem:[%s645 + $0x600] sm:$0xff]
      %v6187 = vld [vmem:[%s645 + $0x608] sm:$0xf]
      %v6188 = vld [vmem:[%s645 + $0x60c] sm:$0xff]
      %v6189 = vld [vmem:[%s645 + $0x614] sm:$0xf]
      %v6190 = vld [vmem:[%s645 + $0x618] sm:$0xff]
      %v6191 = vld [vmem:[%s645 + $0x620] sm:$0xf]
      %v6192 = vld [vmem:[%s645 + $0x624] sm:$0xff]
      %v6193 = vld [vmem:[%s645 + $0x62c] sm:$0xf]
      %v6194 = vld [vmem:[%s645 + $0x630] sm:$0xff]
      %v6195 = vld [vmem:[%s645 + $0x638] sm:$0xf]
      %v6196 = vld [vmem:[%s645 + $0x63c] sm:$0xff]
      %v6197 = vld [vmem:[%s645 + $0x644] sm:$0xf]
      %v6198 = vld [vmem:[%s645 + $0x648] sm:$0xff]
      %v6199 = vld [vmem:[%s645 + $0x650] sm:$0xf]
      %v6200 = vld [vmem:[%s645 + $0x654] sm:$0xff]
      %v6201 = vld [vmem:[%s645 + $0x65c] sm:$0xf]
      %v6202 = vld [vmem:[%s645 + $0x660] sm:$0xff]
      %v6203 = vld [vmem:[%s645 + $0x668] sm:$0xf]
      %v6204 = vld [vmem:[%s645 + $0x66c] sm:$0xff]
      %v6205 = vld [vmem:[%s645 + $0x674] sm:$0xf]
      %v6482 = vunpack.c.l.b16 %v5930
      %v6483 = vunpack.c.h.b16 %v5930
      %v6484 = vunpack.c.l.b16 %v5931
      %v6485 = vunpack.c.l.b16 %v5932
      %v6486 = vunpack.c.h.b16 %v5932
      %v6487 = vunpack.c.l.b16 %v5933
      %v6488 = vunpack.c.l.b16 %v5934
      %v6489 = vunpack.c.h.b16 %v5934
      %v6490 = vunpack.c.l.b16 %v5935
      %v6491 = vunpack.c.l.b16 %v5936
      %v6492 = vunpack.c.h.b16 %v5936
      %v6493 = vunpack.c.l.b16 %v5937
      %v6494 = vunpack.c.l.b16 %v5938
      %v6495 = vunpack.c.h.b16 %v5938
      %v6496 = vunpack.c.l.b16 %v5939
      %v6497 = vunpack.c.l.b16 %v5940
      %v6498 = vunpack.c.h.b16 %v5940
      %v6499 = vunpack.c.l.b16 %v5941
      %v6500 = vunpack.c.l.b16 %v5942
      %v6501 = vunpack.c.h.b16 %v5942
      %v6502 = vunpack.c.l.b16 %v5943
      %v6503 = vunpack.c.l.b16 %v5944
      %v6504 = vunpack.c.h.b16 %v5944
      %v6505 = vunpack.c.l.b16 %v5945
      %v6506 = vunpack.c.l.b16 %v5946
      %v6507 = vunpack.c.h.b16 %v5946
      %v6508 = vunpack.c.l.b16 %v5947
      %v6509 = vunpack.c.l.b16 %v5948
      %v6510 = vunpack.c.h.b16 %v5948
      %v6511 = vunpack.c.l.b16 %v5949
      %v6512 = vunpack.c.l.b16 %v5950
      %v6513 = vunpack.c.h.b16 %v5950
      %v6514 = vunpack.c.l.b16 %v5951
      %v6515 = vunpack.c.l.b16 %v5952
      %v6516 = vunpack.c.h.b16 %v5952
      %v6517 = vunpack.c.l.b16 %v5953
      %v6518 = vunpack.c.l.b16 %v5954
      %v6519 = vunpack.c.h.b16 %v5954
      %v6520 = vunpack.c.l.b16 %v5955
      %v6521 = vunpack.c.l.b16 %v5956
      %v6522 = vunpack.c.h.b16 %v5956
      %v6523 = vunpack.c.l.b16 %v5957
      %v6524 = vunpack.c.l.b16 %v5958
      %v6525 = vunpack.c.h.b16 %v5958
      %v6526 = vunpack.c.l.b16 %v5959
      %v6527 = vunpack.c.l.b16 %v5960
      %v6528 = vunpack.c.h.b16 %v5960
      %v6529 = vunpack.c.l.b16 %v5961
      %v6530 = vunpack.c.l.b16 %v5962
      %v6531 = vunpack.c.h.b16 %v5962
      %v6532 = vunpack.c.l.b16 %v5963
      %v6533 = vunpack.c.l.b16 %v5964
      %v6534 = vunpack.c.h.b16 %v5964
      %v6535 = vunpack.c.l.b16 %v5965
      %v6536 = vunpack.c.l.b16 %v5966
      %v6537 = vunpack.c.h.b16 %v5966
      %v6538 = vunpack.c.l.b16 %v5967
      %v6539 = vunpack.c.l.b16 %v5968
      %v6540 = vunpack.c.h.b16 %v5968
      %v6541 = vunpack.c.l.b16 %v5969
      %v6542 = vunpack.c.l.b16 %v5970
      %v6543 = vunpack.c.h.b16 %v5970
      %v6544 = vunpack.c.l.b16 %v5971
      %v6545 = vunpack.c.l.b16 %v5972
      %v6546 = vunpack.c.h.b16 %v5972
      %v6547 = vunpack.c.l.b16 %v5973
      %v6548 = vunpack.c.l.b16 %v5974
      %v6549 = vunpack.c.h.b16 %v5974
      %v6550 = vunpack.c.l.b16 %v5975
      %v6551 = vunpack.c.l.b16 %v5976
      %v6552 = vunpack.c.h.b16 %v5976
      %v6553 = vunpack.c.l.b16 %v5977
      %v6554 = vunpack.c.l.b16 %v5978
      %v6555 = vunpack.c.h.b16 %v5978
      %v6556 = vunpack.c.l.b16 %v5979
      %v6557 = vunpack.c.l.b16 %v5980
      %v6558 = vunpack.c.h.b16 %v5980
      %v6559 = vunpack.c.l.b16 %v5981
      %v6560 = vunpack.c.l.b16 %v5982
      %v6561 = vunpack.c.h.b16 %v5982
      %v6562 = vunpack.c.l.b16 %v5983
      %v6563 = vunpack.c.l.b16 %v5984
      %v6564 = vunpack.c.h.b16 %v5984
      %v6565 = vunpack.c.l.b16 %v5985
      %v6566 = vunpack.c.l.b16 %v5986
      %v6567 = vunpack.c.h.b16 %v5986
      %v6568 = vunpack.c.l.b16 %v5987
      %v6569 = vunpack.c.l.b16 %v5988
      %v6570 = vunpack.c.h.b16 %v5988
      %v6571 = vunpack.c.l.b16 %v5989
      %v6572 = vunpack.c.l.b16 %v5990
      %v6573 = vunpack.c.h.b16 %v5990
      %v6574 = vunpack.c.l.b16 %v5991
      %v6575 = vunpack.c.l.b16 %v5992
      %v6576 = vunpack.c.h.b16 %v5992
      %v6577 = vunpack.c.l.b16 %v5993
      %v6578 = vunpack.c.l.b16 %v5994
      %v6579 = vunpack.c.h.b16 %v5994
      %v6580 = vunpack.c.l.b16 %v5995
      %v6581 = vunpack.c.l.b16 %v5996
      %v6582 = vunpack.c.h.b16 %v5996
      %v6583 = vunpack.c.l.b16 %v5997
      %v6584 = vunpack.c.l.b16 %v5998
      %v6585 = vunpack.c.h.b16 %v5998
      %v6586 = vunpack.c.l.b16 %v5999
      %v6587 = vunpack.c.l.b16 %v6000
      %v6588 = vunpack.c.h.b16 %v6000
      %v6589 = vunpack.c.l.b16 %v6001
      %v6590 = vunpack.c.l.b16 %v6002
      %v6591 = vunpack.c.h.b16 %v6002
      %v6592 = vunpack.c.l.b16 %v6003
      %v6593 = vunpack.c.l.b16 %v6004
      %v6594 = vunpack.c.h.b16 %v6004
      %v6595 = vunpack.c.l.b16 %v6005
      %v6596 = vunpack.c.l.b16 %v6006
      %v6597 = vunpack.c.h.b16 %v6006
      %v6598 = vunpack.c.l.b16 %v6007
      %v6599 = vunpack.c.l.b16 %v6008
      %v6600 = vunpack.c.h.b16 %v6008
      %v6601 = vunpack.c.l.b16 %v6009
      %v6602 = vunpack.c.l.b16 %v6010
      %v6603 = vunpack.c.h.b16 %v6010
      %v6604 = vunpack.c.l.b16 %v6011
      %v6605 = vunpack.c.l.b16 %v6012
      %v6606 = vunpack.c.h.b16 %v6012
      %v6607 = vunpack.c.l.b16 %v6013
      %v6608 = vunpack.c.l.b16 %v6014
      %v6609 = vunpack.c.h.b16 %v6014
      %v6610 = vunpack.c.l.b16 %v6015
      %v6611 = vunpack.c.l.b16 %v6016
      %v6612 = vunpack.c.h.b16 %v6016
      %v6613 = vunpack.c.l.b16 %v6017
      %v6614 = vunpack.c.l.b16 %v6018
      %v6615 = vunpack.c.h.b16 %v6018
      %v6616 = vunpack.c.l.b16 %v6019
      %v6617 = vunpack.c.l.b16 %v6020
      %v6618 = vunpack.c.h.b16 %v6020
      %v6619 = vunpack.c.l.b16 %v6021
      %v6620 = vunpack.c.l.b16 %v6022
      %v6621 = vunpack.c.h.b16 %v6022
      %v6622 = vunpack.c.l.b16 %v6023
      %v6623 = vunpack.c.l.b16 %v6024
      %v6624 = vunpack.c.h.b16 %v6024
      %v6625 = vunpack.c.l.b16 %v6025
      %v6626 = vunpack.c.l.b16 %v6026
      %v6627 = vunpack.c.h.b16 %v6026
      %v6628 = vunpack.c.l.b16 %v6027
      %v6629 = vunpack.c.l.b16 %v6028
      %v6630 = vunpack.c.h.b16 %v6028
      %v6631 = vunpack.c.l.b16 %v6029
      %v6632 = vunpack.c.l.b16 %v6030
      %v6633 = vunpack.c.h.b16 %v6030
      %v6634 = vunpack.c.l.b16 %v6031
      %v6635 = vunpack.c.l.b16 %v6032
      %v6636 = vunpack.c.h.b16 %v6032
      %v6637 = vunpack.c.l.b16 %v6033
      %v6638 = vunpack.c.l.b16 %v6034
      %v6639 = vunpack.c.h.b16 %v6034
      %v6640 = vunpack.c.l.b16 %v6035
      %v6641 = vunpack.c.l.b16 %v6036
      %v6642 = vunpack.c.h.b16 %v6036
      %v6643 = vunpack.c.l.b16 %v6037
      %v6644 = vunpack.c.l.b16 %v6038
      %v6645 = vunpack.c.h.b16 %v6038
      %v6646 = vunpack.c.l.b16 %v6039
      %v6647 = vunpack.c.l.b16 %v6040
      %v6648 = vunpack.c.h.b16 %v6040
      %v6649 = vunpack.c.l.b16 %v6041
      %v6650 = vunpack.c.l.b16 %v6042
      %v6651 = vunpack.c.h.b16 %v6042
      %v6652 = vunpack.c.l.b16 %v6043
      %v6653 = vunpack.c.l.b16 %v6044
      %v6654 = vunpack.c.h.b16 %v6044
      %v6655 = vunpack.c.l.b16 %v6045
      %v6656 = vunpack.c.l.b16 %v6046
      %v6657 = vunpack.c.h.b16 %v6046
      %v6658 = vunpack.c.l.b16 %v6047
      %v6659 = vunpack.c.l.b16 %v6048
      %v6660 = vunpack.c.h.b16 %v6048
      %v6661 = vunpack.c.l.b16 %v6049
      %v6662 = vunpack.c.l.b16 %v6050
      %v6663 = vunpack.c.h.b16 %v6050
      %v6664 = vunpack.c.l.b16 %v6051
      %v6665 = vunpack.c.l.b16 %v6052
      %v6666 = vunpack.c.h.b16 %v6052
      %v6667 = vunpack.c.l.b16 %v6053
      %v6668 = vunpack.c.l.b16 %v6054
      %v6669 = vunpack.c.h.b16 %v6054
      %v6670 = vunpack.c.l.b16 %v6055
      %v6671 = vunpack.c.l.b16 %v6056
      %v6672 = vunpack.c.h.b16 %v6056
      %v6673 = vunpack.c.l.b16 %v6057
      %v6674 = vunpack.c.l.b16 %v6058
      %v6675 = vunpack.c.h.b16 %v6058
      %v6676 = vunpack.c.l.b16 %v6059
      %v6677 = vunpack.c.l.b16 %v6060
      %v6678 = vunpack.c.h.b16 %v6060
      %v6679 = vunpack.c.l.b16 %v6061
      %v6680 = vunpack.c.l.b16 %v6062
      %v6681 = vunpack.c.h.b16 %v6062
      %v6682 = vunpack.c.l.b16 %v6063
      %v6683 = vunpack.c.l.b16 %v6064
      %v6684 = vunpack.c.h.b16 %v6064
      %v6685 = vunpack.c.l.b16 %v6065
      %v6686 = vunpack.c.l.b16 %v6066
      %v6687 = vunpack.c.h.b16 %v6066
      %v6688 = vunpack.c.l.b16 %v6067
      %v6689 = vunpack.c.l.b16 %v6068
      %v6690 = vunpack.c.h.b16 %v6068
      %v6691 = vunpack.c.l.b16 %v6069
      %v6692 = vunpack.c.l.b16 %v6070
      %v6693 = vunpack.c.h.b16 %v6070
      %v6694 = vunpack.c.l.b16 %v6071
      %v6695 = vunpack.c.l.b16 %v6072
      %v6696 = vunpack.c.h.b16 %v6072
      %v6697 = vunpack.c.l.b16 %v6073
      %v6698 = vunpack.c.l.b16 %v6074
      %v6699 = vunpack.c.h.b16 %v6074
      %v6700 = vunpack.c.l.b16 %v6075
      %v6701 = vunpack.c.l.b16 %v6076
      %v6702 = vunpack.c.h.b16 %v6076
      %v6703 = vunpack.c.l.b16 %v6077
      %v6704 = vunpack.c.l.b16 %v6078
      %v6705 = vunpack.c.h.b16 %v6078
      %v6706 = vunpack.c.l.b16 %v6079
      %v6707 = vunpack.c.l.b16 %v6080
      %v6708 = vunpack.c.h.b16 %v6080
      %v6709 = vunpack.c.l.b16 %v6081
      %v6710 = vunpack.c.l.b16 %v6082
      %v6711 = vunpack.c.h.b16 %v6082
      %v6712 = vunpack.c.l.b16 %v6083
      %v6713 = vunpack.c.l.b16 %v6084
      %v6714 = vunpack.c.h.b16 %v6084
      %v6715 = vunpack.c.l.b16 %v6085
      %v6716 = vunpack.c.l.b16 %v6086
      %v6717 = vunpack.c.h.b16 %v6086
      %v6718 = vunpack.c.l.b16 %v6087
      %v6719 = vunpack.c.l.b16 %v6088
      %v6720 = vunpack.c.h.b16 %v6088
      %v6721 = vunpack.c.l.b16 %v6089
      %v6722 = vunpack.c.l.b16 %v6090
      %v6723 = vunpack.c.h.b16 %v6090
      %v6724 = vunpack.c.l.b16 %v6091
      %v6725 = vunpack.c.l.b16 %v6092
      %v6726 = vunpack.c.h.b16 %v6092
      %v6727 = vunpack.c.l.b16 %v6093
      %v6728 = vunpack.c.l.b16 %v6094
      %v6729 = vunpack.c.h.b16 %v6094
      %v6730 = vunpack.c.l.b16 %v6095
      %v6731 = vunpack.c.l.b16 %v6096
      %v6732 = vunpack.c.h.b16 %v6096
      %v6733 = vunpack.c.l.b16 %v6097
      %v6734 = vunpack.c.l.b16 %v6098
      %v6735 = vunpack.c.h.b16 %v6098
      %v6736 = vunpack.c.l.b16 %v6099
      %v6737 = vunpack.c.l.b16 %v6100
      %v6738 = vunpack.c.h.b16 %v6100
      %v6739 = vunpack.c.l.b16 %v6101
      %v6740 = vunpack.c.l.b16 %v6102
      %v6741 = vunpack.c.h.b16 %v6102
      %v6742 = vunpack.c.l.b16 %v6103
      %v6743 = vunpack.c.l.b16 %v6104
      %v6744 = vunpack.c.h.b16 %v6104
      %v6745 = vunpack.c.l.b16 %v6105
      %v6746 = vunpack.c.l.b16 %v6106
      %v6747 = vunpack.c.h.b16 %v6106
      %v6748 = vunpack.c.l.b16 %v6107
      %v6749 = vunpack.c.l.b16 %v6108
      %v6750 = vunpack.c.h.b16 %v6108
      %v6751 = vunpack.c.l.b16 %v6109
      %v6752 = vunpack.c.l.b16 %v6110
      %v6753 = vunpack.c.h.b16 %v6110
      %v6754 = vunpack.c.l.b16 %v6111
      %v6755 = vunpack.c.l.b16 %v6112
      %v6756 = vunpack.c.h.b16 %v6112
      %v6757 = vunpack.c.l.b16 %v6113
      %v6758 = vunpack.c.l.b16 %v6114
      %v6759 = vunpack.c.h.b16 %v6114
      %v6760 = vunpack.c.l.b16 %v6115
      %v6761 = vunpack.c.l.b16 %v6116
      %v6762 = vunpack.c.h.b16 %v6116
      %v6763 = vunpack.c.l.b16 %v6117
      %v6764 = vunpack.c.l.b16 %v6118
      %v6765 = vunpack.c.h.b16 %v6118
      %v6766 = vunpack.c.l.b16 %v6119
      %v6767 = vunpack.c.l.b16 %v6120
      %v6768 = vunpack.c.h.b16 %v6120
      %v6769 = vunpack.c.l.b16 %v6121
      %v6770 = vunpack.c.l.b16 %v6122
      %v6771 = vunpack.c.h.b16 %v6122
      %v6772 = vunpack.c.l.b16 %v6123
      %v6773 = vunpack.c.l.b16 %v6124
      %v6774 = vunpack.c.h.b16 %v6124
      %v6775 = vunpack.c.l.b16 %v6125
      %v6776 = vunpack.c.l.b16 %v6126
      %v6777 = vunpack.c.h.b16 %v6126
      %v6778 = vunpack.c.l.b16 %v6127
      %v6779 = vunpack.c.l.b16 %v6128
      %v6780 = vunpack.c.h.b16 %v6128
      %v6781 = vunpack.c.l.b16 %v6129
      %v6782 = vunpack.c.l.b16 %v6130
      %v6783 = vunpack.c.h.b16 %v6130
      %v6784 = vunpack.c.l.b16 %v6131
      %v6785 = vunpack.c.l.b16 %v6132
      %v6786 = vunpack.c.h.b16 %v6132
      %v6787 = vunpack.c.l.b16 %v6133
      %v6788 = vunpack.c.l.b16 %v6134
      %v6789 = vunpack.c.h.b16 %v6134
      %v6790 = vunpack.c.l.b16 %v6135
      %v6791 = vunpack.c.l.b16 %v6136
      %v6792 = vunpack.c.h.b16 %v6136
      %v6793 = vunpack.c.l.b16 %v6137
      %v6794 = vunpack.c.l.b16 %v6138
      %v6795 = vunpack.c.h.b16 %v6138
      %v6796 = vunpack.c.l.b16 %v6139
      %v6797 = vunpack.c.l.b16 %v6140
      %v6798 = vunpack.c.h.b16 %v6140
      %v6799 = vunpack.c.l.b16 %v6141
      %v6800 = vunpack.c.l.b16 %v6142
      %v6801 = vunpack.c.h.b16 %v6142
      %v6802 = vunpack.c.l.b16 %v6143
      %v6803 = vunpack.c.l.b16 %v6144
      %v6804 = vunpack.c.h.b16 %v6144
      %v6805 = vunpack.c.l.b16 %v6145
      %v6806 = vunpack.c.l.b16 %v6146
      %v6807 = vunpack.c.h.b16 %v6146
      %v6808 = vunpack.c.l.b16 %v6147
      %v6809 = vunpack.c.l.b16 %v6148
      %v6810 = vunpack.c.h.b16 %v6148
      %v6811 = vunpack.c.l.b16 %v6149
      %v6812 = vunpack.c.l.b16 %v6150
      %v6813 = vunpack.c.h.b16 %v6150
      %v6814 = vunpack.c.l.b16 %v6151
      %v6815 = vunpack.c.l.b16 %v6152
      %v6816 = vunpack.c.h.b16 %v6152
      %v6817 = vunpack.c.l.b16 %v6153
      %v6818 = vunpack.c.l.b16 %v6154
      %v6819 = vunpack.c.h.b16 %v6154
      %v6820 = vunpack.c.l.b16 %v6155
      %v6821 = vunpack.c.l.b16 %v6156
      %v6822 = vunpack.c.h.b16 %v6156
      %v6823 = vunpack.c.l.b16 %v6157
      %v6824 = vunpack.c.l.b16 %v6158
      %v6825 = vunpack.c.h.b16 %v6158
      %v6826 = vunpack.c.l.b16 %v6159
      %v6827 = vunpack.c.l.b16 %v6160
      %v6828 = vunpack.c.h.b16 %v6160
      %v6829 = vunpack.c.l.b16 %v6161
      %v6830 = vunpack.c.l.b16 %v6162
      %v6831 = vunpack.c.h.b16 %v6162
      %v6832 = vunpack.c.l.b16 %v6163
      %v6833 = vunpack.c.l.b16 %v6164
      %v6834 = vunpack.c.h.b16 %v6164
      %v6835 = vunpack.c.l.b16 %v6165
      %v6836 = vunpack.c.l.b16 %v6166
      %v6837 = vunpack.c.h.b16 %v6166
      %v6838 = vunpack.c.l.b16 %v6167
      %v6839 = vunpack.c.l.b16 %v6168
      %v6840 = vunpack.c.h.b16 %v6168
      %v6841 = vunpack.c.l.b16 %v6169
      %v6842 = vunpack.c.l.b16 %v6170
      %v6843 = vunpack.c.h.b16 %v6170
      %v6844 = vunpack.c.l.b16 %v6171
      %v6845 = vunpack.c.l.b16 %v6172
      %v6846 = vunpack.c.h.b16 %v6172
      %v6847 = vunpack.c.l.b16 %v6173
      %v6848 = vunpack.c.l.b16 %v6174
      %v6849 = vunpack.c.h.b16 %v6174
      %v6850 = vunpack.c.l.b16 %v6175
      %v6851 = vunpack.c.l.b16 %v6176
      %v6852 = vunpack.c.h.b16 %v6176
      %v6853 = vunpack.c.l.b16 %v6177
      %v6854 = vunpack.c.l.b16 %v6178
      %v6855 = vunpack.c.h.b16 %v6178
      %v6856 = vunpack.c.l.b16 %v6179
      %v6857 = vunpack.c.l.b16 %v6180
      %v6858 = vunpack.c.h.b16 %v6180
      %v6859 = vunpack.c.l.b16 %v6181
      %v6860 = vunpack.c.l.b16 %v6182
      %v6861 = vunpack.c.h.b16 %v6182
      %v6862 = vunpack.c.l.b16 %v6183
      %v6863 = vunpack.c.l.b16 %v6184
      %v6864 = vunpack.c.h.b16 %v6184
      %v6865 = vunpack.c.l.b16 %v6185
      %v6866 = vunpack.c.l.b16 %v6186
      %v6867 = vunpack.c.h.b16 %v6186
      %v6868 = vunpack.c.l.b16 %v6187
      %v6869 = vunpack.c.l.b16 %v6188
      %v6870 = vunpack.c.h.b16 %v6188
      %v6871 = vunpack.c.l.b16 %v6189
      %v6872 = vunpack.c.l.b16 %v6190
      %v6873 = vunpack.c.h.b16 %v6190
      %v6874 = vunpack.c.l.b16 %v6191
      %v6875 = vunpack.c.l.b16 %v6192
      %v6876 = vunpack.c.h.b16 %v6192
      %v6877 = vunpack.c.l.b16 %v6193
      %v6878 = vunpack.c.l.b16 %v6194
      %v6879 = vunpack.c.h.b16 %v6194
      %v6880 = vunpack.c.l.b16 %v6195
      %v6881 = vunpack.c.l.b16 %v6196
      %v6882 = vunpack.c.h.b16 %v6196
      %v6883 = vunpack.c.l.b16 %v6197
      %v6884 = vunpack.c.l.b16 %v6198
      %v6885 = vunpack.c.h.b16 %v6198
      %v6886 = vunpack.c.l.b16 %v6199
      %v6887 = vunpack.c.l.b16 %v6200
      %v6888 = vunpack.c.h.b16 %v6200
      %v6889 = vunpack.c.l.b16 %v6201
      %v6890 = vunpack.c.l.b16 %v6202
      %v6891 = vunpack.c.h.b16 %v6202
      %v6892 = vunpack.c.l.b16 %v6203
      %v6893 = vunpack.c.l.b16 %v6204
      %v6894 = vunpack.c.h.b16 %v6204
      %v6895 = vunpack.c.l.b16 %v6205
      %v6896 = vpack.c.b16 %v6485, %v6482
      %v6897 = vpack.c.b16 %v6486, %v6483
      %v6898 = vpack.c.b16 %v6487, %v6484
      %v6899 = vpack.c.b16 %v6491, %v6488
      %v6900 = vpack.c.b16 %v6492, %v6489
      %v6901 = vpack.c.b16 %v6493, %v6490
      %v6902 = vpack.c.b16 %v6497, %v6494
      %v6903 = vpack.c.b16 %v6498, %v6495
      %v6904 = vpack.c.b16 %v6499, %v6496
      %v6905 = vpack.c.b16 %v6503, %v6500
      %v6906 = vpack.c.b16 %v6504, %v6501
      %v6907 = vpack.c.b16 %v6505, %v6502
      %v6908 = vpack.c.b16 %v6509, %v6506
      %v6909 = vpack.c.b16 %v6510, %v6507
      %v6910 = vpack.c.b16 %v6511, %v6508
      %v6911 = vpack.c.b16 %v6515, %v6512
      %v6912 = vpack.c.b16 %v6516, %v6513
      %v6913 = vpack.c.b16 %v6517, %v6514
      %v6914 = vpack.c.b16 %v6521, %v6518
      %v6915 = vpack.c.b16 %v6522, %v6519
      %v6916 = vpack.c.b16 %v6523, %v6520
      %v6917 = vpack.c.b16 %v6527, %v6524
      %v6918 = vpack.c.b16 %v6528, %v6525
      %v6919 = vpack.c.b16 %v6529, %v6526
      %v6920 = vpack.c.b16 %v6533, %v6530
      %v6921 = vpack.c.b16 %v6534, %v6531
      %v6922 = vpack.c.b16 %v6535, %v6532
      %v6923 = vpack.c.b16 %v6539, %v6536
      %v6924 = vpack.c.b16 %v6540, %v6537
      %v6925 = vpack.c.b16 %v6541, %v6538
      %v6926 = vpack.c.b16 %v6545, %v6542
      %v6927 = vpack.c.b16 %v6546, %v6543
      %v6928 = vpack.c.b16 %v6547, %v6544
      %v6929 = vpack.c.b16 %v6551, %v6548
      %v6930 = vpack.c.b16 %v6552, %v6549
      %v6931 = vpack.c.b16 %v6553, %v6550
      %v6932 = vpack.c.b16 %v6557, %v6554
      %v6933 = vpack.c.b16 %v6558, %v6555
      %v6934 = vpack.c.b16 %v6559, %v6556
      %v6935 = vpack.c.b16 %v6563, %v6560
      %v6936 = vpack.c.b16 %v6564, %v6561
      %v6937 = vpack.c.b16 %v6565, %v6562
      %v6938 = vpack.c.b16 %v6569, %v6566
      %v6939 = vpack.c.b16 %v6570, %v6567
      %v6940 = vpack.c.b16 %v6571, %v6568
      %v6941 = vpack.c.b16 %v6575, %v6572
      %v6942 = vpack.c.b16 %v6576, %v6573
      %v6943 = vpack.c.b16 %v6577, %v6574
      %v6944 = vpack.c.b16 %v6581, %v6578
      %v6945 = vpack.c.b16 %v6582, %v6579
      %v6946 = vpack.c.b16 %v6583, %v6580
      %v6947 = vpack.c.b16 %v6587, %v6584
      %v6948 = vpack.c.b16 %v6588, %v6585
      %v6949 = vpack.c.b16 %v6589, %v6586
      %v6950 = vpack.c.b16 %v6593, %v6590
      %v6951 = vpack.c.b16 %v6594, %v6591
      %v6952 = vpack.c.b16 %v6595, %v6592
      %v6953 = vpack.c.b16 %v6599, %v6596
      %v6954 = vpack.c.b16 %v6600, %v6597
      %v6955 = vpack.c.b16 %v6601, %v6598
      %v6956 = vpack.c.b16 %v6605, %v6602
      %v6957 = vpack.c.b16 %v6606, %v6603
      %v6958 = vpack.c.b16 %v6607, %v6604
      %v6959 = vpack.c.b16 %v6611, %v6608
      %v6960 = vpack.c.b16 %v6612, %v6609
      %v6961 = vpack.c.b16 %v6613, %v6610
      %v6962 = vpack.c.b16 %v6617, %v6614
      %v6963 = vpack.c.b16 %v6618, %v6615
      %v6964 = vpack.c.b16 %v6619, %v6616
      %v6965 = vpack.c.b16 %v6623, %v6620
      %v6966 = vpack.c.b16 %v6624, %v6621
      %v6967 = vpack.c.b16 %v6625, %v6622
      %v6968 = vpack.c.b16 %v6629, %v6626
      %v6969 = vpack.c.b16 %v6630, %v6627
      %v6970 = vpack.c.b16 %v6631, %v6628
      %v6971 = vpack.c.b16 %v6635, %v6632
      %v6972 = vpack.c.b16 %v6636, %v6633
      %v6973 = vpack.c.b16 %v6637, %v6634
      %v6974 = vpack.c.b16 %v6641, %v6638
      %v6975 = vpack.c.b16 %v6642, %v6639
      %v6976 = vpack.c.b16 %v6643, %v6640
      %v6977 = vpack.c.b16 %v6647, %v6644
      %v6978 = vpack.c.b16 %v6648, %v6645
      %v6979 = vpack.c.b16 %v6649, %v6646
      %v6980 = vpack.c.b16 %v6653, %v6650
      %v6981 = vpack.c.b16 %v6654, %v6651
      %v6982 = vpack.c.b16 %v6655, %v6652
      %v6983 = vpack.c.b16 %v6659, %v6656
      %v6984 = vpack.c.b16 %v6660, %v6657
      %v6985 = vpack.c.b16 %v6661, %v6658
      %v6986 = vpack.c.b16 %v6665, %v6662
      %v6987 = vpack.c.b16 %v6666, %v6663
      %v6988 = vpack.c.b16 %v6667, %v6664
      %v6989 = vpack.c.b16 %v6671, %v6668
      %v6990 = vpack.c.b16 %v6672, %v6669
      %v6991 = vpack.c.b16 %v6673, %v6670
      %v6992 = vpack.c.b16 %v6677, %v6674
      %v6993 = vpack.c.b16 %v6678, %v6675
      %v6994 = vpack.c.b16 %v6679, %v6676
      %v6995 = vpack.c.b16 %v6683, %v6680
      %v6996 = vpack.c.b16 %v6684, %v6681
      %v6997 = vpack.c.b16 %v6685, %v6682
      %v6998 = vpack.c.b16 %v6689, %v6686
      %v6999 = vpack.c.b16 %v6690, %v6687
      %v7000 = vpack.c.b16 %v6691, %v6688
      %v7001 = vpack.c.b16 %v6695, %v6692
      %v7002 = vpack.c.b16 %v6696, %v6693
      %v7003 = vpack.c.b16 %v6697, %v6694
      %v7004 = vpack.c.b16 %v6701, %v6698
      %v7005 = vpack.c.b16 %v6702, %v6699
      %v7006 = vpack.c.b16 %v6703, %v6700
      %v7007 = vpack.c.b16 %v6707, %v6704
      %v7008 = vpack.c.b16 %v6708, %v6705
      %v7009 = vpack.c.b16 %v6709, %v6706
      %v7010 = vpack.c.b16 %v6713, %v6710
      %v7011 = vpack.c.b16 %v6714, %v6711
      %v7012 = vpack.c.b16 %v6715, %v6712
      %v7013 = vpack.c.b16 %v6719, %v6716
      %v7014 = vpack.c.b16 %v6720, %v6717
      %v7015 = vpack.c.b16 %v6721, %v6718
      %v7016 = vpack.c.b16 %v6725, %v6722
      %v7017 = vpack.c.b16 %v6726, %v6723
      %v7018 = vpack.c.b16 %v6727, %v6724
      %v7019 = vpack.c.b16 %v6731, %v6728
      %v7020 = vpack.c.b16 %v6732, %v6729
      %v7021 = vpack.c.b16 %v6733, %v6730
      %v7022 = vpack.c.b16 %v6737, %v6734
      %v7023 = vpack.c.b16 %v6738, %v6735
      %v7024 = vpack.c.b16 %v6739, %v6736
      %v7025 = vpack.c.b16 %v6743, %v6740
      %v7026 = vpack.c.b16 %v6744, %v6741
      %v7027 = vpack.c.b16 %v6745, %v6742
      %v7028 = vpack.c.b16 %v6749, %v6746
      %v7029 = vpack.c.b16 %v6750, %v6747
      %v7030 = vpack.c.b16 %v6751, %v6748
      %v7031 = vpack.c.b16 %v6755, %v6752
      %v7032 = vpack.c.b16 %v6756, %v6753
      %v7033 = vpack.c.b16 %v6757, %v6754
      %v7034 = vpack.c.b16 %v6761, %v6758
      %v7035 = vpack.c.b16 %v6762, %v6759
      %v7036 = vpack.c.b16 %v6763, %v6760
      %v7037 = vpack.c.b16 %v6767, %v6764
      %v7038 = vpack.c.b16 %v6768, %v6765
      %v7039 = vpack.c.b16 %v6769, %v6766
      %v7040 = vpack.c.b16 %v6773, %v6770
      %v7041 = vpack.c.b16 %v6774, %v6771
      %v7042 = vpack.c.b16 %v6775, %v6772
      %v7043 = vpack.c.b16 %v6779, %v6776
      %v7044 = vpack.c.b16 %v6780, %v6777
      %v7045 = vpack.c.b16 %v6781, %v6778
      %v7046 = vpack.c.b16 %v6785, %v6782
      %v7047 = vpack.c.b16 %v6786, %v6783
      %v7048 = vpack.c.b16 %v6787, %v6784
      %v7049 = vpack.c.b16 %v6791, %v6788
      %v7050 = vpack.c.b16 %v6792, %v6789
      %v7051 = vpack.c.b16 %v6793, %v6790
      %v7052 = vpack.c.b16 %v6797, %v6794
      %v7053 = vpack.c.b16 %v6798, %v6795
      %v7054 = vpack.c.b16 %v6799, %v6796
      %v7055 = vpack.c.b16 %v6803, %v6800
      %v7056 = vpack.c.b16 %v6804, %v6801
      %v7057 = vpack.c.b16 %v6805, %v6802
      %v7058 = vpack.c.b16 %v6809, %v6806
      %v7059 = vpack.c.b16 %v6810, %v6807
      %v7060 = vpack.c.b16 %v6811, %v6808
      %v7061 = vpack.c.b16 %v6815, %v6812
      %v7062 = vpack.c.b16 %v6816, %v6813
      %v7063 = vpack.c.b16 %v6817, %v6814
      %v7064 = vpack.c.b16 %v6821, %v6818
      %v7065 = vpack.c.b16 %v6822, %v6819
      %v7066 = vpack.c.b16 %v6823, %v6820
      %v7067 = vpack.c.b16 %v6827, %v6824
      %v7068 = vpack.c.b16 %v6828, %v6825
      %v7069 = vpack.c.b16 %v6829, %v6826
      %v7070 = vpack.c.b16 %v6833, %v6830
      %v7071 = vpack.c.b16 %v6834, %v6831
      %v7072 = vpack.c.b16 %v6835, %v6832
      %v7073 = vpack.c.b16 %v6839, %v6836
      %v7074 = vpack.c.b16 %v6840, %v6837
      %v7075 = vpack.c.b16 %v6841, %v6838
      %v7076 = vpack.c.b16 %v6845, %v6842
      %v7077 = vpack.c.b16 %v6846, %v6843
      %v7078 = vpack.c.b16 %v6847, %v6844
      %v7079 = vpack.c.b16 %v6851, %v6848
      %v7080 = vpack.c.b16 %v6852, %v6849
      %v7081 = vpack.c.b16 %v6853, %v6850
      %v7082 = vpack.c.b16 %v6857, %v6854
      %v7083 = vpack.c.b16 %v6858, %v6855
      %v7084 = vpack.c.b16 %v6859, %v6856
      %v7085 = vpack.c.b16 %v6863, %v6860
      %v7086 = vpack.c.b16 %v6864, %v6861
      %v7087 = vpack.c.b16 %v6865, %v6862
      %v7088 = vpack.c.b16 %v6869, %v6866
      %v7089 = vpack.c.b16 %v6870, %v6867
      %v7090 = vpack.c.b16 %v6871, %v6868
      %v7091 = vpack.c.b16 %v6875, %v6872
      %v7092 = vpack.c.b16 %v6876, %v6873
      %v7093 = vpack.c.b16 %v6877, %v6874
      %v7094 = vpack.c.b16 %v6881, %v6878
      %v7095 = vpack.c.b16 %v6882, %v6879
      %v7096 = vpack.c.b16 %v6883, %v6880
      %v7097 = vpack.c.b16 %v6887, %v6884
      %v7098 = vpack.c.b16 %v6888, %v6885
      %v7099 = vpack.c.b16 %v6889, %v6886
      %v7100 = vpack.c.b16 %v6893, %v6890
      %v7101 = vpack.c.b16 %v6894, %v6891
      %v7102 = vpack.c.b16 %v6895, %v6892
      %vm7310 = vcmask 654336
      %v7312 = vsel %vm7310, %v5920, 0
      %v7315 = vsel %vm7310, %v5929, 0
      %7317 = vmatprep.subr.bf16.mxu0 %v6897
      %7318 = vmatpush1.bf16.msra.mxu0 %v6896
      %7319 = vmatprep.subr.bf16.mxu0 %v6900
      %7320 = vmatpush1.bf16.msra.mxu0 %v6899
      %7321 = vmatprep.subr.bf16.mxu0 %v6903
      %7322 = vmatpush1.bf16.msra.mxu0 %v6902
      %7323 = vmatprep.subr.bf16.mxu0 %v6906
      %7324 = vmatpush1.bf16.msra.mxu0 %v6905
      %7325 = vmatprep.subr.bf16.mxu0 %v6909
      %7326 = vmatpush1.bf16.msra.mxu0 %v6908
      %7327 = vmatprep.subr.bf16.mxu0 %v6912
      %7328 = vmatpush1.bf16.msra.mxu0 %v6911
      %7329 = vmatprep.subr.bf16.mxu0 %v6915
      %7330 = vmatpush1.bf16.msra.mxu0 %v6914
      %7331 = vmatprep.subr.bf16.mxu0 %v6918
      %7332 = vmatpush1.bf16.msra.mxu0 %v6917
      %7333 = vmatprep.subr.bf16.mxu0 %v6921
      %7334 = vmatpush1.bf16.msra.mxu0 %v6920
      %7335 = vmatprep.subr.bf16.mxu0 %v6924
      %7336 = vmatpush1.bf16.msra.mxu0 %v6923
      %7337 = vmatprep.subr.bf16.mxu0 %v6927
      %7338 = vmatpush1.bf16.msra.mxu0 %v6926
      %7339 = vmatprep.subr.bf16.mxu0 %v6930
      %7340 = vmatpush1.bf16.msra.mxu0 %v6929
      %7341 = vmatprep.subr.bf16.mxu0 %v6933
      %7342 = vmatpush1.bf16.msra.mxu0 %v6932
      %7343 = vmatprep.subr.bf16.mxu0 %v6936
      %7344 = vmatpush1.bf16.msra.mxu0 %v6935
      %7345 = vmatprep.subr.bf16.mxu0 %v6939
      %7346 = vmatpush1.bf16.msra.mxu0 %v6938
      %7347 = vmatprep.subr.bf16.mxu0 %v6942
      %7348 = vmatpush1.bf16.msra.mxu0 %v6941
      %7349 = vmatprep.mubr.bf16.mxu0 %v5913
      %7350 = vmatmul.mubr.bf16.gmra.mrb[0].mxu0 %v5912
      %v7351 = vpop.f32.mrb[0].mxu0
      %v7352 = vadd.f32 0.0, %v7351
      %v7353 = vpop.f32.mrb[0].mxu0
      %v7354 = vadd.f32 0.0, %v7353
      %v7355 = vpop.f32.mrb[0].mxu0
      %v7356 = vadd.f32 0.0, %v7355
      %v7357 = vpop.f32.mrb[0].mxu0
      %v7358 = vadd.f32 0.0, %v7357
      %7359 = vmatprep.mubr.bf16.mxu0 %v5922
      %7360 = vmatmul.mubr.bf16.gmra.mrb[0].mxu0 %v5921
      %v7361 = vpop.f32.mrb[0].mxu0
      %v7362 = vadd.f32 0.0, %v7361
      %v7363 = vpop.f32.mrb[0].mxu0
      %v7364 = vadd.f32 0.0, %v7363
      %v7365 = vpop.f32.mrb[0].mxu0
      %v7366 = vadd.f32 0.0, %v7365
      %v7367 = vpop.f32.mrb[0].mxu0
      %v7368 = vadd.f32 0.0, %v7367
      %7369 = vdwg.mxu0
      %7370 = vmatprep.subr.bf16.mxu0 %v6945
      %7371 = vmatpush1.bf16.msra.mxu0 %v6944
      %7372 = vmatprep.subr.bf16.mxu0 %v6948
      %7373 = vmatpush1.bf16.msra.mxu0 %v6947
      %7374 = vmatprep.subr.bf16.mxu0 %v6951
      %7375 = vmatpush1.bf16.msra.mxu0 %v6950
      %7376 = vmatprep.subr.bf16.mxu0 %v6954
      %7377 = vmatpush1.bf16.msra.mxu0 %v6953
      %7378 = vmatprep.subr.bf16.mxu0 %v6957
      %7379 = vmatpush1.bf16.msra.mxu0 %v6956
      %7380 = vmatprep.subr.bf16.mxu0 %v6960
      %7381 = vmatpush1.bf16.msra.mxu0 %v6959
      %7382 = vmatprep.subr.bf16.mxu0 %v6963
      %7383 = vmatpush1.bf16.msra.mxu0 %v6962
      %7384 = vmatprep.subr.bf16.mxu0 %v6966
      %7385 = vmatpush1.bf16.msra.mxu0 %v6965
      %7386 = vmatprep.subr.bf16.mxu0 %v6969
      %7387 = vmatpush1.bf16.msra.mxu0 %v6968
      %7388 = vmatprep.subr.bf16.mxu0 %v6972
      %7389 = vmatpush1.bf16.msra.mxu0 %v6971
      %7390 = vmatprep.subr.bf16.mxu0 %v6975
      %7391 = vmatpush1.bf16.msra.mxu0 %v6974
      %7392 = vmatprep.subr.bf16.mxu0 %v6978
      %7393 = vmatpush1.bf16.msra.mxu0 %v6977
      %7394 = vmatprep.subr.bf16.mxu0 %v6981
      %7395 = vmatpush1.bf16.msra.mxu0 %v6980
      %7396 = vmatprep.subr.bf16.mxu0 %v6984
      %7397 = vmatpush1.bf16.msra.mxu0 %v6983
      %7398 = vmatprep.subr.bf16.mxu0 %v6987
      %7399 = vmatpush1.bf16.msra.mxu0 %v6986
      %7400 = vmatprep.subr.bf16.mxu0 %v6990
      %7401 = vmatpush1.bf16.msra.mxu0 %v6989
      %7402 = vmatprep.mubr.bf16.mxu0 %v5915
      %7403 = vmatmul.mubr.bf16.gmra.mrb[0].mxu0 %v5914
      %v7404 = vpop.f32.mrb[0].mxu0
      %v7405 = vadd.f32 %v7352, %v7404
      %v7406 = vpop.f32.mrb[0].mxu0
      %v7407 = vadd.f32 %v7354, %v7406
      %v7408 = vpop.f32.mrb[0].mxu0
      %v7409 = vadd.f32 %v7356, %v7408
      %v7410 = vpop.f32.mrb[0].mxu0
      %v7411 = vadd.f32 %v7358, %v7410
      %7412 = vmatprep.mubr.bf16.mxu0 %v5924
      %7413 = vmatmul.mubr.bf16.gmra.mrb[0].mxu0 %v5923
      %v7414 = vpop.f32.mrb[0].mxu0
      %v7415 = vadd.f32 %v7362, %v7414
      %v7416 = vpop.f32.mrb[0].mxu0
      %v7417 = vadd.f32 %v7364, %v7416
      %v7418 = vpop.f32.mrb[0].mxu0
      %v7419 = vadd.f32 %v7366, %v7418
      %v7420 = vpop.f32.mrb[0].mxu0
      %v7421 = vadd.f32 %v7368, %v7420
      %7422 = vdwg.mxu0
      %7423 = vmatprep.subr.bf16.mxu0 %v6993
      %7424 = vmatpush1.bf16.msra.mxu0 %v6992
      %7425 = vmatprep.subr.bf16.mxu0 %v6996
      %7426 = vmatpush1.bf16.msra.mxu0 %v6995
      %7427 = vmatprep.subr.bf16.mxu0 %v6999
      %7428 = vmatpush1.bf16.msra.mxu0 %v6998
      %7429 = vmatprep.subr.bf16.mxu0 %v7002
      %7430 = vmatpush1.bf16.msra.mxu0 %v7001
      %7431 = vmatprep.subr.bf16.mxu0 %v7005
      %7432 = vmatpush1.bf16.msra.mxu0 %v7004
      %7433 = vmatprep.subr.bf16.mxu0 %v7008
      %7434 = vmatpush1.bf16.msra.mxu0 %v7007
      %7435 = vmatprep.subr.bf16.mxu0 %v7011
      %7436 = vmatpush1.bf16.msra.mxu0 %v7010
      %7437 = vmatprep.subr.bf16.mxu0 %v7014
      %7438 = vmatpush1.bf16.msra.mxu0 %v7013
      %7439 = vmatprep.subr.bf16.mxu0 %v7017
      %7440 = vmatpush1.bf16.msra.mxu0 %v7016
      %7441 = vmatprep.subr.bf16.mxu0 %v7020
      %7442 = vmatpush1.bf16.msra.mxu0 %v7019
      %7443 = vmatprep.subr.bf16.mxu0 %v7023
      %7444 = vmatpush1.bf16.msra.mxu0 %v7022
      %7445 = vmatprep.subr.bf16.mxu0 %v7026
      %7446 = vmatpush1.bf16.msra.mxu0 %v7025
      %7447 = vmatprep.subr.bf16.mxu0 %v7029
      %7448 = vmatpush1.bf16.msra.mxu0 %v7028
      %7449 = vmatprep.subr.bf16.mxu0 %v7032
      %7450 = vmatpush1.bf16.msra.mxu0 %v7031
      %7451 = vmatprep.subr.bf16.mxu0 %v7035
      %7452 = vmatpush1.bf16.msra.mxu0 %v7034
      %7453 = vmatprep.subr.bf16.mxu0 %v7038
      %7454 = vmatpush1.bf16.msra.mxu0 %v7037
      %7455 = vmatprep.mubr.bf16.mxu0 %v5917
      %7456 = vmatmul.mubr.bf16.gmra.mrb[0].mxu0 %v5916
      %v7457 = vpop.f32.mrb[0].mxu0
      %v7458 = vadd.f32 %v7405, %v7457
      %v7459 = vpop.f32.mrb[0].mxu0
      %v7460 = vadd.f32 %v7407, %v7459
      %v7461 = vpop.f32.mrb[0].mxu0
      %v7462 = vadd.f32 %v7409, %v7461
      %v7463 = vpop.f32.mrb[0].mxu0
      %v7464 = vadd.f32 %v7411, %v7463
      %7465 = vmatprep.mubr.bf16.mxu0 %v5926
      %7466 = vmatmul.mubr.bf16.gmra.mrb[0].mxu0 %v5925
      %v7467 = vpop.f32.mrb[0].mxu0
      %v7468 = vadd.f32 %v7415, %v7467
      %v7469 = vpop.f32.mrb[0].mxu0
      %v7470 = vadd.f32 %v7417, %v7469
      %v7471 = vpop.f32.mrb[0].mxu0
      %v7472 = vadd.f32 %v7419, %v7471
      %v7473 = vpop.f32.mrb[0].mxu0
      %v7474 = vadd.f32 %v7421, %v7473
      %7475 = vdwg.mxu0
      %7476 = vmatprep.subr.bf16.mxu0 %v7041
      %7477 = vmatpush1.bf16.msra.mxu0 %v7040
      %7478 = vmatprep.subr.bf16.mxu0 %v7044
      %7479 = vmatpush1.bf16.msra.mxu0 %v7043
      %7480 = vmatprep.subr.bf16.mxu0 %v7047
      %7481 = vmatpush1.bf16.msra.mxu0 %v7046
      %7482 = vmatprep.subr.bf16.mxu0 %v7050
      %7483 = vmatpush1.bf16.msra.mxu0 %v7049
      %7484 = vmatprep.subr.bf16.mxu0 %v7053
      %7485 = vmatpush1.bf16.msra.mxu0 %v7052
      %7486 = vmatprep.subr.bf16.mxu0 %v7056
      %7487 = vmatpush1.bf16.msra.mxu0 %v7055
      %7488 = vmatprep.subr.bf16.mxu0 %v7059
      %7489 = vmatpush1.bf16.msra.mxu0 %v7058
      %7490 = vmatprep.subr.bf16.mxu0 %v7062
      %7491 = vmatpush1.bf16.msra.mxu0 %v7061
      %7492 = vmatprep.subr.bf16.mxu0 %v7065
      %7493 = vmatpush1.bf16.msra.mxu0 %v7064
      %7494 = vmatprep.subr.bf16.mxu0 %v7068
      %7495 = vmatpush1.bf16.msra.mxu0 %v7067
      %7496 = vmatprep.subr.bf16.mxu0 %v7071
      %7497 = vmatpush1.bf16.msra.mxu0 %v7070
      %7498 = vmatprep.subr.bf16.mxu0 %v7074
      %7499 = vmatpush1.bf16.msra.mxu0 %v7073
      %7500 = vmatprep.subr.bf16.mxu0 %v7077
      %7501 = vmatpush1.bf16.msra.mxu0 %v7076
      %7502 = vmatprep.subr.bf16.mxu0 %v7080
      %7503 = vmatpush1.bf16.msra.mxu0 %v7079
      %7504 = vmatprep.subr.bf16.mxu0 %v7083
      %7505 = vmatpush1.bf16.msra.mxu0 %v7082
      %7506 = vmatprep.subr.bf16.mxu0 %v7086
      %7507 = vmatpush1.bf16.msra.mxu0 %v7085
      %7508 = vmatprep.mubr.bf16.mxu0 %v5919
      %7509 = vmatmul.mubr.bf16.gmra.mrb[0].mxu0 %v5918
      %v7510 = vpop.f32.mrb[0].mxu0
      %v7511 = vadd.f32 %v7458, %v7510
      %v7512 = vpop.f32.mrb[0].mxu0
      %v7513 = vadd.f32 %v7460, %v7512
      %v7514 = vpop.f32.mrb[0].mxu0
      %v7515 = vadd.f32 %v7462, %v7514
      %v7516 = vpop.f32.mrb[0].mxu0
      %v7517 = vadd.f32 %v7464, %v7516
      %7518 = vmatprep.mubr.bf16.mxu0 %v5928
      %7519 = vmatmul.mubr.bf16.gmra.mrb[0].mxu0 %v5927
      %v7520 = vpop.f32.mrb[0].mxu0
      %v7521 = vadd.f32 %v7468, %v7520
      %v7522 = vpop.f32.mrb[0].mxu0
      %v7523 = vadd.f32 %v7470, %v7522
      %v7524 = vpop.f32.mrb[0].mxu0
      %v7525 = vadd.f32 %v7472, %v7524
      %v7526 = vpop.f32.mrb[0].mxu0
      %v7527 = vadd.f32 %v7474, %v7526
      %7528 = vdwg.mxu0
      %7529 = vmatprep.subr.bf16.mxu0 %v7089
      %7530 = vmatpush1.bf16.msra.mxu0 %v7088
      %7531 = vmatprep.subr.bf16.mxu0 %v7092
      %7532 = vmatpush1.bf16.msra.mxu0 %v7091
      %7533 = vmatprep.subr.bf16.mxu0 %v7095
      %7534 = vmatpush1.bf16.msra.mxu0 %v7094
      %7535 = vmatprep.subr.bf16.mxu0 %v7098
      %7536 = vmatpush1.bf16.msra.mxu0 %v7097
      %7537 = vmatprep.subr.bf16.mxu0 %v7101
      %7538 = vmatpush1.bf16.msra.mxu0 %v7100
      %7539 = vmatprep.subr.bf16.mxu0 0
      %7540 = vmatpush1.bf16.msra.mxu0 0
      %7541 = vmatprep.subr.bf16.mxu0 0
      %7542 = vmatpush1.bf16.msra.mxu0 0
      %7543 = vmatprep.subr.bf16.mxu0 0
      %7544 = vmatpush1.bf16.msra.mxu0 0
      %7545 = vmatprep.subr.bf16.mxu0 0
      %7546 = vmatpush1.bf16.msra.mxu0 0
      %7547 = vmatprep.subr.bf16.mxu0 0
      %7548 = vmatpush1.bf16.msra.mxu0 0
      %7549 = vmatprep.subr.bf16.mxu0 0
      %7550 = vmatpush1.bf16.msra.mxu0 0
      %7551 = vmatprep.subr.bf16.mxu0 0
      %7552 = vmatpush1.bf16.msra.mxu0 0
      %7553 = vmatprep.subr.bf16.mxu0 0
      %7554 = vmatpush1.bf16.msra.mxu0 0
      %7555 = vmatprep.subr.bf16.mxu0 0
      %7556 = vmatpush1.bf16.msra.mxu0 0
      %7557 = vmatprep.subr.bf16.mxu0 0
      %7558 = vmatpush1.bf16.msra.mxu0 0
      %7559 = vmatprep.subr.bf16.mxu0 0
      %7560 = vmatpush1.bf16.msra.mxu0 0
      %7561 = vmatprep.mubr.bf16.mxu0 0
      %7562 = vmatmul.mubr.bf16.gmra.mrb[0].mxu0 %v7312
      %v7563 = vpop.f32.mrb[0].mxu0
      %v7564 = vadd.f32 %v7511, %v7563
      %v7565 = vpop.f32.mrb[0].mxu0
      %v7566 = vadd.f32 %v7513, %v7565
      %v7567 = vpop.f32.mrb[0].mxu0
      %v7568 = vadd.f32 %v7515, %v7567
      %v7569 = vpop.f32.mrb[0].mxu0
      %v7570 = vadd.f32 %v7517, %v7569
      %7571 = vmatprep.mubr.bf16.mxu0 0
      %7572 = vmatmul.mubr.bf16.gmra.mrb[0].mxu0 %v7315
      %v7573 = vpop.f32.mrb[0].mxu0
      %v7574 = vadd.f32 %v7521, %v7573
      %v7575 = vpop.f32.mrb[0].mxu0
      %v7576 = vadd.f32 %v7523, %v7575
      %v7577 = vpop.f32.mrb[0].mxu0
      %v7578 = vadd.f32 %v7525, %v7577
      %v7579 = vpop.f32.mrb[0].mxu0
      %v7580 = vadd.f32 %v7527, %v7579
      %7581 = vdwg.mxu0
      %7582 = vmatprep.subr.bf16.mxu0 0
      %7583 = vmatpush1.bf16.msra.mxu0 %v6898
      %7584 = vmatprep.subr.bf16.mxu0 0
      %7585 = vmatpush1.bf16.msra.mxu0 %v6901
      %7586 = vmatprep.subr.bf16.mxu0 0
      %7587 = vmatpush1.bf16.msra.mxu0 %v6904
      %7588 = vmatprep.subr.bf16.mxu0 0
      %7589 = vmatpush1.bf16.msra.mxu0 %v6907
      %7590 = vmatprep.subr.bf16.mxu0 0
      %7591 = vmatpush1.bf16.msra.mxu0 %v6910
      %7592 = vmatprep.subr.bf16.mxu0 0
      %7593 = vmatpush1.bf16.msra.mxu0 %v6913
      %7594 = vmatprep.subr.bf16.mxu0 0
      %7595 = vmatpush1.bf16.msra.mxu0 %v6916
      %7596 = vmatprep.subr.bf16.mxu0 0
      %7597 = vmatpush1.bf16.msra.mxu0 %v6919
      %7598 = vmatprep.subr.bf16.mxu0 0
      %7599 = vmatpush1.bf16.msra.mxu0 %v6922
      %7600 = vmatprep.subr.bf16.mxu0 0
      %7601 = vmatpush1.bf16.msra.mxu0 %v6925
      %7602 = vmatprep.subr.bf16.mxu0 0
      %7603 = vmatpush1.bf16.msra.mxu0 %v6928
      %7604 = vmatprep.subr.bf16.mxu0 0
      %7605 = vmatpush1.bf16.msra.mxu0 %v6931
      %7606 = vmatprep.subr.bf16.mxu0 0
      %7607 = vmatpush1.bf16.msra.mxu0 %v6934
      %7608 = vmatprep.subr.bf16.mxu0 0
      %7609 = vmatpush1.bf16.msra.mxu0 %v6937
      %7610 = vmatprep.subr.bf16.mxu0 0
      %7611 = vmatpush1.bf16.msra.mxu0 %v6940
      %7612 = vmatprep.subr.bf16.mxu0 0
      %7613 = vmatpush1.bf16.msra.mxu0 %v6943
      %7614 = vmatprep.mubr.bf16.mxu0 %v5913
      %7615 = vmatmul.mubr.bf16.gmra.mrb[0].mxu0 %v5912
      %v7616 = vpop.f32.mrb[0].mxu0
      %v7617 = vadd.f32 0.0, %v7616
      %v7618 = vpop.f32.mrb[0].mxu0
      %v7619 = vpop.f32.mrb[0].mxu0
      %v7620 = vadd.f32 0.0, %v7619
      %v7621 = vpop.f32.mrb[0].mxu0
      %7622 = vmatprep.mubr.bf16.mxu0 %v5922
      %7623 = vmatmul.mubr.bf16.gmra.mrb[0].mxu0 %v5921
      %v7624 = vpop.f32.mrb[0].mxu0
      %v7625 = vadd.f32 0.0, %v7624
      %v7626 = vpop.f32.mrb[0].mxu0
      %v7627 = vpop.f32.mrb[0].mxu0
      %v7628 = vadd.f32 0.0, %v7627
      %v7629 = vpop.f32.mrb[0].mxu0
      %7630 = vdwg.mxu0
      %7631 = vmatprep.subr.bf16.mxu0 0
      %7632 = vmatpush1.bf16.msra.mxu0 %v6946
      %7633 = vmatprep.subr.bf16.mxu0 0
      %7634 = vmatpush1.bf16.msra.mxu0 %v6949
      %7635 = vmatprep.subr.bf16.mxu0 0
      %7636 = vmatpush1.bf16.msra.mxu0 %v6952
      %7637 = vmatprep.subr.bf16.mxu0 0
      %7638 = vmatpush1.bf16.msra.mxu0 %v6955
      %7639 = vmatprep.subr.bf16.mxu0 0
      %7640 = vmatpush1.bf16.msra.mxu0 %v6958
      %7641 = vmatprep.subr.bf16.mxu0 0
      %7642 = vmatpush1.bf16.msra.mxu0 %v6961
      %7643 = vmatprep.subr.bf16.mxu0 0
      %7644 = vmatpush1.bf16.msra.mxu0 %v6964
      %7645 = vmatprep.subr.bf16.mxu0 0
      %7646 = vmatpush1.bf16.msra.mxu0 %v6967
      %7647 = vmatprep.subr.bf16.mxu0 0
      %7648 = vmatpush1.bf16.msra.mxu0 %v6970
      %7649 = vmatprep.subr.bf16.mxu0 0
      %7650 = vmatpush1.bf16.msra.mxu0 %v6973
      %7651 = vmatprep.subr.bf16.mxu0 0
      %7652 = vmatpush1.bf16.msra.mxu0 %v6976
      %7653 = vmatprep.subr.bf16.mxu0 0
      %7654 = vmatpush1.bf16.msra.mxu0 %v6979
      %7655 = vmatprep.subr.bf16.mxu0 0
      %7656 = vmatpush1.bf16.msra.mxu0 %v6982
      %7657 = vmatprep.subr.bf16.mxu0 0
      %7658 = vmatpush1.bf16.msra.mxu0 %v6985
      %7659 = vmatprep.subr.bf16.mxu0 0
      %7660 = vmatpush1.bf16.msra.mxu0 %v6988
      %7661 = vmatprep.subr.bf16.mxu0 0
      %7662 = vmatpush1.bf16.msra.mxu0 %v6991
      %7663 = vmatprep.mubr.bf16.mxu0 %v5915
      %7664 = vmatmul.mubr.bf16.gmra.mrb[0].mxu0 %v5914
      %v7665 = vpop.f32.mrb[0].mxu0
      %v7666 = vadd.f32 %v7617, %v7665
      %v7667 = vpop.f32.mrb[0].mxu0
      %v7668 = vpop.f32.mrb[0].mxu0
      %v7669 = vadd.f32 %v7620, %v7668
      %v7670 = vpop.f32.mrb[0].mxu0
      %7671 = vmatprep.mubr.bf16.mxu0 %v5924
      %7672 = vmatmul.mubr.bf16.gmra.mrb[0].mxu0 %v5923
      %v7673 = vpop.f32.mrb[0].mxu0
      %v7674 = vadd.f32 %v7625, %v7673
      %v7675 = vpop.f32.mrb[0].mxu0
      %v7676 = vpop.f32.mrb[0].mxu0
      %v7677 = vadd.f32 %v7628, %v7676
      %v7678 = vpop.f32.mrb[0].mxu0
      %7679 = vdwg.mxu0
      %7680 = vmatprep.subr.bf16.mxu0 0
      %7681 = vmatpush1.bf16.msra.mxu0 %v6994
      %7682 = vmatprep.subr.bf16.mxu0 0
      %7683 = vmatpush1.bf16.msra.mxu0 %v6997
      %7684 = vmatprep.subr.bf16.mxu0 0
      %7685 = vmatpush1.bf16.msra.mxu0 %v7000
      %7686 = vmatprep.subr.bf16.mxu0 0
      %7687 = vmatpush1.bf16.msra.mxu0 %v7003
      %7688 = vmatprep.subr.bf16.mxu0 0
      %7689 = vmatpush1.bf16.msra.mxu0 %v7006
      %7690 = vmatprep.subr.bf16.mxu0 0
      %7691 = vmatpush1.bf16.msra.mxu0 %v7009
      %7692 = vmatprep.subr.bf16.mxu0 0
      %7693 = vmatpush1.bf16.msra.mxu0 %v7012
      %7694 = vmatprep.subr.bf16.mxu0 0
      %7695 = vmatpush1.bf16.msra.mxu0 %v7015
      %7696 = vmatprep.subr.bf16.mxu0 0
      %7697 = vmatpush1.bf16.msra.mxu0 %v7018
      %7698 = vmatprep.subr.bf16.mxu0 0
      %7699 = vmatpush1.bf16.msra.mxu0 %v7021
      %7700 = vmatprep.subr.bf16.mxu0 0
      %7701 = vmatpush1.bf16.msra.mxu0 %v7024
      %7702 = vmatprep.subr.bf16.mxu0 0
      %7703 = vmatpush1.bf16.msra.mxu0 %v7027
      %7704 = vmatprep.subr.bf16.mxu0 0
      %7705 = vmatpush1.bf16.msra.mxu0 %v7030
      %7706 = vmatprep.subr.bf16.mxu0 0
      %7707 = vmatpush1.bf16.msra.mxu0 %v7033
      %7708 = vmatprep.subr.bf16.mxu0 0
      %7709 = vmatpush1.bf16.msra.mxu0 %v7036
      %7710 = vmatprep.subr.bf16.mxu0 0
      %7711 = vmatpush1.bf16.msra.mxu0 %v7039
      %7712 = vmatprep.mubr.bf16.mxu0 %v5917
      %7713 = vmatmul.mubr.bf16.gmra.mrb[0].mxu0 %v5916
      %v7714 = vpop.f32.mrb[0].mxu0
      %v7715 = vadd.f32 %v7666, %v7714
      %v7716 = vpop.f32.mrb[0].mxu0
      %v7717 = vpop.f32.mrb[0].mxu0
      %v7718 = vadd.f32 %v7669, %v7717
      %v7719 = vpop.f32.mrb[0].mxu0
      %7720 = vmatprep.mubr.bf16.mxu0 %v5926
      %7721 = vmatmul.mubr.bf16.gmra.mrb[0].mxu0 %v5925
      %v7722 = vpop.f32.mrb[0].mxu0
      %v7723 = vadd.f32 %v7674, %v7722
      %v7724 = vpop.f32.mrb[0].mxu0
      %v7725 = vpop.f32.mrb[0].mxu0
      %v7726 = vadd.f32 %v7677, %v7725
      %v7727 = vpop.f32.mrb[0].mxu0
      %7728 = vdwg.mxu0
      %7729 = vmatprep.subr.bf16.mxu0 0
      %7730 = vmatpush1.bf16.msra.mxu0 %v7042
      %7731 = vmatprep.subr.bf16.mxu0 0
      %7732 = vmatpush1.bf16.msra.mxu0 %v7045
      %7733 = vmatprep.subr.bf16.mxu0 0
      %7734 = vmatpush1.bf16.msra.mxu0 %v7048
      %7735 = vmatprep.subr.bf16.mxu0 0
      %7736 = vmatpush1.bf16.msra.mxu0 %v7051
      %7737 = vmatprep.subr.bf16.mxu0 0
      %7738 = vmatpush1.bf16.msra.mxu0 %v7054
      %7739 = vmatprep.subr.bf16.mxu0 0
      %7740 = vmatpush1.bf16.msra.mxu0 %v7057
      %7741 = vmatprep.subr.bf16.mxu0 0
      %7742 = vmatpush1.bf16.msra.mxu0 %v7060
      %7743 = vmatprep.subr.bf16.mxu0 0
      %7744 = vmatpush1.bf16.msra.mxu0 %v7063
      %7745 = vmatprep.subr.bf16.mxu0 0
      %7746 = vmatpush1.bf16.msra.mxu0 %v7066
      %7747 = vmatprep.subr.bf16.mxu0 0
      %7748 = vmatpush1.bf16.msra.mxu0 %v7069
      %7749 = vmatprep.subr.bf16.mxu0 0
      %7750 = vmatpush1.bf16.msra.mxu0 %v7072
      %7751 = vmatprep.subr.bf16.mxu0 0
      %7752 = vmatpush1.bf16.msra.mxu0 %v7075
      %7753 = vmatprep.subr.bf16.mxu0 0
      %7754 = vmatpush1.bf16.msra.mxu0 %v7078
      %7755 = vmatprep.subr.bf16.mxu0 0
      %7756 = vmatpush1.bf16.msra.mxu0 %v7081
      %7757 = vmatprep.subr.bf16.mxu0 0
      %7758 = vmatpush1.bf16.msra.mxu0 %v7084
      %7759 = vmatprep.subr.bf16.mxu0 0
      %7760 = vmatpush1.bf16.msra.mxu0 %v7087
      %7761 = vmatprep.mubr.bf16.mxu0 %v5919
      %7762 = vmatmul.mubr.bf16.gmra.mrb[0].mxu0 %v5918
      %v7763 = vpop.f32.mrb[0].mxu0
      %v7764 = vadd.f32 %v7715, %v7763
      %v7765 = vpop.f32.mrb[0].mxu0
      %v7766 = vpop.f32.mrb[0].mxu0
      %v7767 = vadd.f32 %v7718, %v7766
      %v7768 = vpop.f32.mrb[0].mxu0
      %7769 = vmatprep.mubr.bf16.mxu0 %v5928
      %7770 = vmatmul.mubr.bf16.gmra.mrb[0].mxu0 %v5927
      %v7771 = vpop.f32.mrb[0].mxu0
      %v7772 = vadd.f32 %v7723, %v7771
      %v7773 = vpop.f32.mrb[0].mxu0
      %v7774 = vpop.f32.mrb[0].mxu0
      %v7775 = vadd.f32 %v7726, %v7774
      %v7776 = vpop.f32.mrb[0].mxu0
      %7777 = vdwg.mxu0
      %7778 = vmatprep.subr.bf16.mxu0 0
      %7779 = vmatpush1.bf16.msra.mxu0 %v7090
      %7780 = vmatprep.subr.bf16.mxu0 0
      %7781 = vmatpush1.bf16.msra.mxu0 %v7093
      %7782 = vmatprep.subr.bf16.mxu0 0
      %7783 = vmatpush1.bf16.msra.mxu0 %v7096
      %7784 = vmatprep.subr.bf16.mxu0 0
      %7785 = vmatpush1.bf16.msra.mxu0 %v7099
      %7786 = vmatprep.subr.bf16.mxu0 0
      %7787 = vmatpush1.bf16.msra.mxu0 %v7102
      %7788 = vmatprep.subr.bf16.mxu0 0
      %7789 = vmatpush1.bf16.msra.mxu0 0
      %7790 = vmatprep.subr.bf16.mxu0 0
      %7791 = vmatpush1.bf16.msra.mxu0 0
      %7792 = vmatprep.subr.bf16.mxu0 0
      %7793 = vmatpush1.bf16.msra.mxu0 0
      %7794 = vmatprep.subr.bf16.mxu0 0
      %7795 = vmatpush1.bf16.msra.mxu0 0
      %7796 = vmatprep.subr.bf16.mxu0 0
      %7797 = vmatpush1.bf16.msra.mxu0 0
      %7798 = vmatprep.subr.bf16.mxu0 0
      %7799 = vmatpush1.bf16.msra.mxu0 0
      %7800 = vmatprep.subr.bf16.mxu0 0
      %7801 = vmatpush1.bf16.msra.mxu0 0
      %7802 = vmatprep.subr.bf16.mxu0 0
      %7803 = vmatpush1.bf16.msra.mxu0 0
      %7804 = vmatprep.subr.bf16.mxu0 0
      %7805 = vmatpush1.bf16.msra.mxu0 0
      %7806 = vmatprep.subr.bf16.mxu0 0
      %7807 = vmatpush1.bf16.msra.mxu0 0
      %7808 = vmatprep.subr.bf16.mxu0 0
      %7809 = vmatpush1.bf16.msra.mxu0 0
      %7810 = vmatprep.mubr.bf16.mxu0 0
      %7811 = vmatmul.mubr.bf16.gmra.mrb[0].mxu0 %v7312
      %v7812 = vpop.f32.mrb[0].mxu0
      %v7813 = vadd.f32 %v7764, %v7812
      %v7814 = vpop.f32.mrb[0].mxu0
      %v7815 = vpop.f32.mrb[0].mxu0
      %v7816 = vadd.f32 %v7767, %v7815
      %v7817 = vpop.f32.mrb[0].mxu0
      %7818 = vmatprep.mubr.bf16.mxu0 0
      %7819 = vmatmul.mubr.bf16.gmra.mrb[0].mxu0 %v7315
      %v7820 = vpop.f32.mrb[0].mxu0
      %v7821 = vadd.f32 %v7772, %v7820
      %v7822 = vpop.f32.mrb[0].mxu0
      %v7823 = vpop.f32.mrb[0].mxu0
      %v7824 = vadd.f32 %v7775, %v7823
      %v7825 = vpop.f32.mrb[0].mxu0
      %7826 = vdwg.mxu0
      %v7827 = vadd.f32 %v4124, %v7564
      %v7828 = vadd.f32 %v4125, %v7566
      %v7829 = vadd.f32 %v4126, %v7813
      %v7830 = vadd.f32 %v4127, %v7568
      %v7831 = vadd.f32 %v4128, %v7570
      %v7832 = vadd.f32 %v4129, %v7816
      %v7833 = vadd.f32 %v4130, %v7574
      %v7834 = vadd.f32 %v4131, %v7576
      %v7835 = vadd.f32 %v4132, %v7821
      %v7836 = vadd.f32 %v4133, %v7578
      %v7837 = vadd.f32 %v4134, %v7580
      %v7838 = vadd.f32 %v4135, %v7824
      %v7839 = vld [vmem:[%s649] sm:$0x7]
      %v7841 = vlaneseq
      %v7842 = vshrl.u32 %v7841, 7
      %v7843 = vsub.s32 0, %v7842
      %v7844 = vrot.slane %v7839, %v7843
      %v7845 = vlaneseq
      %v7846 = vshrl.u32 %v7845, 7
      %v7847 = vsub.s32 1, %v7846
      %v7848 = vrot.slane %v7839, %v7847
      %v7849 = vlaneseq
      %v7850 = vshrl.u32 %v7849, 7
      %v7851 = vsub.s32 2, %v7850
      %v7852 = vrot.slane %v7839, %v7851
      %v7856 = vadd.f32 %v7827, %v7844
      %v7857 = vadd.f32 %v7828, %v7848
      %v7858 = vadd.f32 %v7829, %v7852
      %v7859 = vadd.f32 %v7830, %v7844
      %v7860 = vadd.f32 %v7831, %v7848
      %v7861 = vadd.f32 %v7832, %v7852
      %v7862 = vadd.f32 %v7833, %v7844
      %v7863 = vadd.f32 %v7834, %v7848
      %v7864 = vadd.f32 %v7835, %v7852
      %v7865 = vadd.f32 %v7836, %v7844
      %v7866 = vadd.f32 %v7837, %v7848
      %v7867 = vadd.f32 %v7838, %v7852
      %7868 = vst [vmem:[#allocation2] sm:$0xff] %v7856
      %7869 = vst [vmem:[#allocation2 + $0x8] sm:$0xff] %v7857
      %7870 = vst.msk [vmem:[#allocation2 + $0x10] sm:$0xff] %vm1019, %v7858
      %7871 = vst [vmem:[#allocation2 + $0x18] sm:$0xff] %v7859
      %7872 = vst [vmem:[#allocation2 + $0x20] sm:$0xff] %v7860
      %7873 = vst.msk [vmem:[#allocation2 + $0x28] sm:$0xff] %vm1019, %v7861
      %7874 = vst [vmem:[#allocation2 + $0x30] sm:$0xff] %v7862
      %7875 = vst [vmem:[#allocation2 + $0x38] sm:$0xff] %v7863
      %7876 = vst.msk [vmem:[#allocation2 + $0x40] sm:$0xff] %vm1019, %v7864
      %7877 = vst [vmem:[#allocation2 + $0x48] sm:$0xff] %v7865
      %7878 = vst [vmem:[#allocation2 + $0x50] sm:$0xff] %v7866
      %7879 = vst.msk [vmem:[#allocation2 + $0x58] sm:$0xff] %vm1019, %v7867
      %p7880 = scmp.eq.s32.totalorder %s26, 3
      // Predicated region
      $region115: #{megatts2_plm1_forward.1} parent=75 // pred_check
        %p7881 = pneg %p7880
      $region116: #{megatts2_plm1_forward.1} parent=75 // pred_check_branch
        %7883 = sbr.rel (%p7881) target = $region118
      $region117: #{megatts2_plm1_forward.1} parent=75 // pred_region
        %s7884 = smul.u32 4, 35
        %s7885 = smul.u32 %s7884, 8
        %s7886 = sshll.u32 %s7885, 4
        %7887 = dma.done [#allocation4], %s7886
        %v7888 = vpack.c.bf16 %v7859, %v7856
        %v7889 = vpack.c.bf16 %v7860, %v7857
        %v7890 = vpack.c.bf16 %v7861, %v7858
        %v7891 = vpack.c.bf16 %v7865, %v7862
        %v7892 = vpack.c.bf16 %v7866, %v7863
        %v7893 = vpack.c.bf16 %v7867, %v7864
        %v7894 = vld [vmem:[#allocation3] sm:$0xff]
        %v7895 = vld [vmem:[#allocation3 + $0x8] sm:$0xff]
        %v7896 = vld [vmem:[#allocation3 + $0x10] sm:$0xff]
        %v7897 = vld [vmem:[#allocation3 + $0x18] sm:$0xff]
        %v7898 = vld [vmem:[#allocation3 + $0x20] sm:$0xff]
        %v7899 = vld [vmem:[#allocation3 + $0x28] sm:$0xff]
        %v7900 = vld [vmem:[#allocation3 + $0x30] sm:$0xff]
        %v7901 = vld [vmem:[#allocation3 + $0x38] sm:$0xff]
        %v7902 = vld [vmem:[#allocation3 + $0x40] sm:$0xff]
        %v7903 = vld [vmem:[#allocation3 + $0x48] sm:$0xff]
        %v7904 = vld [vmem:[#allocation3 + $0x50] sm:$0xff]
        %v7905 = vld [vmem:[#allocation3 + $0x58] sm:$0xff]
        %v7906 = vld [vmem:[#allocation3 + $0x60] sm:$0xff]
        %v7907 = vld [vmem:[#allocation3 + $0x68] sm:$0xff]
        %v7908 = vld [vmem:[#allocation3 + $0x70] sm:$0xff]
        %v7909 = vld [vmem:[#allocation3 + $0x78] sm:$0xff]
        %v7910 = vld [vmem:[#allocation3 + $0x80] sm:$0xff]
        %v7911 = vld [vmem:[#allocation3 + $0x88] sm:$0xff]
        %v7912 = vld [vmem:[#allocation3 + $0x90] sm:$0xff]
        %v7913 = vld [vmem:[#allocation3 + $0x98] sm:$0xff]
        %v7914 = vld [vmem:[#allocation3 + $0xa0] sm:$0xff]
        %v7915 = vld [vmem:[#allocation3 + $0xa8] sm:$0xff]
        %v7916 = vld [vmem:[#allocation3 + $0xb0] sm:$0xff]
        %v7917 = vld [vmem:[#allocation3 + $0xb8] sm:$0xff]
        %v7918 = vld [vmem:[#allocation3 + $0xc0] sm:$0xff]
        %v7919 = vld [vmem:[#allocation3 + $0xc8] sm:$0xff]
        %v7920 = vld [vmem:[#allocation3 + $0xd0] sm:$0xff]
        %v7921 = vld [vmem:[#allocation3 + $0xd8] sm:$0xff]
        %v7922 = vld [vmem:[#allocation3 + $0xe0] sm:$0xff]
        %v7923 = vld [vmem:[#allocation3 + $0xe8] sm:$0xff]
        %v7924 = vld [vmem:[#allocation3 + $0xf0] sm:$0xff]
        %v7925 = vld [vmem:[#allocation3 + $0xf8] sm:$0xff]
        %v7926 = vld [vmem:[#allocation3 + $0x100] sm:$0xff]
        %v7927 = vld [vmem:[#allocation3 + $0x108] sm:$0xff]
        %v7928 = vld [vmem:[#allocation3 + $0x110] sm:$0xff]
        %v7929 = vld [vmem:[#allocation3 + $0x118] sm:$0xff]
        %v7930 = vld [vmem:[#allocation3 + $0x120] sm:$0xff]
        %v7931 = vld [vmem:[#allocation3 + $0x128] sm:$0xff]
        %v7932 = vld [vmem:[#allocation3 + $0x130] sm:$0xff]
        %v7933 = vld [vmem:[#allocation3 + $0x138] sm:$0xff]
        %v7934 = vld [vmem:[#allocation3 + $0x140] sm:$0xff]
        %v7935 = vld [vmem:[#allocation3 + $0x148] sm:$0xff]
        %v7936 = vld [vmem:[#allocation3 + $0x150] sm:$0xff]
        %v7937 = vld [vmem:[#allocation3 + $0x158] sm:$0xff]
        %v7938 = vld [vmem:[#allocation3 + $0x160] sm:$0xff]
        %v7939 = vld [vmem:[#allocation3 + $0x168] sm:$0xff]
        %v7940 = vld [vmem:[#allocation3 + $0x170] sm:$0xff]
        %v7941 = vld [vmem:[#allocation3 + $0x178] sm:$0xff]
        %v7942 = vld [vmem:[#allocation3 + $0x180] sm:$0xff]
        %v7943 = vld [vmem:[#allocation3 + $0x188] sm:$0xff]
        %v7944 = vld [vmem:[#allocation3 + $0x190] sm:$0xff]
        %v7945 = vld [vmem:[#allocation3 + $0x198] sm:$0xff]
        %v7946 = vld [vmem:[#allocation3 + $0x1a0] sm:$0xff]
        %v7947 = vld [vmem:[#allocation3 + $0x1a8] sm:$0xff]
        %v7948 = vld [vmem:[#allocation3 + $0x1b0] sm:$0xff]
        %v7949 = vld [vmem:[#allocation3 + $0x1b8] sm:$0xff]
        %v7950 = vld [vmem:[#allocation3 + $0x1c0] sm:$0xff]
        %v7951 = vld [vmem:[#allocation3 + $0x1c8] sm:$0xff]
        %v7952 = vld [vmem:[#allocation3 + $0x1d0] sm:$0xff]
        %v7953 = vld [vmem:[#allocation3 + $0x1d8] sm:$0xff]
        %v7954 = vld [vmem:[#allocation3 + $0x1e0] sm:$0xff]
        %v7955 = vld [vmem:[#allocation3 + $0x1e8] sm:$0xff]
        %v7956 = vld [vmem:[#allocation3 + $0x1f0] sm:$0xff]
        %v7957 = vld [vmem:[#allocation3 + $0x1f8] sm:$0xff]
        %v7958 = vld [vmem:[#allocation3 + $0x200] sm:$0xff]
        %v7959 = vld [vmem:[#allocation3 + $0x208] sm:$0xff]
        %v7960 = vld [vmem:[#allocation3 + $0x210] sm:$0xff]
        %v7961 = vld [vmem:[#allocation3 + $0x218] sm:$0xff]
        %v7962 = vld [vmem:[#allocation3 + $0x220] sm:$0xff]
        %v7963 = vld [vmem:[#allocation3 + $0x228] sm:$0xff]
        %v7964 = vld [vmem:[#allocation3 + $0x230] sm:$0xff]
        %v7965 = vld [vmem:[#allocation3 + $0x238] sm:$0xff]
        %v7966 = vld [vmem:[#allocation3 + $0x240] sm:$0xff]
        %v7967 = vld [vmem:[#allocation3 + $0x248] sm:$0xff]
        %v7968 = vld [vmem:[#allocation3 + $0x250] sm:$0xff]
        %v7969 = vld [vmem:[#allocation3 + $0x258] sm:$0xff]
        %v7970 = vld [vmem:[#allocation3 + $0x260] sm:$0xff]
        %v7971 = vld [vmem:[#allocation3 + $0x268] sm:$0xff]
        %v7972 = vld [vmem:[#allocation3 + $0x270] sm:$0xff]
        %v7973 = vld [vmem:[#allocation3 + $0x278] sm:$0xff]
        %v7974 = vld [vmem:[#allocation3 + $0x280] sm:$0xff]
        %v7975 = vld [vmem:[#allocation3 + $0x288] sm:$0xff]
        %v7976 = vld [vmem:[#allocation3 + $0x290] sm:$0xff]
        %v7977 = vld [vmem:[#allocation3 + $0x298] sm:$0xff]
        %v7978 = vld [vmem:[#allocation3 + $0x2a0] sm:$0xff]
        %v7979 = vld [vmem:[#allocation3 + $0x2a8] sm:$0xff]
        %v7980 = vld [vmem:[#allocation3 + $0x2b0] sm:$0xff]
        %v7981 = vld [vmem:[#allocation3 + $0x2b8] sm:$0xff]
        %v7982 = vld [vmem:[#allocation3 + $0x2c0] sm:$0xff]
        %v7983 = vld [vmem:[#allocation3 + $0x2c8] sm:$0xff]
        %v7984 = vld [vmem:[#allocation3 + $0x2d0] sm:$0xff]
        %v7985 = vld [vmem:[#allocation3 + $0x2d8] sm:$0xff]
        %v7986 = vld [vmem:[#allocation3 + $0x2e0] sm:$0xff]
        %v7987 = vld [vmem:[#allocation3 + $0x2e8] sm:$0xff]
        %v7988 = vld [vmem:[#allocation3 + $0x2f0] sm:$0xff]
        %v7989 = vld [vmem:[#allocation3 + $0x2f8] sm:$0xff]
        %v7990 = vld [vmem:[#allocation3 + $0x300] sm:$0xff]
        %v7991 = vld [vmem:[#allocation3 + $0x308] sm:$0xff]
        %v7992 = vld [vmem:[#allocation3 + $0x310] sm:$0xff]
        %v7993 = vld [vmem:[#allocation3 + $0x318] sm:$0xff]
        %v7994 = vld [vmem:[#allocation3 + $0x320] sm:$0xff]
        %v7995 = vld [vmem:[#allocation3 + $0x328] sm:$0xff]
        %v7996 = vld [vmem:[#allocation3 + $0x330] sm:$0xff]
        %v7997 = vld [vmem:[#allocation3 + $0x338] sm:$0xff]
        %v7998 = vld [vmem:[#allocation3 + $0x340] sm:$0xff]
        %v7999 = vld [vmem:[#allocation3 + $0x348] sm:$0xff]
        %v8000 = vld [vmem:[#allocation3 + $0x350] sm:$0xff]
        %v8001 = vld [vmem:[#allocation3 + $0x358] sm:$0xff]
        %v8002 = vld [vmem:[#allocation3 + $0x360] sm:$0xff]
        %v8003 = vld [vmem:[#allocation3 + $0x368] sm:$0xff]
        %v8004 = vld [vmem:[#allocation3 + $0x370] sm:$0xff]
        %v8005 = vld [vmem:[#allocation3 + $0x378] sm:$0xff]
        %v8006 = vld [vmem:[#allocation3 + $0x380] sm:$0xff]
        %v8007 = vld [vmem:[#allocation3 + $0x388] sm:$0xff]
        %v8008 = vld [vmem:[#allocation3 + $0x390] sm:$0xff]
        %v8009 = vld [vmem:[#allocation3 + $0x398] sm:$0xff]
        %v8010 = vld [vmem:[#allocation3 + $0x3a0] sm:$0xff]
        %v8011 = vld [vmem:[#allocation3 + $0x3a8] sm:$0xff]
        %v8012 = vld [vmem:[#allocation3 + $0x3b0] sm:$0xff]
        %v8013 = vld [vmem:[#allocation3 + $0x3b8] sm:$0xff]
        %v8014 = vld [vmem:[#allocation3 + $0x3c0] sm:$0xff]
        %v8015 = vld [vmem:[#allocation3 + $0x3c8] sm:$0xff]
        %v8016 = vld [vmem:[#allocation3 + $0x3d0] sm:$0xff]
        %v8017 = vld [vmem:[#allocation3 + $0x3d8] sm:$0xff]
        %v8018 = vld [vmem:[#allocation3 + $0x3e0] sm:$0xff]
        %v8019 = vld [vmem:[#allocation3 + $0x3e8] sm:$0xff]
        %v8020 = vld [vmem:[#allocation3 + $0x3f0] sm:$0xff]
        %v8021 = vld [vmem:[#allocation3 + $0x3f8] sm:$0xff]
        %v8022 = vld [vmem:[#allocation3 + $0x400] sm:$0xff]
        %v8023 = vld [vmem:[#allocation3 + $0x408] sm:$0xff]
        %v8024 = vld [vmem:[#allocation3 + $0x410] sm:$0xff]
        %v8025 = vld [vmem:[#allocation3 + $0x418] sm:$0xff]
        %v8026 = vld [vmem:[#allocation3 + $0x420] sm:$0xff]
        %v8027 = vld [vmem:[#allocation3 + $0x428] sm:$0xff]
        %v8028 = vld [vmem:[#allocation3 + $0x430] sm:$0xff]
        %v8029 = vld [vmem:[#allocation3 + $0x438] sm:$0xff]
        %v8030 = vld [vmem:[#allocation3 + $0x440] sm:$0x33]
        %v8031 = vld [vmem:[#allocation3 + $0x448] sm:$0x33]
        %v8032 = vld [vmem:[#allocation3 + $0x450] sm:$0x33]
        %v8033 = vld [vmem:[#allocation3 + $0x458] sm:$0x33]
        %v8174 = vunpack.c.l.b16 %v7894
        %v8175 = vunpack.c.h.b16 %v7894
        %v8176 = vunpack.c.l.b16 %v7895
        %v8177 = vunpack.c.h.b16 %v7895
        %v8178 = vunpack.c.l.b16 %v7896
        %v8179 = vunpack.c.h.b16 %v7896
        %v8180 = vunpack.c.l.b16 %v7897
        %v8181 = vunpack.c.h.b16 %v7897
        %v8182 = vunpack.c.l.b16 %v7898
        %v8183 = vunpack.c.h.b16 %v7898
        %v8184 = vunpack.c.l.b16 %v7899
        %v8185 = vunpack.c.h.b16 %v7899
        %v8186 = vunpack.c.l.b16 %v7900
        %v8187 = vunpack.c.h.b16 %v7900
        %v8188 = vunpack.c.l.b16 %v7901
        %v8189 = vunpack.c.h.b16 %v7901
        %v8190 = vunpack.c.l.b16 %v7902
        %v8191 = vunpack.c.h.b16 %v7902
        %v8192 = vunpack.c.l.b16 %v7903
        %v8193 = vunpack.c.h.b16 %v7903
        %v8194 = vunpack.c.l.b16 %v7904
        %v8195 = vunpack.c.h.b16 %v7904
        %v8196 = vunpack.c.l.b16 %v7905
        %v8197 = vunpack.c.h.b16 %v7905
        %v8198 = vunpack.c.l.b16 %v7906
        %v8199 = vunpack.c.h.b16 %v7906
        %v8200 = vunpack.c.l.b16 %v7907
        %v8201 = vunpack.c.h.b16 %v7907
        %v8202 = vunpack.c.l.b16 %v7908
        %v8203 = vunpack.c.h.b16 %v7908
        %v8204 = vunpack.c.l.b16 %v7909
        %v8205 = vunpack.c.h.b16 %v7909
        %v8206 = vunpack.c.l.b16 %v7910
        %v8207 = vunpack.c.h.b16 %v7910
        %v8208 = vunpack.c.l.b16 %v7911
        %v8209 = vunpack.c.h.b16 %v7911
        %v8210 = vunpack.c.l.b16 %v7912
        %v8211 = vunpack.c.h.b16 %v7912
        %v8212 = vunpack.c.l.b16 %v7913
        %v8213 = vunpack.c.h.b16 %v7913
        %v8214 = vunpack.c.l.b16 %v7914
        %v8215 = vunpack.c.h.b16 %v7914
        %v8216 = vunpack.c.l.b16 %v7915
        %v8217 = vunpack.c.h.b16 %v7915
        %v8218 = vunpack.c.l.b16 %v7916
        %v8219 = vunpack.c.h.b16 %v7916
        %v8220 = vunpack.c.l.b16 %v7917
        %v8221 = vunpack.c.h.b16 %v7917
        %v8222 = vunpack.c.l.b16 %v7918
        %v8223 = vunpack.c.h.b16 %v7918
        %v8224 = vunpack.c.l.b16 %v7919
        %v8225 = vunpack.c.h.b16 %v7919
        %v8226 = vunpack.c.l.b16 %v7920
        %v8227 = vunpack.c.h.b16 %v7920
        %v8228 = vunpack.c.l.b16 %v7921
        %v8229 = vunpack.c.h.b16 %v7921
        %v8230 = vunpack.c.l.b16 %v7922
        %v8231 = vunpack.c.h.b16 %v7922
        %v8232 = vunpack.c.l.b16 %v7923
        %v8233 = vunpack.c.h.b16 %v7923
        %v8234 = vunpack.c.l.b16 %v7924
        %v8235 = vunpack.c.h.b16 %v7924
        %v8236 = vunpack.c.l.b16 %v7925
        %v8237 = vunpack.c.h.b16 %v7925
        %v8238 = vunpack.c.l.b16 %v7926
        %v8239 = vunpack.c.h.b16 %v7926
        %v8240 = vunpack.c.l.b16 %v7927
        %v8241 = vunpack.c.h.b16 %v7927
        %v8242 = vunpack.c.l.b16 %v7928
        %v8243 = vunpack.c.h.b16 %v7928
        %v8244 = vunpack.c.l.b16 %v7929
        %v8245 = vunpack.c.h.b16 %v7929
        %v8246 = vunpack.c.l.b16 %v7930
        %v8247 = vunpack.c.h.b16 %v7930
        %v8248 = vunpack.c.l.b16 %v7931
        %v8249 = vunpack.c.h.b16 %v7931
        %v8250 = vunpack.c.l.b16 %v7932
        %v8251 = vunpack.c.h.b16 %v7932
        %v8252 = vunpack.c.l.b16 %v7933
        %v8253 = vunpack.c.h.b16 %v7933
        %v8254 = vunpack.c.l.b16 %v7934
        %v8255 = vunpack.c.h.b16 %v7934
        %v8256 = vunpack.c.l.b16 %v7935
        %v8257 = vunpack.c.h.b16 %v7935
        %v8258 = vunpack.c.l.b16 %v7936
        %v8259 = vunpack.c.h.b16 %v7936
        %v8260 = vunpack.c.l.b16 %v7937
        %v8261 = vunpack.c.h.b16 %v7937
        %v8262 = vunpack.c.l.b16 %v7938
        %v8263 = vunpack.c.h.b16 %v7938
        %v8264 = vunpack.c.l.b16 %v7939
        %v8265 = vunpack.c.h.b16 %v7939
        %v8266 = vunpack.c.l.b16 %v7940
        %v8267 = vunpack.c.h.b16 %v7940
        %v8268 = vunpack.c.l.b16 %v7941
        %v8269 = vunpack.c.h.b16 %v7941
        %v8270 = vunpack.c.l.b16 %v7942
        %v8271 = vunpack.c.h.b16 %v7942
        %v8272 = vunpack.c.l.b16 %v7943
        %v8273 = vunpack.c.h.b16 %v7943
        %v8274 = vunpack.c.l.b16 %v7944
        %v8275 = vunpack.c.h.b16 %v7944
        %v8276 = vunpack.c.l.b16 %v7945
        %v8277 = vunpack.c.h.b16 %v7945
        %v8278 = vunpack.c.l.b16 %v7946
        %v8279 = vunpack.c.h.b16 %v7946
        %v8280 = vunpack.c.l.b16 %v7947
        %v8281 = vunpack.c.h.b16 %v7947
        %v8282 = vunpack.c.l.b16 %v7948
        %v8283 = vunpack.c.h.b16 %v7948
        %v8284 = vunpack.c.l.b16 %v7949
        %v8285 = vunpack.c.h.b16 %v7949
        %v8286 = vunpack.c.l.b16 %v7950
        %v8287 = vunpack.c.h.b16 %v7950
        %v8288 = vunpack.c.l.b16 %v7951
        %v8289 = vunpack.c.h.b16 %v7951
        %v8290 = vunpack.c.l.b16 %v7952
        %v8291 = vunpack.c.h.b16 %v7952
        %v8292 = vunpack.c.l.b16 %v7953
        %v8293 = vunpack.c.h.b16 %v7953
        %v8294 = vunpack.c.l.b16 %v7954
        %v8295 = vunpack.c.h.b16 %v7954
        %v8296 = vunpack.c.l.b16 %v7955
        %v8297 = vunpack.c.h.b16 %v7955
        %v8298 = vunpack.c.l.b16 %v7956
        %v8299 = vunpack.c.h.b16 %v7956
        %v8300 = vunpack.c.l.b16 %v7957
        %v8301 = vunpack.c.h.b16 %v7957
        %v8302 = vunpack.c.l.b16 %v7958
        %v8303 = vunpack.c.h.b16 %v7958
        %v8304 = vunpack.c.l.b16 %v7959
        %v8305 = vunpack.c.h.b16 %v7959
        %v8306 = vunpack.c.l.b16 %v7960
        %v8307 = vunpack.c.h.b16 %v7960
        %v8308 = vunpack.c.l.b16 %v7961
        %v8309 = vunpack.c.h.b16 %v7961
        %v8310 = vunpack.c.l.b16 %v7962
        %v8311 = vunpack.c.h.b16 %v7962
        %v8312 = vunpack.c.l.b16 %v7963
        %v8313 = vunpack.c.h.b16 %v7963
        %v8314 = vunpack.c.l.b16 %v7964
        %v8315 = vunpack.c.h.b16 %v7964
        %v8316 = vunpack.c.l.b16 %v7965
        %v8317 = vunpack.c.h.b16 %v7965
        %v8318 = vunpack.c.l.b16 %v7966
        %v8319 = vunpack.c.h.b16 %v7966
        %v8320 = vunpack.c.l.b16 %v7967
        %v8321 = vunpack.c.h.b16 %v7967
        %v8322 = vunpack.c.l.b16 %v7968
        %v8323 = vunpack.c.h.b16 %v7968
        %v8324 = vunpack.c.l.b16 %v7969
        %v8325 = vunpack.c.h.b16 %v7969
        %v8326 = vunpack.c.l.b16 %v7970
        %v8327 = vunpack.c.h.b16 %v7970
        %v8328 = vunpack.c.l.b16 %v7971
        %v8329 = vunpack.c.h.b16 %v7971
        %v8330 = vunpack.c.l.b16 %v7972
        %v8331 = vunpack.c.h.b16 %v7972
        %v8332 = vunpack.c.l.b16 %v7973
        %v8333 = vunpack.c.h.b16 %v7973
        %v8334 = vunpack.c.l.b16 %v7974
        %v8335 = vunpack.c.h.b16 %v7974
        %v8336 = vunpack.c.l.b16 %v7975
        %v8337 = vunpack.c.h.b16 %v7975
        %v8338 = vunpack.c.l.b16 %v7976
        %v8339 = vunpack.c.h.b16 %v7976
        %v8340 = vunpack.c.l.b16 %v7977
        %v8341 = vunpack.c.h.b16 %v7977
        %v8342 = vunpack.c.l.b16 %v7978
        %v8343 = vunpack.c.h.b16 %v7978
        %v8344 = vunpack.c.l.b16 %v7979
        %v8345 = vunpack.c.h.b16 %v7979
        %v8346 = vunpack.c.l.b16 %v7980
        %v8347 = vunpack.c.h.b16 %v7980
        %v8348 = vunpack.c.l.b16 %v7981
        %v8349 = vunpack.c.h.b16 %v7981
        %v8350 = vunpack.c.l.b16 %v7982
        %v8351 = vunpack.c.h.b16 %v7982
        %v8352 = vunpack.c.l.b16 %v7983
        %v8353 = vunpack.c.h.b16 %v7983
        %v8354 = vunpack.c.l.b16 %v7984
        %v8355 = vunpack.c.h.b16 %v7984
        %v8356 = vunpack.c.l.b16 %v7985
        %v8357 = vunpack.c.h.b16 %v7985
        %v8358 = vunpack.c.l.b16 %v7986
        %v8359 = vunpack.c.h.b16 %v7986
        %v8360 = vunpack.c.l.b16 %v7987
        %v8361 = vunpack.c.h.b16 %v7987
        %v8362 = vunpack.c.l.b16 %v7988
        %v8363 = vunpack.c.h.b16 %v7988
        %v8364 = vunpack.c.l.b16 %v7989
        %v8365 = vunpack.c.h.b16 %v7989
        %v8366 = vunpack.c.l.b16 %v7990
        %v8367 = vunpack.c.h.b16 %v7990
        %v8368 = vunpack.c.l.b16 %v7991
        %v8369 = vunpack.c.h.b16 %v7991
        %v8370 = vunpack.c.l.b16 %v7992
        %v8371 = vunpack.c.h.b16 %v7992
        %v8372 = vunpack.c.l.b16 %v7993
        %v8373 = vunpack.c.h.b16 %v7993
        %v8374 = vunpack.c.l.b16 %v7994
        %v8375 = vunpack.c.h.b16 %v7994
        %v8376 = vunpack.c.l.b16 %v7995
        %v8377 = vunpack.c.h.b16 %v7995
        %v8378 = vunpack.c.l.b16 %v7996
        %v8379 = vunpack.c.h.b16 %v7996
        %v8380 = vunpack.c.l.b16 %v7997
        %v8381 = vunpack.c.h.b16 %v7997
        %v8382 = vunpack.c.l.b16 %v7998
        %v8383 = vunpack.c.h.b16 %v7998
        %v8384 = vunpack.c.l.b16 %v7999
        %v8385 = vunpack.c.h.b16 %v7999
        %v8386 = vunpack.c.l.b16 %v8000
        %v8387 = vunpack.c.h.b16 %v8000
        %v8388 = vunpack.c.l.b16 %v8001
        %v8389 = vunpack.c.h.b16 %v8001
        %v8390 = vunpack.c.l.b16 %v8002
        %v8391 = vunpack.c.h.b16 %v8002
        %v8392 = vunpack.c.l.b16 %v8003
        %v8393 = vunpack.c.h.b16 %v8003
        %v8394 = vunpack.c.l.b16 %v8004
        %v8395 = vunpack.c.h.b16 %v8004
        %v8396 = vunpack.c.l.b16 %v8005
        %v8397 = vunpack.c.h.b16 %v8005
        %v8398 = vunpack.c.l.b16 %v8006
        %v8399 = vunpack.c.h.b16 %v8006
        %v8400 = vunpack.c.l.b16 %v8007
        %v8401 = vunpack.c.h.b16 %v8007
        %v8402 = vunpack.c.l.b16 %v8008
        %v8403 = vunpack.c.h.b16 %v8008
        %v8404 = vunpack.c.l.b16 %v8009
        %v8405 = vunpack.c.h.b16 %v8009
        %v8406 = vunpack.c.l.b16 %v8010
        %v8407 = vunpack.c.h.b16 %v8010
        %v8408 = vunpack.c.l.b16 %v8011
        %v8409 = vunpack.c.h.b16 %v8011
        %v8410 = vunpack.c.l.b16 %v8012
        %v8411 = vunpack.c.h.b16 %v8012
        %v8412 = vunpack.c.l.b16 %v8013
        %v8413 = vunpack.c.h.b16 %v8013
        %v8414 = vunpack.c.l.b16 %v8014
        %v8415 = vunpack.c.h.b16 %v8014
        %v8416 = vunpack.c.l.b16 %v8015
        %v8417 = vunpack.c.h.b16 %v8015
        %v8418 = vunpack.c.l.b16 %v8016
        %v8419 = vunpack.c.h.b16 %v8016
        %v8420 = vunpack.c.l.b16 %v8017
        %v8421 = vunpack.c.h.b16 %v8017
        %v8422 = vunpack.c.l.b16 %v8018
        %v8423 = vunpack.c.h.b16 %v8018
        %v8424 = vunpack.c.l.b16 %v8019
        %v8425 = vunpack.c.h.b16 %v8019
        %v8426 = vunpack.c.l.b16 %v8020
        %v8427 = vunpack.c.h.b16 %v8020
        %v8428 = vunpack.c.l.b16 %v8021
        %v8429 = vunpack.c.h.b16 %v8021
        %v8430 = vunpack.c.l.b16 %v8022
        %v8431 = vunpack.c.h.b16 %v8022
        %v8432 = vunpack.c.l.b16 %v8023
        %v8433 = vunpack.c.h.b16 %v8023
        %v8434 = vunpack.c.l.b16 %v8024
        %v8435 = vunpack.c.h.b16 %v8024
        %v8436 = vunpack.c.l.b16 %v8025
        %v8437 = vunpack.c.h.b16 %v8025
        %v8438 = vunpack.c.l.b16 %v8026
        %v8439 = vunpack.c.h.b16 %v8026
        %v8440 = vunpack.c.l.b16 %v8027
        %v8441 = vunpack.c.h.b16 %v8027
        %v8442 = vunpack.c.l.b16 %v8028
        %v8443 = vunpack.c.h.b16 %v8028
        %v8444 = vunpack.c.l.b16 %v8029
        %v8445 = vunpack.c.h.b16 %v8029
        %v8446 = vunpack.c.l.b16 %v8030
        %v8447 = vunpack.c.h.b16 %v8030
        %v8448 = vunpack.c.l.b16 %v8031
        %v8449 = vunpack.c.h.b16 %v8031
        %v8450 = vunpack.c.l.b16 %v8032
        %v8451 = vunpack.c.h.b16 %v8032
        %v8452 = vunpack.c.l.b16 %v8033
        %v8453 = vunpack.c.h.b16 %v8033
        %v8454 = vpack.c.b16 %v8182, %v8174
        %v8455 = vpack.c.b16 %v8183, %v8175
        %v8456 = vpack.c.b16 %v8184, %v8176
        %v8457 = vpack.c.b16 %v8185, %v8177
        %v8458 = vpack.c.b16 %v8186, %v8178
        %v8459 = vpack.c.b16 %v8187, %v8179
        %v8460 = vpack.c.b16 %v8188, %v8180
        %v8461 = vpack.c.b16 %v8189, %v8181
        %v8462 = vpack.c.b16 %v8198, %v8190
        %v8463 = vpack.c.b16 %v8199, %v8191
        %v8464 = vpack.c.b16 %v8200, %v8192
        %v8465 = vpack.c.b16 %v8201, %v8193
        %v8466 = vpack.c.b16 %v8202, %v8194
        %v8467 = vpack.c.b16 %v8203, %v8195
        %v8468 = vpack.c.b16 %v8204, %v8196
        %v8469 = vpack.c.b16 %v8205, %v8197
        %v8470 = vpack.c.b16 %v8214, %v8206
        %v8471 = vpack.c.b16 %v8215, %v8207
        %v8472 = vpack.c.b16 %v8216, %v8208
        %v8473 = vpack.c.b16 %v8217, %v8209
        %v8474 = vpack.c.b16 %v8218, %v8210
        %v8475 = vpack.c.b16 %v8219, %v8211
        %v8476 = vpack.c.b16 %v8220, %v8212
        %v8477 = vpack.c.b16 %v8221, %v8213
        %v8478 = vpack.c.b16 %v8230, %v8222
        %v8479 = vpack.c.b16 %v8231, %v8223
        %v8480 = vpack.c.b16 %v8232, %v8224
        %v8481 = vpack.c.b16 %v8233, %v8225
        %v8482 = vpack.c.b16 %v8234, %v8226
        %v8483 = vpack.c.b16 %v8235, %v8227
        %v8484 = vpack.c.b16 %v8236, %v8228
        %v8485 = vpack.c.b16 %v8237, %v8229
        %v8486 = vpack.c.b16 %v8246, %v8238
        %v8487 = vpack.c.b16 %v8247, %v8239
        %v8488 = vpack.c.b16 %v8248, %v8240
        %v8489 = vpack.c.b16 %v8249, %v8241
        %v8490 = vpack.c.b16 %v8250, %v8242
        %v8491 = vpack.c.b16 %v8251, %v8243
        %v8492 = vpack.c.b16 %v8252, %v8244
        %v8493 = vpack.c.b16 %v8253, %v8245
        %v8494 = vpack.c.b16 %v8262, %v8254
        %v8495 = vpack.c.b16 %v8263, %v8255
        %v8496 = vpack.c.b16 %v8264, %v8256
        %v8497 = vpack.c.b16 %v8265, %v8257
        %v8498 = vpack.c.b16 %v8266, %v8258
        %v8499 = vpack.c.b16 %v8267, %v8259
        %v8500 = vpack.c.b16 %v8268, %v8260
        %v8501 = vpack.c.b16 %v8269, %v8261
        %v8502 = vpack.c.b16 %v8278, %v8270
        %v8503 = vpack.c.b16 %v8279, %v8271
        %v8504 = vpack.c.b16 %v8280, %v8272
        %v8505 = vpack.c.b16 %v8281, %v8273
        %v8506 = vpack.c.b16 %v8282, %v8274
        %v8507 = vpack.c.b16 %v8283, %v8275
        %v8508 = vpack.c.b16 %v8284, %v8276
        %v8509 = vpack.c.b16 %v8285, %v8277
        %v8510 = vpack.c.b16 %v8294, %v8286
        %v8511 = vpack.c.b16 %v8295, %v8287
        %v8512 = vpack.c.b16 %v8296, %v8288
        %v8513 = vpack.c.b16 %v8297, %v8289
        %v8514 = vpack.c.b16 %v8298, %v8290
        %v8515 = vpack.c.b16 %v8299, %v8291
        %v8516 = vpack.c.b16 %v8300, %v8292
        %v8517 = vpack.c.b16 %v8301, %v8293
        %v8518 = vpack.c.b16 %v8310, %v8302
        %v8519 = vpack.c.b16 %v8311, %v8303
        %v8520 = vpack.c.b16 %v8312, %v8304
        %v8521 = vpack.c.b16 %v8313, %v8305
        %v8522 = vpack.c.b16 %v8314, %v8306
        %v8523 = vpack.c.b16 %v8315, %v8307
        %v8524 = vpack.c.b16 %v8316, %v8308
        %v8525 = vpack.c.b16 %v8317, %v8309
        %v8526 = vpack.c.b16 %v8326, %v8318
        %v8527 = vpack.c.b16 %v8327, %v8319
        %v8528 = vpack.c.b16 %v8328, %v8320
        %v8529 = vpack.c.b16 %v8329, %v8321
        %v8530 = vpack.c.b16 %v8330, %v8322
        %v8531 = vpack.c.b16 %v8331, %v8323
        %v8532 = vpack.c.b16 %v8332, %v8324
        %v8533 = vpack.c.b16 %v8333, %v8325
        %v8534 = vpack.c.b16 %v8342, %v8334
        %v8535 = vpack.c.b16 %v8343, %v8335
        %v8536 = vpack.c.b16 %v8344, %v8336
        %v8537 = vpack.c.b16 %v8345, %v8337
        %v8538 = vpack.c.b16 %v8346, %v8338
        %v8539 = vpack.c.b16 %v8347, %v8339
        %v8540 = vpack.c.b16 %v8348, %v8340
        %v8541 = vpack.c.b16 %v8349, %v8341
        %v8542 = vpack.c.b16 %v8358, %v8350
        %v8543 = vpack.c.b16 %v8359, %v8351
        %v8544 = vpack.c.b16 %v8360, %v8352
        %v8545 = vpack.c.b16 %v8361, %v8353
        %v8546 = vpack.c.b16 %v8362, %v8354
        %v8547 = vpack.c.b16 %v8363, %v8355
        %v8548 = vpack.c.b16 %v8364, %v8356
        %v8549 = vpack.c.b16 %v8365, %v8357
        %v8550 = vpack.c.b16 %v8374, %v8366
        %v8551 = vpack.c.b16 %v8375, %v8367
        %v8552 = vpack.c.b16 %v8376, %v8368
        %v8553 = vpack.c.b16 %v8377, %v8369
        %v8554 = vpack.c.b16 %v8378, %v8370
        %v8555 = vpack.c.b16 %v8379, %v8371
        %v8556 = vpack.c.b16 %v8380, %v8372
        %v8557 = vpack.c.b16 %v8381, %v8373
        %v8558 = vpack.c.b16 %v8390, %v8382
        %v8559 = vpack.c.b16 %v8391, %v8383
        %v8560 = vpack.c.b16 %v8392, %v8384
        %v8561 = vpack.c.b16 %v8393, %v8385
        %v8562 = vpack.c.b16 %v8394, %v8386
        %v8563 = vpack.c.b16 %v8395, %v8387
        %v8564 = vpack.c.b16 %v8396, %v8388
        %v8565 = vpack.c.b16 %v8397, %v8389
        %v8566 = vpack.c.b16 %v8406, %v8398
        %v8567 = vpack.c.b16 %v8407, %v8399
        %v8568 = vpack.c.b16 %v8408, %v8400
        %v8569 = vpack.c.b16 %v8409, %v8401
        %v8570 = vpack.c.b16 %v8410, %v8402
        %v8571 = vpack.c.b16 %v8411, %v8403
        %v8572 = vpack.c.b16 %v8412, %v8404
        %v8573 = vpack.c.b16 %v8413, %v8405
        %v8574 = vpack.c.b16 %v8422, %v8414
        %v8575 = vpack.c.b16 %v8423, %v8415
        %v8576 = vpack.c.b16 %v8424, %v8416
        %v8577 = vpack.c.b16 %v8425, %v8417
        %v8578 = vpack.c.b16 %v8426, %v8418
        %v8579 = vpack.c.b16 %v8427, %v8419
        %v8580 = vpack.c.b16 %v8428, %v8420
        %v8581 = vpack.c.b16 %v8429, %v8421
        %v8582 = vpack.c.b16 %v8438, %v8430
        %v8583 = vpack.c.b16 %v8439, %v8431
        %v8584 = vpack.c.b16 %v8440, %v8432
        %v8585 = vpack.c.b16 %v8441, %v8433
        %v8586 = vpack.c.b16 %v8442, %v8434
        %v8587 = vpack.c.b16 %v8443, %v8435
        %v8588 = vpack.c.b16 %v8444, %v8436
        %v8589 = vpack.c.b16 %v8445, %v8437
        %v8590 = vpack.c.b16 %v8446, %v8446
        %v8591 = vpack.c.b16 %v8447, %v8447
        %v8592 = vpack.c.b16 %v8448, %v8448
        %v8593 = vpack.c.b16 %v8449, %v8449
        %v8594 = vpack.c.b16 %v8450, %v8450
        %v8595 = vpack.c.b16 %v8451, %v8451
        %v8596 = vpack.c.b16 %v8452, %v8452
        %v8597 = vpack.c.b16 %v8453, %v8453
        %v8735 = vsel %vm1019, %v7890, 0
        %v8738 = vsel %vm1019, %v7893, 0
        %v8741 = vsel %vm1987, %v8590, 0
        %v8744 = vsel %vm1987, %v8591, 0
        %v8747 = vsel %vm1987, %v8592, 0
        %v8750 = vsel %vm1987, %v8593, 0
        %v8753 = vsel %vm1987, %v8594, 0
        %v8756 = vsel %vm1987, %v8595, 0
        %v8759 = vsel %vm1987, %v8596, 0
        %v8762 = vsel %vm1987, %v8597, 0
        %8764 = vmatprep.subr.bf16.mxu0 %v8455
        %8765 = vmatpush1.bf16.msra.mxu0 %v8454
        %8766 = vmatprep.subr.bf16.mxu0 %v8463
        %8767 = vmatpush1.bf16.msra.mxu0 %v8462
        %8768 = vmatprep.subr.bf16.mxu0 %v8471
        %8769 = vmatpush1.bf16.msra.mxu0 %v8470
        %8770 = vmatprep.subr.bf16.mxu0 %v8479
        %8771 = vmatpush1.bf16.msra.mxu0 %v8478
        %8772 = vmatprep.subr.bf16.mxu0 %v8487
        %8773 = vmatpush1.bf16.msra.mxu0 %v8486
        %8774 = vmatprep.subr.bf16.mxu0 %v8495
        %8775 = vmatpush1.bf16.msra.mxu0 %v8494
        %8776 = vmatprep.subr.bf16.mxu0 %v8503
        %8777 = vmatpush1.bf16.msra.mxu0 %v8502
        %8778 = vmatprep.subr.bf16.mxu0 %v8511
        %8779 = vmatpush1.bf16.msra.mxu0 %v8510
        %8780 = vmatprep.subr.bf16.mxu0 %v8519
        %8781 = vmatpush1.bf16.msra.mxu0 %v8518
        %8782 = vmatprep.subr.bf16.mxu0 %v8527
        %8783 = vmatpush1.bf16.msra.mxu0 %v8526
        %8784 = vmatprep.subr.bf16.mxu0 %v8535
        %8785 = vmatpush1.bf16.msra.mxu0 %v8534
        %8786 = vmatprep.subr.bf16.mxu0 %v8543
        %8787 = vmatpush1.bf16.msra.mxu0 %v8542
        %8788 = vmatprep.subr.bf16.mxu0 %v8551
        %8789 = vmatpush1.bf16.msra.mxu0 %v8550
        %8790 = vmatprep.subr.bf16.mxu0 %v8559
        %8791 = vmatpush1.bf16.msra.mxu0 %v8558
        %8792 = vmatprep.subr.bf16.mxu0 %v8567
        %8793 = vmatpush1.bf16.msra.mxu0 %v8566
        %8794 = vmatprep.subr.bf16.mxu0 %v8575
        %8795 = vmatpush1.bf16.msra.mxu0 %v8574
        %8796 = vmatprep.mubr.bf16.mxu0 %v7889
        %8797 = vmatmul.mubr.bf16.gmra.mrb[0].mxu0 %v7888
        %v8798 = vpop.f32.mrb[0].mxu0
        %v8799 = vadd.f32 0.0, %v8798
        %v8800 = vpop.f32.mrb[0].mxu0
        %v8801 = vadd.f32 0.0, %v8800
        %v8802 = vpop.f32.mrb[0].mxu0
        %v8803 = vadd.f32 0.0, %v8802
        %v8804 = vpop.f32.mrb[0].mxu0
        %v8805 = vadd.f32 0.0, %v8804
        %8806 = vmatprep.mubr.bf16.mxu0 %v7892
        %8807 = vmatmul.mubr.bf16.gmra.mrb[0].mxu0 %v7891
        %v8808 = vpop.f32.mrb[0].mxu0
        %v8809 = vadd.f32 0.0, %v8808
        %v8810 = vpop.f32.mrb[0].mxu0
        %v8811 = vadd.f32 0.0, %v8810
        %v8812 = vpop.f32.mrb[0].mxu0
        %v8813 = vadd.f32 0.0, %v8812
        %v8814 = vpop.f32.mrb[0].mxu0
        %v8815 = vadd.f32 0.0, %v8814
        %8816 = vdwg.mxu0
        %8817 = vmatprep.subr.bf16.mxu0 %v8583
        %8818 = vmatpush1.bf16.msra.mxu0 %v8582
        %8819 = vmatprep.subr.bf16.mxu0 %v8744
        %8820 = vmatpush1.bf16.msra.mxu0 %v8741
        %8821 = vmatprep.subr.bf16.mxu0 0
        %8822 = vmatpush1.bf16.msra.mxu0 0
        %8823 = vmatprep.subr.bf16.mxu0 0
        %8824 = vmatpush1.bf16.msra.mxu0 0
        %8825 = vmatprep.subr.bf16.mxu0 0
        %8826 = vmatpush1.bf16.msra.mxu0 0
        %8827 = vmatprep.subr.bf16.mxu0 0
        %8828 = vmatpush1.bf16.msra.mxu0 0
        %8829 = vmatprep.subr.bf16.mxu0 0
        %8830 = vmatpush1.bf16.msra.mxu0 0
        %8831 = vmatprep.subr.bf16.mxu0 0
        %8832 = vmatpush1.bf16.msra.mxu0 0
        %8833 = vmatprep.subr.bf16.mxu0 0
        %8834 = vmatpush1.bf16.msra.mxu0 0
        %8835 = vmatprep.subr.bf16.mxu0 0
        %8836 = vmatpush1.bf16.msra.mxu0 0
        %8837 = vmatprep.subr.bf16.mxu0 0
        %8838 = vmatpush1.bf16.msra.mxu0 0
        %8839 = vmatprep.subr.bf16.mxu0 0
        %8840 = vmatpush1.bf16.msra.mxu0 0
        %8841 = vmatprep.subr.bf16.mxu0 0
        %8842 = vmatpush1.bf16.msra.mxu0 0
        %8843 = vmatprep.subr.bf16.mxu0 0
        %8844 = vmatpush1.bf16.msra.mxu0 0
        %8845 = vmatprep.subr.bf16.mxu0 0
        %8846 = vmatpush1.bf16.msra.mxu0 0
        %8847 = vmatprep.subr.bf16.mxu0 0
        %8848 = vmatpush1.bf16.msra.mxu0 0
        %8849 = vmatprep.mubr.bf16.mxu0 0
        %8850 = vmatmul.mubr.bf16.gmra.mrb[0].mxu0 %v8735
        %v8851 = vpop.f32.mrb[0].mxu0
        %v8852 = vadd.f32 %v8799, %v8851
        %v8853 = vpop.f32.mrb[0].mxu0
        %v8854 = vadd.f32 %v8801, %v8853
        %v8855 = vpop.f32.mrb[0].mxu0
        %v8856 = vadd.f32 %v8803, %v8855
        %v8857 = vpop.f32.mrb[0].mxu0
        %v8858 = vadd.f32 %v8805, %v8857
        %8859 = vmatprep.mubr.bf16.mxu0 0
        %8860 = vmatmul.mubr.bf16.gmra.mrb[0].mxu0 %v8738
        %v8861 = vpop.f32.mrb[0].mxu0
        %v8862 = vadd.f32 %v8809, %v8861
        %v8863 = vpop.f32.mrb[0].mxu0
        %v8864 = vadd.f32 %v8811, %v8863
        %v8865 = vpop.f32.mrb[0].mxu0
        %v8866 = vadd.f32 %v8813, %v8865
        %v8867 = vpop.f32.mrb[0].mxu0
        %v8868 = vadd.f32 %v8815, %v8867
        %8869 = vdwg.mxu0
        %8870 = vmatprep.subr.bf16.mxu0 %v8457
        %8871 = vmatpush1.bf16.msra.mxu0 %v8456
        %8872 = vmatprep.subr.bf16.mxu0 %v8465
        %8873 = vmatpush1.bf16.msra.mxu0 %v8464
        %8874 = vmatprep.subr.bf16.mxu0 %v8473
        %8875 = vmatpush1.bf16.msra.mxu0 %v8472
        %8876 = vmatprep.subr.bf16.mxu0 %v8481
        %8877 = vmatpush1.bf16.msra.mxu0 %v8480
        %8878 = vmatprep.subr.bf16.mxu0 %v8489
        %8879 = vmatpush1.bf16.msra.mxu0 %v8488
        %8880 = vmatprep.subr.bf16.mxu0 %v8497
        %8881 = vmatpush1.bf16.msra.mxu0 %v8496
        %8882 = vmatprep.subr.bf16.mxu0 %v8505
        %8883 = vmatpush1.bf16.msra.mxu0 %v8504
        %8884 = vmatprep.subr.bf16.mxu0 %v8513
        %8885 = vmatpush1.bf16.msra.mxu0 %v8512
        %8886 = vmatprep.subr.bf16.mxu0 %v8521
        %8887 = vmatpush1.bf16.msra.mxu0 %v8520
        %8888 = vmatprep.subr.bf16.mxu0 %v8529
        %8889 = vmatpush1.bf16.msra.mxu0 %v8528
        %8890 = vmatprep.subr.bf16.mxu0 %v8537
        %8891 = vmatpush1.bf16.msra.mxu0 %v8536
        %8892 = vmatprep.subr.bf16.mxu0 %v8545
        %8893 = vmatpush1.bf16.msra.mxu0 %v8544
        %8894 = vmatprep.subr.bf16.mxu0 %v8553
        %8895 = vmatpush1.bf16.msra.mxu0 %v8552
        %8896 = vmatprep.subr.bf16.mxu0 %v8561
        %8897 = vmatpush1.bf16.msra.mxu0 %v8560
        %8898 = vmatprep.subr.bf16.mxu0 %v8569
        %8899 = vmatpush1.bf16.msra.mxu0 %v8568
        %8900 = vmatprep.subr.bf16.mxu0 %v8577
        %8901 = vmatpush1.bf16.msra.mxu0 %v8576
        %8902 = vmatprep.mubr.bf16.mxu0 %v7889
        %8903 = vmatmul.mubr.bf16.gmra.mrb[0].mxu0 %v7888
        %v8904 = vpop.f32.mrb[0].mxu0
        %v8905 = vadd.f32 0.0, %v8904
        %v8906 = vpop.f32.mrb[0].mxu0
        %v8907 = vadd.f32 0.0, %v8906
        %v8908 = vpop.f32.mrb[0].mxu0
        %v8909 = vadd.f32 0.0, %v8908
        %v8910 = vpop.f32.mrb[0].mxu0
        %v8911 = vadd.f32 0.0, %v8910
        %8912 = vmatprep.mubr.bf16.mxu0 %v7892
        %8913 = vmatmul.mubr.bf16.gmra.mrb[0].mxu0 %v7891
        %v8914 = vpop.f32.mrb[0].mxu0
        %v8915 = vadd.f32 0.0, %v8914
        %v8916 = vpop.f32.mrb[0].mxu0
        %v8917 = vadd.f32 0.0, %v8916
        %v8918 = vpop.f32.mrb[0].mxu0
        %v8919 = vadd.f32 0.0, %v8918
        %v8920 = vpop.f32.mrb[0].mxu0
        %v8921 = vadd.f32 0.0, %v8920
        %8922 = vdwg.mxu0
        %8923 = vmatprep.subr.bf16.mxu0 %v8585
        %8924 = vmatpush1.bf16.msra.mxu0 %v8584
        %8925 = vmatprep.subr.bf16.mxu0 %v8750
        %8926 = vmatpush1.bf16.msra.mxu0 %v8747
        %8927 = vmatprep.subr.bf16.mxu0 0
        %8928 = vmatpush1.bf16.msra.mxu0 0
        %8929 = vmatprep.subr.bf16.mxu0 0
        %8930 = vmatpush1.bf16.msra.mxu0 0
        %8931 = vmatprep.subr.bf16.mxu0 0
        %8932 = vmatpush1.bf16.msra.mxu0 0
        %8933 = vmatprep.subr.bf16.mxu0 0
        %8934 = vmatpush1.bf16.msra.mxu0 0
        %8935 = vmatprep.subr.bf16.mxu0 0
        %8936 = vmatpush1.bf16.msra.mxu0 0
        %8937 = vmatprep.subr.bf16.mxu0 0
        %8938 = vmatpush1.bf16.msra.mxu0 0
        %8939 = vmatprep.subr.bf16.mxu0 0
        %8940 = vmatpush1.bf16.msra.mxu0 0
        %8941 = vmatprep.subr.bf16.mxu0 0
        %8942 = vmatpush1.bf16.msra.mxu0 0
        %8943 = vmatprep.subr.bf16.mxu0 0
        %8944 = vmatpush1.bf16.msra.mxu0 0
        %8945 = vmatprep.subr.bf16.mxu0 0
        %8946 = vmatpush1.bf16.msra.mxu0 0
        %8947 = vmatprep.subr.bf16.mxu0 0
        %8948 = vmatpush1.bf16.msra.mxu0 0
        %8949 = vmatprep.subr.bf16.mxu0 0
        %8950 = vmatpush1.bf16.msra.mxu0 0
        %8951 = vmatprep.subr.bf16.mxu0 0
        %8952 = vmatpush1.bf16.msra.mxu0 0
        %8953 = vmatprep.subr.bf16.mxu0 0
        %8954 = vmatpush1.bf16.msra.mxu0 0
        %8955 = vmatprep.mubr.bf16.mxu0 0
        %8956 = vmatmul.mubr.bf16.gmra.mrb[0].mxu0 %v8735
        %v8957 = vpop.f32.mrb[0].mxu0
        %v8958 = vadd.f32 %v8905, %v8957
        %v8959 = vpop.f32.mrb[0].mxu0
        %v8960 = vadd.f32 %v8907, %v8959
        %v8961 = vpop.f32.mrb[0].mxu0
        %v8962 = vadd.f32 %v8909, %v8961
        %v8963 = vpop.f32.mrb[0].mxu0
        %v8964 = vadd.f32 %v8911, %v8963
        %8965 = vmatprep.mubr.bf16.mxu0 0
        %8966 = vmatmul.mubr.bf16.gmra.mrb[0].mxu0 %v8738
        %v8967 = vpop.f32.mrb[0].mxu0
        %v8968 = vadd.f32 %v8915, %v8967
        %v8969 = vpop.f32.mrb[0].mxu0
        %v8970 = vadd.f32 %v8917, %v8969
        %v8971 = vpop.f32.mrb[0].mxu0
        %v8972 = vadd.f32 %v8919, %v8971
        %v8973 = vpop.f32.mrb[0].mxu0
        %v8974 = vadd.f32 %v8921, %v8973
        %8975 = vdwg.mxu0
        %8976 = vmatprep.subr.bf16.mxu0 %v8459
        %8977 = vmatpush1.bf16.msra.mxu0 %v8458
        %8978 = vmatprep.subr.bf16.mxu0 %v8467
        %8979 = vmatpush1.bf16.msra.mxu0 %v8466
        %8980 = vmatprep.subr.bf16.mxu0 %v8475
        %8981 = vmatpush1.bf16.msra.mxu0 %v8474
        %8982 = vmatprep.subr.bf16.mxu0 %v8483
        %8983 = vmatpush1.bf16.msra.mxu0 %v8482
        %8984 = vmatprep.subr.bf16.mxu0 %v8491
        %8985 = vmatpush1.bf16.msra.mxu0 %v8490
        %8986 = vmatprep.subr.bf16.mxu0 %v8499
        %8987 = vmatpush1.bf16.msra.mxu0 %v8498
        %8988 = vmatprep.subr.bf16.mxu0 %v8507
        %8989 = vmatpush1.bf16.msra.mxu0 %v8506
        %8990 = vmatprep.subr.bf16.mxu0 %v8515
        %8991 = vmatpush1.bf16.msra.mxu0 %v8514
        %8992 = vmatprep.subr.bf16.mxu0 %v8523
        %8993 = vmatpush1.bf16.msra.mxu0 %v8522
        %8994 = vmatprep.subr.bf16.mxu0 %v8531
        %8995 = vmatpush1.bf16.msra.mxu0 %v8530
        %8996 = vmatprep.subr.bf16.mxu0 %v8539
        %8997 = vmatpush1.bf16.msra.mxu0 %v8538
        %8998 = vmatprep.subr.bf16.mxu0 %v8547
        %8999 = vmatpush1.bf16.msra.mxu0 %v8546
        %9000 = vmatprep.subr.bf16.mxu0 %v8555
        %9001 = vmatpush1.bf16.msra.mxu0 %v8554
        %9002 = vmatprep.subr.bf16.mxu0 %v8563
        %9003 = vmatpush1.bf16.msra.mxu0 %v8562
        %9004 = vmatprep.subr.bf16.mxu0 %v8571
        %9005 = vmatpush1.bf16.msra.mxu0 %v8570
        %9006 = vmatprep.subr.bf16.mxu0 %v8579
        %9007 = vmatpush1.bf16.msra.mxu0 %v8578
        %9008 = vmatprep.mubr.bf16.mxu0 %v7889
        %9009 = vmatmul.mubr.bf16.gmra.mrb[0].mxu0 %v7888
        %v9010 = vpop.f32.mrb[0].mxu0
        %v9011 = vadd.f32 0.0, %v9010
        %v9012 = vpop.f32.mrb[0].mxu0
        %v9013 = vadd.f32 0.0, %v9012
        %v9014 = vpop.f32.mrb[0].mxu0
        %v9015 = vadd.f32 0.0, %v9014
        %v9016 = vpop.f32.mrb[0].mxu0
        %v9017 = vadd.f32 0.0, %v9016
        %9018 = vmatprep.mubr.bf16.mxu0 %v7892
        %9019 = vmatmul.mubr.bf16.gmra.mrb[0].mxu0 %v7891
        %v9020 = vpop.f32.mrb[0].mxu0
        %v9021 = vadd.f32 0.0, %v9020
        %v9022 = vpop.f32.mrb[0].mxu0
        %v9023 = vadd.f32 0.0, %v9022
        %v9024 = vpop.f32.mrb[0].mxu0
        %v9025 = vadd.f32 0.0, %v9024
        %v9026 = vpop.f32.mrb[0].mxu0
        %v9027 = vadd.f32 0.0, %v9026
        %9028 = vdwg.mxu0
        %9029 = vmatprep.subr.bf16.mxu0 %v8587
        %9030 = vmatpush1.bf16.msra.mxu0 %v8586
        %9031 = vmatprep.subr.bf16.mxu0 %v8756
        %9032 = vmatpush1.bf16.msra.mxu0 %v8753
        %9033 = vmatprep.subr.bf16.mxu0 0
        %9034 = vmatpush1.bf16.msra.mxu0 0
        %9035 = vmatprep.subr.bf16.mxu0 0
        %9036 = vmatpush1.bf16.msra.mxu0 0
        %9037 = vmatprep.subr.bf16.mxu0 0
        %9038 = vmatpush1.bf16.msra.mxu0 0
        %9039 = vmatprep.subr.bf16.mxu0 0
        %9040 = vmatpush1.bf16.msra.mxu0 0
        %9041 = vmatprep.subr.bf16.mxu0 0
        %9042 = vmatpush1.bf16.msra.mxu0 0
        %9043 = vmatprep.subr.bf16.mxu0 0
        %9044 = vmatpush1.bf16.msra.mxu0 0
        %9045 = vmatprep.subr.bf16.mxu0 0
        %9046 = vmatpush1.bf16.msra.mxu0 0
        %9047 = vmatprep.subr.bf16.mxu0 0
        %9048 = vmatpush1.bf16.msra.mxu0 0
        %9049 = vmatprep.subr.bf16.mxu0 0
        %9050 = vmatpush1.bf16.msra.mxu0 0
        %9051 = vmatprep.subr.bf16.mxu0 0
        %9052 = vmatpush1.bf16.msra.mxu0 0
        %9053 = vmatprep.subr.bf16.mxu0 0
        %9054 = vmatpush1.bf16.msra.mxu0 0
        %9055 = vmatprep.subr.bf16.mxu0 0
        %9056 = vmatpush1.bf16.msra.mxu0 0
        %9057 = vmatprep.subr.bf16.mxu0 0
        %9058 = vmatpush1.bf16.msra.mxu0 0
        %9059 = vmatprep.subr.bf16.mxu0 0
        %9060 = vmatpush1.bf16.msra.mxu0 0
        %9061 = vmatprep.mubr.bf16.mxu0 0
        %9062 = vmatmul.mubr.bf16.gmra.mrb[0].mxu0 %v8735
        %v9063 = vpop.f32.mrb[0].mxu0
        %v9064 = vadd.f32 %v9011, %v9063
        %v9065 = vpop.f32.mrb[0].mxu0
        %v9066 = vadd.f32 %v9013, %v9065
        %v9067 = vpop.f32.mrb[0].mxu0
        %v9068 = vadd.f32 %v9015, %v9067
        %v9069 = vpop.f32.mrb[0].mxu0
        %v9070 = vadd.f32 %v9017, %v9069
        %9071 = vmatprep.mubr.bf16.mxu0 0
        %9072 = vmatmul.mubr.bf16.gmra.mrb[0].mxu0 %v8738
        %v9073 = vpop.f32.mrb[0].mxu0
        %v9074 = vadd.f32 %v9021, %v9073
        %v9075 = vpop.f32.mrb[0].mxu0
        %v9076 = vadd.f32 %v9023, %v9075
        %v9077 = vpop.f32.mrb[0].mxu0
        %v9078 = vadd.f32 %v9025, %v9077
        %v9079 = vpop.f32.mrb[0].mxu0
        %v9080 = vadd.f32 %v9027, %v9079
        %9081 = vdwg.mxu0
        %9082 = vmatprep.subr.bf16.mxu0 %v8461
        %9083 = vmatpush1.bf16.msra.mxu0 %v8460
        %9084 = vmatprep.subr.bf16.mxu0 %v8469
        %9085 = vmatpush1.bf16.msra.mxu0 %v8468
        %9086 = vmatprep.subr.bf16.mxu0 %v8477
        %9087 = vmatpush1.bf16.msra.mxu0 %v8476
        %9088 = vmatprep.subr.bf16.mxu0 %v8485
        %9089 = vmatpush1.bf16.msra.mxu0 %v8484
        %9090 = vmatprep.subr.bf16.mxu0 %v8493
        %9091 = vmatpush1.bf16.msra.mxu0 %v8492
        %9092 = vmatprep.subr.bf16.mxu0 %v8501
        %9093 = vmatpush1.bf16.msra.mxu0 %v8500
        %9094 = vmatprep.subr.bf16.mxu0 %v8509
        %9095 = vmatpush1.bf16.msra.mxu0 %v8508
        %9096 = vmatprep.subr.bf16.mxu0 %v8517
        %9097 = vmatpush1.bf16.msra.mxu0 %v8516
        %9098 = vmatprep.subr.bf16.mxu0 %v8525
        %9099 = vmatpush1.bf16.msra.mxu0 %v8524
        %9100 = vmatprep.subr.bf16.mxu0 %v8533
        %9101 = vmatpush1.bf16.msra.mxu0 %v8532
        %9102 = vmatprep.subr.bf16.mxu0 %v8541
        %9103 = vmatpush1.bf16.msra.mxu0 %v8540
        %9104 = vmatprep.subr.bf16.mxu0 %v8549
        %9105 = vmatpush1.bf16.msra.mxu0 %v8548
        %9106 = vmatprep.subr.bf16.mxu0 %v8557
        %9107 = vmatpush1.bf16.msra.mxu0 %v8556
        %9108 = vmatprep.subr.bf16.mxu0 %v8565
        %9109 = vmatpush1.bf16.msra.mxu0 %v8564
        %9110 = vmatprep.subr.bf16.mxu0 %v8573
        %9111 = vmatpush1.bf16.msra.mxu0 %v8572
        %9112 = vmatprep.subr.bf16.mxu0 %v8581
        %9113 = vmatpush1.bf16.msra.mxu0 %v8580
        %9114 = vmatprep.mubr.bf16.mxu0 %v7889
        %9115 = vmatmul.mubr.bf16.gmra.mrb[0].mxu0 %v7888
        %v9116 = vpop.f32.mrb[0].mxu0
        %v9117 = vadd.f32 0.0, %v9116
        %v9118 = vpop.f32.mrb[0].mxu0
        %v9119 = vadd.f32 0.0, %v9118
        %v9120 = vpop.f32.mrb[0].mxu0
        %v9121 = vadd.f32 0.0, %v9120
        %v9122 = vpop.f32.mrb[0].mxu0
        %v9123 = vadd.f32 0.0, %v9122
        %9124 = vmatprep.mubr.bf16.mxu0 %v7892
        %9125 = vmatmul.mubr.bf16.gmra.mrb[0].mxu0 %v7891
        %v9126 = vpop.f32.mrb[0].mxu0
        %v9127 = vadd.f32 0.0, %v9126
        %v9128 = vpop.f32.mrb[0].mxu0
        %v9129 = vadd.f32 0.0, %v9128
        %v9130 = vpop.f32.mrb[0].mxu0
        %v9131 = vadd.f32 0.0, %v9130
        %v9132 = vpop.f32.mrb[0].mxu0
        %v9133 = vadd.f32 0.0, %v9132
        %9134 = vdwg.mxu0
        %9135 = vmatprep.subr.bf16.mxu0 %v8589
        %9136 = vmatpush1.bf16.msra.mxu0 %v8588
        %9137 = vmatprep.subr.bf16.mxu0 %v8762
        %9138 = vmatpush1.bf16.msra.mxu0 %v8759
        %9139 = vmatprep.subr.bf16.mxu0 0
        %9140 = vmatpush1.bf16.msra.mxu0 0
        %9141 = vmatprep.subr.bf16.mxu0 0
        %9142 = vmatpush1.bf16.msra.mxu0 0
        %9143 = vmatprep.subr.bf16.mxu0 0
        %9144 = vmatpush1.bf16.msra.mxu0 0
        %9145 = vmatprep.subr.bf16.mxu0 0
        %9146 = vmatpush1.bf16.msra.mxu0 0
        %9147 = vmatprep.subr.bf16.mxu0 0
        %9148 = vmatpush1.bf16.msra.mxu0 0
        %9149 = vmatprep.subr.bf16.mxu0 0
        %9150 = vmatpush1.bf16.msra.mxu0 0
        %9151 = vmatprep.subr.bf16.mxu0 0
        %9152 = vmatpush1.bf16.msra.mxu0 0
        %9153 = vmatprep.subr.bf16.mxu0 0
        %9154 = vmatpush1.bf16.msra.mxu0 0
        %9155 = vmatprep.subr.bf16.mxu0 0
        %9156 = vmatpush1.bf16.msra.mxu0 0
        %9157 = vmatprep.subr.bf16.mxu0 0
        %9158 = vmatpush1.bf16.msra.mxu0 0
        %9159 = vmatprep.subr.bf16.mxu0 0
        %9160 = vmatpush1.bf16.msra.mxu0 0
        %9161 = vmatprep.subr.bf16.mxu0 0
        %9162 = vmatpush1.bf16.msra.mxu0 0
        %9163 = vmatprep.subr.bf16.mxu0 0
        %9164 = vmatpush1.bf16.msra.mxu0 0
        %9165 = vmatprep.subr.bf16.mxu0 0
        %9166 = vmatpush1.bf16.msra.mxu0 0
        %9167 = vmatprep.mubr.bf16.mxu0 0
        %9168 = vmatmul.mubr.bf16.gmra.mrb[0].mxu0 %v8735
        %v9169 = vpop.f32.mrb[0].mxu0
        %v9170 = vadd.f32 %v9117, %v9169
        %v9171 = vpop.f32.mrb[0].mxu0
        %v9172 = vadd.f32 %v9119, %v9171
        %v9173 = vpop.f32.mrb[0].mxu0
        %v9174 = vadd.f32 %v9121, %v9173
        %v9175 = vpop.f32.mrb[0].mxu0
        %v9176 = vadd.f32 %v9123, %v9175
        %9177 = vmatprep.mubr.bf16.mxu0 0
        %9178 = vmatmul.mubr.bf16.gmra.mrb[0].mxu0 %v8738
        %v9179 = vpop.f32.mrb[0].mxu0
        %v9180 = vadd.f32 %v9127, %v9179
        %v9181 = vpop.f32.mrb[0].mxu0
        %v9182 = vadd.f32 %v9129, %v9181
        %v9183 = vpop.f32.mrb[0].mxu0
        %v9184 = vadd.f32 %v9131, %v9183
        %v9185 = vpop.f32.mrb[0].mxu0
        %v9186 = vadd.f32 %v9133, %v9185
        %9187 = vdwg.mxu0
        %9188 = vst [vmem:[%s15] sm:$0xff] %v8852
        %9189 = vst [vmem:[%s15 + $0x8] sm:$0xff] %v8854
        %9190 = vst [vmem:[%s15 + $0x10] sm:$0xff] %v8958
        %9191 = vst [vmem:[%s15 + $0x18] sm:$0xff] %v8960
        %9192 = vst [vmem:[%s15 + $0x20] sm:$0xff] %v9064
        %9193 = vst [vmem:[%s15 + $0x28] sm:$0xff] %v9066
        %9194 = vst [vmem:[%s15 + $0x30] sm:$0xff] %v9170
        %9195 = vst [vmem:[%s15 + $0x38] sm:$0xff] %v9172
        %9196 = vst [vmem:[%s15 + $0x40] sm:$0xff] %v8856
        %9197 = vst [vmem:[%s15 + $0x48] sm:$0xff] %v8858
        %9198 = vst [vmem:[%s15 + $0x50] sm:$0xff] %v8962
        %9199 = vst [vmem:[%s15 + $0x58] sm:$0xff] %v8964
        %9200 = vst [vmem:[%s15 + $0x60] sm:$0xff] %v9068
        %9201 = vst [vmem:[%s15 + $0x68] sm:$0xff] %v9070
        %9202 = vst [vmem:[%s15 + $0x70] sm:$0xff] %v9174
        %9203 = vst [vmem:[%s15 + $0x78] sm:$0xff] %v9176
        %9204 = vst [vmem:[%s15 + $0x80] sm:$0xff] %v8862
        %9205 = vst [vmem:[%s15 + $0x88] sm:$0xff] %v8864
        %9206 = vst [vmem:[%s15 + $0x90] sm:$0xff] %v8968
        %9207 = vst [vmem:[%s15 + $0x98] sm:$0xff] %v8970
        %9208 = vst [vmem:[%s15 + $0xa0] sm:$0xff] %v9074
        %9209 = vst [vmem:[%s15 + $0xa8] sm:$0xff] %v9076
        %9210 = vst [vmem:[%s15 + $0xb0] sm:$0xff] %v9180
        %9211 = vst [vmem:[%s15 + $0xb8] sm:$0xff] %v9182
        %9212 = vst [vmem:[%s15 + $0xc0] sm:$0xff] %v8866
        %9213 = vst [vmem:[%s15 + $0xc8] sm:$0xff] %v8868
        %9214 = vst [vmem:[%s15 + $0xd0] sm:$0xff] %v8972
        %9215 = vst [vmem:[%s15 + $0xd8] sm:$0xff] %v8974
        %9216 = vst [vmem:[%s15 + $0xe0] sm:$0xff] %v9078
        %9217 = vst [vmem:[%s15 + $0xe8] sm:$0xff] %v9080
        %9218 = vst [vmem:[%s15 + $0xf0] sm:$0xff] %v9184
        %9219 = vst [vmem:[%s15 + $0xf8] sm:$0xff] %v9186
      $region118: #{megatts2_plm1_forward.1} parent=75 // pred_fallthru
        _
      // Predicated region
      $region119: #{megatts2_plm1_forward.1} parent=75 // pred_check
        %p9220 = pneg %p393
      $region120: #{megatts2_plm1_forward.1} parent=75 // pred_check_branch
        %9222 = sbr.rel (%p9220) target = $region122
      $region121: #{megatts2_plm1_forward.1} parent=75 // pred_region
        _
      $region122: #{megatts2_plm1_forward.1} parent=75 // pred_fallthru
        _
      // Predicated region
      $region123: #{megatts2_plm1_forward.1} parent=75 // pred_check
        %p9223 = pneg %p393
      $region124: #{megatts2_plm1_forward.1} parent=75 // pred_check_branch
        %9225 = sbr.rel (%p9223) target = $region126
      $region125: #{megatts2_plm1_forward.1} parent=75 // pred_region
        _
      $region126: #{megatts2_plm1_forward.1} parent=75 // pred_fallthru
        _
    $region76: #{megatts2_plm1_forward.1} parent=5 // pred_fallthru
      _
    %p9226 = scmp.le.s32.totalorder 2, %s21
    // Predicated region
    $region127: #{megatts2_plm1_forward.1} parent=5 // pred_check
      %p9227 = pneg %p9226
    $region128: #{megatts2_plm1_forward.1} parent=5 // pred_check_branch
      %9229 = sbr.rel (%p9227) target = $region130
    $region129: #{megatts2_plm1_forward.1} parent=5 // pred_region
      %s9230 = ssub.s32 %s21, 2
    $region130: #{megatts2_plm1_forward.1} parent=5 // pred_fallthru
      _
  $region6: #{megatts2_plm1_forward.1} parent=0 // loop_footer
    %s25 = sadd.s32 1, %s21
  $region7: #{megatts2_plm1_forward.1} parent=0 // loop_footer_branch
    %20 = sbr.rel target = $region3
  $region8: #{megatts2_plm1_forward.1} parent=0 // loop_exit
    _
  %9231 = vsyncmov [#allocation4]
  %s9232 = vpop.sfrf %9231
  %p9233 = scmp.eq.s32.totalorder %s9232, 0
  %p9234 = pneg %p9233
  %9236 = shalt.err (%p9234)

</llo_original>
